<compile_context>
chip_gen: v7x
topology: tpu7x:2x2x1
jax: 0.10.0
libtpu: 0.0.40
codegen_flags: <defaults>
</compile_context>

<pallas_src>
import jax
import jax.numpy as jnp
from jax.experimental import pallas as pl
from jax.experimental.pallas import tpu as pltpu  # noqa: F401  (TPU backend assumed)

# ---- static config (small synthetic GPT-2-like stand-in) -------------------
D = 128          # hidden size (model.config.hidden_size stand-in)
V = 128          # vocab size after adding the new tokens
POS_VOCAB = 75   # pos_vocab_size
NT = 2           # number of new prompt tokens (token_weights rows)
F_IN = 32        # brain-signal feature dim fed to the Encoding_model stand-in
F_PAD = 64       # padded encoder-feature columns (F_IN data + 1 bias + zeros)
N_HEAD = 4
MAX_CTX = 64     # wpe table rows
VC_PAD = 256     # combined table rows: [wte | pos_table | token_weights | zeros]
ZERO_ROW = VC_PAD - 1   # guaranteed all-zero row (used for additional_bs slots)


# ---------------------------------------------------------------------------
# Fused kernel: prompt assembly followed by a single-block GPT-2-style causal
# LM (stand-in for self.model) -> logits for the flattened (B*s_total) tokens.
# ---------------------------------------------------------------------------
def prompt_lm_kernel(ids_ref, feats_ref, mask_ref, table_ref, enc_ref, wpe_ref,
                     normb_ref, bigb_ref, qkvw_ref, projw_ref, fcw_ref, fc2w_ref,
                     wtet_ref, logits_ref):
    f32 = jnp.float32
    bf16 = jnp.bfloat16
    N = logits_ref.shape[0]          # B * s_total
    d = table_ref.shape[1]
    vc = table_ref.shape[0]
    S = wpe_ref.shape[0]             # s_total
    B = N // S
    dh = d // N_HEAD
    eps = 1e-5

    # ---- prompt assembly (words2embedding / get_tokens / pos_embedding /
    #      get_prev / concat) as two matmuls:
    #      x = one_hot(ids) @ combined_table + [bs_feats|1|0] @ [enc_w;enc_b;0]
    ids = ids_ref[...]                                           # (N, 1) int32
    vi = jax.lax.broadcasted_iota(jnp.int32, (N, vc), 1)
    onehot = (ids == vi).astype(bf16)                            # (N, VC_PAD)
    x = jnp.dot(onehot, table_ref[...], preferred_element_type=f32)
    x = x + jnp.dot(feats_ref[...].astype(bf16), enc_ref[...],
                    preferred_element_type=f32)                  # (N, D) f32

    # inputs_embeds + position embeddings (positions restart per batch element;
    # attention_mask is all-ones in forward(), so only the causal mask matters).
    h = x + jnp.tile(wpe_ref[...], (B, 1))

    nb = normb_ref[...]              # (8, D): ln1 g,b | ln2 g,b | lnf g,b | proj_b | fc2_b
    bb = bigb_ref[...]               # (2, 4D): [qkv_b | 0] ; fc_b
    qkv_b = bb[0:1, :3 * d]
    fc_b = bb[1:2, :]

    def layernorm(v, g, b):          # f32 math
        mu = jnp.mean(v, axis=-1, keepdims=True)
        var = jnp.mean((v - mu) ** 2, axis=-1, keepdims=True)
        return (v - mu) * jax.lax.rsqrt(var + eps) * g + b

    # ---- causal (block-diagonal per batch) multi-head self-attention ----
    a_in = layernorm(h, nb[0:1], nb[1:2]).astype(bf16)
    qkv = jnp.dot(a_in, qkvw_ref[...], preferred_element_type=f32) + qkv_b   # (N, 3D)
    scale = 1.0 / (dh ** 0.5)
    q = (qkv[:, :d] * scale).reshape(N, N_HEAD, dh).astype(bf16)
    k = qkv[:, d:2 * d].reshape(N, N_HEAD, dh).astype(bf16)
    v = qkv[:, 2 * d:].reshape(N, N_HEAD, dh).astype(bf16)

    s = jnp.einsum('qhd,khd->hqk', q, k, preferred_element_type=f32)         # (H, N, N)
    s = s + mask_ref[...][None, :, :]
    s = s - jnp.max(s, axis=-1, keepdims=True)
    p = jnp.exp(s)
    p = p * pl.reciprocal(jnp.sum(p, axis=-1, keepdims=True), approx=True)
    o = jnp.einsum('hqk,khd->qhd', p.astype(bf16), v, preferred_element_type=f32)
    attn = o.reshape(N, d).astype(bf16)
    attn = jnp.dot(attn, projw_ref[...], preferred_element_type=f32) + nb[6:7]
    h = h + attn

    # ---- MLP (gelu_new like GPT-2) ----
    m_in = layernorm(h, nb[2:3], nb[3:4]).astype(bf16)
    m = jnp.dot(m_in, fcw_ref[...], preferred_element_type=f32) + fc_b
    m = jax.nn.gelu(m, approximate=True).astype(bf16)
    m = jnp.dot(m, fc2w_ref[...], preferred_element_type=f32) + nb[7:8]
    h = h + m

    hf = layernorm(h, nb[4:5], nb[5:6]).astype(bf16)
    # tied LM head: logits = hf @ wte^T (wte^T pre-built at init time, bf16)
    logits_ref[...] = jnp.dot(hf, wtet_ref[...], preferred_element_type=f32)


# ---------------------------------------------------------------------------
# Wrapper (glue): merged gather ids, padded encoder features, block-diagonal
# causal mask (compile-time constant), one grid-less pallas_call.
# ---------------------------------------------------------------------------
def prompt_model_forward(params, content_all, content_all_mask,
                         additional_bs, additional_bs_mask,
                         content_prev_sep, pos_tags):
    del content_all_mask, additional_bs_mask  # forward() regenerates an all-ones mask
    B, s_ca = content_all.shape
    s_sep = content_prev_sep.shape[1]
    s_pos = pos_tags.shape[1]
    s_bs = additional_bs.shape[1]
    s_total = 1 + s_bs + (s_sep - 1) + s_ca + s_pos
    N = B * s_total
    assert s_total <= MAX_CTX, "assembled prompt exceeds the wpe position table"

    ca = content_all.astype(jnp.int32)
    sep = content_prev_sep.astype(jnp.int32)
    pos = pos_tags.astype(jnp.int32)

    # get_tokens: sep[:, -1] / sep[:, -2] come from token_weights -> redirect ids
    # into the token_weights rows of the combined table.
    tw_base = V + POS_VOCAB
    sep = sep.at[:, s_sep - 2].set(tw_base + NT - 2)
    sep = sep.at[:, s_sep - 1].set(tw_base + NT - 1)

    # get_prev + concat order: [sep[:, :1], additional_bs, sep[:, 1:], content_all, pos]
    # additional_bs positions gather the all-zero pad row (their value comes from
    # the encoder-feature matmul instead). pos ids are offset into the pos table.
    bs_ids = jnp.full((B, s_bs), ZERO_ROW, jnp.int32)
    ids = jnp.concatenate([sep[:, :1], bs_ids, sep[:, 1:], ca, pos + V], axis=1)
    ids = ids.reshape(N, 1)

    # Encoding_model input features, zero-padded to the full flattened sequence,
    # with an extra constant-1 column so enc_b is folded into the matmul.
    feats = jnp.zeros((B, s_total, F_PAD), jnp.float32)
    feats = feats.at[:, 1:1 + s_bs, :F_IN].set(additional_bs.astype(jnp.float32))
    feats = feats.at[:, 1:1 + s_bs, F_IN].set(1.0)
    feats = feats.reshape(N, F_PAD)

    # Block-diagonal causal additive mask: depends only on static shapes, so it
    # is constant-folded under jit (no per-call compute).
    r = jnp.arange(N)
    same_batch = (r[:, None] // s_total) == (r[None, :] // s_total)
    causal = r[:, None] >= r[None, :]
    attn_mask = jnp.where(same_batch & causal, 0.0, -1e30).astype(jnp.float32)

    wpe = params["wpe"][:s_total, :]

    logits = pl.pallas_call(
        prompt_lm_kernel,
        out_shape=jax.ShapeDtypeStruct((N, V), jnp.float32),
    )(ids, feats, attn_mask,
      params["table"], params["enc_w_aug"], wpe,
      params["normb"], params["bigb"],
      params["qkv_w"], params["proj_w"], params["fc_w"], params["fc2_w"],
      params["wte_t"])

    logits = logits.reshape(B, s_total, V)
    # forward(): content_all_mask regenerated as ones((batch, seq_len), float32)
    content_all_mask = jnp.ones((B, s_total), dtype=jnp.float32)
    return logits, content_all_mask


# ---------------------------------------------------------------------------
# Deterministic synthetic parameter initialization (bf16 matmul weights,
# combined embedding table and transposed LM head built once here).
# ---------------------------------------------------------------------------
def init_params(key):
    ks = jax.random.split(key, 8)

    def nrm(k, shape, scale=0.02):
        return scale * jax.random.normal(k, shape, dtype=jnp.float32)

    wte = nrm(ks[0], (V, D))
    pos_table = nrm(ks[2], (POS_VOCAB, D))
    # token_weights = embedding rows of the NT newly-added tokens (last vocab rows)
    token_weights = wte[V - NT:, :]

    table = jnp.zeros((VC_PAD, D), jnp.float32)
    table = table.at[:V].set(wte)
    table = table.at[V:V + POS_VOCAB].set(pos_table)
    table = table.at[V + POS_VOCAB:V + POS_VOCAB + NT].set(token_weights)

    enc_w = nrm(ks[3], (F_IN, D))
    enc_b = jnp.zeros((D,), jnp.float32)
    enc_w_aug = jnp.zeros((F_PAD, D), jnp.float32)
    enc_w_aug = enc_w_aug.at[:F_IN].set(enc_w)
    enc_w_aug = enc_w_aug.at[F_IN].set(enc_b)

    ln_g = jnp.ones((D,), jnp.float32)
    ln_b = jnp.zeros((D,), jnp.float32)
    proj_b = jnp.zeros((D,), jnp.float32)
    fc2_b = jnp.zeros((D,), jnp.float32)
    normb = jnp.stack([ln_g, ln_b, ln_g, ln_b, ln_g, ln_b, proj_b, fc2_b])   # (8, D)

    qkv_b = jnp.zeros((3 * D,), jnp.float32)
    fc_b = jnp.zeros((4 * D,), jnp.float32)
    bigb = jnp.stack([jnp.concatenate([qkv_b, jnp.zeros((D,), jnp.float32)]), fc_b])

    return dict(
        table=table.astype(jnp.bfloat16),
        wte_t=jnp.transpose(wte).astype(jnp.bfloat16),    # built once, not per call
        enc_w_aug=enc_w_aug.astype(jnp.bfloat16),
        wpe=nrm(ks[1], (MAX_CTX, D)),
        normb=normb,
        bigb=bigb,
        qkv_w=nrm(ks[4], (D, 3 * D)).astype(jnp.bfloat16),
        proj_w=nrm(ks[5], (D, D)).astype(jnp.bfloat16),
        fc_w=nrm(ks[6], (D, 4 * D)).astype(jnp.bfloat16),
        fc2_w=nrm(ks[7], (4 * D, D)).astype(jnp.bfloat16),
    )


if __name__ == "__main__":
    key = jax.random.PRNGKey(0)
    pkey, k1, k2, k3, k4 = jax.random.split(key, 5)
    params = init_params(pkey)

    B, S_CA, S_SEP, S_BS, S_POS = 2, 8, 4, 4, 4
    content_all = jax.random.randint(k1, (B, S_CA), 0, V, dtype=jnp.int32)
    content_all_mask = jnp.ones((B, S_CA), jnp.float32)
    additional_bs = jax.random.normal(k2, (B, S_BS, F_IN), dtype=jnp.float32)
    additional_bs_mask = jnp.ones((B, S_BS), jnp.float32)
    content_prev_sep = jax.random.randint(k3, (B, S_SEP), 0, V, dtype=jnp.int32)
    pos_tags = jax.random.randint(k4, (B, S_POS), 0, POS_VOCAB, dtype=jnp.int32)

    logits, mask = jax.jit(prompt_model_forward)(
        params, content_all, content_all_mask,
        additional_bs, additional_bs_mask, content_prev_sep, pos_tags)
    jax.block_until_ready((logits, mask))

    s_total = 1 + S_BS + (S_SEP - 1) + S_CA + S_POS
    assert logits.shape == (B, s_total, V) and logits.dtype == jnp.float32
    assert mask.shape == (B, s_total) and mask.dtype == jnp.float32
    assert bool(jnp.all(jnp.isfinite(logits)))
    print("KERNEL_OK")
</pallas_src>

<mosaic_0001>
module attributes {stable_mosaic.version = 11 : i64} {
  func.func @prompt_lm_kernel(%arg0: memref<40x1xi32, #tpu.memory_space<vmem>>, %arg1: memref<40x64xf32, #tpu.memory_space<vmem>>, %arg2: memref<40x40xf32, #tpu.memory_space<vmem>>, %arg3: memref<256x128xbf16, #tpu.memory_space<vmem>>, %arg4: memref<64x128xbf16, #tpu.memory_space<vmem>>, %arg5: memref<20x128xf32, #tpu.memory_space<vmem>>, %arg6: memref<8x128xf32, #tpu.memory_space<vmem>>, %arg7: memref<2x512xf32, #tpu.memory_space<vmem>>, %arg8: memref<128x384xbf16, #tpu.memory_space<vmem>>, %arg9: memref<128x128xbf16, #tpu.memory_space<vmem>>, %arg10: memref<128x512xbf16, #tpu.memory_space<vmem>>, %arg11: memref<512x128xbf16, #tpu.memory_space<vmem>>, %arg12: memref<128x128xbf16, #tpu.memory_space<vmem>>, %arg13: memref<40x128xf32, #tpu.memory_space<vmem>>) attributes {dimension_semantics = [], scalar_prefetch = 0 : i64, scratch_operands = 0 : i64, tpu.core_type = #tpu.core_type<tc>} {
    %c0 = arith.constant 0 : index
    %c0_0 = arith.constant 0 : index
    %0 = vector.load %arg0[%c0, %c0_0] : memref<40x1xi32, #tpu.memory_space<vmem>>, vector<40x1xi32>
    %1 = tpu.iota {dimensions = array<i32: 1>} : vector<40x256xi32>
    %2 = vector.broadcast %0 : vector<40x1xi32> to vector<40x256xi32>
    %3 = arith.cmpi eq, %2, %1 : vector<40x256xi32>
    %4 = arith.extui %3 : vector<40x256xi1> to vector<40x256xi32>
    %5 = arith.sitofp %4 : vector<40x256xi32> to vector<40x256xf32>
    %6 = arith.truncf %5 : vector<40x256xf32> to vector<40x256xbf16>
    %c0_1 = arith.constant 0 : index
    %c0_2 = arith.constant 0 : index
    %7 = vector.load %arg3[%c0_1, %c0_2] : memref<256x128xbf16, #tpu.memory_space<vmem>>, vector<256x128xbf16>
    %cst = arith.constant dense<0.000000e+00> : vector<40x128xf32>
    %8 = tpu.matmul %6, %7, %cst {dimension_numbers = #tpu.dot_dimension_numbers<[1], [0], [0], [1], [0, 0, 1, 1], [], []>} : vector<40x256xbf16>, vector<256x128xbf16>, vector<40x128xf32> -> vector<40x128xf32>
    %c0_3 = arith.constant 0 : index
    %c0_4 = arith.constant 0 : index
    %9 = vector.load %arg1[%c0_3, %c0_4] : memref<40x64xf32, #tpu.memory_space<vmem>>, vector<40x64xf32>
    %10 = arith.truncf %9 : vector<40x64xf32> to vector<40x64xbf16>
    %c0_5 = arith.constant 0 : index
    %c0_6 = arith.constant 0 : index
    %11 = vector.load %arg4[%c0_5, %c0_6] : memref<64x128xbf16, #tpu.memory_space<vmem>>, vector<64x128xbf16>
    %cst_7 = arith.constant dense<0.000000e+00> : vector<40x128xf32>
    %12 = tpu.matmul %10, %11, %cst_7 {dimension_numbers = #tpu.dot_dimension_numbers<[1], [0], [0], [1], [0, 0, 1, 1], [], []>} : vector<40x64xbf16>, vector<64x128xbf16>, vector<40x128xf32> -> vector<40x128xf32>
    %13 = arith.addf %8, %12 : vector<40x128xf32>
    %c0_8 = arith.constant 0 : index
    %c0_9 = arith.constant 0 : index
    %14 = vector.load %arg5[%c0_8, %c0_9] : memref<20x128xf32, #tpu.memory_space<vmem>>, vector<20x128xf32>
    %15 = tpu.concatenate %14, %14 in 0 : vector<20x128xf32>, vector<20x128xf32> -> vector<40x128xf32>
    %16 = arith.addf %13, %15 : vector<40x128xf32>
    %c0_10 = arith.constant 0 : index
    %c0_11 = arith.constant 0 : index
    %17 = vector.load %arg6[%c0_10, %c0_11] : memref<8x128xf32, #tpu.memory_space<vmem>>, vector<8x128xf32>
    %c0_12 = arith.constant 0 : index
    %c0_13 = arith.constant 0 : index
    %18 = vector.load %arg7[%c0_12, %c0_13] : memref<2x512xf32, #tpu.memory_space<vmem>>, vector<2x512xf32>
    %19 = vector.extract_strided_slice %18 {offsets = [0, 0], sizes = [1, 384], strides = [1, 1]} : vector<2x512xf32> to vector<1x384xf32>
    %20 = vector.extract_strided_slice %18 {offsets = [1, 0], sizes = [1, 512], strides = [1, 1]} : vector<2x512xf32> to vector<1x512xf32>
    %21 = vector.extract_strided_slice %17 {offsets = [0, 0], sizes = [1, 128], strides = [1, 1]} : vector<8x128xf32> to vector<1x128xf32>
    %22 = vector.extract_strided_slice %17 {offsets = [1, 0], sizes = [1, 128], strides = [1, 1]} : vector<8x128xf32> to vector<1x128xf32>
    %cst_14 = arith.constant dense<0.000000e+00> : vector<40xf32>
    %23 = vector.multi_reduction <add>, %16, %cst_14 [1] : vector<40x128xf32> to vector<40xf32>
    %24 = vector.shape_cast %23 : vector<40xf32> to vector<40x1xf32>
    %cst_15 = arith.constant 1.280000e+02 : f32
    %25 = vector.broadcast %cst_15 : f32 to vector<40x1xf32>
    %26 = arith.divf %24, %25 : vector<40x1xf32>
    %27 = vector.broadcast %26 : vector<40x1xf32> to vector<40x128xf32>
    %28 = arith.subf %16, %27 : vector<40x128xf32>
    %29 = arith.mulf %28, %28 : vector<40x128xf32>
    %cst_16 = arith.constant dense<0.000000e+00> : vector<40xf32>
    %30 = vector.multi_reduction <add>, %29, %cst_16 [1] : vector<40x128xf32> to vector<40xf32>
    %31 = vector.shape_cast %30 : vector<40xf32> to vector<40x1xf32>
    %cst_17 = arith.constant 1.280000e+02 : f32
    %32 = vector.broadcast %cst_17 : f32 to vector<40x1xf32>
    %33 = arith.divf %31, %32 : vector<40x1xf32>
    %34 = vector.broadcast %26 : vector<40x1xf32> to vector<40x128xf32>
    %35 = arith.subf %16, %34 : vector<40x128xf32>
    %cst_18 = arith.constant 9.99999974E-6 : f32
    %36 = vector.broadcast %cst_18 : f32 to vector<40x1xf32>
    %37 = arith.addf %33, %36 : vector<40x1xf32>
    %38 = math.rsqrt %37 : vector<40x1xf32>
    %39 = vector.broadcast %38 : vector<40x1xf32> to vector<40x128xf32>
    %40 = arith.mulf %35, %39 : vector<40x128xf32>
    %41 = vector.broadcast %21 : vector<1x128xf32> to vector<40x128xf32>
    %42 = arith.mulf %40, %41 : vector<40x128xf32>
    %43 = vector.broadcast %22 : vector<1x128xf32> to vector<40x128xf32>
    %44 = arith.addf %42, %43 : vector<40x128xf32>
    %45 = arith.truncf %44 : vector<40x128xf32> to vector<40x128xbf16>
    %c0_19 = arith.constant 0 : index
    %c0_20 = arith.constant 0 : index
    %46 = vector.load %arg8[%c0_19, %c0_20] : memref<128x384xbf16, #tpu.memory_space<vmem>>, vector<128x384xbf16>
    %cst_21 = arith.constant dense<0.000000e+00> : vector<40x384xf32>
    %47 = tpu.matmul %45, %46, %cst_21 {dimension_numbers = #tpu.dot_dimension_numbers<[1], [0], [0], [1], [0, 0, 1, 1], [], []>} : vector<40x128xbf16>, vector<128x384xbf16>, vector<40x384xf32> -> vector<40x384xf32>
    %48 = vector.broadcast %19 : vector<1x384xf32> to vector<40x384xf32>
    %49 = arith.addf %47, %48 : vector<40x384xf32>
    %50 = vector.extract_strided_slice %49 {offsets = [0, 0], sizes = [40, 128], strides = [1, 1]} : vector<40x384xf32> to vector<40x128xf32>
    %cst_22 = arith.constant 0.176776692 : f32
    %51 = vector.broadcast %cst_22 : f32 to vector<40x128xf32>
    %52 = arith.mulf %50, %51 : vector<40x128xf32>
    %53 = vector.shape_cast %52 : vector<40x128xf32> to vector<40x4x32xf32>
    %54 = arith.truncf %53 : vector<40x4x32xf32> to vector<40x4x32xbf16>
    %55 = vector.extract_strided_slice %49 {offsets = [0, 128], sizes = [40, 128], strides = [1, 1]} : vector<40x384xf32> to vector<40x128xf32>
    %56 = vector.shape_cast %55 : vector<40x128xf32> to vector<40x4x32xf32>
    %57 = arith.truncf %56 : vector<40x4x32xf32> to vector<40x4x32xbf16>
    %58 = vector.extract_strided_slice %49 {offsets = [0, 256], sizes = [40, 128], strides = [1, 1]} : vector<40x384xf32> to vector<40x128xf32>
    %59 = vector.shape_cast %58 : vector<40x128xf32> to vector<40x4x32xf32>
    %60 = arith.truncf %59 : vector<40x4x32xf32> to vector<40x4x32xbf16>
    "tpu.trace_start"() <{level = 10 : i32, message = "qhd,khd->hqk"}> : () -> ()
    %cst_23 = arith.constant dense<0.000000e+00> : vector<4x40x40xf32>
    %61 = tpu.matmul %54, %57, %cst_23 {dimension_numbers = #tpu.dot_dimension_numbers<[2], [2], [0], [0], [0, 1, 0, 0, 1, 0], [1], [1]>} : vector<40x4x32xbf16>, vector<40x4x32xbf16>, vector<4x40x40xf32> -> vector<4x40x40xf32>
    "tpu.trace_stop"() : () -> ()
    %c0_24 = arith.constant 0 : index
    %c0_25 = arith.constant 0 : index
    %62 = vector.load %arg2[%c0_24, %c0_25] : memref<40x40xf32, #tpu.memory_space<vmem>>, vector<40x40xf32>
    %63 = vector.shape_cast %62 : vector<40x40xf32> to vector<1x40x40xf32>
    %64 = vector.broadcast %63 : vector<1x40x40xf32> to vector<4x40x40xf32>
    %65 = arith.addf %61, %64 : vector<4x40x40xf32>
    %cst_26 = arith.constant dense<0xFF800000> : vector<4x40xf32>
    %66 = vector.multi_reduction <maximumf>, %65, %cst_26 [2] : vector<4x40x40xf32> to vector<4x40xf32>
    %67 = vector.shape_cast %66 : vector<4x40xf32> to vector<4x40x1xf32>
    %68 = vector.broadcast %67 : vector<4x40x1xf32> to vector<4x40x40xf32>
    %69 = arith.subf %65, %68 : vector<4x40x40xf32>
    %70 = math.exp %69 : vector<4x40x40xf32>
    %cst_27 = arith.constant dense<0.000000e+00> : vector<4x40xf32>
    %71 = vector.multi_reduction <add>, %70, %cst_27 [2] : vector<4x40x40xf32> to vector<4x40xf32>
    %72 = vector.shape_cast %71 : vector<4x40xf32> to vector<4x40x1xf32>
    %73 = tpu.reciprocal %72 {approx = true} : vector<4x40x1xf32> -> vector<4x40x1xf32>
    %74 = vector.broadcast %73 : vector<4x40x1xf32> to vector<4x40x40xf32>
    %75 = arith.mulf %70, %74 : vector<4x40x40xf32>
    %76 = arith.truncf %75 : vector<4x40x40xf32> to vector<4x40x40xbf16>
    "tpu.trace_start"() <{level = 10 : i32, message = "hqk,khd->qhd"}> : () -> ()
    %cst_28 = arith.constant dense<0.000000e+00> : vector<4x32x40xf32>
    %77 = tpu.matmul %60, %76, %cst_28 {dimension_numbers = #tpu.dot_dimension_numbers<[0], [2], [2], [1], [0, 1, 0, 2, 1, 1], [1], [0]>} : vector<40x4x32xbf16>, vector<4x40x40xbf16>, vector<4x32x40xf32> -> vector<4x32x40xf32>
    %78 = tpu.transpose %77, [2, 0, 1] : vector<4x32x40xf32> -> vector<40x4x32xf32>
    "tpu.trace_stop"() : () -> ()
    %79 = vector.shape_cast %78 : vector<40x4x32xf32> to vector<40x128xf32>
    %80 = arith.truncf %79 : vector<40x128xf32> to vector<40x128xbf16>
    %c0_29 = arith.constant 0 : index
    %c0_30 = arith.constant 0 : index
    %81 = vector.load %arg9[%c0_29, %c0_30] : memref<128x128xbf16, #tpu.memory_space<vmem>>, vector<128x128xbf16>
    %cst_31 = arith.constant dense<0.000000e+00> : vector<40x128xf32>
    %82 = tpu.matmul %80, %81, %cst_31 {dimension_numbers = #tpu.dot_dimension_numbers<[1], [0], [0], [1], [0, 0, 1, 1], [], []>} : vector<40x128xbf16>, vector<128x128xbf16>, vector<40x128xf32> -> vector<40x128xf32>
    %83 = vector.extract_strided_slice %17 {offsets = [6, 0], sizes = [1, 128], strides = [1, 1]} : vector<8x128xf32> to vector<1x128xf32>
    %84 = vector.broadcast %83 : vector<1x128xf32> to vector<40x128xf32>
    %85 = arith.addf %82, %84 : vector<40x128xf32>
    %86 = arith.addf %16, %85 : vector<40x128xf32>
    %87 = vector.extract_strided_slice %17 {offsets = [2, 0], sizes = [1, 128], strides = [1, 1]} : vector<8x128xf32> to vector<1x128xf32>
    %88 = vector.extract_strided_slice %17 {offsets = [3, 0], sizes = [1, 128], strides = [1, 1]} : vector<8x128xf32> to vector<1x128xf32>
    %cst_32 = arith.constant dense<0.000000e+00> : vector<40xf32>
    %89 = vector.multi_reduction <add>, %86, %cst_32 [1] : vector<40x128xf32> to vector<40xf32>
    %90 = vector.shape_cast %89 : vector<40xf32> to vector<40x1xf32>
    %cst_33 = arith.constant 1.280000e+02 : f32
    %91 = vector.broadcast %cst_33 : f32 to vector<40x1xf32>
    %92 = arith.divf %90, %91 : vector<40x1xf32>
    %93 = vector.broadcast %92 : vector<40x1xf32> to vector<40x128xf32>
    %94 = arith.subf %86, %93 : vector<40x128xf32>
    %95 = arith.mulf %94, %94 : vector<40x128xf32>
    %cst_34 = arith.constant dense<0.000000e+00> : vector<40xf32>
    %96 = vector.multi_reduction <add>, %95, %cst_34 [1] : vector<40x128xf32> to vector<40xf32>
    %97 = vector.shape_cast %96 : vector<40xf32> to vector<40x1xf32>
    %cst_35 = arith.constant 1.280000e+02 : f32
    %98 = vector.broadcast %cst_35 : f32 to vector<40x1xf32>
    %99 = arith.divf %97, %98 : vector<40x1xf32>
    %100 = vector.broadcast %92 : vector<40x1xf32> to vector<40x128xf32>
    %101 = arith.subf %86, %100 : vector<40x128xf32>
    %cst_36 = arith.constant 9.99999974E-6 : f32
    %102 = vector.broadcast %cst_36 : f32 to vector<40x1xf32>
    %103 = arith.addf %99, %102 : vector<40x1xf32>
    %104 = math.rsqrt %103 : vector<40x1xf32>
    %105 = vector.broadcast %104 : vector<40x1xf32> to vector<40x128xf32>
    %106 = arith.mulf %101, %105 : vector<40x128xf32>
    %107 = vector.broadcast %87 : vector<1x128xf32> to vector<40x128xf32>
    %108 = arith.mulf %106, %107 : vector<40x128xf32>
    %109 = vector.broadcast %88 : vector<1x128xf32> to vector<40x128xf32>
    %110 = arith.addf %108, %109 : vector<40x128xf32>
    %111 = arith.truncf %110 : vector<40x128xf32> to vector<40x128xbf16>
    %c0_37 = arith.constant 0 : index
    %c0_38 = arith.constant 0 : index
    %112 = vector.load %arg10[%c0_37, %c0_38] : memref<128x512xbf16, #tpu.memory_space<vmem>>, vector<128x512xbf16>
    %cst_39 = arith.constant dense<0.000000e+00> : vector<40x512xf32>
    %113 = tpu.matmul %111, %112, %cst_39 {dimension_numbers = #tpu.dot_dimension_numbers<[1], [0], [0], [1], [0, 0, 1, 1], [], []>} : vector<40x128xbf16>, vector<128x512xbf16>, vector<40x512xf32> -> vector<40x512xf32>
    %114 = vector.broadcast %20 : vector<1x512xf32> to vector<40x512xf32>
    %115 = arith.addf %113, %114 : vector<40x512xf32>
    %116 = arith.mulf %115, %115 : vector<40x512xf32>
    %117 = arith.mulf %115, %116 : vector<40x512xf32>
    %cst_40 = arith.constant 4.471500e-02 : f32
    %118 = vector.broadcast %cst_40 : f32 to vector<40x512xf32>
    %119 = arith.mulf %118, %117 : vector<40x512xf32>
    %120 = arith.addf %115, %119 : vector<40x512xf32>
    %cst_41 = arith.constant 0.797884583 : f32
    %121 = vector.broadcast %cst_41 : f32 to vector<40x512xf32>
    %122 = arith.mulf %121, %120 : vector<40x512xf32>
    %123 = math.tanh %122 : vector<40x512xf32>
    %cst_42 = arith.constant 1.000000e+00 : f32
    %124 = vector.broadcast %cst_42 : f32 to vector<40x512xf32>
    %125 = arith.addf %124, %123 : vector<40x512xf32>
    %cst_43 = arith.constant 5.000000e-01 : f32
    %126 = vector.broadcast %cst_43 : f32 to vector<40x512xf32>
    %127 = arith.mulf %126, %125 : vector<40x512xf32>
    %128 = arith.mulf %115, %127 : vector<40x512xf32>
    %129 = arith.truncf %128 : vector<40x512xf32> to vector<40x512xbf16>
    %c0_44 = arith.constant 0 : index
    %c0_45 = arith.constant 0 : index
    %130 = vector.load %arg11[%c0_44, %c0_45] : memref<512x128xbf16, #tpu.memory_space<vmem>>, vector<512x128xbf16>
    %cst_46 = arith.constant dense<0.000000e+00> : vector<40x128xf32>
    %131 = tpu.matmul %129, %130, %cst_46 {dimension_numbers = #tpu.dot_dimension_numbers<[1], [0], [0], [1], [0, 0, 1, 1], [], []>} : vector<40x512xbf16>, vector<512x128xbf16>, vector<40x128xf32> -> vector<40x128xf32>
    %132 = vector.extract_strided_slice %17 {offsets = [7, 0], sizes = [1, 128], strides = [1, 1]} : vector<8x128xf32> to vector<1x128xf32>
    %133 = vector.broadcast %132 : vector<1x128xf32> to vector<40x128xf32>
    %134 = arith.addf %131, %133 : vector<40x128xf32>
    %135 = arith.addf %86, %134 : vector<40x128xf32>
    %136 = vector.extract_strided_slice %17 {offsets = [4, 0], sizes = [1, 128], strides = [1, 1]} : vector<8x128xf32> to vector<1x128xf32>
    %137 = vector.extract_strided_slice %17 {offsets = [5, 0], sizes = [1, 128], strides = [1, 1]} : vector<8x128xf32> to vector<1x128xf32>
    %cst_47 = arith.constant dense<0.000000e+00> : vector<40xf32>
    %138 = vector.multi_reduction <add>, %135, %cst_47 [1] : vector<40x128xf32> to vector<40xf32>
    %139 = vector.shape_cast %138 : vector<40xf32> to vector<40x1xf32>
    %cst_48 = arith.constant 1.280000e+02 : f32
    %140 = vector.broadcast %cst_48 : f32 to vector<40x1xf32>
    %141 = arith.divf %139, %140 : vector<40x1xf32>
    %142 = vector.broadcast %141 : vector<40x1xf32> to vector<40x128xf32>
    %143 = arith.subf %135, %142 : vector<40x128xf32>
    %144 = arith.mulf %143, %143 : vector<40x128xf32>
    %cst_49 = arith.constant dense<0.000000e+00> : vector<40xf32>
    %145 = vector.multi_reduction <add>, %144, %cst_49 [1] : vector<40x128xf32> to vector<40xf32>
    %146 = vector.shape_cast %145 : vector<40xf32> to vector<40x1xf32>
    %cst_50 = arith.constant 1.280000e+02 : f32
    %147 = vector.broadcast %cst_50 : f32 to vector<40x1xf32>
    %148 = arith.divf %146, %147 : vector<40x1xf32>
    %149 = vector.broadcast %141 : vector<40x1xf32> to vector<40x128xf32>
    %150 = arith.subf %135, %149 : vector<40x128xf32>
    %cst_51 = arith.constant 9.99999974E-6 : f32
    %151 = vector.broadcast %cst_51 : f32 to vector<40x1xf32>
    %152 = arith.addf %148, %151 : vector<40x1xf32>
    %153 = math.rsqrt %152 : vector<40x1xf32>
    %154 = vector.broadcast %153 : vector<40x1xf32> to vector<40x128xf32>
    %155 = arith.mulf %150, %154 : vector<40x128xf32>
    %156 = vector.broadcast %136 : vector<1x128xf32> to vector<40x128xf32>
    %157 = arith.mulf %155, %156 : vector<40x128xf32>
    %158 = vector.broadcast %137 : vector<1x128xf32> to vector<40x128xf32>
    %159 = arith.addf %157, %158 : vector<40x128xf32>
    %160 = arith.truncf %159 : vector<40x128xf32> to vector<40x128xbf16>
    %c0_52 = arith.constant 0 : index
    %c0_53 = arith.constant 0 : index
    %161 = vector.load %arg12[%c0_52, %c0_53] : memref<128x128xbf16, #tpu.memory_space<vmem>>, vector<128x128xbf16>
    %cst_54 = arith.constant dense<0.000000e+00> : vector<40x128xf32>
    %162 = tpu.matmul %160, %161, %cst_54 {dimension_numbers = #tpu.dot_dimension_numbers<[1], [0], [0], [1], [0, 0, 1, 1], [], []>} : vector<40x128xbf16>, vector<128x128xbf16>, vector<40x128xf32> -> vector<40x128xf32>
    %c0_55 = arith.constant 0 : index
    %c0_56 = arith.constant 0 : index
    %163 = vector.load %arg13[%c0_55, %c0_56] : memref<40x128xf32, #tpu.memory_space<vmem>>, vector<40x128xf32>
    tpu.vector_store %arg13[%c0_55, %c0_56], %162 {strides = array<i32>} : memref<40x128xf32, #tpu.memory_space<vmem>>, vector<40x128xf32>,
    return
  }
}

</mosaic_0001>

<llo_original>
// kernel: prompt_model_forward.1
$region0: #{prompt_model_forward.1}
  #allocation0 [shape = 'u32[]', space=smem, size = 0x4, offset = 0x4, fixed_abs, tag = 'smem constant byte address 0x4 - core index']
  #allocation1 [shape = 'u32[144,128]{1,0:T(1,128)}', space=vmem, size = 0x12000, scoped, tag = 'internal scratch']
  %s0 = inlined_call_operand.vmem [shape: s32[40,1], index: 0, kind: input, shape index: {}]
  %s1 = inlined_call_operand.vmem [shape: f32[40,64], index: 1, kind: input, shape index: {}]
  %s2 = inlined_call_operand.vmem [shape: f32[40,40], index: 2, kind: input, shape index: {}]
  %s3 = inlined_call_operand.vmem [shape: bf16[256,128], index: 3, kind: input, shape index: {}]
  %s4 = inlined_call_operand.hbm [shape: bf16[64,128], index: 4, kind: input, shape index: {}]
  %s5 = inlined_call_operand.vmem [shape: f32[20,128], index: 5, kind: input, shape index: {}]
  %s6 = inlined_call_operand.vmem [shape: f32[8,128], index: 6, kind: input, shape index: {}]
  %s7 = inlined_call_operand.vmem [shape: f32[2,512], index: 7, kind: input, shape index: {}]
  %s8 = inlined_call_operand.hbm [shape: bf16[128,384], index: 8, kind: input, shape index: {}]
  %s9 = inlined_call_operand.hbm [shape: bf16[128,128], index: 9, kind: input, shape index: {}]
  %s10 = inlined_call_operand.vmem [shape: bf16[128,512], index: 10, kind: input, shape index: {}]
  %s11 = inlined_call_operand.hbm [shape: bf16[512,128], index: 11, kind: input, shape index: {}]
  %s12 = inlined_call_operand.hbm [shape: bf16[128,128], index: 12, kind: input, shape index: {}]
  %s13 = inlined_call_operand.vmem [shape: f32[40,128], index: 13, kind: output, shape index: {}]
  %s14 = sld [smem:[#allocation0]]
  $region82: #{prompt_model_forward.1} parent=0
    _
  %s16 = ssub.s32 1, %s14
  %s17 = scalar_select 0, %s16, %s14
  $region1: #{prompt_model_forward.1} parent=0
    #allocation2 [shape = 'u8[16384]{0}', space=vmem, size = 0x4000, scoped, tag = 'input window, operand 4, single buffered']
    #allocation3 [shape = 's32[1]{0}', space=sflag, size = 0x4, scoped, tag = 'scoped memory for prompt_model_forward.1']
    #allocation4 [shape = 'u8[98304]{0}', space=vmem, size = 0x18000, scoped, tag = 'input window, operand 8, single buffered']
    #allocation5 [shape = 's32[1]{0}', space=sflag, size = 0x4, scoped, tag = 'scoped memory for prompt_model_forward.1']
    #allocation6 [shape = 'u8[32768]{0}', space=vmem, size = 0x8000, scoped, tag = 'input window, operand 9, single buffered']
    #allocation7 [shape = 'u8[131072]{0}', space=vmem, size = 0x20000, scoped, tag = 'input window, operand 11, single buffered']
    #allocation8 [shape = 's32[1]{0}', space=sflag, size = 0x4, scoped, tag = 'scoped memory for prompt_model_forward.1']
    #allocation9 [shape = 'u8[32768]{0}', space=vmem, size = 0x8000, scoped, tag = 'input window, operand 12, single buffered']
    %18 = vsyncpa [#allocation3], 0
    %19 = vsyncpa [#allocation5], 0
    %20 = vsyncpa [#allocation8], 0
    // Predicated region
    $region2: #{prompt_model_forward.1} parent=1 // pred_check
      _
    $region3: #{prompt_model_forward.1} parent=1 // pred_check_branch
      %22 = sbr.rel (0) target = $region5
    $region4: #{prompt_model_forward.1} parent=1 // pred_region
      _
    $region5: #{prompt_model_forward.1} parent=1 // pred_fallthru
      _
    // Predicated region
    $region6: #{prompt_model_forward.1} parent=1 // pred_check
      _
    $region7: #{prompt_model_forward.1} parent=1 // pred_check_branch
      %24 = sbr.rel (0) target = $region9
    $region8: #{prompt_model_forward.1} parent=1 // pred_region
      _
    $region9: #{prompt_model_forward.1} parent=1 // pred_fallthru
      _
    // Predicated region
    $region10: #{prompt_model_forward.1} parent=1 // pred_check
      _
    $region11: #{prompt_model_forward.1} parent=1 // pred_check_branch
      %26 = sbr.rel (0) target = $region13
    $region12: #{prompt_model_forward.1} parent=1 // pred_region
      _
    $region13: #{prompt_model_forward.1} parent=1 // pred_fallthru
      _
    // Predicated region
    $region14: #{prompt_model_forward.1} parent=1 // pred_check
      _
    $region15: #{prompt_model_forward.1} parent=1 // pred_check_branch
      %28 = sbr.rel (0) target = $region17
    $region16: #{prompt_model_forward.1} parent=1 // pred_region
      _
    $region17: #{prompt_model_forward.1} parent=1 // pred_fallthru
      _
    // Predicated region
    $region18: #{prompt_model_forward.1} parent=1 // pred_check
      _
    $region19: #{prompt_model_forward.1} parent=1 // pred_check_branch
      %30 = sbr.rel (0) target = $region21
    $region20: #{prompt_model_forward.1} parent=1 // pred_region
      %s32 = ssub.s32 512, 512
      %33 = vsyncadd [#allocation3], %s32
      %s34 = sshll.u32 [#allocation2], 4
      %s35 = int_to_ptr.vmem [resolvable:$true] %s34
      %40 = dma.hbm_to_vmem [thread:$0]  %s4, 512, %s35, [#allocation3], 64, 64, 4
    $region21: #{prompt_model_forward.1} parent=1 // pred_fallthru
      _
    // Predicated region
    $region22: #{prompt_model_forward.1} parent=1 // pred_check
      _
    $region23: #{prompt_model_forward.1} parent=1 // pred_check_branch
      %42 = sbr.rel (0) target = $region25
    $region24: #{prompt_model_forward.1} parent=1 // pred_region
      _
    $region25: #{prompt_model_forward.1} parent=1 // pred_fallthru
      _
    // Predicated region
    $region26: #{prompt_model_forward.1} parent=1 // pred_check
      _
    $region27: #{prompt_model_forward.1} parent=1 // pred_check_branch
      %44 = sbr.rel (0) target = $region29
    $region28: #{prompt_model_forward.1} parent=1 // pred_region
      _
    $region29: #{prompt_model_forward.1} parent=1 // pred_fallthru
      _
    // Predicated region
    $region30: #{prompt_model_forward.1} parent=1 // pred_check
      _
    $region31: #{prompt_model_forward.1} parent=1 // pred_check_branch
      %46 = sbr.rel (0) target = $region33
    $region32: #{prompt_model_forward.1} parent=1 // pred_region
      _
    $region33: #{prompt_model_forward.1} parent=1 // pred_fallthru
      _
    // Predicated region
    $region34: #{prompt_model_forward.1} parent=1 // pred_check
      _
    $region35: #{prompt_model_forward.1} parent=1 // pred_check_branch
      %48 = sbr.rel (0) target = $region37
    $region36: #{prompt_model_forward.1} parent=1 // pred_region
      %s50 = ssub.s32 3072, 3072
      %51 = vsyncadd [#allocation5], %s50
      %s52 = sshll.u32 [#allocation4], 4
      %s53 = int_to_ptr.vmem [resolvable:$true] %s52
      %58 = dma.hbm_to_vmem [thread:$0]  %s8, 3072, %s53, [#allocation5], 192, 192, 12
    $region37: #{prompt_model_forward.1} parent=1 // pred_fallthru
      _
    // Predicated region
    $region38: #{prompt_model_forward.1} parent=1 // pred_check
      _
    $region39: #{prompt_model_forward.1} parent=1 // pred_check_branch
      %60 = sbr.rel (0) target = $region41
    $region40: #{prompt_model_forward.1} parent=1 // pred_region
      %s62 = ssub.s32 1024, 1024
      %63 = vsyncadd [#allocation5], %s62
      %s64 = sshll.u32 [#allocation6], 4
      %s65 = int_to_ptr.vmem [resolvable:$true] %s64
      %70 = dma.hbm_to_vmem [thread:$0]  %s9, 1024, %s65, [#allocation5], 64, 64, 4
    $region41: #{prompt_model_forward.1} parent=1 // pred_fallthru
      _
    // Predicated region
    $region42: #{prompt_model_forward.1} parent=1 // pred_check
      _
    $region43: #{prompt_model_forward.1} parent=1 // pred_check_branch
      %72 = sbr.rel (0) target = $region45
    $region44: #{prompt_model_forward.1} parent=1 // pred_region
      _
    $region45: #{prompt_model_forward.1} parent=1 // pred_fallthru
      _
    // Predicated region
    $region46: #{prompt_model_forward.1} parent=1 // pred_check
      _
    $region47: #{prompt_model_forward.1} parent=1 // pred_check_branch
      %74 = sbr.rel (0) target = $region49
    $region48: #{prompt_model_forward.1} parent=1 // pred_region
      %s76 = ssub.s32 4096, 4096
      %77 = vsyncadd [#allocation8], %s76
      %s78 = sshll.u32 [#allocation7], 4
      %s79 = int_to_ptr.vmem [resolvable:$true] %s78
      %84 = dma.hbm_to_vmem [thread:$0]  %s11, 4096, %s79, [#allocation8], 64, 64, 4
    $region49: #{prompt_model_forward.1} parent=1 // pred_fallthru
      _
    // Predicated region
    $region50: #{prompt_model_forward.1} parent=1 // pred_check
      _
    $region51: #{prompt_model_forward.1} parent=1 // pred_check_branch
      %86 = sbr.rel (0) target = $region53
    $region52: #{prompt_model_forward.1} parent=1 // pred_region
      %s88 = ssub.s32 1024, 1024
      %89 = vsyncadd [#allocation8], %s88
      %s90 = sshll.u32 [#allocation9], 4
      %s91 = int_to_ptr.vmem [resolvable:$true] %s90
      %96 = dma.hbm_to_vmem [thread:$0]  %s12, 1024, %s91, [#allocation8], 64, 64, 4
    $region53: #{prompt_model_forward.1} parent=1 // pred_fallthru
      _
    // Predicated region
    $region54: #{prompt_model_forward.1} parent=1 // pred_check
      _
    $region55: #{prompt_model_forward.1} parent=1 // pred_check_branch
      %98 = sbr.rel (0) target = $region57
    $region56: #{prompt_model_forward.1} parent=1 // pred_region
      %99 = dma.done [#allocation3], 512
    $region57: #{prompt_model_forward.1} parent=1 // pred_fallthru
      _
    // Predicated region
    $region58: #{prompt_model_forward.1} parent=1 // pred_check
      _
    $region59: #{prompt_model_forward.1} parent=1 // pred_check_branch
      %101 = sbr.rel (0) target = $region61
    $region60: #{prompt_model_forward.1} parent=1 // pred_region
      %102 = dma.done [#allocation5], 3072
    $region61: #{prompt_model_forward.1} parent=1 // pred_fallthru
      _
    // Predicated region
    $region62: #{prompt_model_forward.1} parent=1 // pred_check
      _
    $region63: #{prompt_model_forward.1} parent=1 // pred_check_branch
      %104 = sbr.rel (0) target = $region65
    $region64: #{prompt_model_forward.1} parent=1 // pred_region
      %105 = dma.done [#allocation5], 1024
    $region65: #{prompt_model_forward.1} parent=1 // pred_fallthru
      _
    // Predicated region
    $region66: #{prompt_model_forward.1} parent=1 // pred_check
      _
    $region67: #{prompt_model_forward.1} parent=1 // pred_check_branch
      %107 = sbr.rel (0) target = $region69
    $region68: #{prompt_model_forward.1} parent=1 // pred_region
      %108 = dma.done [#allocation8], 4096
    $region69: #{prompt_model_forward.1} parent=1 // pred_fallthru
      _
    // Predicated region
    $region70: #{prompt_model_forward.1} parent=1 // pred_check
      _
    $region71: #{prompt_model_forward.1} parent=1 // pred_check_branch
      %110 = sbr.rel (0) target = $region73
    $region72: #{prompt_model_forward.1} parent=1 // pred_region
      %111 = dma.done [#allocation8], 1024
    $region73: #{prompt_model_forward.1} parent=1 // pred_fallthru
      _
    %v113 = vld [vmem:[%s0] sm:$0xff]
    %v114 = vld [vmem:[%s0 + $0x8] sm:$0xff]
    %v115 = vld [vmem:[%s0 + $0x10] sm:$0xff]
    %v116 = vld [vmem:[%s0 + $0x18] sm:$0xff]
    %v117 = vld [vmem:[%s0 + $0x20] sm:$0xff]
    %v118 = vlaneseq
    %v119 = vand.u32 %v118, 127
    %v120 = vadd.s32 %v119, 128
    %121 = vset.pattern.permute.xlu0 0
    %122 = vperm.xlu0 %121, %v113
    %v123 = vpop.permute.xlu0 %122
    %124 = vset.pattern.permute.xlu0 0
    %125 = vperm.xlu0 %124, %v114
    %v126 = vpop.permute.xlu0 %125
    %127 = vset.pattern.permute.xlu0 0
    %128 = vperm.xlu0 %127, %v115
    %v129 = vpop.permute.xlu0 %128
    %130 = vset.pattern.permute.xlu0 0
    %131 = vperm.xlu0 %130, %v116
    %v132 = vpop.permute.xlu0 %131
    %133 = vset.pattern.permute.xlu0 0
    %134 = vperm.xlu0 %133, %v117
    %v135 = vpop.permute.xlu0 %134
    %vm136 = vcmp.eq.s32.totalorder %v123, %v119
    %vm137 = vcmp.eq.s32.totalorder %v123, %v120
    %vm138 = vcmp.eq.s32.totalorder %v126, %v119
    %vm139 = vcmp.eq.s32.totalorder %v126, %v120
    %vm140 = vcmp.eq.s32.totalorder %v129, %v119
    %vm141 = vcmp.eq.s32.totalorder %v129, %v120
    %vm142 = vcmp.eq.s32.totalorder %v132, %v119
    %vm143 = vcmp.eq.s32.totalorder %v132, %v120
    %vm144 = vcmp.eq.s32.totalorder %v135, %v119
    %vm145 = vcmp.eq.s32.totalorder %v135, %v120
    %v146 = vsel %vm136, 1, 0
    %v147 = vsel %vm137, 1, 0
    %v148 = vsel %vm138, 1, 0
    %v149 = vsel %vm139, 1, 0
    %v150 = vsel %vm140, 1, 0
    %v151 = vsel %vm141, 1, 0
    %v152 = vsel %vm142, 1, 0
    %v153 = vsel %vm143, 1, 0
    %v154 = vsel %vm144, 1, 0
    %v155 = vsel %vm145, 1, 0
    %v156 = vcvt.s32.f32 %v146
    %v157 = vcvt.s32.f32 %v147
    %v158 = vcvt.s32.f32 %v148
    %v159 = vcvt.s32.f32 %v149
    %v160 = vcvt.s32.f32 %v150
    %v161 = vcvt.s32.f32 %v151
    %v162 = vcvt.s32.f32 %v152
    %v163 = vcvt.s32.f32 %v153
    %v164 = vcvt.s32.f32 %v154
    %v165 = vcvt.s32.f32 %v155
    %v166 = vpack.c.bf16 %v158, %v156
    %v167 = vpack.c.bf16 %v159, %v157
    %v168 = vpack.c.bf16 %v162, %v160
    %v169 = vpack.c.bf16 %v163, %v161
    %v170 = vpack.c.bf16 %v164, %v164
    %v171 = vpack.c.bf16 %v165, %v165
    %v172 = vld [vmem:[%s3] sm:$0xf]
    %v173 = vld [vmem:[%s3 + $0x4] sm:$0xf]
    %v174 = vld [vmem:[%s3 + $0x8] sm:$0xf]
    %v175 = vld [vmem:[%s3 + $0xc] sm:$0xf]
    %v176 = vld [vmem:[%s3 + $0x10] sm:$0xf]
    %v177 = vld [vmem:[%s3 + $0x14] sm:$0xf]
    %v178 = vld [vmem:[%s3 + $0x18] sm:$0xf]
    %v179 = vld [vmem:[%s3 + $0x1c] sm:$0xf]
    %v180 = vld [vmem:[%s3 + $0x20] sm:$0xf]
    %v181 = vld [vmem:[%s3 + $0x24] sm:$0xf]
    %v182 = vld [vmem:[%s3 + $0x28] sm:$0xf]
    %v183 = vld [vmem:[%s3 + $0x2c] sm:$0xf]
    %v184 = vld [vmem:[%s3 + $0x30] sm:$0xf]
    %v185 = vld [vmem:[%s3 + $0x34] sm:$0xf]
    %v186 = vld [vmem:[%s3 + $0x38] sm:$0xf]
    %v187 = vld [vmem:[%s3 + $0x3c] sm:$0xf]
    %v188 = vld [vmem:[%s3 + $0x40] sm:$0xf]
    %v189 = vld [vmem:[%s3 + $0x44] sm:$0xf]
    %v190 = vld [vmem:[%s3 + $0x48] sm:$0xf]
    %v191 = vld [vmem:[%s3 + $0x4c] sm:$0xf]
    %v192 = vld [vmem:[%s3 + $0x50] sm:$0xf]
    %v193 = vld [vmem:[%s3 + $0x54] sm:$0xf]
    %v194 = vld [vmem:[%s3 + $0x58] sm:$0xf]
    %v195 = vld [vmem:[%s3 + $0x5c] sm:$0xf]
    %v196 = vld [vmem:[%s3 + $0x60] sm:$0xf]
    %v197 = vld [vmem:[%s3 + $0x64] sm:$0xf]
    %v198 = vld [vmem:[%s3 + $0x68] sm:$0xf]
    %v199 = vld [vmem:[%s3 + $0x6c] sm:$0xf]
    %v200 = vld [vmem:[%s3 + $0x70] sm:$0xf]
    %v201 = vld [vmem:[%s3 + $0x74] sm:$0xf]
    %v202 = vld [vmem:[%s3 + $0x78] sm:$0xf]
    %v203 = vld [vmem:[%s3 + $0x7c] sm:$0xf]
    %v204 = vld [vmem:[%s1] sm:$0xff]
    %v205 = vld [vmem:[%s1 + $0x8] sm:$0xff]
    %v206 = vld [vmem:[%s1 + $0x10] sm:$0xff]
    %v207 = vld [vmem:[%s1 + $0x18] sm:$0xff]
    %v208 = vld [vmem:[%s1 + $0x20] sm:$0xff]
    %v209 = vpack.c.bf16 %v205, %v204
    %v210 = vpack.c.bf16 %v207, %v206
    %v211 = vpack.c.bf16 %v208, %v208
    %v212 = vld [vmem:[#allocation2] sm:$0xf]
    %v213 = vld [vmem:[#allocation2 + $0x4] sm:$0xf]
    %v214 = vld [vmem:[#allocation2 + $0x8] sm:$0xf]
    %v215 = vld [vmem:[#allocation2 + $0xc] sm:$0xf]
    %v216 = vld [vmem:[#allocation2 + $0x10] sm:$0xf]
    %v217 = vld [vmem:[#allocation2 + $0x14] sm:$0xf]
    %v218 = vld [vmem:[#allocation2 + $0x18] sm:$0xf]
    %v219 = vld [vmem:[#allocation2 + $0x1c] sm:$0xf]
    %v228 = vunpack.c.l.b16 %v212
    %v229 = vunpack.c.l.b16 %v213
    %v230 = vunpack.c.l.b16 %v214
    %v231 = vunpack.c.l.b16 %v215
    %v232 = vunpack.c.l.b16 %v216
    %v233 = vunpack.c.l.b16 %v217
    %v234 = vunpack.c.l.b16 %v218
    %v235 = vunpack.c.l.b16 %v219
    %v236 = vpack.c.b16 %v229, %v228
    %v237 = vpack.c.b16 %v231, %v230
    %v238 = vpack.c.b16 %v233, %v232
    %v239 = vpack.c.b16 %v235, %v234
    %vm244 = vcmask 523264
    %v246 = vsel %vm244, %v209, 0
    %v249 = vsel %vm244, %v210, 0
    %v252 = vsel %vm244, %v211, 0
    %254 = vmatprep.subr.bf16.mxu0 0
    %255 = vmatpush1.bf16.msra.mxu0 %v236
    %256 = vmatprep.subr.bf16.mxu0 0
    %257 = vmatpush1.bf16.msra.mxu0 %v237
    %258 = vmatprep.subr.bf16.mxu0 0
    %259 = vmatpush1.bf16.msra.mxu0 %v238
    %260 = vmatprep.subr.bf16.mxu0 0
    %261 = vmatpush1.bf16.msra.mxu0 %v239
    %262 = vmatprep.subr.bf16.mxu0 0
    %263 = vmatpush1.bf16.msra.mxu0 0
    %264 = vmatprep.subr.bf16.mxu0 0
    %265 = vmatpush1.bf16.msra.mxu0 0
    %266 = vmatprep.subr.bf16.mxu0 0
    %267 = vmatpush1.bf16.msra.mxu0 0
    %268 = vmatprep.subr.bf16.mxu0 0
    %269 = vmatpush1.bf16.msra.mxu0 0
    %270 = vmatprep.subr.bf16.mxu0 0
    %271 = vmatpush1.bf16.msra.mxu0 0
    %272 = vmatprep.subr.bf16.mxu0 0
    %273 = vmatpush1.bf16.msra.mxu0 0
    %274 = vmatprep.subr.bf16.mxu0 0
    %275 = vmatpush1.bf16.msra.mxu0 0
    %276 = vmatprep.subr.bf16.mxu0 0
    %277 = vmatpush1.bf16.msra.mxu0 0
    %278 = vmatprep.subr.bf16.mxu0 0
    %279 = vmatpush1.bf16.msra.mxu0 0
    %280 = vmatprep.subr.bf16.mxu0 0
    %281 = vmatpush1.bf16.msra.mxu0 0
    %282 = vmatprep.subr.bf16.mxu0 0
    %283 = vmatpush1.bf16.msra.mxu0 0
    %284 = vmatprep.subr.bf16.mxu0 0
    %285 = vmatpush1.bf16.msra.mxu0 0
    %286 = vmatprep.mubr.bf16.mxu0 0
    %287 = vmatmul.mubr.bf16.gmra.mrb[0].mxu0 %v246
    %v288 = vpop.f32.mrb[0].mxu0
    %v289 = vadd.f32 0.0, %v288
    %v290 = vpop.f32.mrb[0].mxu0
    %v291 = vpop.f32.mrb[0].mxu0
    %v292 = vadd.f32 0.0, %v291
    %v293 = vpop.f32.mrb[0].mxu0
    %294 = vmatprep.mubr.bf16.mxu0 0
    %295 = vmatmul.mubr.bf16.gmra.mrb[0].mxu0 %v249
    %v296 = vpop.f32.mrb[0].mxu0
    %v297 = vadd.f32 0.0, %v296
    %v298 = vpop.f32.mrb[0].mxu0
    %v299 = vpop.f32.mrb[0].mxu0
    %v300 = vadd.f32 0.0, %v299
    %v301 = vpop.f32.mrb[0].mxu0
    %302 = vmatprep.mubr.bf16.mxu0 0
    %303 = vmatmul.mubr.bf16.gmra.mrb[0].mxu0 %v252
    %v304 = vpop.f32.mrb[0].mxu0
    %v305 = vadd.f32 0.0, %v304
    %v306 = vpop.f32.mrb[0].mxu0
    %v307 = vpop.f32.mrb[0].mxu0
    %v308 = vpop.f32.mrb[0].mxu0
    %309 = vdwg.mxu0
    %v342 = vunpack.c.l.b16 %v172
    %v343 = vunpack.c.l.b16 %v173
    %v344 = vunpack.c.l.b16 %v174
    %v345 = vunpack.c.l.b16 %v175
    %v346 = vunpack.c.l.b16 %v176
    %v347 = vunpack.c.l.b16 %v177
    %v348 = vunpack.c.l.b16 %v178
    %v349 = vunpack.c.l.b16 %v179
    %v350 = vunpack.c.l.b16 %v180
    %v351 = vunpack.c.l.b16 %v181
    %v352 = vunpack.c.l.b16 %v182
    %v353 = vunpack.c.l.b16 %v183
    %v354 = vunpack.c.l.b16 %v184
    %v355 = vunpack.c.l.b16 %v185
    %v356 = vunpack.c.l.b16 %v186
    %v357 = vunpack.c.l.b16 %v187
    %v358 = vunpack.c.l.b16 %v188
    %v359 = vunpack.c.l.b16 %v189
    %v360 = vunpack.c.l.b16 %v190
    %v361 = vunpack.c.l.b16 %v191
    %v362 = vunpack.c.l.b16 %v192
    %v363 = vunpack.c.l.b16 %v193
    %v364 = vunpack.c.l.b16 %v194
    %v365 = vunpack.c.l.b16 %v195
    %v366 = vunpack.c.l.b16 %v196
    %v367 = vunpack.c.l.b16 %v197
    %v368 = vunpack.c.l.b16 %v198
    %v369 = vunpack.c.l.b16 %v199
    %v370 = vunpack.c.l.b16 %v200
    %v371 = vunpack.c.l.b16 %v201
    %v372 = vunpack.c.l.b16 %v202
    %v373 = vunpack.c.l.b16 %v203
    %v374 = vpack.c.b16 %v343, %v342
    %v375 = vpack.c.b16 %v345, %v344
    %v376 = vpack.c.b16 %v347, %v346
    %v377 = vpack.c.b16 %v349, %v348
    %v378 = vpack.c.b16 %v351, %v350
    %v379 = vpack.c.b16 %v353, %v352
    %v380 = vpack.c.b16 %v355, %v354
    %v381 = vpack.c.b16 %v357, %v356
    %v382 = vpack.c.b16 %v359, %v358
    %v383 = vpack.c.b16 %v361, %v360
    %v384 = vpack.c.b16 %v363, %v362
    %v385 = vpack.c.b16 %v365, %v364
    %v386 = vpack.c.b16 %v367, %v366
    %v387 = vpack.c.b16 %v369, %v368
    %v388 = vpack.c.b16 %v371, %v370
    %v389 = vpack.c.b16 %v373, %v372
    %406 = vmatprep.subr.bf16.mxu0 0
    %407 = vmatpush1.bf16.msra.mxu0 %v374
    %408 = vmatprep.subr.bf16.mxu0 0
    %409 = vmatpush1.bf16.msra.mxu0 %v375
    %410 = vmatprep.subr.bf16.mxu0 0
    %411 = vmatpush1.bf16.msra.mxu0 %v376
    %412 = vmatprep.subr.bf16.mxu0 0
    %413 = vmatpush1.bf16.msra.mxu0 %v377
    %414 = vmatprep.subr.bf16.mxu0 0
    %415 = vmatpush1.bf16.msra.mxu0 %v378
    %416 = vmatprep.subr.bf16.mxu0 0
    %417 = vmatpush1.bf16.msra.mxu0 %v379
    %418 = vmatprep.subr.bf16.mxu0 0
    %419 = vmatpush1.bf16.msra.mxu0 %v380
    %420 = vmatprep.subr.bf16.mxu0 0
    %421 = vmatpush1.bf16.msra.mxu0 %v381
    %422 = vmatprep.subr.bf16.mxu0 0
    %423 = vmatpush1.bf16.msra.mxu0 %v382
    %424 = vmatprep.subr.bf16.mxu0 0
    %425 = vmatpush1.bf16.msra.mxu0 %v383
    %426 = vmatprep.subr.bf16.mxu0 0
    %427 = vmatpush1.bf16.msra.mxu0 %v384
    %428 = vmatprep.subr.bf16.mxu0 0
    %429 = vmatpush1.bf16.msra.mxu0 %v385
    %430 = vmatprep.subr.bf16.mxu0 0
    %431 = vmatpush1.bf16.msra.mxu0 %v386
    %432 = vmatprep.subr.bf16.mxu0 0
    %433 = vmatpush1.bf16.msra.mxu0 %v387
    %434 = vmatprep.subr.bf16.mxu0 0
    %435 = vmatpush1.bf16.msra.mxu0 %v388
    %436 = vmatprep.subr.bf16.mxu0 0
    %437 = vmatpush1.bf16.msra.mxu0 %v389
    %438 = vmatprep.mubr.bf16.mxu0 %v167
    %439 = vmatmul.mubr.bf16.gmra.mrb[0].mxu0 %v166
    %v440 = vpop.f32.mrb[0].mxu0
    %v441 = vadd.f32 %v289, %v440
    %v442 = vpop.f32.mrb[0].mxu0
    %v443 = vpop.f32.mrb[0].mxu0
    %v444 = vadd.f32 %v292, %v443
    %v445 = vpop.f32.mrb[0].mxu0
    %446 = vmatprep.mubr.bf16.mxu0 %v169
    %447 = vmatmul.mubr.bf16.gmra.mrb[0].mxu0 %v168
    %v448 = vpop.f32.mrb[0].mxu0
    %v449 = vadd.f32 %v297, %v448
    %v450 = vpop.f32.mrb[0].mxu0
    %v451 = vpop.f32.mrb[0].mxu0
    %v452 = vadd.f32 %v300, %v451
    %v453 = vpop.f32.mrb[0].mxu0
    %454 = vmatprep.mubr.bf16.mxu0 %v171
    %455 = vmatmul.mubr.bf16.gmra.mrb[0].mxu0 %v170
    %v456 = vpop.f32.mrb[0].mxu0
    %v457 = vadd.f32 %v305, %v456
    %v458 = vpop.f32.mrb[0].mxu0
    %v459 = vpop.f32.mrb[0].mxu0
    %v460 = vpop.f32.mrb[0].mxu0
    %461 = vdwg.mxu0
    %v462 = vld [vmem:[%s5] sm:$0xff]
    %v463 = vld [vmem:[%s5 + $0x8] sm:$0xff]
    %v464 = vld [vmem:[%s5 + $0x10] sm:$0xf]
    %vm468 = vcmask 1043456
    %v469 = vrot.slane %v462, 4
    %v470 = vrot.slane %v463, 4
    %v471 = vsel %vm468, %v469, %v470
    %v472 = vrot.slane %v464, 4
    %v473 = vsel %vm468, %v470, %v472
    %v477 = vsel %vm468, %v464, %v469
    %v478 = vadd.f32 %v441, %v462
    %v479 = vadd.f32 %v444, %v463
    %v480 = vadd.f32 %v449, %v477
    %v481 = vadd.f32 %v452, %v471
    %v482 = vadd.f32 %v457, %v473
    %v483 = vld [vmem:[%s6] sm:$0xff]
    %v484 = vld [vmem:[%s7] sm:$0xff]
    %485 = vadd.xlane.f32.xlu0 %v478
    %v486 = vpop.xlane.xlu0 %485
    %487 = vadd.xlane.f32.xlu0 %v479
    %v488 = vpop.xlane.xlu0 %487
    %489 = vadd.xlane.f32.xlu0 %v480
    %v490 = vpop.xlane.xlu0 %489
    %491 = vadd.xlane.f32.xlu0 %v481
    %v492 = vpop.xlane.xlu0 %491
    %493 = vadd.xlane.f32.xlu0 %v482
    %v494 = vpop.xlane.xlu0 %493
    %v495 = vrcp.pop 128.0
    %v496 = vmul.f32 %v486, %v495
    %v497 = vmul.f32 %v488, %v495
    %v498 = vmul.f32 %v490, %v495
    %v499 = vmul.f32 %v492, %v495
    %v500 = vmul.f32 %v494, %v495
    %v501 = vsub.f32 %v478, %v496
    %v502 = vsub.f32 %v479, %v497
    %v503 = vsub.f32 %v480, %v498
    %v504 = vsub.f32 %v481, %v499
    %v505 = vsub.f32 %v482, %v500
    %v506 = vmul.f32 %v501, %v501
    %v507 = vmul.f32 %v502, %v502
    %v508 = vmul.f32 %v503, %v503
    %v509 = vmul.f32 %v504, %v504
    %v510 = vmul.f32 %v505, %v505
    %511 = vadd.xlane.f32.xlu0 %v506
    %v512 = vpop.xlane.xlu0 %511
    %513 = vadd.xlane.f32.xlu0 %v507
    %v514 = vpop.xlane.xlu0 %513
    %515 = vadd.xlane.f32.xlu0 %v508
    %v516 = vpop.xlane.xlu0 %515
    %517 = vadd.xlane.f32.xlu0 %v509
    %v518 = vpop.xlane.xlu0 %517
    %519 = vadd.xlane.f32.xlu0 %v510
    %v520 = vpop.xlane.xlu0 %519
    %v521 = vmul.f32 %v512, %v495
    %v522 = vmul.f32 %v514, %v495
    %v523 = vmul.f32 %v516, %v495
    %v524 = vmul.f32 %v518, %v495
    %v525 = vmul.f32 %v520, %v495
    %v526 = vadd.f32 %v521, 1e-05
    %v527 = vadd.f32 %v522, 1e-05
    %v528 = vadd.f32 %v523, 1e-05
    %v529 = vadd.f32 %v524, 1e-05
    %v530 = vadd.f32 %v525, 1e-05
    %v531 = vrsqrt.pop %v526
    %v532 = vrsqrt.pop %v527
    %v533 = vrsqrt.pop %v528
    %v534 = vrsqrt.pop %v529
    %v535 = vrsqrt.pop %v530
    %v536 = vmul.f32 %v501, %v531
    %v537 = vmul.f32 %v502, %v532
    %v538 = vmul.f32 %v503, %v533
    %v539 = vmul.f32 %v504, %v534
    %v540 = vmul.f32 %v505, %v535
    %v541 = vlaneseq
    %v542 = vshrl.u32 %v541, 7
    %v543 = vsub.s32 0, %v542
    %v544 = vrot.slane %v483, %v543
    %v545 = vmul.f32 %v536, %v544
    %v546 = vmul.f32 %v537, %v544
    %v547 = vmul.f32 %v538, %v544
    %v548 = vmul.f32 %v539, %v544
    %v549 = vmul.f32 %v540, %v544
    %v550 = vlaneseq
    %v551 = vshrl.u32 %v550, 7
    %v552 = vsub.s32 1, %v551
    %v553 = vrot.slane %v483, %v552
    %v554 = vadd.f32 %v545, %v553
    %v555 = vadd.f32 %v546, %v553
    %v556 = vadd.f32 %v547, %v553
    %v557 = vadd.f32 %v548, %v553
    %v558 = vadd.f32 %v549, %v553
    %v559 = vpack.c.bf16 %v555, %v554
    %v560 = vpack.c.bf16 %v557, %v556
    %v561 = vpack.c.bf16 %v558, %v558
    %v562 = vld [vmem:[#allocation4] sm:$0xff]
    %v563 = vld [vmem:[#allocation4 + $0x8] sm:$0xf]
    %v564 = vld [vmem:[#allocation4 + $0xc] sm:$0xff]
    %v565 = vld [vmem:[#allocation4 + $0x14] sm:$0xf]
    %v566 = vld [vmem:[#allocation4 + $0x18] sm:$0xff]
    %v567 = vld [vmem:[#allocation4 + $0x20] sm:$0xf]
    %v568 = vld [vmem:[#allocation4 + $0x24] sm:$0xff]
    %v569 = vld [vmem:[#allocation4 + $0x2c] sm:$0xf]
    %v570 = vld [vmem:[#allocation4 + $0x30] sm:$0xff]
    %v571 = vld [vmem:[#allocation4 + $0x38] sm:$0xf]
    %v572 = vld [vmem:[#allocation4 + $0x3c] sm:$0xff]
    %v573 = vld [vmem:[#allocation4 + $0x44] sm:$0xf]
    %v574 = vld [vmem:[#allocation4 + $0x48] sm:$0xff]
    %v575 = vld [vmem:[#allocation4 + $0x50] sm:$0xf]
    %v576 = vld [vmem:[#allocation4 + $0x54] sm:$0xff]
    %v577 = vld [vmem:[#allocation4 + $0x5c] sm:$0xf]
    %v578 = vld [vmem:[#allocation4 + $0x60] sm:$0xff]
    %v579 = vld [vmem:[#allocation4 + $0x68] sm:$0xf]
    %v580 = vld [vmem:[#allocation4 + $0x6c] sm:$0xff]
    %v581 = vld [vmem:[#allocation4 + $0x74] sm:$0xf]
    %v582 = vld [vmem:[#allocation4 + $0x78] sm:$0xff]
    %v583 = vld [vmem:[#allocation4 + $0x80] sm:$0xf]
    %v584 = vld [vmem:[#allocation4 + $0x84] sm:$0xff]
    %v585 = vld [vmem:[#allocation4 + $0x8c] sm:$0xf]
    %v586 = vld [vmem:[#allocation4 + $0x90] sm:$0xff]
    %v587 = vld [vmem:[#allocation4 + $0x98] sm:$0xf]
    %v588 = vld [vmem:[#allocation4 + $0x9c] sm:$0xff]
    %v589 = vld [vmem:[#allocation4 + $0xa4] sm:$0xf]
    %v590 = vld [vmem:[#allocation4 + $0xa8] sm:$0xff]
    %v591 = vld [vmem:[#allocation4 + $0xb0] sm:$0xf]
    %v592 = vld [vmem:[#allocation4 + $0xb4] sm:$0xff]
    %v593 = vld [vmem:[#allocation4 + $0xbc] sm:$0xf]
    %v595 = vlaneseq
    %v596 = vshrl.u32 %v595, 7
    %v597 = vsub.s32 0, %v596
    %v598 = vrot.slane %v484, %v597
    %v599 = vlaneseq
    %v600 = vshrl.u32 %v599, 7
    %v601 = vsub.s32 2, %v600
    %v602 = vrot.slane %v484, %v601
    %v603 = vlaneseq
    %v604 = vshrl.u32 %v603, 7
    %v605 = vsub.s32 4, %v604
    %v606 = vrot.slane %v484, %v605
    %v610 = vlaneseq
    %v611 = vshrl.u32 %v610, 7
    %v612 = vsub.s32 0, %v611
    %v613 = vrot.slane %v598, %v612
    %v614 = vlaneseq
    %v615 = vshrl.u32 %v614, 7
    %v616 = vsub.s32 0, %v615
    %v617 = vrot.slane %v602, %v616
    %v618 = vlaneseq
    %v619 = vshrl.u32 %v618, 7
    %v620 = vsub.s32 0, %v619
    %v621 = vrot.slane %v606, %v620
    %v654 = vunpack.c.l.b16 %v562
    %v655 = vunpack.c.h.b16 %v562
    %v656 = vunpack.c.l.b16 %v563
    %v657 = vunpack.c.l.b16 %v564
    %v658 = vunpack.c.h.b16 %v564
    %v659 = vunpack.c.l.b16 %v565
    %v660 = vunpack.c.l.b16 %v566
    %v661 = vunpack.c.h.b16 %v566
    %v662 = vunpack.c.l.b16 %v567
    %v663 = vunpack.c.l.b16 %v568
    %v664 = vunpack.c.h.b16 %v568
    %v665 = vunpack.c.l.b16 %v569
    %v666 = vunpack.c.l.b16 %v570
    %v667 = vunpack.c.h.b16 %v570
    %v668 = vunpack.c.l.b16 %v571
    %v669 = vunpack.c.l.b16 %v572
    %v670 = vunpack.c.h.b16 %v572
    %v671 = vunpack.c.l.b16 %v573
    %v672 = vunpack.c.l.b16 %v574
    %v673 = vunpack.c.h.b16 %v574
    %v674 = vunpack.c.l.b16 %v575
    %v675 = vunpack.c.l.b16 %v576
    %v676 = vunpack.c.h.b16 %v576
    %v677 = vunpack.c.l.b16 %v577
    %v678 = vunpack.c.l.b16 %v578
    %v679 = vunpack.c.h.b16 %v578
    %v680 = vunpack.c.l.b16 %v579
    %v681 = vunpack.c.l.b16 %v580
    %v682 = vunpack.c.h.b16 %v580
    %v683 = vunpack.c.l.b16 %v581
    %v684 = vunpack.c.l.b16 %v582
    %v685 = vunpack.c.h.b16 %v582
    %v686 = vunpack.c.l.b16 %v583
    %v687 = vunpack.c.l.b16 %v584
    %v688 = vunpack.c.h.b16 %v584
    %v689 = vunpack.c.l.b16 %v585
    %v690 = vunpack.c.l.b16 %v586
    %v691 = vunpack.c.h.b16 %v586
    %v692 = vunpack.c.l.b16 %v587
    %v693 = vunpack.c.l.b16 %v588
    %v694 = vunpack.c.h.b16 %v588
    %v695 = vunpack.c.l.b16 %v589
    %v696 = vunpack.c.l.b16 %v590
    %v697 = vunpack.c.h.b16 %v590
    %v698 = vunpack.c.l.b16 %v591
    %v699 = vunpack.c.l.b16 %v592
    %v700 = vunpack.c.h.b16 %v592
    %v701 = vunpack.c.l.b16 %v593
    %v702 = vpack.c.b16 %v657, %v654
    %v703 = vpack.c.b16 %v658, %v655
    %v704 = vpack.c.b16 %v659, %v656
    %v705 = vpack.c.b16 %v663, %v660
    %v706 = vpack.c.b16 %v664, %v661
    %v707 = vpack.c.b16 %v665, %v662
    %v708 = vpack.c.b16 %v669, %v666
    %v709 = vpack.c.b16 %v670, %v667
    %v710 = vpack.c.b16 %v671, %v668
    %v711 = vpack.c.b16 %v675, %v672
    %v712 = vpack.c.b16 %v676, %v673
    %v713 = vpack.c.b16 %v677, %v674
    %v714 = vpack.c.b16 %v681, %v678
    %v715 = vpack.c.b16 %v682, %v679
    %v716 = vpack.c.b16 %v683, %v680
    %v717 = vpack.c.b16 %v687, %v684
    %v718 = vpack.c.b16 %v688, %v685
    %v719 = vpack.c.b16 %v689, %v686
    %v720 = vpack.c.b16 %v693, %v690
    %v721 = vpack.c.b16 %v694, %v691
    %v722 = vpack.c.b16 %v695, %v692
    %v723 = vpack.c.b16 %v699, %v696
    %v724 = vpack.c.b16 %v700, %v697
    %v725 = vpack.c.b16 %v701, %v698
    %750 = vmatprep.subr.bf16.mxu0 %v703
    %751 = vmatpush1.bf16.msra.mxu0 %v702
    %752 = vmatprep.subr.bf16.mxu0 %v706
    %753 = vmatpush1.bf16.msra.mxu0 %v705
    %754 = vmatprep.subr.bf16.mxu0 %v709
    %755 = vmatpush1.bf16.msra.mxu0 %v708
    %756 = vmatprep.subr.bf16.mxu0 %v712
    %757 = vmatpush1.bf16.msra.mxu0 %v711
    %758 = vmatprep.subr.bf16.mxu0 %v715
    %759 = vmatpush1.bf16.msra.mxu0 %v714
    %760 = vmatprep.subr.bf16.mxu0 %v718
    %761 = vmatpush1.bf16.msra.mxu0 %v717
    %762 = vmatprep.subr.bf16.mxu0 %v721
    %763 = vmatpush1.bf16.msra.mxu0 %v720
    %764 = vmatprep.subr.bf16.mxu0 %v724
    %765 = vmatpush1.bf16.msra.mxu0 %v723
    %766 = vmatprep.subr.bf16.mxu0 0
    %767 = vmatpush1.bf16.msra.mxu0 0
    %768 = vmatprep.subr.bf16.mxu0 0
    %769 = vmatpush1.bf16.msra.mxu0 0
    %770 = vmatprep.subr.bf16.mxu0 0
    %771 = vmatpush1.bf16.msra.mxu0 0
    %772 = vmatprep.subr.bf16.mxu0 0
    %773 = vmatpush1.bf16.msra.mxu0 0
    %774 = vmatprep.subr.bf16.mxu0 0
    %775 = vmatpush1.bf16.msra.mxu0 0
    %776 = vmatprep.subr.bf16.mxu0 0
    %777 = vmatpush1.bf16.msra.mxu0 0
    %778 = vmatprep.subr.bf16.mxu0 0
    %779 = vmatpush1.bf16.msra.mxu0 0
    %780 = vmatprep.subr.bf16.mxu0 0
    %781 = vmatpush1.bf16.msra.mxu0 0
    %782 = vmatprep.mubr.bf16.mxu0 0
    %783 = vmatmul.mubr.bf16.gmra.mrb[0].mxu0 %v559
    %v784 = vpop.f32.mrb[0].mxu0
    %v785 = vadd.f32 %v613, %v784
    %v786 = vpop.f32.mrb[0].mxu0
    %v787 = vadd.f32 %v617, %v786
    %v788 = vpop.f32.mrb[0].mxu0
    %v789 = vadd.f32 %v613, %v788
    %v790 = vpop.f32.mrb[0].mxu0
    %v791 = vadd.f32 %v617, %v790
    %792 = vmatprep.mubr.bf16.mxu0 0
    %793 = vmatmul.mubr.bf16.gmra.mrb[0].mxu0 %v560
    %v794 = vpop.f32.mrb[0].mxu0
    %v795 = vadd.f32 %v613, %v794
    %v796 = vpop.f32.mrb[0].mxu0
    %v797 = vadd.f32 %v617, %v796
    %v798 = vpop.f32.mrb[0].mxu0
    %v799 = vadd.f32 %v613, %v798
    %v800 = vpop.f32.mrb[0].mxu0
    %v801 = vadd.f32 %v617, %v800
    %802 = vmatprep.mubr.bf16.mxu0 0
    %803 = vmatmul.mubr.bf16.gmra.mrb[0].mxu0 %v561
    %v804 = vpop.f32.mrb[0].mxu0
    %v805 = vadd.f32 %v613, %v804
    %v806 = vpop.f32.mrb[0].mxu0
    %v807 = vadd.f32 %v617, %v806
    %v808 = vpop.f32.mrb[0].mxu0
    %v809 = vpop.f32.mrb[0].mxu0
    %810 = vdwg.mxu0
    %811 = vmatprep.subr.bf16.mxu0 0
    %812 = vmatpush1.bf16.msra.mxu0 %v704
    %813 = vmatprep.subr.bf16.mxu0 0
    %814 = vmatpush1.bf16.msra.mxu0 %v707
    %815 = vmatprep.subr.bf16.mxu0 0
    %816 = vmatpush1.bf16.msra.mxu0 %v710
    %817 = vmatprep.subr.bf16.mxu0 0
    %818 = vmatpush1.bf16.msra.mxu0 %v713
    %819 = vmatprep.subr.bf16.mxu0 0
    %820 = vmatpush1.bf16.msra.mxu0 %v716
    %821 = vmatprep.subr.bf16.mxu0 0
    %822 = vmatpush1.bf16.msra.mxu0 %v719
    %823 = vmatprep.subr.bf16.mxu0 0
    %824 = vmatpush1.bf16.msra.mxu0 %v722
    %825 = vmatprep.subr.bf16.mxu0 0
    %826 = vmatpush1.bf16.msra.mxu0 %v725
    %827 = vmatprep.subr.bf16.mxu0 0
    %828 = vmatpush1.bf16.msra.mxu0 0
    %829 = vmatprep.subr.bf16.mxu0 0
    %830 = vmatpush1.bf16.msra.mxu0 0
    %831 = vmatprep.subr.bf16.mxu0 0
    %832 = vmatpush1.bf16.msra.mxu0 0
    %833 = vmatprep.subr.bf16.mxu0 0
    %834 = vmatpush1.bf16.msra.mxu0 0
    %835 = vmatprep.subr.bf16.mxu0 0
    %836 = vmatpush1.bf16.msra.mxu0 0
    %837 = vmatprep.subr.bf16.mxu0 0
    %838 = vmatpush1.bf16.msra.mxu0 0
    %839 = vmatprep.subr.bf16.mxu0 0
    %840 = vmatpush1.bf16.msra.mxu0 0
    %841 = vmatprep.subr.bf16.mxu0 0
    %842 = vmatpush1.bf16.msra.mxu0 0
    %843 = vmatprep.mubr.bf16.mxu0 0
    %844 = vmatmul.mubr.bf16.gmra.mrb[0].mxu0 %v559
    %v845 = vpop.f32.mrb[0].mxu0
    %v846 = vadd.f32 %v621, %v845
    %v847 = vpop.f32.mrb[0].mxu0
    %v848 = vpop.f32.mrb[0].mxu0
    %v849 = vadd.f32 %v621, %v848
    %v850 = vpop.f32.mrb[0].mxu0
    %851 = vmatprep.mubr.bf16.mxu0 0
    %852 = vmatmul.mubr.bf16.gmra.mrb[0].mxu0 %v560
    %v853 = vpop.f32.mrb[0].mxu0
    %v854 = vadd.f32 %v621, %v853
    %v855 = vpop.f32.mrb[0].mxu0
    %v856 = vpop.f32.mrb[0].mxu0
    %v857 = vadd.f32 %v621, %v856
    %v858 = vpop.f32.mrb[0].mxu0
    %859 = vmatprep.mubr.bf16.mxu0 0
    %860 = vmatmul.mubr.bf16.gmra.mrb[0].mxu0 %v561
    %v861 = vpop.f32.mrb[0].mxu0
    %v862 = vadd.f32 %v621, %v861
    %v863 = vpop.f32.mrb[0].mxu0
    %v864 = vpop.f32.mrb[0].mxu0
    %v865 = vpop.f32.mrb[0].mxu0
    %866 = vdwg.mxu0
    %v867 = vmul.f32 %v785, 0.17677669
    %v868 = vmul.f32 %v789, 0.17677669
    %v869 = vmul.f32 %v795, 0.17677669
    %v870 = vmul.f32 %v799, 0.17677669
    %v871 = vmul.f32 %v805, 0.17677669
    %877 = vrot.lane.b32.xlu0 %v867, 96
    %v878 = vpop.permute.xlu0 %877
    %879 = vrot.lane.b32.xlu0 %v868, 96
    %v880 = vpop.permute.xlu0 %879
    %881 = vrot.lane.b32.xlu0 %v869, 96
    %v882 = vpop.permute.xlu0 %881
    %883 = vrot.lane.b32.xlu0 %v870, 96
    %v884 = vpop.permute.xlu0 %883
    %885 = vrot.lane.b32.xlu0 %v871, 96
    %v886 = vpop.permute.xlu0 %885
    %892 = vrot.lane.b32.xlu0 %v867, 64
    %v893 = vpop.permute.xlu0 %892
    %894 = vrot.lane.b32.xlu0 %v868, 64
    %v895 = vpop.permute.xlu0 %894
    %896 = vrot.lane.b32.xlu0 %v869, 64
    %v897 = vpop.permute.xlu0 %896
    %898 = vrot.lane.b32.xlu0 %v870, 64
    %v899 = vpop.permute.xlu0 %898
    %900 = vrot.lane.b32.xlu0 %v871, 64
    %v901 = vpop.permute.xlu0 %900
    %907 = vrot.lane.b32.xlu0 %v867, 32
    %v908 = vpop.permute.xlu0 %907
    %909 = vrot.lane.b32.xlu0 %v868, 32
    %v910 = vpop.permute.xlu0 %909
    %911 = vrot.lane.b32.xlu0 %v869, 32
    %v912 = vpop.permute.xlu0 %911
    %913 = vrot.lane.b32.xlu0 %v870, 32
    %v914 = vpop.permute.xlu0 %913
    %915 = vrot.lane.b32.xlu0 %v871, 32
    %v916 = vpop.permute.xlu0 %915
    %v922 = vcombine.low %v867, %v893
    %v923 = vcombine.high %v867, %v893
    %v925 = vunpack.c.l.s4 1983009808
    %v926 = vunpack.c.0.s8 %v925
    %v927 = vlaneseq
    %v928 = vshrl.u32 %v927, 7
    %v929 = vsub.s32 %v926, %v928
    %v930 = vrot.slane %v922, %v929
    %v932 = vunpack.c.l.s4 1983009808
    %v933 = vunpack.c.0.s8 %v932
    %v934 = vlaneseq
    %v935 = vshrl.u32 %v934, 7
    %v936 = vsub.s32 %v933, %v935
    %v937 = vrot.slane %v923, %v936
    %v938 = vcombine.low %v878, %v908
    %v939 = vcombine.high %v878, %v908
    %v941 = vunpack.c.l.s4 1983009808
    %v942 = vunpack.c.0.s8 %v941
    %v943 = vlaneseq
    %v944 = vshrl.u32 %v943, 7
    %v945 = vsub.s32 %v942, %v944
    %v946 = vrot.slane %v938, %v945
    %v948 = vunpack.c.l.s4 1983009808
    %v949 = vunpack.c.0.s8 %v948
    %v950 = vlaneseq
    %v951 = vshrl.u32 %v950, 7
    %v952 = vsub.s32 %v949, %v951
    %v953 = vrot.slane %v939, %v952
    %v954 = vcombine.low %v930, %v946
    %v955 = vcombine.high %v930, %v946
    %v957 = vunpack.c.l.s4 1934713408
    %v958 = vunpack.c.0.s8 %v957
    %v959 = vlaneseq
    %v960 = vshrl.u32 %v959, 7
    %v961 = vsub.s32 %v958, %v960
    %v962 = vrot.slane %v954, %v961
    %v964 = vunpack.c.l.s4 1934713408
    %v965 = vunpack.c.0.s8 %v964
    %v966 = vlaneseq
    %v967 = vshrl.u32 %v966, 7
    %v968 = vsub.s32 %v965, %v967
    %v969 = vrot.slane %v955, %v968
    %v970 = vcombine.low %v937, %v953
    %v971 = vcombine.high %v937, %v953
    %v973 = vunpack.c.l.s4 1934713408
    %v974 = vunpack.c.0.s8 %v973
    %v975 = vlaneseq
    %v976 = vshrl.u32 %v975, 7
    %v977 = vsub.s32 %v974, %v976
    %v978 = vrot.slane %v970, %v977
    %v980 = vunpack.c.l.s4 1934713408
    %v981 = vunpack.c.0.s8 %v980
    %v982 = vlaneseq
    %v983 = vshrl.u32 %v982, 7
    %v984 = vsub.s32 %v981, %v983
    %v985 = vrot.slane %v971, %v984
    %v986 = vcombine.high %v962, 0.0
    %v987 = vcombine.high %v969, 0.0
    %v988 = vcombine.high %v978, 0.0
    %v989 = vcombine.high %v985, 0.0
    %v990 = vcombine.low %v868, %v895
    %v991 = vcombine.high %v868, %v895
    %v993 = vunpack.c.l.s4 1983009808
    %v994 = vunpack.c.0.s8 %v993
    %v995 = vlaneseq
    %v996 = vshrl.u32 %v995, 7
    %v997 = vsub.s32 %v994, %v996
    %v998 = vrot.slane %v990, %v997
    %v1000 = vunpack.c.l.s4 1983009808
    %v1001 = vunpack.c.0.s8 %v1000
    %v1002 = vlaneseq
    %v1003 = vshrl.u32 %v1002, 7
    %v1004 = vsub.s32 %v1001, %v1003
    %v1005 = vrot.slane %v991, %v1004
    %v1006 = vcombine.low %v880, %v910
    %v1007 = vcombine.high %v880, %v910
    %v1009 = vunpack.c.l.s4 1983009808
    %v1010 = vunpack.c.0.s8 %v1009
    %v1011 = vlaneseq
    %v1012 = vshrl.u32 %v1011, 7
    %v1013 = vsub.s32 %v1010, %v1012
    %v1014 = vrot.slane %v1006, %v1013
    %v1016 = vunpack.c.l.s4 1983009808
    %v1017 = vunpack.c.0.s8 %v1016
    %v1018 = vlaneseq
    %v1019 = vshrl.u32 %v1018, 7
    %v1020 = vsub.s32 %v1017, %v1019
    %v1021 = vrot.slane %v1007, %v1020
    %v1022 = vcombine.low %v998, %v1014
    %v1023 = vcombine.high %v998, %v1014
    %v1025 = vunpack.c.l.s4 1934713408
    %v1026 = vunpack.c.0.s8 %v1025
    %v1027 = vlaneseq
    %v1028 = vshrl.u32 %v1027, 7
    %v1029 = vsub.s32 %v1026, %v1028
    %v1030 = vrot.slane %v1022, %v1029
    %v1032 = vunpack.c.l.s4 1934713408
    %v1033 = vunpack.c.0.s8 %v1032
    %v1034 = vlaneseq
    %v1035 = vshrl.u32 %v1034, 7
    %v1036 = vsub.s32 %v1033, %v1035
    %v1037 = vrot.slane %v1023, %v1036
    %v1038 = vcombine.low %v1005, %v1021
    %v1039 = vcombine.high %v1005, %v1021
    %v1041 = vunpack.c.l.s4 1934713408
    %v1042 = vunpack.c.0.s8 %v1041
    %v1043 = vlaneseq
    %v1044 = vshrl.u32 %v1043, 7
    %v1045 = vsub.s32 %v1042, %v1044
    %v1046 = vrot.slane %v1038, %v1045
    %v1048 = vunpack.c.l.s4 1934713408
    %v1049 = vunpack.c.0.s8 %v1048
    %v1050 = vlaneseq
    %v1051 = vshrl.u32 %v1050, 7
    %v1052 = vsub.s32 %v1049, %v1051
    %v1053 = vrot.slane %v1039, %v1052
    %v1054 = vcombine.high %v1030, 0.0
    %v1055 = vcombine.high %v1037, 0.0
    %v1056 = vcombine.high %v1046, 0.0
    %v1057 = vcombine.high %v1053, 0.0
    %v1058 = vcombine.low %v869, %v897
    %v1059 = vcombine.high %v869, %v897
    %v1061 = vunpack.c.l.s4 1983009808
    %v1062 = vunpack.c.0.s8 %v1061
    %v1063 = vlaneseq
    %v1064 = vshrl.u32 %v1063, 7
    %v1065 = vsub.s32 %v1062, %v1064
    %v1066 = vrot.slane %v1058, %v1065
    %v1068 = vunpack.c.l.s4 1983009808
    %v1069 = vunpack.c.0.s8 %v1068
    %v1070 = vlaneseq
    %v1071 = vshrl.u32 %v1070, 7
    %v1072 = vsub.s32 %v1069, %v1071
    %v1073 = vrot.slane %v1059, %v1072
    %v1074 = vcombine.low %v882, %v912
    %v1075 = vcombine.high %v882, %v912
    %v1077 = vunpack.c.l.s4 1983009808
    %v1078 = vunpack.c.0.s8 %v1077
    %v1079 = vlaneseq
    %v1080 = vshrl.u32 %v1079, 7
    %v1081 = vsub.s32 %v1078, %v1080
    %v1082 = vrot.slane %v1074, %v1081
    %v1084 = vunpack.c.l.s4 1983009808
    %v1085 = vunpack.c.0.s8 %v1084
    %v1086 = vlaneseq
    %v1087 = vshrl.u32 %v1086, 7
    %v1088 = vsub.s32 %v1085, %v1087
    %v1089 = vrot.slane %v1075, %v1088
    %v1090 = vcombine.low %v1066, %v1082
    %v1091 = vcombine.high %v1066, %v1082
    %v1093 = vunpack.c.l.s4 1934713408
    %v1094 = vunpack.c.0.s8 %v1093
    %v1095 = vlaneseq
    %v1096 = vshrl.u32 %v1095, 7
    %v1097 = vsub.s32 %v1094, %v1096
    %v1098 = vrot.slane %v1090, %v1097
    %v1100 = vunpack.c.l.s4 1934713408
    %v1101 = vunpack.c.0.s8 %v1100
    %v1102 = vlaneseq
    %v1103 = vshrl.u32 %v1102, 7
    %v1104 = vsub.s32 %v1101, %v1103
    %v1105 = vrot.slane %v1091, %v1104
    %v1106 = vcombine.low %v1073, %v1089
    %v1107 = vcombine.high %v1073, %v1089
    %v1109 = vunpack.c.l.s4 1934713408
    %v1110 = vunpack.c.0.s8 %v1109
    %v1111 = vlaneseq
    %v1112 = vshrl.u32 %v1111, 7
    %v1113 = vsub.s32 %v1110, %v1112
    %v1114 = vrot.slane %v1106, %v1113
    %v1116 = vunpack.c.l.s4 1934713408
    %v1117 = vunpack.c.0.s8 %v1116
    %v1118 = vlaneseq
    %v1119 = vshrl.u32 %v1118, 7
    %v1120 = vsub.s32 %v1117, %v1119
    %v1121 = vrot.slane %v1107, %v1120
    %v1122 = vcombine.high %v1098, 0.0
    %v1123 = vcombine.high %v1105, 0.0
    %v1124 = vcombine.high %v1114, 0.0
    %v1125 = vcombine.high %v1121, 0.0
    %v1126 = vcombine.low %v870, %v899
    %v1127 = vcombine.high %v870, %v899
    %v1129 = vunpack.c.l.s4 1983009808
    %v1130 = vunpack.c.0.s8 %v1129
    %v1131 = vlaneseq
    %v1132 = vshrl.u32 %v1131, 7
    %v1133 = vsub.s32 %v1130, %v1132
    %v1134 = vrot.slane %v1126, %v1133
    %v1136 = vunpack.c.l.s4 1983009808
    %v1137 = vunpack.c.0.s8 %v1136
    %v1138 = vlaneseq
    %v1139 = vshrl.u32 %v1138, 7
    %v1140 = vsub.s32 %v1137, %v1139
    %v1141 = vrot.slane %v1127, %v1140
    %v1142 = vcombine.low %v884, %v914
    %v1143 = vcombine.high %v884, %v914
    %v1145 = vunpack.c.l.s4 1983009808
    %v1146 = vunpack.c.0.s8 %v1145
    %v1147 = vlaneseq
    %v1148 = vshrl.u32 %v1147, 7
    %v1149 = vsub.s32 %v1146, %v1148
    %v1150 = vrot.slane %v1142, %v1149
    %v1152 = vunpack.c.l.s4 1983009808
    %v1153 = vunpack.c.0.s8 %v1152
    %v1154 = vlaneseq
    %v1155 = vshrl.u32 %v1154, 7
    %v1156 = vsub.s32 %v1153, %v1155
    %v1157 = vrot.slane %v1143, %v1156
    %v1158 = vcombine.low %v1134, %v1150
    %v1159 = vcombine.high %v1134, %v1150
    %v1161 = vunpack.c.l.s4 1934713408
    %v1162 = vunpack.c.0.s8 %v1161
    %v1163 = vlaneseq
    %v1164 = vshrl.u32 %v1163, 7
    %v1165 = vsub.s32 %v1162, %v1164
    %v1166 = vrot.slane %v1158, %v1165
    %v1168 = vunpack.c.l.s4 1934713408
    %v1169 = vunpack.c.0.s8 %v1168
    %v1170 = vlaneseq
    %v1171 = vshrl.u32 %v1170, 7
    %v1172 = vsub.s32 %v1169, %v1171
    %v1173 = vrot.slane %v1159, %v1172
    %v1174 = vcombine.low %v1141, %v1157
    %v1175 = vcombine.high %v1141, %v1157
    %v1177 = vunpack.c.l.s4 1934713408
    %v1178 = vunpack.c.0.s8 %v1177
    %v1179 = vlaneseq
    %v1180 = vshrl.u32 %v1179, 7
    %v1181 = vsub.s32 %v1178, %v1180
    %v1182 = vrot.slane %v1174, %v1181
    %v1184 = vunpack.c.l.s4 1934713408
    %v1185 = vunpack.c.0.s8 %v1184
    %v1186 = vlaneseq
    %v1187 = vshrl.u32 %v1186, 7
    %v1188 = vsub.s32 %v1185, %v1187
    %v1189 = vrot.slane %v1175, %v1188
    %v1190 = vcombine.high %v1166, 0.0
    %v1191 = vcombine.high %v1173, 0.0
    %v1192 = vcombine.high %v1182, 0.0
    %v1193 = vcombine.high %v1189, 0.0
    %v1194 = vcombine.low %v871, %v901
    %v1195 = vcombine.high %v871, %v901
    %v1197 = vunpack.c.l.s4 1983009808
    %v1198 = vunpack.c.0.s8 %v1197
    %v1199 = vlaneseq
    %v1200 = vshrl.u32 %v1199, 7
    %v1201 = vsub.s32 %v1198, %v1200
    %v1202 = vrot.slane %v1194, %v1201
    %v1204 = vunpack.c.l.s4 1983009808
    %v1205 = vunpack.c.0.s8 %v1204
    %v1206 = vlaneseq
    %v1207 = vshrl.u32 %v1206, 7
    %v1208 = vsub.s32 %v1205, %v1207
    %v1209 = vrot.slane %v1195, %v1208
    %v1210 = vcombine.low %v886, %v916
    %v1211 = vcombine.high %v886, %v916
    %v1213 = vunpack.c.l.s4 1983009808
    %v1214 = vunpack.c.0.s8 %v1213
    %v1215 = vlaneseq
    %v1216 = vshrl.u32 %v1215, 7
    %v1217 = vsub.s32 %v1214, %v1216
    %v1218 = vrot.slane %v1210, %v1217
    %v1220 = vunpack.c.l.s4 1983009808
    %v1221 = vunpack.c.0.s8 %v1220
    %v1222 = vlaneseq
    %v1223 = vshrl.u32 %v1222, 7
    %v1224 = vsub.s32 %v1221, %v1223
    %v1225 = vrot.slane %v1211, %v1224
    %v1226 = vcombine.low %v1202, %v1218
    %v1227 = vcombine.high %v1202, %v1218
    %v1229 = vunpack.c.l.s4 1934713408
    %v1230 = vunpack.c.0.s8 %v1229
    %v1231 = vlaneseq
    %v1232 = vshrl.u32 %v1231, 7
    %v1233 = vsub.s32 %v1230, %v1232
    %v1234 = vrot.slane %v1226, %v1233
    %v1236 = vunpack.c.l.s4 1934713408
    %v1237 = vunpack.c.0.s8 %v1236
    %v1238 = vlaneseq
    %v1239 = vshrl.u32 %v1238, 7
    %v1240 = vsub.s32 %v1237, %v1239
    %v1241 = vrot.slane %v1227, %v1240
    %v1242 = vcombine.low %v1209, %v1225
    %v1243 = vcombine.high %v1209, %v1225
    %v1245 = vunpack.c.l.s4 1934713408
    %v1246 = vunpack.c.0.s8 %v1245
    %v1247 = vlaneseq
    %v1248 = vshrl.u32 %v1247, 7
    %v1249 = vsub.s32 %v1246, %v1248
    %v1250 = vrot.slane %v1242, %v1249
    %v1252 = vunpack.c.l.s4 1934713408
    %v1253 = vunpack.c.0.s8 %v1252
    %v1254 = vlaneseq
    %v1255 = vshrl.u32 %v1254, 7
    %v1256 = vsub.s32 %v1253, %v1255
    %v1257 = vrot.slane %v1243, %v1256
    %v1258 = vcombine.high %v1234, 0.0
    %v1259 = vcombine.high %v1241, 0.0
    %v1260 = vcombine.high %v1250, 0.0
    %v1261 = vcombine.high %v1257, 0.0
    %v1262 = vpack.c.bf16 %v962, %v962
    %v1263 = vpack.c.bf16 %v986, %v986
    %v1264 = vpack.c.bf16 %v969, %v969
    %v1265 = vpack.c.bf16 %v987, %v987
    %v1266 = vpack.c.bf16 %v978, %v978
    %v1267 = vpack.c.bf16 %v988, %v988
    %v1268 = vpack.c.bf16 %v985, %v985
    %v1269 = vpack.c.bf16 %v989, %v989
    %v1270 = vpack.c.bf16 %v1030, %v1030
    %v1271 = vpack.c.bf16 %v1054, %v1054
    %v1272 = vpack.c.bf16 %v1037, %v1037
    %v1273 = vpack.c.bf16 %v1055, %v1055
    %v1274 = vpack.c.bf16 %v1046, %v1046
    %v1275 = vpack.c.bf16 %v1056, %v1056
    %v1276 = vpack.c.bf16 %v1053, %v1053
    %v1277 = vpack.c.bf16 %v1057, %v1057
    %v1278 = vpack.c.bf16 %v1098, %v1098
    %v1279 = vpack.c.bf16 %v1122, %v1122
    %v1280 = vpack.c.bf16 %v1105, %v1105
    %v1281 = vpack.c.bf16 %v1123, %v1123
    %v1282 = vpack.c.bf16 %v1114, %v1114
    %v1283 = vpack.c.bf16 %v1124, %v1124
    %v1284 = vpack.c.bf16 %v1121, %v1121
    %v1285 = vpack.c.bf16 %v1125, %v1125
    %v1286 = vpack.c.bf16 %v1166, %v1166
    %v1287 = vpack.c.bf16 %v1190, %v1190
    %v1288 = vpack.c.bf16 %v1173, %v1173
    %v1289 = vpack.c.bf16 %v1191, %v1191
    %v1290 = vpack.c.bf16 %v1182, %v1182
    %v1291 = vpack.c.bf16 %v1192, %v1192
    %v1292 = vpack.c.bf16 %v1189, %v1189
    %v1293 = vpack.c.bf16 %v1193, %v1193
    %v1294 = vpack.c.bf16 %v1234, %v1234
    %v1295 = vpack.c.bf16 %v1258, %v1258
    %v1296 = vpack.c.bf16 %v1241, %v1241
    %v1297 = vpack.c.bf16 %v1259, %v1259
    %v1298 = vpack.c.bf16 %v1250, %v1250
    %v1299 = vpack.c.bf16 %v1260, %v1260
    %v1300 = vpack.c.bf16 %v1257, %v1257
    %v1301 = vpack.c.bf16 %v1261, %v1261
    %1307 = vrot.lane.b32.xlu0 %v787, 96
    %v1308 = vpop.permute.xlu0 %1307
    %1309 = vrot.lane.b32.xlu0 %v791, 96
    %v1310 = vpop.permute.xlu0 %1309
    %1311 = vrot.lane.b32.xlu0 %v797, 96
    %v1312 = vpop.permute.xlu0 %1311
    %1313 = vrot.lane.b32.xlu0 %v801, 96
    %v1314 = vpop.permute.xlu0 %1313
    %1315 = vrot.lane.b32.xlu0 %v807, 96
    %v1316 = vpop.permute.xlu0 %1315
    %1322 = vrot.lane.b32.xlu0 %v787, 64
    %v1323 = vpop.permute.xlu0 %1322
    %1324 = vrot.lane.b32.xlu0 %v791, 64
    %v1325 = vpop.permute.xlu0 %1324
    %1326 = vrot.lane.b32.xlu0 %v797, 64
    %v1327 = vpop.permute.xlu0 %1326
    %1328 = vrot.lane.b32.xlu0 %v801, 64
    %v1329 = vpop.permute.xlu0 %1328
    %1330 = vrot.lane.b32.xlu0 %v807, 64
    %v1331 = vpop.permute.xlu0 %1330
    %1337 = vrot.lane.b32.xlu0 %v787, 32
    %v1338 = vpop.permute.xlu0 %1337
    %1339 = vrot.lane.b32.xlu0 %v791, 32
    %v1340 = vpop.permute.xlu0 %1339
    %1341 = vrot.lane.b32.xlu0 %v797, 32
    %v1342 = vpop.permute.xlu0 %1341
    %1343 = vrot.lane.b32.xlu0 %v801, 32
    %v1344 = vpop.permute.xlu0 %1343
    %1345 = vrot.lane.b32.xlu0 %v807, 32
    %v1346 = vpop.permute.xlu0 %1345
    %v1352 = vcombine.low %v787, %v1323
    %v1353 = vcombine.high %v787, %v1323
    %v1355 = vunpack.c.l.s4 1983009808
    %v1356 = vunpack.c.0.s8 %v1355
    %v1357 = vlaneseq
    %v1358 = vshrl.u32 %v1357, 7
    %v1359 = vsub.s32 %v1356, %v1358
    %v1360 = vrot.slane %v1352, %v1359
    %v1362 = vunpack.c.l.s4 1983009808
    %v1363 = vunpack.c.0.s8 %v1362
    %v1364 = vlaneseq
    %v1365 = vshrl.u32 %v1364, 7
    %v1366 = vsub.s32 %v1363, %v1365
    %v1367 = vrot.slane %v1353, %v1366
    %v1368 = vcombine.low %v1308, %v1338
    %v1369 = vcombine.high %v1308, %v1338
    %v1371 = vunpack.c.l.s4 1983009808
    %v1372 = vunpack.c.0.s8 %v1371
    %v1373 = vlaneseq
    %v1374 = vshrl.u32 %v1373, 7
    %v1375 = vsub.s32 %v1372, %v1374
    %v1376 = vrot.slane %v1368, %v1375
    %v1378 = vunpack.c.l.s4 1983009808
    %v1379 = vunpack.c.0.s8 %v1378
    %v1380 = vlaneseq
    %v1381 = vshrl.u32 %v1380, 7
    %v1382 = vsub.s32 %v1379, %v1381
    %v1383 = vrot.slane %v1369, %v1382
    %v1384 = vcombine.low %v1360, %v1376
    %v1385 = vcombine.high %v1360, %v1376
    %v1387 = vunpack.c.l.s4 1934713408
    %v1388 = vunpack.c.0.s8 %v1387
    %v1389 = vlaneseq
    %v1390 = vshrl.u32 %v1389, 7
    %v1391 = vsub.s32 %v1388, %v1390
    %v1392 = vrot.slane %v1384, %v1391
    %v1394 = vunpack.c.l.s4 1934713408
    %v1395 = vunpack.c.0.s8 %v1394
    %v1396 = vlaneseq
    %v1397 = vshrl.u32 %v1396, 7
    %v1398 = vsub.s32 %v1395, %v1397
    %v1399 = vrot.slane %v1385, %v1398
    %v1400 = vcombine.low %v1367, %v1383
    %v1401 = vcombine.high %v1367, %v1383
    %v1403 = vunpack.c.l.s4 1934713408
    %v1404 = vunpack.c.0.s8 %v1403
    %v1405 = vlaneseq
    %v1406 = vshrl.u32 %v1405, 7
    %v1407 = vsub.s32 %v1404, %v1406
    %v1408 = vrot.slane %v1400, %v1407
    %v1410 = vunpack.c.l.s4 1934713408
    %v1411 = vunpack.c.0.s8 %v1410
    %v1412 = vlaneseq
    %v1413 = vshrl.u32 %v1412, 7
    %v1414 = vsub.s32 %v1411, %v1413
    %v1415 = vrot.slane %v1401, %v1414
    %v1416 = vcombine.high %v1392, 0.0
    %v1417 = vcombine.high %v1399, 0.0
    %v1418 = vcombine.high %v1408, 0.0
    %v1419 = vcombine.high %v1415, 0.0
    %v1420 = vcombine.low %v791, %v1325
    %v1421 = vcombine.high %v791, %v1325
    %v1423 = vunpack.c.l.s4 1983009808
    %v1424 = vunpack.c.0.s8 %v1423
    %v1425 = vlaneseq
    %v1426 = vshrl.u32 %v1425, 7
    %v1427 = vsub.s32 %v1424, %v1426
    %v1428 = vrot.slane %v1420, %v1427
    %v1430 = vunpack.c.l.s4 1983009808
    %v1431 = vunpack.c.0.s8 %v1430
    %v1432 = vlaneseq
    %v1433 = vshrl.u32 %v1432, 7
    %v1434 = vsub.s32 %v1431, %v1433
    %v1435 = vrot.slane %v1421, %v1434
    %v1436 = vcombine.low %v1310, %v1340
    %v1437 = vcombine.high %v1310, %v1340
    %v1439 = vunpack.c.l.s4 1983009808
    %v1440 = vunpack.c.0.s8 %v1439
    %v1441 = vlaneseq
    %v1442 = vshrl.u32 %v1441, 7
    %v1443 = vsub.s32 %v1440, %v1442
    %v1444 = vrot.slane %v1436, %v1443
    %v1446 = vunpack.c.l.s4 1983009808
    %v1447 = vunpack.c.0.s8 %v1446
    %v1448 = vlaneseq
    %v1449 = vshrl.u32 %v1448, 7
    %v1450 = vsub.s32 %v1447, %v1449
    %v1451 = vrot.slane %v1437, %v1450
    %v1452 = vcombine.low %v1428, %v1444
    %v1453 = vcombine.high %v1428, %v1444
    %v1455 = vunpack.c.l.s4 1934713408
    %v1456 = vunpack.c.0.s8 %v1455
    %v1457 = vlaneseq
    %v1458 = vshrl.u32 %v1457, 7
    %v1459 = vsub.s32 %v1456, %v1458
    %v1460 = vrot.slane %v1452, %v1459
    %v1462 = vunpack.c.l.s4 1934713408
    %v1463 = vunpack.c.0.s8 %v1462
    %v1464 = vlaneseq
    %v1465 = vshrl.u32 %v1464, 7
    %v1466 = vsub.s32 %v1463, %v1465
    %v1467 = vrot.slane %v1453, %v1466
    %v1468 = vcombine.low %v1435, %v1451
    %v1469 = vcombine.high %v1435, %v1451
    %v1471 = vunpack.c.l.s4 1934713408
    %v1472 = vunpack.c.0.s8 %v1471
    %v1473 = vlaneseq
    %v1474 = vshrl.u32 %v1473, 7
    %v1475 = vsub.s32 %v1472, %v1474
    %v1476 = vrot.slane %v1468, %v1475
    %v1478 = vunpack.c.l.s4 1934713408
    %v1479 = vunpack.c.0.s8 %v1478
    %v1480 = vlaneseq
    %v1481 = vshrl.u32 %v1480, 7
    %v1482 = vsub.s32 %v1479, %v1481
    %v1483 = vrot.slane %v1469, %v1482
    %v1484 = vcombine.high %v1460, 0.0
    %v1485 = vcombine.high %v1467, 0.0
    %v1486 = vcombine.high %v1476, 0.0
    %v1487 = vcombine.high %v1483, 0.0
    %v1488 = vcombine.low %v797, %v1327
    %v1489 = vcombine.high %v797, %v1327
    %v1491 = vunpack.c.l.s4 1983009808
    %v1492 = vunpack.c.0.s8 %v1491
    %v1493 = vlaneseq
    %v1494 = vshrl.u32 %v1493, 7
    %v1495 = vsub.s32 %v1492, %v1494
    %v1496 = vrot.slane %v1488, %v1495
    %v1498 = vunpack.c.l.s4 1983009808
    %v1499 = vunpack.c.0.s8 %v1498
    %v1500 = vlaneseq
    %v1501 = vshrl.u32 %v1500, 7
    %v1502 = vsub.s32 %v1499, %v1501
    %v1503 = vrot.slane %v1489, %v1502
    %v1504 = vcombine.low %v1312, %v1342
    %v1505 = vcombine.high %v1312, %v1342
    %v1507 = vunpack.c.l.s4 1983009808
    %v1508 = vunpack.c.0.s8 %v1507
    %v1509 = vlaneseq
    %v1510 = vshrl.u32 %v1509, 7
    %v1511 = vsub.s32 %v1508, %v1510
    %v1512 = vrot.slane %v1504, %v1511
    %v1514 = vunpack.c.l.s4 1983009808
    %v1515 = vunpack.c.0.s8 %v1514
    %v1516 = vlaneseq
    %v1517 = vshrl.u32 %v1516, 7
    %v1518 = vsub.s32 %v1515, %v1517
    %v1519 = vrot.slane %v1505, %v1518
    %v1520 = vcombine.low %v1496, %v1512
    %v1521 = vcombine.high %v1496, %v1512
    %v1523 = vunpack.c.l.s4 1934713408
    %v1524 = vunpack.c.0.s8 %v1523
    %v1525 = vlaneseq
    %v1526 = vshrl.u32 %v1525, 7
    %v1527 = vsub.s32 %v1524, %v1526
    %v1528 = vrot.slane %v1520, %v1527
    %v1530 = vunpack.c.l.s4 1934713408
    %v1531 = vunpack.c.0.s8 %v1530
    %v1532 = vlaneseq
    %v1533 = vshrl.u32 %v1532, 7
    %v1534 = vsub.s32 %v1531, %v1533
    %v1535 = vrot.slane %v1521, %v1534
    %v1536 = vcombine.low %v1503, %v1519
    %v1537 = vcombine.high %v1503, %v1519
    %v1539 = vunpack.c.l.s4 1934713408
    %v1540 = vunpack.c.0.s8 %v1539
    %v1541 = vlaneseq
    %v1542 = vshrl.u32 %v1541, 7
    %v1543 = vsub.s32 %v1540, %v1542
    %v1544 = vrot.slane %v1536, %v1543
    %v1546 = vunpack.c.l.s4 1934713408
    %v1547 = vunpack.c.0.s8 %v1546
    %v1548 = vlaneseq
    %v1549 = vshrl.u32 %v1548, 7
    %v1550 = vsub.s32 %v1547, %v1549
    %v1551 = vrot.slane %v1537, %v1550
    %v1552 = vcombine.high %v1528, 0.0
    %v1553 = vcombine.high %v1535, 0.0
    %v1554 = vcombine.high %v1544, 0.0
    %v1555 = vcombine.high %v1551, 0.0
    %v1556 = vcombine.low %v801, %v1329
    %v1557 = vcombine.high %v801, %v1329
    %v1559 = vunpack.c.l.s4 1983009808
    %v1560 = vunpack.c.0.s8 %v1559
    %v1561 = vlaneseq
    %v1562 = vshrl.u32 %v1561, 7
    %v1563 = vsub.s32 %v1560, %v1562
    %v1564 = vrot.slane %v1556, %v1563
    %v1566 = vunpack.c.l.s4 1983009808
    %v1567 = vunpack.c.0.s8 %v1566
    %v1568 = vlaneseq
    %v1569 = vshrl.u32 %v1568, 7
    %v1570 = vsub.s32 %v1567, %v1569
    %v1571 = vrot.slane %v1557, %v1570
    %v1572 = vcombine.low %v1314, %v1344
    %v1573 = vcombine.high %v1314, %v1344
    %v1575 = vunpack.c.l.s4 1983009808
    %v1576 = vunpack.c.0.s8 %v1575
    %v1577 = vlaneseq
    %v1578 = vshrl.u32 %v1577, 7
    %v1579 = vsub.s32 %v1576, %v1578
    %v1580 = vrot.slane %v1572, %v1579
    %v1582 = vunpack.c.l.s4 1983009808
    %v1583 = vunpack.c.0.s8 %v1582
    %v1584 = vlaneseq
    %v1585 = vshrl.u32 %v1584, 7
    %v1586 = vsub.s32 %v1583, %v1585
    %v1587 = vrot.slane %v1573, %v1586
    %v1588 = vcombine.low %v1564, %v1580
    %v1589 = vcombine.high %v1564, %v1580
    %v1591 = vunpack.c.l.s4 1934713408
    %v1592 = vunpack.c.0.s8 %v1591
    %v1593 = vlaneseq
    %v1594 = vshrl.u32 %v1593, 7
    %v1595 = vsub.s32 %v1592, %v1594
    %v1596 = vrot.slane %v1588, %v1595
    %v1598 = vunpack.c.l.s4 1934713408
    %v1599 = vunpack.c.0.s8 %v1598
    %v1600 = vlaneseq
    %v1601 = vshrl.u32 %v1600, 7
    %v1602 = vsub.s32 %v1599, %v1601
    %v1603 = vrot.slane %v1589, %v1602
    %v1604 = vcombine.low %v1571, %v1587
    %v1605 = vcombine.high %v1571, %v1587
    %v1607 = vunpack.c.l.s4 1934713408
    %v1608 = vunpack.c.0.s8 %v1607
    %v1609 = vlaneseq
    %v1610 = vshrl.u32 %v1609, 7
    %v1611 = vsub.s32 %v1608, %v1610
    %v1612 = vrot.slane %v1604, %v1611
    %v1614 = vunpack.c.l.s4 1934713408
    %v1615 = vunpack.c.0.s8 %v1614
    %v1616 = vlaneseq
    %v1617 = vshrl.u32 %v1616, 7
    %v1618 = vsub.s32 %v1615, %v1617
    %v1619 = vrot.slane %v1605, %v1618
    %v1620 = vcombine.high %v1596, 0.0
    %v1621 = vcombine.high %v1603, 0.0
    %v1622 = vcombine.high %v1612, 0.0
    %v1623 = vcombine.high %v1619, 0.0
    %v1624 = vcombine.low %v807, %v1331
    %v1625 = vcombine.high %v807, %v1331
    %v1627 = vunpack.c.l.s4 1983009808
    %v1628 = vunpack.c.0.s8 %v1627
    %v1629 = vlaneseq
    %v1630 = vshrl.u32 %v1629, 7
    %v1631 = vsub.s32 %v1628, %v1630
    %v1632 = vrot.slane %v1624, %v1631
    %v1634 = vunpack.c.l.s4 1983009808
    %v1635 = vunpack.c.0.s8 %v1634
    %v1636 = vlaneseq
    %v1637 = vshrl.u32 %v1636, 7
    %v1638 = vsub.s32 %v1635, %v1637
    %v1639 = vrot.slane %v1625, %v1638
    %v1640 = vcombine.low %v1316, %v1346
    %v1641 = vcombine.high %v1316, %v1346
    %v1643 = vunpack.c.l.s4 1983009808
    %v1644 = vunpack.c.0.s8 %v1643
    %v1645 = vlaneseq
    %v1646 = vshrl.u32 %v1645, 7
    %v1647 = vsub.s32 %v1644, %v1646
    %v1648 = vrot.slane %v1640, %v1647
    %v1650 = vunpack.c.l.s4 1983009808
    %v1651 = vunpack.c.0.s8 %v1650
    %v1652 = vlaneseq
    %v1653 = vshrl.u32 %v1652, 7
    %v1654 = vsub.s32 %v1651, %v1653
    %v1655 = vrot.slane %v1641, %v1654
    %v1656 = vcombine.low %v1632, %v1648
    %v1657 = vcombine.high %v1632, %v1648
    %v1659 = vunpack.c.l.s4 1934713408
    %v1660 = vunpack.c.0.s8 %v1659
    %v1661 = vlaneseq
    %v1662 = vshrl.u32 %v1661, 7
    %v1663 = vsub.s32 %v1660, %v1662
    %v1664 = vrot.slane %v1656, %v1663
    %v1666 = vunpack.c.l.s4 1934713408
    %v1667 = vunpack.c.0.s8 %v1666
    %v1668 = vlaneseq
    %v1669 = vshrl.u32 %v1668, 7
    %v1670 = vsub.s32 %v1667, %v1669
    %v1671 = vrot.slane %v1657, %v1670
    %v1672 = vcombine.low %v1639, %v1655
    %v1673 = vcombine.high %v1639, %v1655
    %v1675 = vunpack.c.l.s4 1934713408
    %v1676 = vunpack.c.0.s8 %v1675
    %v1677 = vlaneseq
    %v1678 = vshrl.u32 %v1677, 7
    %v1679 = vsub.s32 %v1676, %v1678
    %v1680 = vrot.slane %v1672, %v1679
    %v1682 = vunpack.c.l.s4 1934713408
    %v1683 = vunpack.c.0.s8 %v1682
    %v1684 = vlaneseq
    %v1685 = vshrl.u32 %v1684, 7
    %v1686 = vsub.s32 %v1683, %v1685
    %v1687 = vrot.slane %v1673, %v1686
    %v1688 = vcombine.high %v1664, 0.0
    %v1689 = vcombine.high %v1671, 0.0
    %v1690 = vcombine.high %v1680, 0.0
    %v1691 = vcombine.high %v1687, 0.0
    %v1692 = vpack.c.bf16 %v1392, %v1392
    %v1693 = vpack.c.bf16 %v1416, %v1416
    %v1694 = vpack.c.bf16 %v1399, %v1399
    %v1695 = vpack.c.bf16 %v1417, %v1417
    %v1696 = vpack.c.bf16 %v1408, %v1408
    %v1697 = vpack.c.bf16 %v1418, %v1418
    %v1698 = vpack.c.bf16 %v1415, %v1415
    %v1699 = vpack.c.bf16 %v1419, %v1419
    %v1700 = vpack.c.bf16 %v1460, %v1460
    %v1701 = vpack.c.bf16 %v1484, %v1484
    %v1702 = vpack.c.bf16 %v1467, %v1467
    %v1703 = vpack.c.bf16 %v1485, %v1485
    %v1704 = vpack.c.bf16 %v1476, %v1476
    %v1705 = vpack.c.bf16 %v1486, %v1486
    %v1706 = vpack.c.bf16 %v1483, %v1483
    %v1707 = vpack.c.bf16 %v1487, %v1487
    %v1708 = vpack.c.bf16 %v1528, %v1528
    %v1709 = vpack.c.bf16 %v1552, %v1552
    %v1710 = vpack.c.bf16 %v1535, %v1535
    %v1711 = vpack.c.bf16 %v1553, %v1553
    %v1712 = vpack.c.bf16 %v1544, %v1544
    %v1713 = vpack.c.bf16 %v1554, %v1554
    %v1714 = vpack.c.bf16 %v1551, %v1551
    %v1715 = vpack.c.bf16 %v1555, %v1555
    %v1716 = vpack.c.bf16 %v1596, %v1596
    %v1717 = vpack.c.bf16 %v1620, %v1620
    %v1718 = vpack.c.bf16 %v1603, %v1603
    %v1719 = vpack.c.bf16 %v1621, %v1621
    %v1720 = vpack.c.bf16 %v1612, %v1612
    %v1721 = vpack.c.bf16 %v1622, %v1622
    %v1722 = vpack.c.bf16 %v1619, %v1619
    %v1723 = vpack.c.bf16 %v1623, %v1623
    %v1724 = vpack.c.bf16 %v1664, %v1664
    %v1725 = vpack.c.bf16 %v1688, %v1688
    %v1726 = vpack.c.bf16 %v1671, %v1671
    %v1727 = vpack.c.bf16 %v1689, %v1689
    %v1728 = vpack.c.bf16 %v1680, %v1680
    %v1729 = vpack.c.bf16 %v1690, %v1690
    %v1730 = vpack.c.bf16 %v1687, %v1687
    %v1731 = vpack.c.bf16 %v1691, %v1691
    %1737 = vrot.lane.b32.xlu0 %v846, 96
    %v1738 = vpop.permute.xlu0 %1737
    %1739 = vrot.lane.b32.xlu0 %v849, 96
    %v1740 = vpop.permute.xlu0 %1739
    %1741 = vrot.lane.b32.xlu0 %v854, 96
    %v1742 = vpop.permute.xlu0 %1741
    %1743 = vrot.lane.b32.xlu0 %v857, 96
    %v1744 = vpop.permute.xlu0 %1743
    %1745 = vrot.lane.b32.xlu0 %v862, 96
    %v1746 = vpop.permute.xlu0 %1745
    %1752 = vrot.lane.b32.xlu0 %v846, 64
    %v1753 = vpop.permute.xlu0 %1752
    %1754 = vrot.lane.b32.xlu0 %v849, 64
    %v1755 = vpop.permute.xlu0 %1754
    %1756 = vrot.lane.b32.xlu0 %v854, 64
    %v1757 = vpop.permute.xlu0 %1756
    %1758 = vrot.lane.b32.xlu0 %v857, 64
    %v1759 = vpop.permute.xlu0 %1758
    %1760 = vrot.lane.b32.xlu0 %v862, 64
    %v1761 = vpop.permute.xlu0 %1760
    %1767 = vrot.lane.b32.xlu0 %v846, 32
    %v1768 = vpop.permute.xlu0 %1767
    %1769 = vrot.lane.b32.xlu0 %v849, 32
    %v1770 = vpop.permute.xlu0 %1769
    %1771 = vrot.lane.b32.xlu0 %v854, 32
    %v1772 = vpop.permute.xlu0 %1771
    %1773 = vrot.lane.b32.xlu0 %v857, 32
    %v1774 = vpop.permute.xlu0 %1773
    %1775 = vrot.lane.b32.xlu0 %v862, 32
    %v1776 = vpop.permute.xlu0 %1775
    %v1782 = vcombine.low %v846, %v1753
    %v1783 = vcombine.high %v846, %v1753
    %v1785 = vunpack.c.l.s4 1983009808
    %v1786 = vunpack.c.0.s8 %v1785
    %v1787 = vlaneseq
    %v1788 = vshrl.u32 %v1787, 7
    %v1789 = vsub.s32 %v1786, %v1788
    %v1790 = vrot.slane %v1782, %v1789
    %v1792 = vunpack.c.l.s4 1983009808
    %v1793 = vunpack.c.0.s8 %v1792
    %v1794 = vlaneseq
    %v1795 = vshrl.u32 %v1794, 7
    %v1796 = vsub.s32 %v1793, %v1795
    %v1797 = vrot.slane %v1783, %v1796
    %v1798 = vcombine.low %v1738, %v1768
    %v1799 = vcombine.high %v1738, %v1768
    %v1801 = vunpack.c.l.s4 1983009808
    %v1802 = vunpack.c.0.s8 %v1801
    %v1803 = vlaneseq
    %v1804 = vshrl.u32 %v1803, 7
    %v1805 = vsub.s32 %v1802, %v1804
    %v1806 = vrot.slane %v1798, %v1805
    %v1808 = vunpack.c.l.s4 1983009808
    %v1809 = vunpack.c.0.s8 %v1808
    %v1810 = vlaneseq
    %v1811 = vshrl.u32 %v1810, 7
    %v1812 = vsub.s32 %v1809, %v1811
    %v1813 = vrot.slane %v1799, %v1812
    %v1814 = vcombine.low %v1790, %v1806
    %v1815 = vcombine.high %v1790, %v1806
    %v1817 = vunpack.c.l.s4 1934713408
    %v1818 = vunpack.c.0.s8 %v1817
    %v1819 = vlaneseq
    %v1820 = vshrl.u32 %v1819, 7
    %v1821 = vsub.s32 %v1818, %v1820
    %v1822 = vrot.slane %v1814, %v1821
    %v1824 = vunpack.c.l.s4 1934713408
    %v1825 = vunpack.c.0.s8 %v1824
    %v1826 = vlaneseq
    %v1827 = vshrl.u32 %v1826, 7
    %v1828 = vsub.s32 %v1825, %v1827
    %v1829 = vrot.slane %v1815, %v1828
    %v1830 = vcombine.low %v1797, %v1813
    %v1831 = vcombine.high %v1797, %v1813
    %v1833 = vunpack.c.l.s4 1934713408
    %v1834 = vunpack.c.0.s8 %v1833
    %v1835 = vlaneseq
    %v1836 = vshrl.u32 %v1835, 7
    %v1837 = vsub.s32 %v1834, %v1836
    %v1838 = vrot.slane %v1830, %v1837
    %v1840 = vunpack.c.l.s4 1934713408
    %v1841 = vunpack.c.0.s8 %v1840
    %v1842 = vlaneseq
    %v1843 = vshrl.u32 %v1842, 7
    %v1844 = vsub.s32 %v1841, %v1843
    %v1845 = vrot.slane %v1831, %v1844
    %v1846 = vcombine.high %v1822, 0.0
    %v1847 = vcombine.high %v1829, 0.0
    %v1848 = vcombine.high %v1838, 0.0
    %v1849 = vcombine.high %v1845, 0.0
    %v1850 = vcombine.low %v849, %v1755
    %v1851 = vcombine.high %v849, %v1755
    %v1853 = vunpack.c.l.s4 1983009808
    %v1854 = vunpack.c.0.s8 %v1853
    %v1855 = vlaneseq
    %v1856 = vshrl.u32 %v1855, 7
    %v1857 = vsub.s32 %v1854, %v1856
    %v1858 = vrot.slane %v1850, %v1857
    %v1860 = vunpack.c.l.s4 1983009808
    %v1861 = vunpack.c.0.s8 %v1860
    %v1862 = vlaneseq
    %v1863 = vshrl.u32 %v1862, 7
    %v1864 = vsub.s32 %v1861, %v1863
    %v1865 = vrot.slane %v1851, %v1864
    %v1866 = vcombine.low %v1740, %v1770
    %v1867 = vcombine.high %v1740, %v1770
    %v1869 = vunpack.c.l.s4 1983009808
    %v1870 = vunpack.c.0.s8 %v1869
    %v1871 = vlaneseq
    %v1872 = vshrl.u32 %v1871, 7
    %v1873 = vsub.s32 %v1870, %v1872
    %v1874 = vrot.slane %v1866, %v1873
    %v1876 = vunpack.c.l.s4 1983009808
    %v1877 = vunpack.c.0.s8 %v1876
    %v1878 = vlaneseq
    %v1879 = vshrl.u32 %v1878, 7
    %v1880 = vsub.s32 %v1877, %v1879
    %v1881 = vrot.slane %v1867, %v1880
    %v1882 = vcombine.low %v1858, %v1874
    %v1883 = vcombine.high %v1858, %v1874
    %v1885 = vunpack.c.l.s4 1934713408
    %v1886 = vunpack.c.0.s8 %v1885
    %v1887 = vlaneseq
    %v1888 = vshrl.u32 %v1887, 7
    %v1889 = vsub.s32 %v1886, %v1888
    %v1890 = vrot.slane %v1882, %v1889
    %v1892 = vunpack.c.l.s4 1934713408
    %v1893 = vunpack.c.0.s8 %v1892
    %v1894 = vlaneseq
    %v1895 = vshrl.u32 %v1894, 7
    %v1896 = vsub.s32 %v1893, %v1895
    %v1897 = vrot.slane %v1883, %v1896
    %v1898 = vcombine.low %v1865, %v1881
    %v1899 = vcombine.high %v1865, %v1881
    %v1901 = vunpack.c.l.s4 1934713408
    %v1902 = vunpack.c.0.s8 %v1901
    %v1903 = vlaneseq
    %v1904 = vshrl.u32 %v1903, 7
    %v1905 = vsub.s32 %v1902, %v1904
    %v1906 = vrot.slane %v1898, %v1905
    %v1908 = vunpack.c.l.s4 1934713408
    %v1909 = vunpack.c.0.s8 %v1908
    %v1910 = vlaneseq
    %v1911 = vshrl.u32 %v1910, 7
    %v1912 = vsub.s32 %v1909, %v1911
    %v1913 = vrot.slane %v1899, %v1912
    %v1914 = vcombine.high %v1890, 0.0
    %v1915 = vcombine.high %v1897, 0.0
    %v1916 = vcombine.high %v1906, 0.0
    %v1917 = vcombine.high %v1913, 0.0
    %v1918 = vcombine.low %v854, %v1757
    %v1919 = vcombine.high %v854, %v1757
    %v1921 = vunpack.c.l.s4 1983009808
    %v1922 = vunpack.c.0.s8 %v1921
    %v1923 = vlaneseq
    %v1924 = vshrl.u32 %v1923, 7
    %v1925 = vsub.s32 %v1922, %v1924
    %v1926 = vrot.slane %v1918, %v1925
    %v1928 = vunpack.c.l.s4 1983009808
    %v1929 = vunpack.c.0.s8 %v1928
    %v1930 = vlaneseq
    %v1931 = vshrl.u32 %v1930, 7
    %v1932 = vsub.s32 %v1929, %v1931
    %v1933 = vrot.slane %v1919, %v1932
    %v1934 = vcombine.low %v1742, %v1772
    %v1935 = vcombine.high %v1742, %v1772
    %v1937 = vunpack.c.l.s4 1983009808
    %v1938 = vunpack.c.0.s8 %v1937
    %v1939 = vlaneseq
    %v1940 = vshrl.u32 %v1939, 7
    %v1941 = vsub.s32 %v1938, %v1940
    %v1942 = vrot.slane %v1934, %v1941
    %v1944 = vunpack.c.l.s4 1983009808
    %v1945 = vunpack.c.0.s8 %v1944
    %v1946 = vlaneseq
    %v1947 = vshrl.u32 %v1946, 7
    %v1948 = vsub.s32 %v1945, %v1947
    %v1949 = vrot.slane %v1935, %v1948
    %v1950 = vcombine.low %v1926, %v1942
    %v1951 = vcombine.high %v1926, %v1942
    %v1953 = vunpack.c.l.s4 1934713408
    %v1954 = vunpack.c.0.s8 %v1953
    %v1955 = vlaneseq
    %v1956 = vshrl.u32 %v1955, 7
    %v1957 = vsub.s32 %v1954, %v1956
    %v1958 = vrot.slane %v1950, %v1957
    %v1960 = vunpack.c.l.s4 1934713408
    %v1961 = vunpack.c.0.s8 %v1960
    %v1962 = vlaneseq
    %v1963 = vshrl.u32 %v1962, 7
    %v1964 = vsub.s32 %v1961, %v1963
    %v1965 = vrot.slane %v1951, %v1964
    %v1966 = vcombine.low %v1933, %v1949
    %v1967 = vcombine.high %v1933, %v1949
    %v1969 = vunpack.c.l.s4 1934713408
    %v1970 = vunpack.c.0.s8 %v1969
    %v1971 = vlaneseq
    %v1972 = vshrl.u32 %v1971, 7
    %v1973 = vsub.s32 %v1970, %v1972
    %v1974 = vrot.slane %v1966, %v1973
    %v1976 = vunpack.c.l.s4 1934713408
    %v1977 = vunpack.c.0.s8 %v1976
    %v1978 = vlaneseq
    %v1979 = vshrl.u32 %v1978, 7
    %v1980 = vsub.s32 %v1977, %v1979
    %v1981 = vrot.slane %v1967, %v1980
    %v1982 = vcombine.high %v1958, 0.0
    %v1983 = vcombine.high %v1965, 0.0
    %v1984 = vcombine.high %v1974, 0.0
    %v1985 = vcombine.high %v1981, 0.0
    %v1986 = vcombine.low %v857, %v1759
    %v1987 = vcombine.high %v857, %v1759
    %v1989 = vunpack.c.l.s4 1983009808
    %v1990 = vunpack.c.0.s8 %v1989
    %v1991 = vlaneseq
    %v1992 = vshrl.u32 %v1991, 7
    %v1993 = vsub.s32 %v1990, %v1992
    %v1994 = vrot.slane %v1986, %v1993
    %v1996 = vunpack.c.l.s4 1983009808
    %v1997 = vunpack.c.0.s8 %v1996
    %v1998 = vlaneseq
    %v1999 = vshrl.u32 %v1998, 7
    %v2000 = vsub.s32 %v1997, %v1999
    %v2001 = vrot.slane %v1987, %v2000
    %v2002 = vcombine.low %v1744, %v1774
    %v2003 = vcombine.high %v1744, %v1774
    %v2005 = vunpack.c.l.s4 1983009808
    %v2006 = vunpack.c.0.s8 %v2005
    %v2007 = vlaneseq
    %v2008 = vshrl.u32 %v2007, 7
    %v2009 = vsub.s32 %v2006, %v2008
    %v2010 = vrot.slane %v2002, %v2009
    %v2012 = vunpack.c.l.s4 1983009808
    %v2013 = vunpack.c.0.s8 %v2012
    %v2014 = vlaneseq
    %v2015 = vshrl.u32 %v2014, 7
    %v2016 = vsub.s32 %v2013, %v2015
    %v2017 = vrot.slane %v2003, %v2016
    %v2018 = vcombine.low %v1994, %v2010
    %v2019 = vcombine.high %v1994, %v2010
    %v2021 = vunpack.c.l.s4 1934713408
    %v2022 = vunpack.c.0.s8 %v2021
    %v2023 = vlaneseq
    %v2024 = vshrl.u32 %v2023, 7
    %v2025 = vsub.s32 %v2022, %v2024
    %v2026 = vrot.slane %v2018, %v2025
    %v2028 = vunpack.c.l.s4 1934713408
    %v2029 = vunpack.c.0.s8 %v2028
    %v2030 = vlaneseq
    %v2031 = vshrl.u32 %v2030, 7
    %v2032 = vsub.s32 %v2029, %v2031
    %v2033 = vrot.slane %v2019, %v2032
    %v2034 = vcombine.low %v2001, %v2017
    %v2035 = vcombine.high %v2001, %v2017
    %v2037 = vunpack.c.l.s4 1934713408
    %v2038 = vunpack.c.0.s8 %v2037
    %v2039 = vlaneseq
    %v2040 = vshrl.u32 %v2039, 7
    %v2041 = vsub.s32 %v2038, %v2040
    %v2042 = vrot.slane %v2034, %v2041
    %v2044 = vunpack.c.l.s4 1934713408
    %v2045 = vunpack.c.0.s8 %v2044
    %v2046 = vlaneseq
    %v2047 = vshrl.u32 %v2046, 7
    %v2048 = vsub.s32 %v2045, %v2047
    %v2049 = vrot.slane %v2035, %v2048
    %v2050 = vcombine.high %v2026, 0.0
    %v2051 = vcombine.high %v2033, 0.0
    %v2052 = vcombine.high %v2042, 0.0
    %v2053 = vcombine.high %v2049, 0.0
    %v2054 = vcombine.low %v862, %v1761
    %v2055 = vcombine.high %v862, %v1761
    %v2057 = vunpack.c.l.s4 1983009808
    %v2058 = vunpack.c.0.s8 %v2057
    %v2059 = vlaneseq
    %v2060 = vshrl.u32 %v2059, 7
    %v2061 = vsub.s32 %v2058, %v2060
    %v2062 = vrot.slane %v2054, %v2061
    %v2064 = vunpack.c.l.s4 1983009808
    %v2065 = vunpack.c.0.s8 %v2064
    %v2066 = vlaneseq
    %v2067 = vshrl.u32 %v2066, 7
    %v2068 = vsub.s32 %v2065, %v2067
    %v2069 = vrot.slane %v2055, %v2068
    %v2070 = vcombine.low %v1746, %v1776
    %v2071 = vcombine.high %v1746, %v1776
    %v2073 = vunpack.c.l.s4 1983009808
    %v2074 = vunpack.c.0.s8 %v2073
    %v2075 = vlaneseq
    %v2076 = vshrl.u32 %v2075, 7
    %v2077 = vsub.s32 %v2074, %v2076
    %v2078 = vrot.slane %v2070, %v2077
    %v2080 = vunpack.c.l.s4 1983009808
    %v2081 = vunpack.c.0.s8 %v2080
    %v2082 = vlaneseq
    %v2083 = vshrl.u32 %v2082, 7
    %v2084 = vsub.s32 %v2081, %v2083
    %v2085 = vrot.slane %v2071, %v2084
    %v2086 = vcombine.low %v2062, %v2078
    %v2087 = vcombine.high %v2062, %v2078
    %v2089 = vunpack.c.l.s4 1934713408
    %v2090 = vunpack.c.0.s8 %v2089
    %v2091 = vlaneseq
    %v2092 = vshrl.u32 %v2091, 7
    %v2093 = vsub.s32 %v2090, %v2092
    %v2094 = vrot.slane %v2086, %v2093
    %v2096 = vunpack.c.l.s4 1934713408
    %v2097 = vunpack.c.0.s8 %v2096
    %v2098 = vlaneseq
    %v2099 = vshrl.u32 %v2098, 7
    %v2100 = vsub.s32 %v2097, %v2099
    %v2101 = vrot.slane %v2087, %v2100
    %v2102 = vcombine.low %v2069, %v2085
    %v2103 = vcombine.high %v2069, %v2085
    %v2105 = vunpack.c.l.s4 1934713408
    %v2106 = vunpack.c.0.s8 %v2105
    %v2107 = vlaneseq
    %v2108 = vshrl.u32 %v2107, 7
    %v2109 = vsub.s32 %v2106, %v2108
    %v2110 = vrot.slane %v2102, %v2109
    %v2112 = vunpack.c.l.s4 1934713408
    %v2113 = vunpack.c.0.s8 %v2112
    %v2114 = vlaneseq
    %v2115 = vshrl.u32 %v2114, 7
    %v2116 = vsub.s32 %v2113, %v2115
    %v2117 = vrot.slane %v2103, %v2116
    %v2118 = vcombine.high %v2094, 0.0
    %v2119 = vcombine.high %v2101, 0.0
    %v2120 = vcombine.high %v2110, 0.0
    %v2121 = vcombine.high %v2117, 0.0
    %v2122 = vpack.c.bf16 %v1822, %v1822
    %v2123 = vpack.c.bf16 %v1846, %v1846
    %v2124 = vpack.c.bf16 %v1829, %v1829
    %v2125 = vpack.c.bf16 %v1847, %v1847
    %v2126 = vpack.c.bf16 %v1838, %v1838
    %v2127 = vpack.c.bf16 %v1848, %v1848
    %v2128 = vpack.c.bf16 %v1845, %v1845
    %v2129 = vpack.c.bf16 %v1849, %v1849
    %v2130 = vpack.c.bf16 %v1890, %v1890
    %v2131 = vpack.c.bf16 %v1914, %v1914
    %v2132 = vpack.c.bf16 %v1897, %v1897
    %v2133 = vpack.c.bf16 %v1915, %v1915
    %v2134 = vpack.c.bf16 %v1906, %v1906
    %v2135 = vpack.c.bf16 %v1916, %v1916
    %v2136 = vpack.c.bf16 %v1913, %v1913
    %v2137 = vpack.c.bf16 %v1917, %v1917
    %v2138 = vpack.c.bf16 %v1958, %v1958
    %v2139 = vpack.c.bf16 %v1982, %v1982
    %v2140 = vpack.c.bf16 %v1965, %v1965
    %v2141 = vpack.c.bf16 %v1983, %v1983
    %v2142 = vpack.c.bf16 %v1974, %v1974
    %v2143 = vpack.c.bf16 %v1984, %v1984
    %v2144 = vpack.c.bf16 %v1981, %v1981
    %v2145 = vpack.c.bf16 %v1985, %v1985
    %v2146 = vpack.c.bf16 %v2026, %v2026
    %v2147 = vpack.c.bf16 %v2050, %v2050
    %v2148 = vpack.c.bf16 %v2033, %v2033
    %v2149 = vpack.c.bf16 %v2051, %v2051
    %v2150 = vpack.c.bf16 %v2042, %v2042
    %v2151 = vpack.c.bf16 %v2052, %v2052
    %v2152 = vpack.c.bf16 %v2049, %v2049
    %v2153 = vpack.c.bf16 %v2053, %v2053
    %v2154 = vpack.c.bf16 %v2094, %v2094
    %v2155 = vpack.c.bf16 %v2118, %v2118
    %v2156 = vpack.c.bf16 %v2101, %v2101
    %v2157 = vpack.c.bf16 %v2119, %v2119
    %v2158 = vpack.c.bf16 %v2110, %v2110
    %v2159 = vpack.c.bf16 %v2120, %v2120
    %v2160 = vpack.c.bf16 %v2117, %v2117
    %v2161 = vpack.c.bf16 %v2121, %v2121
    %v2162 = vld [vmem:[%s2] sm:$0xff]
    %v2163 = vld [vmem:[%s2 + $0x8] sm:$0xff]
    %v2164 = vld [vmem:[%s2 + $0x10] sm:$0xff]
    %v2165 = vld [vmem:[%s2 + $0x18] sm:$0xff]
    %v2166 = vld [vmem:[%s2 + $0x20] sm:$0xff]
    %v2167 = vcombine.low %v1262, %v1266
    %v2169 = vunpack.c.l.s4 1983009808
    %v2170 = vunpack.c.0.s8 %v2169
    %v2171 = vlaneseq
    %v2172 = vshrl.u32 %v2171, 7
    %v2173 = vsub.s32 %v2170, %v2172
    %v2174 = vrot.slane %v2167, %v2173
    %v2175 = vcombine.low %v1264, %v1268
    %v2177 = vunpack.c.l.s4 1983009808
    %v2178 = vunpack.c.0.s8 %v2177
    %v2179 = vlaneseq
    %v2180 = vshrl.u32 %v2179, 7
    %v2181 = vsub.s32 %v2178, %v2180
    %v2182 = vrot.slane %v2175, %v2181
    %v2183 = vcombine.low %v1270, %v1274
    %v2185 = vunpack.c.l.s4 1983009808
    %v2186 = vunpack.c.0.s8 %v2185
    %v2187 = vlaneseq
    %v2188 = vshrl.u32 %v2187, 7
    %v2189 = vsub.s32 %v2186, %v2188
    %v2190 = vrot.slane %v2183, %v2189
    %v2191 = vcombine.low %v1272, %v1276
    %v2193 = vunpack.c.l.s4 1983009808
    %v2194 = vunpack.c.0.s8 %v2193
    %v2195 = vlaneseq
    %v2196 = vshrl.u32 %v2195, 7
    %v2197 = vsub.s32 %v2194, %v2196
    %v2198 = vrot.slane %v2191, %v2197
    %v2199 = vcombine.low %v2174, %v2182
    %v2201 = vunpack.c.l.s4 1934713408
    %v2202 = vunpack.c.0.s8 %v2201
    %v2203 = vlaneseq
    %v2204 = vshrl.u32 %v2203, 7
    %v2205 = vsub.s32 %v2202, %v2204
    %v2206 = vrot.slane %v2199, %v2205
    %v2207 = vcombine.low %v2190, %v2198
    %v2209 = vunpack.c.l.s4 1934713408
    %v2210 = vunpack.c.0.s8 %v2209
    %v2211 = vlaneseq
    %v2212 = vshrl.u32 %v2211, 7
    %v2213 = vsub.s32 %v2210, %v2212
    %v2214 = vrot.slane %v2207, %v2213
    %v2215 = vcombine.low %v2206, %v2214
    %v2216 = vcombine.high %v2206, %v2214
    %v2217 = vcombine.low %v1263, %v1267
    %v2219 = vunpack.c.l.s4 1983009808
    %v2220 = vunpack.c.0.s8 %v2219
    %v2221 = vlaneseq
    %v2222 = vshrl.u32 %v2221, 7
    %v2223 = vsub.s32 %v2220, %v2222
    %v2224 = vrot.slane %v2217, %v2223
    %v2225 = vcombine.low %v1265, %v1269
    %v2227 = vunpack.c.l.s4 1983009808
    %v2228 = vunpack.c.0.s8 %v2227
    %v2229 = vlaneseq
    %v2230 = vshrl.u32 %v2229, 7
    %v2231 = vsub.s32 %v2228, %v2230
    %v2232 = vrot.slane %v2225, %v2231
    %v2233 = vcombine.low %v1271, %v1275
    %v2235 = vunpack.c.l.s4 1983009808
    %v2236 = vunpack.c.0.s8 %v2235
    %v2237 = vlaneseq
    %v2238 = vshrl.u32 %v2237, 7
    %v2239 = vsub.s32 %v2236, %v2238
    %v2240 = vrot.slane %v2233, %v2239
    %v2241 = vcombine.low %v1273, %v1277
    %v2243 = vunpack.c.l.s4 1983009808
    %v2244 = vunpack.c.0.s8 %v2243
    %v2245 = vlaneseq
    %v2246 = vshrl.u32 %v2245, 7
    %v2247 = vsub.s32 %v2244, %v2246
    %v2248 = vrot.slane %v2241, %v2247
    %v2249 = vcombine.low %v2224, %v2232
    %v2251 = vunpack.c.l.s4 1934713408
    %v2252 = vunpack.c.0.s8 %v2251
    %v2253 = vlaneseq
    %v2254 = vshrl.u32 %v2253, 7
    %v2255 = vsub.s32 %v2252, %v2254
    %v2256 = vrot.slane %v2249, %v2255
    %v2257 = vcombine.low %v2240, %v2248
    %v2259 = vunpack.c.l.s4 1934713408
    %v2260 = vunpack.c.0.s8 %v2259
    %v2261 = vlaneseq
    %v2262 = vshrl.u32 %v2261, 7
    %v2263 = vsub.s32 %v2260, %v2262
    %v2264 = vrot.slane %v2257, %v2263
    %v2265 = vcombine.low %v2256, %v2264
    %v2266 = vcombine.high %v2256, %v2264
    %v2267 = vcombine.low %v1278, %v1282
    %v2269 = vunpack.c.l.s4 1983009808
    %v2270 = vunpack.c.0.s8 %v2269
    %v2271 = vlaneseq
    %v2272 = vshrl.u32 %v2271, 7
    %v2273 = vsub.s32 %v2270, %v2272
    %v2274 = vrot.slane %v2267, %v2273
    %v2275 = vcombine.low %v1280, %v1284
    %v2277 = vunpack.c.l.s4 1983009808
    %v2278 = vunpack.c.0.s8 %v2277
    %v2279 = vlaneseq
    %v2280 = vshrl.u32 %v2279, 7
    %v2281 = vsub.s32 %v2278, %v2280
    %v2282 = vrot.slane %v2275, %v2281
    %v2283 = vcombine.low %v1286, %v1290
    %v2285 = vunpack.c.l.s4 1983009808
    %v2286 = vunpack.c.0.s8 %v2285
    %v2287 = vlaneseq
    %v2288 = vshrl.u32 %v2287, 7
    %v2289 = vsub.s32 %v2286, %v2288
    %v2290 = vrot.slane %v2283, %v2289
    %v2291 = vcombine.low %v1288, %v1292
    %v2293 = vunpack.c.l.s4 1983009808
    %v2294 = vunpack.c.0.s8 %v2293
    %v2295 = vlaneseq
    %v2296 = vshrl.u32 %v2295, 7
    %v2297 = vsub.s32 %v2294, %v2296
    %v2298 = vrot.slane %v2291, %v2297
    %v2299 = vcombine.low %v2274, %v2282
    %v2301 = vunpack.c.l.s4 1934713408
    %v2302 = vunpack.c.0.s8 %v2301
    %v2303 = vlaneseq
    %v2304 = vshrl.u32 %v2303, 7
    %v2305 = vsub.s32 %v2302, %v2304
    %v2306 = vrot.slane %v2299, %v2305
    %v2307 = vcombine.low %v2290, %v2298
    %v2309 = vunpack.c.l.s4 1934713408
    %v2310 = vunpack.c.0.s8 %v2309
    %v2311 = vlaneseq
    %v2312 = vshrl.u32 %v2311, 7
    %v2313 = vsub.s32 %v2310, %v2312
    %v2314 = vrot.slane %v2307, %v2313
    %v2315 = vcombine.low %v2306, %v2314
    %v2316 = vcombine.high %v2306, %v2314
    %v2317 = vcombine.low %v1279, %v1283
    %v2319 = vunpack.c.l.s4 1983009808
    %v2320 = vunpack.c.0.s8 %v2319
    %v2321 = vlaneseq
    %v2322 = vshrl.u32 %v2321, 7
    %v2323 = vsub.s32 %v2320, %v2322
    %v2324 = vrot.slane %v2317, %v2323
    %v2325 = vcombine.low %v1281, %v1285
    %v2327 = vunpack.c.l.s4 1983009808
    %v2328 = vunpack.c.0.s8 %v2327
    %v2329 = vlaneseq
    %v2330 = vshrl.u32 %v2329, 7
    %v2331 = vsub.s32 %v2328, %v2330
    %v2332 = vrot.slane %v2325, %v2331
    %v2333 = vcombine.low %v1287, %v1291
    %v2335 = vunpack.c.l.s4 1983009808
    %v2336 = vunpack.c.0.s8 %v2335
    %v2337 = vlaneseq
    %v2338 = vshrl.u32 %v2337, 7
    %v2339 = vsub.s32 %v2336, %v2338
    %v2340 = vrot.slane %v2333, %v2339
    %v2341 = vcombine.low %v1289, %v1293
    %v2343 = vunpack.c.l.s4 1983009808
    %v2344 = vunpack.c.0.s8 %v2343
    %v2345 = vlaneseq
    %v2346 = vshrl.u32 %v2345, 7
    %v2347 = vsub.s32 %v2344, %v2346
    %v2348 = vrot.slane %v2341, %v2347
    %v2349 = vcombine.low %v2324, %v2332
    %v2351 = vunpack.c.l.s4 1934713408
    %v2352 = vunpack.c.0.s8 %v2351
    %v2353 = vlaneseq
    %v2354 = vshrl.u32 %v2353, 7
    %v2355 = vsub.s32 %v2352, %v2354
    %v2356 = vrot.slane %v2349, %v2355
    %v2357 = vcombine.low %v2340, %v2348
    %v2359 = vunpack.c.l.s4 1934713408
    %v2360 = vunpack.c.0.s8 %v2359
    %v2361 = vlaneseq
    %v2362 = vshrl.u32 %v2361, 7
    %v2363 = vsub.s32 %v2360, %v2362
    %v2364 = vrot.slane %v2357, %v2363
    %v2365 = vcombine.low %v2356, %v2364
    %v2366 = vcombine.high %v2356, %v2364
    %v2367 = vcombine.low %v1294, %v1298
    %v2369 = vunpack.c.l.s4 1983009808
    %v2370 = vunpack.c.0.s8 %v2369
    %v2371 = vlaneseq
    %v2372 = vshrl.u32 %v2371, 7
    %v2373 = vsub.s32 %v2370, %v2372
    %v2374 = vrot.slane %v2367, %v2373
    %v2375 = vcombine.low %v1296, %v1300
    %v2377 = vunpack.c.l.s4 1983009808
    %v2378 = vunpack.c.0.s8 %v2377
    %v2379 = vlaneseq
    %v2380 = vshrl.u32 %v2379, 7
    %v2381 = vsub.s32 %v2378, %v2380
    %v2382 = vrot.slane %v2375, %v2381
    %v2383 = vcombine.low %v2374, %v2382
    %v2385 = vunpack.c.l.s4 1934713408
    %v2386 = vunpack.c.0.s8 %v2385
    %v2387 = vlaneseq
    %v2388 = vshrl.u32 %v2387, 7
    %v2389 = vsub.s32 %v2386, %v2388
    %v2390 = vrot.slane %v2383, %v2389
    %v2391 = vcombine.high %v2390, 0
    %v2392 = vcombine.low %v1295, %v1299
    %v2394 = vunpack.c.l.s4 1983009808
    %v2395 = vunpack.c.0.s8 %v2394
    %v2396 = vlaneseq
    %v2397 = vshrl.u32 %v2396, 7
    %v2398 = vsub.s32 %v2395, %v2397
    %v2399 = vrot.slane %v2392, %v2398
    %v2400 = vcombine.low %v1297, %v1301
    %v2402 = vunpack.c.l.s4 1983009808
    %v2403 = vunpack.c.0.s8 %v2402
    %v2404 = vlaneseq
    %v2405 = vshrl.u32 %v2404, 7
    %v2406 = vsub.s32 %v2403, %v2405
    %v2407 = vrot.slane %v2400, %v2406
    %v2408 = vcombine.low %v2399, %v2407
    %v2410 = vunpack.c.l.s4 1934713408
    %v2411 = vunpack.c.0.s8 %v2410
    %v2412 = vlaneseq
    %v2413 = vshrl.u32 %v2412, 7
    %v2414 = vsub.s32 %v2411, %v2413
    %v2415 = vrot.slane %v2408, %v2414
    %v2416 = vcombine.high %v2415, 0
    %v2419 = vpack.i.b16 %v2265, %v2215
    %v2420 = vshrl.u32 %v2215, 16
    %v2421 = vshrl.u32 %v2265, 16
    %v2422 = vpack.i.b16 %v2421, %v2420
    %v2425 = vpack.i.b16 %v2266, %v2216
    %v2426 = vshrl.u32 %v2216, 16
    %v2427 = vshrl.u32 %v2266, 16
    %v2428 = vpack.i.b16 %v2427, %v2426
    %v2431 = vpack.i.b16 %v2365, %v2315
    %v2432 = vshrl.u32 %v2315, 16
    %v2433 = vshrl.u32 %v2365, 16
    %v2434 = vpack.i.b16 %v2433, %v2432
    %v2437 = vpack.i.b16 %v2366, %v2316
    %v2438 = vshrl.u32 %v2316, 16
    %v2439 = vshrl.u32 %v2366, 16
    %v2440 = vpack.i.b16 %v2439, %v2438
    %v2443 = vpack.i.b16 %v2415, %v2390
    %v2444 = vshrl.u32 %v2390, 16
    %v2445 = vshrl.u32 %v2415, 16
    %v2446 = vpack.i.b16 %v2445, %v2444
    %v2449 = vpack.i.b16 %v2416, %v2391
    %v2450 = vshrl.u32 %v2391, 16
    %v2451 = vshrl.u32 %v2416, 16
    %v2452 = vpack.i.b16 %v2451, %v2450
    %2453 = vxpose.xlu0.c.b16.start [1/8] %v1692, 128
    %2454 = vxpose.xlu0.c.b16.cont [2/8] 0, 128
    %2455 = vxpose.xlu0.c.b16.cont [3/8] 0, 128
    %2456 = vxpose.xlu0.c.b16.cont [4/8] 0, 128
    %2457 = vxpose.xlu0.c.b16.cont [5/8] 0, 128
    %2458 = vxpose.xlu0.c.b16.cont [6/8] 0, 128
    %2459 = vxpose.xlu0.c.b16.cont [7/8] 0, 128
    %2460 = vxpose.xlu0.c.b16.end [8/8] 0, 128
    %v2461 = vpop.trf.xlu0
    %v2462 = vpop.trf.xlu0
    %v2463 = vpop.trf.xlu0
    %v2464 = vpop.trf.xlu0
    %v2465 = vpop.trf.xlu0
    %v2466 = vpop.trf.xlu0
    %v2467 = vpop.trf.xlu0
    %v2468 = vpop.trf.xlu0
    %2469 = vxpose.xlu0.c.b16.start [1/8] %v1693, 128
    %2470 = vxpose.xlu0.c.b16.cont [2/8] 0, 128
    %2471 = vxpose.xlu0.c.b16.cont [3/8] 0, 128
    %2472 = vxpose.xlu0.c.b16.cont [4/8] 0, 128
    %2473 = vxpose.xlu0.c.b16.cont [5/8] 0, 128
    %2474 = vxpose.xlu0.c.b16.cont [6/8] 0, 128
    %2475 = vxpose.xlu0.c.b16.cont [7/8] 0, 128
    %2476 = vxpose.xlu0.c.b16.end [8/8] 0, 128
    %v2477 = vpop.trf.xlu0
    %v2478 = vpop.trf.xlu0
    %v2479 = vpop.trf.xlu0
    %v2480 = vpop.trf.xlu0
    %v2481 = vpop.trf.xlu0
    %v2482 = vpop.trf.xlu0
    %v2483 = vpop.trf.xlu0
    %v2484 = vpop.trf.xlu0
    %2485 = vxpose.xlu0.c.b16.start [1/8] %v1694, 128
    %2486 = vxpose.xlu0.c.b16.cont [2/8] 0, 128
    %2487 = vxpose.xlu0.c.b16.cont [3/8] 0, 128
    %2488 = vxpose.xlu0.c.b16.cont [4/8] 0, 128
    %2489 = vxpose.xlu0.c.b16.cont [5/8] 0, 128
    %2490 = vxpose.xlu0.c.b16.cont [6/8] 0, 128
    %2491 = vxpose.xlu0.c.b16.cont [7/8] 0, 128
    %2492 = vxpose.xlu0.c.b16.end [8/8] 0, 128
    %v2493 = vpop.trf.xlu0
    %v2494 = vpop.trf.xlu0
    %v2495 = vpop.trf.xlu0
    %v2496 = vpop.trf.xlu0
    %v2497 = vpop.trf.xlu0
    %v2498 = vpop.trf.xlu0
    %v2499 = vpop.trf.xlu0
    %v2500 = vpop.trf.xlu0
    %2501 = vxpose.xlu0.c.b16.start [1/8] %v1695, 128
    %2502 = vxpose.xlu0.c.b16.cont [2/8] 0, 128
    %2503 = vxpose.xlu0.c.b16.cont [3/8] 0, 128
    %2504 = vxpose.xlu0.c.b16.cont [4/8] 0, 128
    %2505 = vxpose.xlu0.c.b16.cont [5/8] 0, 128
    %2506 = vxpose.xlu0.c.b16.cont [6/8] 0, 128
    %2507 = vxpose.xlu0.c.b16.cont [7/8] 0, 128
    %2508 = vxpose.xlu0.c.b16.end [8/8] 0, 128
    %v2509 = vpop.trf.xlu0
    %v2510 = vpop.trf.xlu0
    %v2511 = vpop.trf.xlu0
    %v2512 = vpop.trf.xlu0
    %v2513 = vpop.trf.xlu0
    %v2514 = vpop.trf.xlu0
    %v2515 = vpop.trf.xlu0
    %v2516 = vpop.trf.xlu0
    %2517 = vxpose.xlu0.c.b16.start [1/8] %v1696, 128
    %2518 = vxpose.xlu0.c.b16.cont [2/8] 0, 128
    %2519 = vxpose.xlu0.c.b16.cont [3/8] 0, 128
    %2520 = vxpose.xlu0.c.b16.cont [4/8] 0, 128
    %2521 = vxpose.xlu0.c.b16.cont [5/8] 0, 128
    %2522 = vxpose.xlu0.c.b16.cont [6/8] 0, 128
    %2523 = vxpose.xlu0.c.b16.cont [7/8] 0, 128
    %2524 = vxpose.xlu0.c.b16.end [8/8] 0, 128
    %v2525 = vpop.trf.xlu0
    %v2526 = vpop.trf.xlu0
    %v2527 = vpop.trf.xlu0
    %v2528 = vpop.trf.xlu0
    %v2529 = vpop.trf.xlu0
    %v2530 = vpop.trf.xlu0
    %v2531 = vpop.trf.xlu0
    %v2532 = vpop.trf.xlu0
    %2533 = vxpose.xlu0.c.b16.start [1/8] %v1697, 128
    %2534 = vxpose.xlu0.c.b16.cont [2/8] 0, 128
    %2535 = vxpose.xlu0.c.b16.cont [3/8] 0, 128
    %2536 = vxpose.xlu0.c.b16.cont [4/8] 0, 128
    %2537 = vxpose.xlu0.c.b16.cont [5/8] 0, 128
    %2538 = vxpose.xlu0.c.b16.cont [6/8] 0, 128
    %2539 = vxpose.xlu0.c.b16.cont [7/8] 0, 128
    %2540 = vxpose.xlu0.c.b16.end [8/8] 0, 128
    %v2541 = vpop.trf.xlu0
    %v2542 = vpop.trf.xlu0
    %v2543 = vpop.trf.xlu0
    %v2544 = vpop.trf.xlu0
    %v2545 = vpop.trf.xlu0
    %v2546 = vpop.trf.xlu0
    %v2547 = vpop.trf.xlu0
    %v2548 = vpop.trf.xlu0
    %2549 = vxpose.xlu0.c.b16.start [1/8] %v1698, 128
    %2550 = vxpose.xlu0.c.b16.cont [2/8] 0, 128
    %2551 = vxpose.xlu0.c.b16.cont [3/8] 0, 128
    %2552 = vxpose.xlu0.c.b16.cont [4/8] 0, 128
    %2553 = vxpose.xlu0.c.b16.cont [5/8] 0, 128
    %2554 = vxpose.xlu0.c.b16.cont [6/8] 0, 128
    %2555 = vxpose.xlu0.c.b16.cont [7/8] 0, 128
    %2556 = vxpose.xlu0.c.b16.end [8/8] 0, 128
    %v2557 = vpop.trf.xlu0
    %v2558 = vpop.trf.xlu0
    %v2559 = vpop.trf.xlu0
    %v2560 = vpop.trf.xlu0
    %v2561 = vpop.trf.xlu0
    %v2562 = vpop.trf.xlu0
    %v2563 = vpop.trf.xlu0
    %v2564 = vpop.trf.xlu0
    %2565 = vxpose.xlu0.c.b16.start [1/8] %v1699, 128
    %2566 = vxpose.xlu0.c.b16.cont [2/8] 0, 128
    %2567 = vxpose.xlu0.c.b16.cont [3/8] 0, 128
    %2568 = vxpose.xlu0.c.b16.cont [4/8] 0, 128
    %2569 = vxpose.xlu0.c.b16.cont [5/8] 0, 128
    %2570 = vxpose.xlu0.c.b16.cont [6/8] 0, 128
    %2571 = vxpose.xlu0.c.b16.cont [7/8] 0, 128
    %2572 = vxpose.xlu0.c.b16.end [8/8] 0, 128
    %v2573 = vpop.trf.xlu0
    %v2574 = vpop.trf.xlu0
    %v2575 = vpop.trf.xlu0
    %v2576 = vpop.trf.xlu0
    %v2577 = vpop.trf.xlu0
    %v2578 = vpop.trf.xlu0
    %v2579 = vpop.trf.xlu0
    %v2580 = vpop.trf.xlu0
    %2581 = vxpose.xlu0.c.b16.start [1/8] %v1700, 128
    %2582 = vxpose.xlu0.c.b16.cont [2/8] 0, 128
    %2583 = vxpose.xlu0.c.b16.cont [3/8] 0, 128
    %2584 = vxpose.xlu0.c.b16.cont [4/8] 0, 128
    %2585 = vxpose.xlu0.c.b16.cont [5/8] 0, 128
    %2586 = vxpose.xlu0.c.b16.cont [6/8] 0, 128
    %2587 = vxpose.xlu0.c.b16.cont [7/8] 0, 128
    %2588 = vxpose.xlu0.c.b16.end [8/8] 0, 128
    %v2589 = vpop.trf.xlu0
    %v2590 = vpop.trf.xlu0
    %v2591 = vpop.trf.xlu0
    %v2592 = vpop.trf.xlu0
    %v2593 = vpop.trf.xlu0
    %v2594 = vpop.trf.xlu0
    %v2595 = vpop.trf.xlu0
    %v2596 = vpop.trf.xlu0
    %2597 = vxpose.xlu0.c.b16.start [1/8] %v1701, 128
    %2598 = vxpose.xlu0.c.b16.cont [2/8] 0, 128
    %2599 = vxpose.xlu0.c.b16.cont [3/8] 0, 128
    %2600 = vxpose.xlu0.c.b16.cont [4/8] 0, 128
    %2601 = vxpose.xlu0.c.b16.cont [5/8] 0, 128
    %2602 = vxpose.xlu0.c.b16.cont [6/8] 0, 128
    %2603 = vxpose.xlu0.c.b16.cont [7/8] 0, 128
    %2604 = vxpose.xlu0.c.b16.end [8/8] 0, 128
    %v2605 = vpop.trf.xlu0
    %v2606 = vpop.trf.xlu0
    %v2607 = vpop.trf.xlu0
    %v2608 = vpop.trf.xlu0
    %v2609 = vpop.trf.xlu0
    %v2610 = vpop.trf.xlu0
    %v2611 = vpop.trf.xlu0
    %v2612 = vpop.trf.xlu0
    %2613 = vxpose.xlu0.c.b16.start [1/8] %v1702, 128
    %2614 = vxpose.xlu0.c.b16.cont [2/8] 0, 128
    %2615 = vxpose.xlu0.c.b16.cont [3/8] 0, 128
    %2616 = vxpose.xlu0.c.b16.cont [4/8] 0, 128
    %2617 = vxpose.xlu0.c.b16.cont [5/8] 0, 128
    %2618 = vxpose.xlu0.c.b16.cont [6/8] 0, 128
    %2619 = vxpose.xlu0.c.b16.cont [7/8] 0, 128
    %2620 = vxpose.xlu0.c.b16.end [8/8] 0, 128
    %v2621 = vpop.trf.xlu0
    %v2622 = vpop.trf.xlu0
    %v2623 = vpop.trf.xlu0
    %v2624 = vpop.trf.xlu0
    %v2625 = vpop.trf.xlu0
    %v2626 = vpop.trf.xlu0
    %v2627 = vpop.trf.xlu0
    %v2628 = vpop.trf.xlu0
    %2629 = vxpose.xlu0.c.b16.start [1/8] %v1703, 128
    %2630 = vxpose.xlu0.c.b16.cont [2/8] 0, 128
    %2631 = vxpose.xlu0.c.b16.cont [3/8] 0, 128
    %2632 = vxpose.xlu0.c.b16.cont [4/8] 0, 128
    %2633 = vxpose.xlu0.c.b16.cont [5/8] 0, 128
    %2634 = vxpose.xlu0.c.b16.cont [6/8] 0, 128
    %2635 = vxpose.xlu0.c.b16.cont [7/8] 0, 128
    %2636 = vxpose.xlu0.c.b16.end [8/8] 0, 128
    %v2637 = vpop.trf.xlu0
    %v2638 = vpop.trf.xlu0
    %v2639 = vpop.trf.xlu0
    %v2640 = vpop.trf.xlu0
    %v2641 = vpop.trf.xlu0
    %v2642 = vpop.trf.xlu0
    %v2643 = vpop.trf.xlu0
    %v2644 = vpop.trf.xlu0
    %2645 = vxpose.xlu0.c.b16.start [1/8] %v1704, 128
    %2646 = vxpose.xlu0.c.b16.cont [2/8] 0, 128
    %2647 = vxpose.xlu0.c.b16.cont [3/8] 0, 128
    %2648 = vxpose.xlu0.c.b16.cont [4/8] 0, 128
    %2649 = vxpose.xlu0.c.b16.cont [5/8] 0, 128
    %2650 = vxpose.xlu0.c.b16.cont [6/8] 0, 128
    %2651 = vxpose.xlu0.c.b16.cont [7/8] 0, 128
    %2652 = vxpose.xlu0.c.b16.end [8/8] 0, 128
    %v2653 = vpop.trf.xlu0
    %v2654 = vpop.trf.xlu0
    %v2655 = vpop.trf.xlu0
    %v2656 = vpop.trf.xlu0
    %v2657 = vpop.trf.xlu0
    %v2658 = vpop.trf.xlu0
    %v2659 = vpop.trf.xlu0
    %v2660 = vpop.trf.xlu0
    %2661 = vxpose.xlu0.c.b16.start [1/8] %v1705, 128
    %2662 = vxpose.xlu0.c.b16.cont [2/8] 0, 128
    %2663 = vxpose.xlu0.c.b16.cont [3/8] 0, 128
    %2664 = vxpose.xlu0.c.b16.cont [4/8] 0, 128
    %2665 = vxpose.xlu0.c.b16.cont [5/8] 0, 128
    %2666 = vxpose.xlu0.c.b16.cont [6/8] 0, 128
    %2667 = vxpose.xlu0.c.b16.cont [7/8] 0, 128
    %2668 = vxpose.xlu0.c.b16.end [8/8] 0, 128
    %v2669 = vpop.trf.xlu0
    %v2670 = vpop.trf.xlu0
    %v2671 = vpop.trf.xlu0
    %v2672 = vpop.trf.xlu0
    %v2673 = vpop.trf.xlu0
    %v2674 = vpop.trf.xlu0
    %v2675 = vpop.trf.xlu0
    %v2676 = vpop.trf.xlu0
    %2677 = vxpose.xlu0.c.b16.start [1/8] %v1706, 128
    %2678 = vxpose.xlu0.c.b16.cont [2/8] 0, 128
    %2679 = vxpose.xlu0.c.b16.cont [3/8] 0, 128
    %2680 = vxpose.xlu0.c.b16.cont [4/8] 0, 128
    %2681 = vxpose.xlu0.c.b16.cont [5/8] 0, 128
    %2682 = vxpose.xlu0.c.b16.cont [6/8] 0, 128
    %2683 = vxpose.xlu0.c.b16.cont [7/8] 0, 128
    %2684 = vxpose.xlu0.c.b16.end [8/8] 0, 128
    %v2685 = vpop.trf.xlu0
    %v2686 = vpop.trf.xlu0
    %v2687 = vpop.trf.xlu0
    %v2688 = vpop.trf.xlu0
    %v2689 = vpop.trf.xlu0
    %v2690 = vpop.trf.xlu0
    %v2691 = vpop.trf.xlu0
    %v2692 = vpop.trf.xlu0
    %2693 = vxpose.xlu0.c.b16.start [1/8] %v1707, 128
    %2694 = vxpose.xlu0.c.b16.cont [2/8] 0, 128
    %2695 = vxpose.xlu0.c.b16.cont [3/8] 0, 128
    %2696 = vxpose.xlu0.c.b16.cont [4/8] 0, 128
    %2697 = vxpose.xlu0.c.b16.cont [5/8] 0, 128
    %2698 = vxpose.xlu0.c.b16.cont [6/8] 0, 128
    %2699 = vxpose.xlu0.c.b16.cont [7/8] 0, 128
    %2700 = vxpose.xlu0.c.b16.end [8/8] 0, 128
    %v2701 = vpop.trf.xlu0
    %v2702 = vpop.trf.xlu0
    %v2703 = vpop.trf.xlu0
    %v2704 = vpop.trf.xlu0
    %v2705 = vpop.trf.xlu0
    %v2706 = vpop.trf.xlu0
    %v2707 = vpop.trf.xlu0
    %v2708 = vpop.trf.xlu0
    %2709 = vxpose.xlu0.c.b16.start [1/8] %v1708, 128
    %2710 = vxpose.xlu0.c.b16.cont [2/8] 0, 128
    %2711 = vxpose.xlu0.c.b16.cont [3/8] 0, 128
    %2712 = vxpose.xlu0.c.b16.cont [4/8] 0, 128
    %2713 = vxpose.xlu0.c.b16.cont [5/8] 0, 128
    %2714 = vxpose.xlu0.c.b16.cont [6/8] 0, 128
    %2715 = vxpose.xlu0.c.b16.cont [7/8] 0, 128
    %2716 = vxpose.xlu0.c.b16.end [8/8] 0, 128
    %v2717 = vpop.trf.xlu0
    %v2718 = vpop.trf.xlu0
    %v2719 = vpop.trf.xlu0
    %v2720 = vpop.trf.xlu0
    %v2721 = vpop.trf.xlu0
    %v2722 = vpop.trf.xlu0
    %v2723 = vpop.trf.xlu0
    %v2724 = vpop.trf.xlu0
    %2725 = vxpose.xlu0.c.b16.start [1/8] %v1709, 128
    %2726 = vxpose.xlu0.c.b16.cont [2/8] 0, 128
    %2727 = vxpose.xlu0.c.b16.cont [3/8] 0, 128
    %2728 = vxpose.xlu0.c.b16.cont [4/8] 0, 128
    %2729 = vxpose.xlu0.c.b16.cont [5/8] 0, 128
    %2730 = vxpose.xlu0.c.b16.cont [6/8] 0, 128
    %2731 = vxpose.xlu0.c.b16.cont [7/8] 0, 128
    %2732 = vxpose.xlu0.c.b16.end [8/8] 0, 128
    %v2733 = vpop.trf.xlu0
    %v2734 = vpop.trf.xlu0
    %v2735 = vpop.trf.xlu0
    %v2736 = vpop.trf.xlu0
    %v2737 = vpop.trf.xlu0
    %v2738 = vpop.trf.xlu0
    %v2739 = vpop.trf.xlu0
    %v2740 = vpop.trf.xlu0
    %2741 = vxpose.xlu0.c.b16.start [1/8] %v1710, 128
    %2742 = vxpose.xlu0.c.b16.cont [2/8] 0, 128
    %2743 = vxpose.xlu0.c.b16.cont [3/8] 0, 128
    %2744 = vxpose.xlu0.c.b16.cont [4/8] 0, 128
    %2745 = vxpose.xlu0.c.b16.cont [5/8] 0, 128
    %2746 = vxpose.xlu0.c.b16.cont [6/8] 0, 128
    %2747 = vxpose.xlu0.c.b16.cont [7/8] 0, 128
    %2748 = vxpose.xlu0.c.b16.end [8/8] 0, 128
    %v2749 = vpop.trf.xlu0
    %v2750 = vpop.trf.xlu0
    %v2751 = vpop.trf.xlu0
    %v2752 = vpop.trf.xlu0
    %v2753 = vpop.trf.xlu0
    %v2754 = vpop.trf.xlu0
    %v2755 = vpop.trf.xlu0
    %v2756 = vpop.trf.xlu0
    %2757 = vxpose.xlu0.c.b16.start [1/8] %v1711, 128
    %2758 = vxpose.xlu0.c.b16.cont [2/8] 0, 128
    %2759 = vxpose.xlu0.c.b16.cont [3/8] 0, 128
    %2760 = vxpose.xlu0.c.b16.cont [4/8] 0, 128
    %2761 = vxpose.xlu0.c.b16.cont [5/8] 0, 128
    %2762 = vxpose.xlu0.c.b16.cont [6/8] 0, 128
    %2763 = vxpose.xlu0.c.b16.cont [7/8] 0, 128
    %2764 = vxpose.xlu0.c.b16.end [8/8] 0, 128
    %v2765 = vpop.trf.xlu0
    %v2766 = vpop.trf.xlu0
    %v2767 = vpop.trf.xlu0
    %v2768 = vpop.trf.xlu0
    %v2769 = vpop.trf.xlu0
    %v2770 = vpop.trf.xlu0
    %v2771 = vpop.trf.xlu0
    %v2772 = vpop.trf.xlu0
    %2773 = vxpose.xlu0.c.b16.start [1/8] %v1712, 128
    %2774 = vxpose.xlu0.c.b16.cont [2/8] 0, 128
    %2775 = vxpose.xlu0.c.b16.cont [3/8] 0, 128
    %2776 = vxpose.xlu0.c.b16.cont [4/8] 0, 128
    %2777 = vxpose.xlu0.c.b16.cont [5/8] 0, 128
    %2778 = vxpose.xlu0.c.b16.cont [6/8] 0, 128
    %2779 = vxpose.xlu0.c.b16.cont [7/8] 0, 128
    %2780 = vxpose.xlu0.c.b16.end [8/8] 0, 128
    %v2781 = vpop.trf.xlu0
    %v2782 = vpop.trf.xlu0
    %v2783 = vpop.trf.xlu0
    %v2784 = vpop.trf.xlu0
    %v2785 = vpop.trf.xlu0
    %v2786 = vpop.trf.xlu0
    %v2787 = vpop.trf.xlu0
    %v2788 = vpop.trf.xlu0
    %2789 = vxpose.xlu0.c.b16.start [1/8] %v1713, 128
    %2790 = vxpose.xlu0.c.b16.cont [2/8] 0, 128
    %2791 = vxpose.xlu0.c.b16.cont [3/8] 0, 128
    %2792 = vxpose.xlu0.c.b16.cont [4/8] 0, 128
    %2793 = vxpose.xlu0.c.b16.cont [5/8] 0, 128
    %2794 = vxpose.xlu0.c.b16.cont [6/8] 0, 128
    %2795 = vxpose.xlu0.c.b16.cont [7/8] 0, 128
    %2796 = vxpose.xlu0.c.b16.end [8/8] 0, 128
    %v2797 = vpop.trf.xlu0
    %v2798 = vpop.trf.xlu0
    %v2799 = vpop.trf.xlu0
    %v2800 = vpop.trf.xlu0
    %v2801 = vpop.trf.xlu0
    %v2802 = vpop.trf.xlu0
    %v2803 = vpop.trf.xlu0
    %v2804 = vpop.trf.xlu0
    %2805 = vxpose.xlu0.c.b16.start [1/8] %v1714, 128
    %2806 = vxpose.xlu0.c.b16.cont [2/8] 0, 128
    %2807 = vxpose.xlu0.c.b16.cont [3/8] 0, 128
    %2808 = vxpose.xlu0.c.b16.cont [4/8] 0, 128
    %2809 = vxpose.xlu0.c.b16.cont [5/8] 0, 128
    %2810 = vxpose.xlu0.c.b16.cont [6/8] 0, 128
    %2811 = vxpose.xlu0.c.b16.cont [7/8] 0, 128
    %2812 = vxpose.xlu0.c.b16.end [8/8] 0, 128
    %v2813 = vpop.trf.xlu0
    %v2814 = vpop.trf.xlu0
    %v2815 = vpop.trf.xlu0
    %v2816 = vpop.trf.xlu0
    %v2817 = vpop.trf.xlu0
    %v2818 = vpop.trf.xlu0
    %v2819 = vpop.trf.xlu0
    %v2820 = vpop.trf.xlu0
    %2821 = vxpose.xlu0.c.b16.start [1/8] %v1715, 128
    %2822 = vxpose.xlu0.c.b16.cont [2/8] 0, 128
    %2823 = vxpose.xlu0.c.b16.cont [3/8] 0, 128
    %2824 = vxpose.xlu0.c.b16.cont [4/8] 0, 128
    %2825 = vxpose.xlu0.c.b16.cont [5/8] 0, 128
    %2826 = vxpose.xlu0.c.b16.cont [6/8] 0, 128
    %2827 = vxpose.xlu0.c.b16.cont [7/8] 0, 128
    %2828 = vxpose.xlu0.c.b16.end [8/8] 0, 128
    %v2829 = vpop.trf.xlu0
    %v2830 = vpop.trf.xlu0
    %v2831 = vpop.trf.xlu0
    %v2832 = vpop.trf.xlu0
    %v2833 = vpop.trf.xlu0
    %v2834 = vpop.trf.xlu0
    %v2835 = vpop.trf.xlu0
    %v2836 = vpop.trf.xlu0
    %2837 = vxpose.xlu0.c.b16.start [1/8] %v1716, 128
    %2838 = vxpose.xlu0.c.b16.cont [2/8] 0, 128
    %2839 = vxpose.xlu0.c.b16.cont [3/8] 0, 128
    %2840 = vxpose.xlu0.c.b16.cont [4/8] 0, 128
    %2841 = vxpose.xlu0.c.b16.cont [5/8] 0, 128
    %2842 = vxpose.xlu0.c.b16.cont [6/8] 0, 128
    %2843 = vxpose.xlu0.c.b16.cont [7/8] 0, 128
    %2844 = vxpose.xlu0.c.b16.end [8/8] 0, 128
    %v2845 = vpop.trf.xlu0
    %v2846 = vpop.trf.xlu0
    %v2847 = vpop.trf.xlu0
    %v2848 = vpop.trf.xlu0
    %v2849 = vpop.trf.xlu0
    %v2850 = vpop.trf.xlu0
    %v2851 = vpop.trf.xlu0
    %v2852 = vpop.trf.xlu0
    %2853 = vxpose.xlu0.c.b16.start [1/8] %v1717, 128
    %2854 = vxpose.xlu0.c.b16.cont [2/8] 0, 128
    %2855 = vxpose.xlu0.c.b16.cont [3/8] 0, 128
    %2856 = vxpose.xlu0.c.b16.cont [4/8] 0, 128
    %2857 = vxpose.xlu0.c.b16.cont [5/8] 0, 128
    %2858 = vxpose.xlu0.c.b16.cont [6/8] 0, 128
    %2859 = vxpose.xlu0.c.b16.cont [7/8] 0, 128
    %2860 = vxpose.xlu0.c.b16.end [8/8] 0, 128
    %v2861 = vpop.trf.xlu0
    %v2862 = vpop.trf.xlu0
    %v2863 = vpop.trf.xlu0
    %v2864 = vpop.trf.xlu0
    %v2865 = vpop.trf.xlu0
    %v2866 = vpop.trf.xlu0
    %v2867 = vpop.trf.xlu0
    %v2868 = vpop.trf.xlu0
    %2869 = vxpose.xlu0.c.b16.start [1/8] %v1718, 128
    %2870 = vxpose.xlu0.c.b16.cont [2/8] 0, 128
    %2871 = vxpose.xlu0.c.b16.cont [3/8] 0, 128
    %2872 = vxpose.xlu0.c.b16.cont [4/8] 0, 128
    %2873 = vxpose.xlu0.c.b16.cont [5/8] 0, 128
    %2874 = vxpose.xlu0.c.b16.cont [6/8] 0, 128
    %2875 = vxpose.xlu0.c.b16.cont [7/8] 0, 128
    %2876 = vxpose.xlu0.c.b16.end [8/8] 0, 128
    %v2877 = vpop.trf.xlu0
    %v2878 = vpop.trf.xlu0
    %v2879 = vpop.trf.xlu0
    %v2880 = vpop.trf.xlu0
    %v2881 = vpop.trf.xlu0
    %v2882 = vpop.trf.xlu0
    %v2883 = vpop.trf.xlu0
    %v2884 = vpop.trf.xlu0
    %2885 = vxpose.xlu0.c.b16.start [1/8] %v1719, 128
    %2886 = vxpose.xlu0.c.b16.cont [2/8] 0, 128
    %2887 = vxpose.xlu0.c.b16.cont [3/8] 0, 128
    %2888 = vxpose.xlu0.c.b16.cont [4/8] 0, 128
    %2889 = vxpose.xlu0.c.b16.cont [5/8] 0, 128
    %2890 = vxpose.xlu0.c.b16.cont [6/8] 0, 128
    %2891 = vxpose.xlu0.c.b16.cont [7/8] 0, 128
    %2892 = vxpose.xlu0.c.b16.end [8/8] 0, 128
    %v2893 = vpop.trf.xlu0
    %v2894 = vpop.trf.xlu0
    %v2895 = vpop.trf.xlu0
    %v2896 = vpop.trf.xlu0
    %v2897 = vpop.trf.xlu0
    %v2898 = vpop.trf.xlu0
    %v2899 = vpop.trf.xlu0
    %v2900 = vpop.trf.xlu0
    %2901 = vxpose.xlu0.c.b16.start [1/8] %v1720, 128
    %2902 = vxpose.xlu0.c.b16.cont [2/8] 0, 128
    %2903 = vxpose.xlu0.c.b16.cont [3/8] 0, 128
    %2904 = vxpose.xlu0.c.b16.cont [4/8] 0, 128
    %2905 = vxpose.xlu0.c.b16.cont [5/8] 0, 128
    %2906 = vxpose.xlu0.c.b16.cont [6/8] 0, 128
    %2907 = vxpose.xlu0.c.b16.cont [7/8] 0, 128
    %2908 = vxpose.xlu0.c.b16.end [8/8] 0, 128
    %v2909 = vpop.trf.xlu0
    %v2910 = vpop.trf.xlu0
    %v2911 = vpop.trf.xlu0
    %v2912 = vpop.trf.xlu0
    %v2913 = vpop.trf.xlu0
    %v2914 = vpop.trf.xlu0
    %v2915 = vpop.trf.xlu0
    %v2916 = vpop.trf.xlu0
    %2917 = vxpose.xlu0.c.b16.start [1/8] %v1721, 128
    %2918 = vxpose.xlu0.c.b16.cont [2/8] 0, 128
    %2919 = vxpose.xlu0.c.b16.cont [3/8] 0, 128
    %2920 = vxpose.xlu0.c.b16.cont [4/8] 0, 128
    %2921 = vxpose.xlu0.c.b16.cont [5/8] 0, 128
    %2922 = vxpose.xlu0.c.b16.cont [6/8] 0, 128
    %2923 = vxpose.xlu0.c.b16.cont [7/8] 0, 128
    %2924 = vxpose.xlu0.c.b16.end [8/8] 0, 128
    %v2925 = vpop.trf.xlu0
    %v2926 = vpop.trf.xlu0
    %v2927 = vpop.trf.xlu0
    %v2928 = vpop.trf.xlu0
    %v2929 = vpop.trf.xlu0
    %v2930 = vpop.trf.xlu0
    %v2931 = vpop.trf.xlu0
    %v2932 = vpop.trf.xlu0
    %2933 = vxpose.xlu0.c.b16.start [1/8] %v1722, 128
    %2934 = vxpose.xlu0.c.b16.cont [2/8] 0, 128
    %2935 = vxpose.xlu0.c.b16.cont [3/8] 0, 128
    %2936 = vxpose.xlu0.c.b16.cont [4/8] 0, 128
    %2937 = vxpose.xlu0.c.b16.cont [5/8] 0, 128
    %2938 = vxpose.xlu0.c.b16.cont [6/8] 0, 128
    %2939 = vxpose.xlu0.c.b16.cont [7/8] 0, 128
    %2940 = vxpose.xlu0.c.b16.end [8/8] 0, 128
    %v2941 = vpop.trf.xlu0
    %v2942 = vpop.trf.xlu0
    %v2943 = vpop.trf.xlu0
    %v2944 = vpop.trf.xlu0
    %v2945 = vpop.trf.xlu0
    %v2946 = vpop.trf.xlu0
    %v2947 = vpop.trf.xlu0
    %v2948 = vpop.trf.xlu0
    %2949 = vxpose.xlu0.c.b16.start [1/8] %v1723, 128
    %2950 = vxpose.xlu0.c.b16.cont [2/8] 0, 128
    %2951 = vxpose.xlu0.c.b16.cont [3/8] 0, 128
    %2952 = vxpose.xlu0.c.b16.cont [4/8] 0, 128
    %2953 = vxpose.xlu0.c.b16.cont [5/8] 0, 128
    %2954 = vxpose.xlu0.c.b16.cont [6/8] 0, 128
    %2955 = vxpose.xlu0.c.b16.cont [7/8] 0, 128
    %2956 = vxpose.xlu0.c.b16.end [8/8] 0, 128
    %v2957 = vpop.trf.xlu0
    %v2958 = vpop.trf.xlu0
    %v2959 = vpop.trf.xlu0
    %v2960 = vpop.trf.xlu0
    %v2961 = vpop.trf.xlu0
    %v2962 = vpop.trf.xlu0
    %v2963 = vpop.trf.xlu0
    %v2964 = vpop.trf.xlu0
    %2965 = vxpose.xlu0.c.b16.start [1/8] %v1724, 128
    %2966 = vxpose.xlu0.c.b16.cont [2/8] 0, 128
    %2967 = vxpose.xlu0.c.b16.cont [3/8] 0, 128
    %2968 = vxpose.xlu0.c.b16.cont [4/8] 0, 128
    %2969 = vxpose.xlu0.c.b16.cont [5/8] 0, 128
    %2970 = vxpose.xlu0.c.b16.cont [6/8] 0, 128
    %2971 = vxpose.xlu0.c.b16.cont [7/8] 0, 128
    %2972 = vxpose.xlu0.c.b16.end [8/8] 0, 128
    %v2973 = vpop.trf.xlu0
    %v2974 = vpop.trf.xlu0
    %v2975 = vpop.trf.xlu0
    %v2976 = vpop.trf.xlu0
    %v2977 = vpop.trf.xlu0
    %v2978 = vpop.trf.xlu0
    %v2979 = vpop.trf.xlu0
    %v2980 = vpop.trf.xlu0
    %2981 = vxpose.xlu0.c.b16.start [1/8] %v1725, 128
    %2982 = vxpose.xlu0.c.b16.cont [2/8] 0, 128
    %2983 = vxpose.xlu0.c.b16.cont [3/8] 0, 128
    %2984 = vxpose.xlu0.c.b16.cont [4/8] 0, 128
    %2985 = vxpose.xlu0.c.b16.cont [5/8] 0, 128
    %2986 = vxpose.xlu0.c.b16.cont [6/8] 0, 128
    %2987 = vxpose.xlu0.c.b16.cont [7/8] 0, 128
    %2988 = vxpose.xlu0.c.b16.end [8/8] 0, 128
    %v2989 = vpop.trf.xlu0
    %v2990 = vpop.trf.xlu0
    %v2991 = vpop.trf.xlu0
    %v2992 = vpop.trf.xlu0
    %v2993 = vpop.trf.xlu0
    %v2994 = vpop.trf.xlu0
    %v2995 = vpop.trf.xlu0
    %v2996 = vpop.trf.xlu0
    %2997 = vxpose.xlu0.c.b16.start [1/8] %v1726, 128
    %2998 = vxpose.xlu0.c.b16.cont [2/8] 0, 128
    %2999 = vxpose.xlu0.c.b16.cont [3/8] 0, 128
    %3000 = vxpose.xlu0.c.b16.cont [4/8] 0, 128
    %3001 = vxpose.xlu0.c.b16.cont [5/8] 0, 128
    %3002 = vxpose.xlu0.c.b16.cont [6/8] 0, 128
    %3003 = vxpose.xlu0.c.b16.cont [7/8] 0, 128
    %3004 = vxpose.xlu0.c.b16.end [8/8] 0, 128
    %v3005 = vpop.trf.xlu0
    %v3006 = vpop.trf.xlu0
    %v3007 = vpop.trf.xlu0
    %v3008 = vpop.trf.xlu0
    %v3009 = vpop.trf.xlu0
    %v3010 = vpop.trf.xlu0
    %v3011 = vpop.trf.xlu0
    %v3012 = vpop.trf.xlu0
    %3013 = vxpose.xlu0.c.b16.start [1/8] %v1727, 128
    %3014 = vxpose.xlu0.c.b16.cont [2/8] 0, 128
    %3015 = vxpose.xlu0.c.b16.cont [3/8] 0, 128
    %3016 = vxpose.xlu0.c.b16.cont [4/8] 0, 128
    %3017 = vxpose.xlu0.c.b16.cont [5/8] 0, 128
    %3018 = vxpose.xlu0.c.b16.cont [6/8] 0, 128
    %3019 = vxpose.xlu0.c.b16.cont [7/8] 0, 128
    %3020 = vxpose.xlu0.c.b16.end [8/8] 0, 128
    %v3021 = vpop.trf.xlu0
    %v3022 = vpop.trf.xlu0
    %v3023 = vpop.trf.xlu0
    %v3024 = vpop.trf.xlu0
    %v3025 = vpop.trf.xlu0
    %v3026 = vpop.trf.xlu0
    %v3027 = vpop.trf.xlu0
    %v3028 = vpop.trf.xlu0
    %3029 = vxpose.xlu0.c.b16.start [1/8] %v1728, 128
    %3030 = vxpose.xlu0.c.b16.cont [2/8] 0, 128
    %3031 = vxpose.xlu0.c.b16.cont [3/8] 0, 128
    %3032 = vxpose.xlu0.c.b16.cont [4/8] 0, 128
    %3033 = vxpose.xlu0.c.b16.cont [5/8] 0, 128
    %3034 = vxpose.xlu0.c.b16.cont [6/8] 0, 128
    %3035 = vxpose.xlu0.c.b16.cont [7/8] 0, 128
    %3036 = vxpose.xlu0.c.b16.end [8/8] 0, 128
    %v3037 = vpop.trf.xlu0
    %v3038 = vpop.trf.xlu0
    %v3039 = vpop.trf.xlu0
    %v3040 = vpop.trf.xlu0
    %v3041 = vpop.trf.xlu0
    %v3042 = vpop.trf.xlu0
    %v3043 = vpop.trf.xlu0
    %v3044 = vpop.trf.xlu0
    %3045 = vxpose.xlu0.c.b16.start [1/8] %v1729, 128
    %3046 = vxpose.xlu0.c.b16.cont [2/8] 0, 128
    %3047 = vxpose.xlu0.c.b16.cont [3/8] 0, 128
    %3048 = vxpose.xlu0.c.b16.cont [4/8] 0, 128
    %3049 = vxpose.xlu0.c.b16.cont [5/8] 0, 128
    %3050 = vxpose.xlu0.c.b16.cont [6/8] 0, 128
    %3051 = vxpose.xlu0.c.b16.cont [7/8] 0, 128
    %3052 = vxpose.xlu0.c.b16.end [8/8] 0, 128
    %v3053 = vpop.trf.xlu0
    %v3054 = vpop.trf.xlu0
    %v3055 = vpop.trf.xlu0
    %v3056 = vpop.trf.xlu0
    %v3057 = vpop.trf.xlu0
    %v3058 = vpop.trf.xlu0
    %v3059 = vpop.trf.xlu0
    %v3060 = vpop.trf.xlu0
    %3061 = vxpose.xlu0.c.b16.start [1/8] %v1730, 128
    %3062 = vxpose.xlu0.c.b16.cont [2/8] 0, 128
    %3063 = vxpose.xlu0.c.b16.cont [3/8] 0, 128
    %3064 = vxpose.xlu0.c.b16.cont [4/8] 0, 128
    %3065 = vxpose.xlu0.c.b16.cont [5/8] 0, 128
    %3066 = vxpose.xlu0.c.b16.cont [6/8] 0, 128
    %3067 = vxpose.xlu0.c.b16.cont [7/8] 0, 128
    %3068 = vxpose.xlu0.c.b16.end [8/8] 0, 128
    %v3069 = vpop.trf.xlu0
    %v3070 = vpop.trf.xlu0
    %v3071 = vpop.trf.xlu0
    %v3072 = vpop.trf.xlu0
    %v3073 = vpop.trf.xlu0
    %v3074 = vpop.trf.xlu0
    %v3075 = vpop.trf.xlu0
    %v3076 = vpop.trf.xlu0
    %3077 = vxpose.xlu0.c.b16.start [1/8] %v1731, 128
    %3078 = vxpose.xlu0.c.b16.cont [2/8] 0, 128
    %3079 = vxpose.xlu0.c.b16.cont [3/8] 0, 128
    %3080 = vxpose.xlu0.c.b16.cont [4/8] 0, 128
    %3081 = vxpose.xlu0.c.b16.cont [5/8] 0, 128
    %3082 = vxpose.xlu0.c.b16.cont [6/8] 0, 128
    %3083 = vxpose.xlu0.c.b16.cont [7/8] 0, 128
    %3084 = vxpose.xlu0.c.b16.end [8/8] 0, 128
    %v3085 = vpop.trf.xlu0
    %v3086 = vpop.trf.xlu0
    %v3087 = vpop.trf.xlu0
    %v3088 = vpop.trf.xlu0
    %v3089 = vpop.trf.xlu0
    %v3090 = vpop.trf.xlu0
    %v3091 = vpop.trf.xlu0
    %v3092 = vpop.trf.xlu0
    %v3095 = vpack.i.b16 %v2477, %v2461
    %v3097 = vshrl.u32 %v2461, 16
    %v3098 = vshrl.u32 %v2477, 16
    %v3099 = vpack.i.b16 %v3098, %v3097
    %v3103 = vpack.i.b16 %v2509, %v2493
    %v3105 = vshrl.u32 %v2493, 16
    %v3106 = vshrl.u32 %v2509, 16
    %v3107 = vpack.i.b16 %v3106, %v3105
    %v3111 = vpack.i.b16 %v2541, %v2525
    %v3113 = vshrl.u32 %v2525, 16
    %v3114 = vshrl.u32 %v2541, 16
    %v3115 = vpack.i.b16 %v3114, %v3113
    %v3119 = vpack.i.b16 %v2573, %v2557
    %v3121 = vshrl.u32 %v2557, 16
    %v3122 = vshrl.u32 %v2573, 16
    %v3123 = vpack.i.b16 %v3122, %v3121
    %v3127 = vpack.i.b16 %v2605, %v2589
    %v3129 = vshrl.u32 %v2589, 16
    %v3130 = vshrl.u32 %v2605, 16
    %v3131 = vpack.i.b16 %v3130, %v3129
    %v3135 = vpack.i.b16 %v2637, %v2621
    %v3137 = vshrl.u32 %v2621, 16
    %v3138 = vshrl.u32 %v2637, 16
    %v3139 = vpack.i.b16 %v3138, %v3137
    %v3143 = vpack.i.b16 %v2669, %v2653
    %v3145 = vshrl.u32 %v2653, 16
    %v3146 = vshrl.u32 %v2669, 16
    %v3147 = vpack.i.b16 %v3146, %v3145
    %v3151 = vpack.i.b16 %v2701, %v2685
    %v3153 = vshrl.u32 %v2685, 16
    %v3154 = vshrl.u32 %v2701, 16
    %v3155 = vpack.i.b16 %v3154, %v3153
    %v3159 = vpack.i.b16 %v2733, %v2717
    %v3161 = vshrl.u32 %v2717, 16
    %v3162 = vshrl.u32 %v2733, 16
    %v3163 = vpack.i.b16 %v3162, %v3161
    %v3167 = vpack.i.b16 %v2765, %v2749
    %v3169 = vshrl.u32 %v2749, 16
    %v3170 = vshrl.u32 %v2765, 16
    %v3171 = vpack.i.b16 %v3170, %v3169
    %v3175 = vpack.i.b16 %v2797, %v2781
    %v3177 = vshrl.u32 %v2781, 16
    %v3178 = vshrl.u32 %v2797, 16
    %v3179 = vpack.i.b16 %v3178, %v3177
    %v3183 = vpack.i.b16 %v2829, %v2813
    %v3185 = vshrl.u32 %v2813, 16
    %v3186 = vshrl.u32 %v2829, 16
    %v3187 = vpack.i.b16 %v3186, %v3185
    %v3191 = vpack.i.b16 %v2861, %v2845
    %v3193 = vshrl.u32 %v2845, 16
    %v3194 = vshrl.u32 %v2861, 16
    %v3195 = vpack.i.b16 %v3194, %v3193
    %v3199 = vpack.i.b16 %v2893, %v2877
    %v3201 = vshrl.u32 %v2877, 16
    %v3202 = vshrl.u32 %v2893, 16
    %v3203 = vpack.i.b16 %v3202, %v3201
    %v3207 = vpack.i.b16 %v2925, %v2909
    %v3209 = vshrl.u32 %v2909, 16
    %v3210 = vshrl.u32 %v2925, 16
    %v3211 = vpack.i.b16 %v3210, %v3209
    %v3215 = vpack.i.b16 %v2957, %v2941
    %v3217 = vshrl.u32 %v2941, 16
    %v3218 = vshrl.u32 %v2957, 16
    %v3219 = vpack.i.b16 %v3218, %v3217
    %v3223 = vpack.i.b16 %v2989, %v2973
    %v3225 = vshrl.u32 %v2973, 16
    %v3226 = vshrl.u32 %v2989, 16
    %v3227 = vpack.i.b16 %v3226, %v3225
    %v3231 = vpack.i.b16 %v3021, %v3005
    %v3233 = vshrl.u32 %v3005, 16
    %v3234 = vshrl.u32 %v3021, 16
    %v3235 = vpack.i.b16 %v3234, %v3233
    %v3239 = vpack.i.b16 %v3053, %v3037
    %v3241 = vshrl.u32 %v3037, 16
    %v3242 = vshrl.u32 %v3053, 16
    %v3243 = vpack.i.b16 %v3242, %v3241
    %v3247 = vpack.i.b16 %v3085, %v3069
    %v3249 = vshrl.u32 %v3069, 16
    %v3250 = vshrl.u32 %v3085, 16
    %v3251 = vpack.i.b16 %v3250, %v3249
    %v3255 = vpack.i.b16 %v2478, %v2462
    %v3257 = vshrl.u32 %v2462, 16
    %v3258 = vshrl.u32 %v2478, 16
    %v3259 = vpack.i.b16 %v3258, %v3257
    %v3263 = vpack.i.b16 %v2510, %v2494
    %v3265 = vshrl.u32 %v2494, 16
    %v3266 = vshrl.u32 %v2510, 16
    %v3267 = vpack.i.b16 %v3266, %v3265
    %v3271 = vpack.i.b16 %v2542, %v2526
    %v3273 = vshrl.u32 %v2526, 16
    %v3274 = vshrl.u32 %v2542, 16
    %v3275 = vpack.i.b16 %v3274, %v3273
    %v3279 = vpack.i.b16 %v2574, %v2558
    %v3281 = vshrl.u32 %v2558, 16
    %v3282 = vshrl.u32 %v2574, 16
    %v3283 = vpack.i.b16 %v3282, %v3281
    %v3287 = vpack.i.b16 %v2606, %v2590
    %v3289 = vshrl.u32 %v2590, 16
    %v3290 = vshrl.u32 %v2606, 16
    %v3291 = vpack.i.b16 %v3290, %v3289
    %v3295 = vpack.i.b16 %v2638, %v2622
    %v3297 = vshrl.u32 %v2622, 16
    %v3298 = vshrl.u32 %v2638, 16
    %v3299 = vpack.i.b16 %v3298, %v3297
    %v3303 = vpack.i.b16 %v2670, %v2654
    %v3305 = vshrl.u32 %v2654, 16
    %v3306 = vshrl.u32 %v2670, 16
    %v3307 = vpack.i.b16 %v3306, %v3305
    %v3311 = vpack.i.b16 %v2702, %v2686
    %v3313 = vshrl.u32 %v2686, 16
    %v3314 = vshrl.u32 %v2702, 16
    %v3315 = vpack.i.b16 %v3314, %v3313
    %v3319 = vpack.i.b16 %v2734, %v2718
    %v3321 = vshrl.u32 %v2718, 16
    %v3322 = vshrl.u32 %v2734, 16
    %v3323 = vpack.i.b16 %v3322, %v3321
    %v3327 = vpack.i.b16 %v2766, %v2750
    %v3329 = vshrl.u32 %v2750, 16
    %v3330 = vshrl.u32 %v2766, 16
    %v3331 = vpack.i.b16 %v3330, %v3329
    %v3335 = vpack.i.b16 %v2798, %v2782
    %v3337 = vshrl.u32 %v2782, 16
    %v3338 = vshrl.u32 %v2798, 16
    %v3339 = vpack.i.b16 %v3338, %v3337
    %v3343 = vpack.i.b16 %v2830, %v2814
    %v3345 = vshrl.u32 %v2814, 16
    %v3346 = vshrl.u32 %v2830, 16
    %v3347 = vpack.i.b16 %v3346, %v3345
    %v3351 = vpack.i.b16 %v2862, %v2846
    %v3353 = vshrl.u32 %v2846, 16
    %v3354 = vshrl.u32 %v2862, 16
    %v3355 = vpack.i.b16 %v3354, %v3353
    %v3359 = vpack.i.b16 %v2894, %v2878
    %v3361 = vshrl.u32 %v2878, 16
    %v3362 = vshrl.u32 %v2894, 16
    %v3363 = vpack.i.b16 %v3362, %v3361
    %v3367 = vpack.i.b16 %v2926, %v2910
    %v3369 = vshrl.u32 %v2910, 16
    %v3370 = vshrl.u32 %v2926, 16
    %v3371 = vpack.i.b16 %v3370, %v3369
    %v3375 = vpack.i.b16 %v2958, %v2942
    %v3377 = vshrl.u32 %v2942, 16
    %v3378 = vshrl.u32 %v2958, 16
    %v3379 = vpack.i.b16 %v3378, %v3377
    %v3383 = vpack.i.b16 %v2990, %v2974
    %v3385 = vshrl.u32 %v2974, 16
    %v3386 = vshrl.u32 %v2990, 16
    %v3387 = vpack.i.b16 %v3386, %v3385
    %v3391 = vpack.i.b16 %v3022, %v3006
    %v3393 = vshrl.u32 %v3006, 16
    %v3394 = vshrl.u32 %v3022, 16
    %v3395 = vpack.i.b16 %v3394, %v3393
    %v3399 = vpack.i.b16 %v3054, %v3038
    %v3401 = vshrl.u32 %v3038, 16
    %v3402 = vshrl.u32 %v3054, 16
    %v3403 = vpack.i.b16 %v3402, %v3401
    %v3407 = vpack.i.b16 %v3086, %v3070
    %v3409 = vshrl.u32 %v3070, 16
    %v3410 = vshrl.u32 %v3086, 16
    %v3411 = vpack.i.b16 %v3410, %v3409
    %v3413 = vcombine.low %v3095, %v3111
    %v3414 = vcombine.high %v3095, %v3111
    %v3416 = vunpack.c.l.s4 1983009808
    %v3417 = vunpack.c.0.s8 %v3416
    %v3418 = vlaneseq
    %v3419 = vshrl.u32 %v3418, 7
    %v3420 = vsub.s32 %v3417, %v3419
    %v3421 = vrot.slane %v3413, %v3420
    %v3423 = vunpack.c.l.s4 1983009808
    %v3424 = vunpack.c.0.s8 %v3423
    %v3425 = vlaneseq
    %v3426 = vshrl.u32 %v3425, 7
    %v3427 = vsub.s32 %v3424, %v3426
    %v3428 = vrot.slane %v3414, %v3427
    %v3429 = vcombine.low %v3103, %v3119
    %v3430 = vcombine.high %v3103, %v3119
    %v3432 = vunpack.c.l.s4 1983009808
    %v3433 = vunpack.c.0.s8 %v3432
    %v3434 = vlaneseq
    %v3435 = vshrl.u32 %v3434, 7
    %v3436 = vsub.s32 %v3433, %v3435
    %v3437 = vrot.slane %v3429, %v3436
    %v3439 = vunpack.c.l.s4 1983009808
    %v3440 = vunpack.c.0.s8 %v3439
    %v3441 = vlaneseq
    %v3442 = vshrl.u32 %v3441, 7
    %v3443 = vsub.s32 %v3440, %v3442
    %v3444 = vrot.slane %v3430, %v3443
    %v3445 = vcombine.low %v3127, %v3143
    %v3446 = vcombine.high %v3127, %v3143
    %v3448 = vunpack.c.l.s4 1983009808
    %v3449 = vunpack.c.0.s8 %v3448
    %v3450 = vlaneseq
    %v3451 = vshrl.u32 %v3450, 7
    %v3452 = vsub.s32 %v3449, %v3451
    %v3453 = vrot.slane %v3445, %v3452
    %v3455 = vunpack.c.l.s4 1983009808
    %v3456 = vunpack.c.0.s8 %v3455
    %v3457 = vlaneseq
    %v3458 = vshrl.u32 %v3457, 7
    %v3459 = vsub.s32 %v3456, %v3458
    %v3460 = vrot.slane %v3446, %v3459
    %v3461 = vcombine.low %v3135, %v3151
    %v3462 = vcombine.high %v3135, %v3151
    %v3464 = vunpack.c.l.s4 1983009808
    %v3465 = vunpack.c.0.s8 %v3464
    %v3466 = vlaneseq
    %v3467 = vshrl.u32 %v3466, 7
    %v3468 = vsub.s32 %v3465, %v3467
    %v3469 = vrot.slane %v3461, %v3468
    %v3471 = vunpack.c.l.s4 1983009808
    %v3472 = vunpack.c.0.s8 %v3471
    %v3473 = vlaneseq
    %v3474 = vshrl.u32 %v3473, 7
    %v3475 = vsub.s32 %v3472, %v3474
    %v3476 = vrot.slane %v3462, %v3475
    %v3477 = vcombine.low %v3421, %v3437
    %v3478 = vcombine.high %v3421, %v3437
    %v3480 = vunpack.c.l.s4 1934713408
    %v3481 = vunpack.c.0.s8 %v3480
    %v3482 = vlaneseq
    %v3483 = vshrl.u32 %v3482, 7
    %v3484 = vsub.s32 %v3481, %v3483
    %v3485 = vrot.slane %v3477, %v3484
    %v3487 = vunpack.c.l.s4 1934713408
    %v3488 = vunpack.c.0.s8 %v3487
    %v3489 = vlaneseq
    %v3490 = vshrl.u32 %v3489, 7
    %v3491 = vsub.s32 %v3488, %v3490
    %v3492 = vrot.slane %v3478, %v3491
    %v3493 = vcombine.low %v3428, %v3444
    %v3494 = vcombine.high %v3428, %v3444
    %v3496 = vunpack.c.l.s4 1934713408
    %v3497 = vunpack.c.0.s8 %v3496
    %v3498 = vlaneseq
    %v3499 = vshrl.u32 %v3498, 7
    %v3500 = vsub.s32 %v3497, %v3499
    %v3501 = vrot.slane %v3493, %v3500
    %v3503 = vunpack.c.l.s4 1934713408
    %v3504 = vunpack.c.0.s8 %v3503
    %v3505 = vlaneseq
    %v3506 = vshrl.u32 %v3505, 7
    %v3507 = vsub.s32 %v3504, %v3506
    %v3508 = vrot.slane %v3494, %v3507
    %v3509 = vcombine.low %v3453, %v3469
    %v3510 = vcombine.high %v3453, %v3469
    %v3512 = vunpack.c.l.s4 1934713408
    %v3513 = vunpack.c.0.s8 %v3512
    %v3514 = vlaneseq
    %v3515 = vshrl.u32 %v3514, 7
    %v3516 = vsub.s32 %v3513, %v3515
    %v3517 = vrot.slane %v3509, %v3516
    %v3519 = vunpack.c.l.s4 1934713408
    %v3520 = vunpack.c.0.s8 %v3519
    %v3521 = vlaneseq
    %v3522 = vshrl.u32 %v3521, 7
    %v3523 = vsub.s32 %v3520, %v3522
    %v3524 = vrot.slane %v3510, %v3523
    %v3525 = vcombine.low %v3460, %v3476
    %v3526 = vcombine.high %v3460, %v3476
    %v3528 = vunpack.c.l.s4 1934713408
    %v3529 = vunpack.c.0.s8 %v3528
    %v3530 = vlaneseq
    %v3531 = vshrl.u32 %v3530, 7
    %v3532 = vsub.s32 %v3529, %v3531
    %v3533 = vrot.slane %v3525, %v3532
    %v3535 = vunpack.c.l.s4 1934713408
    %v3536 = vunpack.c.0.s8 %v3535
    %v3537 = vlaneseq
    %v3538 = vshrl.u32 %v3537, 7
    %v3539 = vsub.s32 %v3536, %v3538
    %v3540 = vrot.slane %v3526, %v3539
    %v3541 = vcombine.low %v3485, %v3517
    %v3542 = vcombine.high %v3485, %v3517
    %v3543 = vcombine.low %v3492, %v3524
    %v3544 = vcombine.high %v3492, %v3524
    %v3545 = vcombine.low %v3501, %v3533
    %v3546 = vcombine.high %v3501, %v3533
    %v3547 = vcombine.low %v3508, %v3540
    %v3548 = vcombine.high %v3508, %v3540
    %v3549 = vcombine.low %v3099, %v3115
    %v3550 = vcombine.high %v3099, %v3115
    %v3552 = vunpack.c.l.s4 1983009808
    %v3553 = vunpack.c.0.s8 %v3552
    %v3554 = vlaneseq
    %v3555 = vshrl.u32 %v3554, 7
    %v3556 = vsub.s32 %v3553, %v3555
    %v3557 = vrot.slane %v3549, %v3556
    %v3559 = vunpack.c.l.s4 1983009808
    %v3560 = vunpack.c.0.s8 %v3559
    %v3561 = vlaneseq
    %v3562 = vshrl.u32 %v3561, 7
    %v3563 = vsub.s32 %v3560, %v3562
    %v3564 = vrot.slane %v3550, %v3563
    %v3565 = vcombine.low %v3107, %v3123
    %v3566 = vcombine.high %v3107, %v3123
    %v3568 = vunpack.c.l.s4 1983009808
    %v3569 = vunpack.c.0.s8 %v3568
    %v3570 = vlaneseq
    %v3571 = vshrl.u32 %v3570, 7
    %v3572 = vsub.s32 %v3569, %v3571
    %v3573 = vrot.slane %v3565, %v3572
    %v3575 = vunpack.c.l.s4 1983009808
    %v3576 = vunpack.c.0.s8 %v3575
    %v3577 = vlaneseq
    %v3578 = vshrl.u32 %v3577, 7
    %v3579 = vsub.s32 %v3576, %v3578
    %v3580 = vrot.slane %v3566, %v3579
    %v3581 = vcombine.low %v3131, %v3147
    %v3582 = vcombine.high %v3131, %v3147
    %v3584 = vunpack.c.l.s4 1983009808
    %v3585 = vunpack.c.0.s8 %v3584
    %v3586 = vlaneseq
    %v3587 = vshrl.u32 %v3586, 7
    %v3588 = vsub.s32 %v3585, %v3587
    %v3589 = vrot.slane %v3581, %v3588
    %v3591 = vunpack.c.l.s4 1983009808
    %v3592 = vunpack.c.0.s8 %v3591
    %v3593 = vlaneseq
    %v3594 = vshrl.u32 %v3593, 7
    %v3595 = vsub.s32 %v3592, %v3594
    %v3596 = vrot.slane %v3582, %v3595
    %v3597 = vcombine.low %v3139, %v3155
    %v3598 = vcombine.high %v3139, %v3155
    %v3600 = vunpack.c.l.s4 1983009808
    %v3601 = vunpack.c.0.s8 %v3600
    %v3602 = vlaneseq
    %v3603 = vshrl.u32 %v3602, 7
    %v3604 = vsub.s32 %v3601, %v3603
    %v3605 = vrot.slane %v3597, %v3604
    %v3607 = vunpack.c.l.s4 1983009808
    %v3608 = vunpack.c.0.s8 %v3607
    %v3609 = vlaneseq
    %v3610 = vshrl.u32 %v3609, 7
    %v3611 = vsub.s32 %v3608, %v3610
    %v3612 = vrot.slane %v3598, %v3611
    %v3613 = vcombine.low %v3557, %v3573
    %v3614 = vcombine.high %v3557, %v3573
    %v3616 = vunpack.c.l.s4 1934713408
    %v3617 = vunpack.c.0.s8 %v3616
    %v3618 = vlaneseq
    %v3619 = vshrl.u32 %v3618, 7
    %v3620 = vsub.s32 %v3617, %v3619
    %v3621 = vrot.slane %v3613, %v3620
    %v3623 = vunpack.c.l.s4 1934713408
    %v3624 = vunpack.c.0.s8 %v3623
    %v3625 = vlaneseq
    %v3626 = vshrl.u32 %v3625, 7
    %v3627 = vsub.s32 %v3624, %v3626
    %v3628 = vrot.slane %v3614, %v3627
    %v3629 = vcombine.low %v3564, %v3580
    %v3630 = vcombine.high %v3564, %v3580
    %v3632 = vunpack.c.l.s4 1934713408
    %v3633 = vunpack.c.0.s8 %v3632
    %v3634 = vlaneseq
    %v3635 = vshrl.u32 %v3634, 7
    %v3636 = vsub.s32 %v3633, %v3635
    %v3637 = vrot.slane %v3629, %v3636
    %v3639 = vunpack.c.l.s4 1934713408
    %v3640 = vunpack.c.0.s8 %v3639
    %v3641 = vlaneseq
    %v3642 = vshrl.u32 %v3641, 7
    %v3643 = vsub.s32 %v3640, %v3642
    %v3644 = vrot.slane %v3630, %v3643
    %v3645 = vcombine.low %v3589, %v3605
    %v3646 = vcombine.high %v3589, %v3605
    %v3648 = vunpack.c.l.s4 1934713408
    %v3649 = vunpack.c.0.s8 %v3648
    %v3650 = vlaneseq
    %v3651 = vshrl.u32 %v3650, 7
    %v3652 = vsub.s32 %v3649, %v3651
    %v3653 = vrot.slane %v3645, %v3652
    %v3655 = vunpack.c.l.s4 1934713408
    %v3656 = vunpack.c.0.s8 %v3655
    %v3657 = vlaneseq
    %v3658 = vshrl.u32 %v3657, 7
    %v3659 = vsub.s32 %v3656, %v3658
    %v3660 = vrot.slane %v3646, %v3659
    %v3661 = vcombine.low %v3596, %v3612
    %v3662 = vcombine.high %v3596, %v3612
    %v3664 = vunpack.c.l.s4 1934713408
    %v3665 = vunpack.c.0.s8 %v3664
    %v3666 = vlaneseq
    %v3667 = vshrl.u32 %v3666, 7
    %v3668 = vsub.s32 %v3665, %v3667
    %v3669 = vrot.slane %v3661, %v3668
    %v3671 = vunpack.c.l.s4 1934713408
    %v3672 = vunpack.c.0.s8 %v3671
    %v3673 = vlaneseq
    %v3674 = vshrl.u32 %v3673, 7
    %v3675 = vsub.s32 %v3672, %v3674
    %v3676 = vrot.slane %v3662, %v3675
    %v3677 = vcombine.low %v3621, %v3653
    %v3678 = vcombine.high %v3621, %v3653
    %v3679 = vcombine.low %v3628, %v3660
    %v3680 = vcombine.high %v3628, %v3660
    %v3681 = vcombine.low %v3637, %v3669
    %v3682 = vcombine.high %v3637, %v3669
    %v3683 = vcombine.low %v3644, %v3676
    %v3684 = vcombine.high %v3644, %v3676
    %v3685 = vcombine.low %v3159, %v3175
    %v3686 = vcombine.high %v3159, %v3175
    %v3688 = vunpack.c.l.s4 1983009808
    %v3689 = vunpack.c.0.s8 %v3688
    %v3690 = vlaneseq
    %v3691 = vshrl.u32 %v3690, 7
    %v3692 = vsub.s32 %v3689, %v3691
    %v3693 = vrot.slane %v3685, %v3692
    %v3695 = vunpack.c.l.s4 1983009808
    %v3696 = vunpack.c.0.s8 %v3695
    %v3697 = vlaneseq
    %v3698 = vshrl.u32 %v3697, 7
    %v3699 = vsub.s32 %v3696, %v3698
    %v3700 = vrot.slane %v3686, %v3699
    %v3701 = vcombine.low %v3167, %v3183
    %v3702 = vcombine.high %v3167, %v3183
    %v3704 = vunpack.c.l.s4 1983009808
    %v3705 = vunpack.c.0.s8 %v3704
    %v3706 = vlaneseq
    %v3707 = vshrl.u32 %v3706, 7
    %v3708 = vsub.s32 %v3705, %v3707
    %v3709 = vrot.slane %v3701, %v3708
    %v3711 = vunpack.c.l.s4 1983009808
    %v3712 = vunpack.c.0.s8 %v3711
    %v3713 = vlaneseq
    %v3714 = vshrl.u32 %v3713, 7
    %v3715 = vsub.s32 %v3712, %v3714
    %v3716 = vrot.slane %v3702, %v3715
    %v3717 = vcombine.low %v3191, %v3207
    %v3718 = vcombine.high %v3191, %v3207
    %v3720 = vunpack.c.l.s4 1983009808
    %v3721 = vunpack.c.0.s8 %v3720
    %v3722 = vlaneseq
    %v3723 = vshrl.u32 %v3722, 7
    %v3724 = vsub.s32 %v3721, %v3723
    %v3725 = vrot.slane %v3717, %v3724
    %v3727 = vunpack.c.l.s4 1983009808
    %v3728 = vunpack.c.0.s8 %v3727
    %v3729 = vlaneseq
    %v3730 = vshrl.u32 %v3729, 7
    %v3731 = vsub.s32 %v3728, %v3730
    %v3732 = vrot.slane %v3718, %v3731
    %v3733 = vcombine.low %v3199, %v3215
    %v3734 = vcombine.high %v3199, %v3215
    %v3736 = vunpack.c.l.s4 1983009808
    %v3737 = vunpack.c.0.s8 %v3736
    %v3738 = vlaneseq
    %v3739 = vshrl.u32 %v3738, 7
    %v3740 = vsub.s32 %v3737, %v3739
    %v3741 = vrot.slane %v3733, %v3740
    %v3743 = vunpack.c.l.s4 1983009808
    %v3744 = vunpack.c.0.s8 %v3743
    %v3745 = vlaneseq
    %v3746 = vshrl.u32 %v3745, 7
    %v3747 = vsub.s32 %v3744, %v3746
    %v3748 = vrot.slane %v3734, %v3747
    %v3749 = vcombine.low %v3693, %v3709
    %v3750 = vcombine.high %v3693, %v3709
    %v3752 = vunpack.c.l.s4 1934713408
    %v3753 = vunpack.c.0.s8 %v3752
    %v3754 = vlaneseq
    %v3755 = vshrl.u32 %v3754, 7
    %v3756 = vsub.s32 %v3753, %v3755
    %v3757 = vrot.slane %v3749, %v3756
    %v3759 = vunpack.c.l.s4 1934713408
    %v3760 = vunpack.c.0.s8 %v3759
    %v3761 = vlaneseq
    %v3762 = vshrl.u32 %v3761, 7
    %v3763 = vsub.s32 %v3760, %v3762
    %v3764 = vrot.slane %v3750, %v3763
    %v3765 = vcombine.low %v3700, %v3716
    %v3766 = vcombine.high %v3700, %v3716
    %v3768 = vunpack.c.l.s4 1934713408
    %v3769 = vunpack.c.0.s8 %v3768
    %v3770 = vlaneseq
    %v3771 = vshrl.u32 %v3770, 7
    %v3772 = vsub.s32 %v3769, %v3771
    %v3773 = vrot.slane %v3765, %v3772
    %v3775 = vunpack.c.l.s4 1934713408
    %v3776 = vunpack.c.0.s8 %v3775
    %v3777 = vlaneseq
    %v3778 = vshrl.u32 %v3777, 7
    %v3779 = vsub.s32 %v3776, %v3778
    %v3780 = vrot.slane %v3766, %v3779
    %v3781 = vcombine.low %v3725, %v3741
    %v3782 = vcombine.high %v3725, %v3741
    %v3784 = vunpack.c.l.s4 1934713408
    %v3785 = vunpack.c.0.s8 %v3784
    %v3786 = vlaneseq
    %v3787 = vshrl.u32 %v3786, 7
    %v3788 = vsub.s32 %v3785, %v3787
    %v3789 = vrot.slane %v3781, %v3788
    %v3791 = vunpack.c.l.s4 1934713408
    %v3792 = vunpack.c.0.s8 %v3791
    %v3793 = vlaneseq
    %v3794 = vshrl.u32 %v3793, 7
    %v3795 = vsub.s32 %v3792, %v3794
    %v3796 = vrot.slane %v3782, %v3795
    %v3797 = vcombine.low %v3732, %v3748
    %v3798 = vcombine.high %v3732, %v3748
    %v3800 = vunpack.c.l.s4 1934713408
    %v3801 = vunpack.c.0.s8 %v3800
    %v3802 = vlaneseq
    %v3803 = vshrl.u32 %v3802, 7
    %v3804 = vsub.s32 %v3801, %v3803
    %v3805 = vrot.slane %v3797, %v3804
    %v3807 = vunpack.c.l.s4 1934713408
    %v3808 = vunpack.c.0.s8 %v3807
    %v3809 = vlaneseq
    %v3810 = vshrl.u32 %v3809, 7
    %v3811 = vsub.s32 %v3808, %v3810
    %v3812 = vrot.slane %v3798, %v3811
    %v3813 = vcombine.low %v3757, %v3789
    %v3814 = vcombine.high %v3757, %v3789
    %v3815 = vcombine.low %v3764, %v3796
    %v3816 = vcombine.high %v3764, %v3796
    %v3817 = vcombine.low %v3773, %v3805
    %v3818 = vcombine.high %v3773, %v3805
    %v3819 = vcombine.low %v3780, %v3812
    %v3820 = vcombine.high %v3780, %v3812
    %v3821 = vcombine.low %v3163, %v3179
    %v3822 = vcombine.high %v3163, %v3179
    %v3824 = vunpack.c.l.s4 1983009808
    %v3825 = vunpack.c.0.s8 %v3824
    %v3826 = vlaneseq
    %v3827 = vshrl.u32 %v3826, 7
    %v3828 = vsub.s32 %v3825, %v3827
    %v3829 = vrot.slane %v3821, %v3828
    %v3831 = vunpack.c.l.s4 1983009808
    %v3832 = vunpack.c.0.s8 %v3831
    %v3833 = vlaneseq
    %v3834 = vshrl.u32 %v3833, 7
    %v3835 = vsub.s32 %v3832, %v3834
    %v3836 = vrot.slane %v3822, %v3835
    %v3837 = vcombine.low %v3171, %v3187
    %v3838 = vcombine.high %v3171, %v3187
    %v3840 = vunpack.c.l.s4 1983009808
    %v3841 = vunpack.c.0.s8 %v3840
    %v3842 = vlaneseq
    %v3843 = vshrl.u32 %v3842, 7
    %v3844 = vsub.s32 %v3841, %v3843
    %v3845 = vrot.slane %v3837, %v3844
    %v3847 = vunpack.c.l.s4 1983009808
    %v3848 = vunpack.c.0.s8 %v3847
    %v3849 = vlaneseq
    %v3850 = vshrl.u32 %v3849, 7
    %v3851 = vsub.s32 %v3848, %v3850
    %v3852 = vrot.slane %v3838, %v3851
    %v3853 = vcombine.low %v3195, %v3211
    %v3854 = vcombine.high %v3195, %v3211
    %v3856 = vunpack.c.l.s4 1983009808
    %v3857 = vunpack.c.0.s8 %v3856
    %v3858 = vlaneseq
    %v3859 = vshrl.u32 %v3858, 7
    %v3860 = vsub.s32 %v3857, %v3859
    %v3861 = vrot.slane %v3853, %v3860
    %v3863 = vunpack.c.l.s4 1983009808
    %v3864 = vunpack.c.0.s8 %v3863
    %v3865 = vlaneseq
    %v3866 = vshrl.u32 %v3865, 7
    %v3867 = vsub.s32 %v3864, %v3866
    %v3868 = vrot.slane %v3854, %v3867
    %v3869 = vcombine.low %v3203, %v3219
    %v3870 = vcombine.high %v3203, %v3219
    %v3872 = vunpack.c.l.s4 1983009808
    %v3873 = vunpack.c.0.s8 %v3872
    %v3874 = vlaneseq
    %v3875 = vshrl.u32 %v3874, 7
    %v3876 = vsub.s32 %v3873, %v3875
    %v3877 = vrot.slane %v3869, %v3876
    %v3879 = vunpack.c.l.s4 1983009808
    %v3880 = vunpack.c.0.s8 %v3879
    %v3881 = vlaneseq
    %v3882 = vshrl.u32 %v3881, 7
    %v3883 = vsub.s32 %v3880, %v3882
    %v3884 = vrot.slane %v3870, %v3883
    %v3885 = vcombine.low %v3829, %v3845
    %v3886 = vcombine.high %v3829, %v3845
    %v3888 = vunpack.c.l.s4 1934713408
    %v3889 = vunpack.c.0.s8 %v3888
    %v3890 = vlaneseq
    %v3891 = vshrl.u32 %v3890, 7
    %v3892 = vsub.s32 %v3889, %v3891
    %v3893 = vrot.slane %v3885, %v3892
    %v3895 = vunpack.c.l.s4 1934713408
    %v3896 = vunpack.c.0.s8 %v3895
    %v3897 = vlaneseq
    %v3898 = vshrl.u32 %v3897, 7
    %v3899 = vsub.s32 %v3896, %v3898
    %v3900 = vrot.slane %v3886, %v3899
    %v3901 = vcombine.low %v3836, %v3852
    %v3902 = vcombine.high %v3836, %v3852
    %v3904 = vunpack.c.l.s4 1934713408
    %v3905 = vunpack.c.0.s8 %v3904
    %v3906 = vlaneseq
    %v3907 = vshrl.u32 %v3906, 7
    %v3908 = vsub.s32 %v3905, %v3907
    %v3909 = vrot.slane %v3901, %v3908
    %v3911 = vunpack.c.l.s4 1934713408
    %v3912 = vunpack.c.0.s8 %v3911
    %v3913 = vlaneseq
    %v3914 = vshrl.u32 %v3913, 7
    %v3915 = vsub.s32 %v3912, %v3914
    %v3916 = vrot.slane %v3902, %v3915
    %v3917 = vcombine.low %v3861, %v3877
    %v3918 = vcombine.high %v3861, %v3877
    %v3920 = vunpack.c.l.s4 1934713408
    %v3921 = vunpack.c.0.s8 %v3920
    %v3922 = vlaneseq
    %v3923 = vshrl.u32 %v3922, 7
    %v3924 = vsub.s32 %v3921, %v3923
    %v3925 = vrot.slane %v3917, %v3924
    %v3927 = vunpack.c.l.s4 1934713408
    %v3928 = vunpack.c.0.s8 %v3927
    %v3929 = vlaneseq
    %v3930 = vshrl.u32 %v3929, 7
    %v3931 = vsub.s32 %v3928, %v3930
    %v3932 = vrot.slane %v3918, %v3931
    %v3933 = vcombine.low %v3868, %v3884
    %v3934 = vcombine.high %v3868, %v3884
    %v3936 = vunpack.c.l.s4 1934713408
    %v3937 = vunpack.c.0.s8 %v3936
    %v3938 = vlaneseq
    %v3939 = vshrl.u32 %v3938, 7
    %v3940 = vsub.s32 %v3937, %v3939
    %v3941 = vrot.slane %v3933, %v3940
    %v3943 = vunpack.c.l.s4 1934713408
    %v3944 = vunpack.c.0.s8 %v3943
    %v3945 = vlaneseq
    %v3946 = vshrl.u32 %v3945, 7
    %v3947 = vsub.s32 %v3944, %v3946
    %v3948 = vrot.slane %v3934, %v3947
    %v3949 = vcombine.low %v3893, %v3925
    %v3950 = vcombine.high %v3893, %v3925
    %v3951 = vcombine.low %v3900, %v3932
    %v3952 = vcombine.high %v3900, %v3932
    %v3953 = vcombine.low %v3909, %v3941
    %v3954 = vcombine.high %v3909, %v3941
    %v3955 = vcombine.low %v3916, %v3948
    %v3956 = vcombine.high %v3916, %v3948
    %v3957 = vcombine.low %v3223, %v3239
    %v3958 = vcombine.high %v3223, %v3239
    %v3960 = vunpack.c.l.s4 1983009808
    %v3961 = vunpack.c.0.s8 %v3960
    %v3962 = vlaneseq
    %v3963 = vshrl.u32 %v3962, 7
    %v3964 = vsub.s32 %v3961, %v3963
    %v3965 = vrot.slane %v3957, %v3964
    %v3967 = vunpack.c.l.s4 1983009808
    %v3968 = vunpack.c.0.s8 %v3967
    %v3969 = vlaneseq
    %v3970 = vshrl.u32 %v3969, 7
    %v3971 = vsub.s32 %v3968, %v3970
    %v3972 = vrot.slane %v3958, %v3971
    %v3973 = vcombine.low %v3231, %v3247
    %v3974 = vcombine.high %v3231, %v3247
    %v3976 = vunpack.c.l.s4 1983009808
    %v3977 = vunpack.c.0.s8 %v3976
    %v3978 = vlaneseq
    %v3979 = vshrl.u32 %v3978, 7
    %v3980 = vsub.s32 %v3977, %v3979
    %v3981 = vrot.slane %v3973, %v3980
    %v3983 = vunpack.c.l.s4 1983009808
    %v3984 = vunpack.c.0.s8 %v3983
    %v3985 = vlaneseq
    %v3986 = vshrl.u32 %v3985, 7
    %v3987 = vsub.s32 %v3984, %v3986
    %v3988 = vrot.slane %v3974, %v3987
    %v3989 = vcombine.low %v3965, %v3981
    %v3990 = vcombine.high %v3965, %v3981
    %v3992 = vunpack.c.l.s4 1934713408
    %v3993 = vunpack.c.0.s8 %v3992
    %v3994 = vlaneseq
    %v3995 = vshrl.u32 %v3994, 7
    %v3996 = vsub.s32 %v3993, %v3995
    %v3997 = vrot.slane %v3989, %v3996
    %v3999 = vunpack.c.l.s4 1934713408
    %v4000 = vunpack.c.0.s8 %v3999
    %v4001 = vlaneseq
    %v4002 = vshrl.u32 %v4001, 7
    %v4003 = vsub.s32 %v4000, %v4002
    %v4004 = vrot.slane %v3990, %v4003
    %v4005 = vcombine.low %v3972, %v3988
    %v4006 = vcombine.high %v3972, %v3988
    %v4008 = vunpack.c.l.s4 1934713408
    %v4009 = vunpack.c.0.s8 %v4008
    %v4010 = vlaneseq
    %v4011 = vshrl.u32 %v4010, 7
    %v4012 = vsub.s32 %v4009, %v4011
    %v4013 = vrot.slane %v4005, %v4012
    %v4015 = vunpack.c.l.s4 1934713408
    %v4016 = vunpack.c.0.s8 %v4015
    %v4017 = vlaneseq
    %v4018 = vshrl.u32 %v4017, 7
    %v4019 = vsub.s32 %v4016, %v4018
    %v4020 = vrot.slane %v4006, %v4019
    %v4021 = vcombine.high %v3997, 0
    %v4022 = vcombine.high %v4004, 0
    %v4023 = vcombine.high %v4013, 0
    %v4024 = vcombine.high %v4020, 0
    %v4025 = vcombine.low %v3227, %v3243
    %v4026 = vcombine.high %v3227, %v3243
    %v4028 = vunpack.c.l.s4 1983009808
    %v4029 = vunpack.c.0.s8 %v4028
    %v4030 = vlaneseq
    %v4031 = vshrl.u32 %v4030, 7
    %v4032 = vsub.s32 %v4029, %v4031
    %v4033 = vrot.slane %v4025, %v4032
    %v4035 = vunpack.c.l.s4 1983009808
    %v4036 = vunpack.c.0.s8 %v4035
    %v4037 = vlaneseq
    %v4038 = vshrl.u32 %v4037, 7
    %v4039 = vsub.s32 %v4036, %v4038
    %v4040 = vrot.slane %v4026, %v4039
    %v4041 = vcombine.low %v3235, %v3251
    %v4042 = vcombine.high %v3235, %v3251
    %v4044 = vunpack.c.l.s4 1983009808
    %v4045 = vunpack.c.0.s8 %v4044
    %v4046 = vlaneseq
    %v4047 = vshrl.u32 %v4046, 7
    %v4048 = vsub.s32 %v4045, %v4047
    %v4049 = vrot.slane %v4041, %v4048
    %v4051 = vunpack.c.l.s4 1983009808
    %v4052 = vunpack.c.0.s8 %v4051
    %v4053 = vlaneseq
    %v4054 = vshrl.u32 %v4053, 7
    %v4055 = vsub.s32 %v4052, %v4054
    %v4056 = vrot.slane %v4042, %v4055
    %v4057 = vcombine.low %v4033, %v4049
    %v4058 = vcombine.high %v4033, %v4049
    %v4060 = vunpack.c.l.s4 1934713408
    %v4061 = vunpack.c.0.s8 %v4060
    %v4062 = vlaneseq
    %v4063 = vshrl.u32 %v4062, 7
    %v4064 = vsub.s32 %v4061, %v4063
    %v4065 = vrot.slane %v4057, %v4064
    %v4067 = vunpack.c.l.s4 1934713408
    %v4068 = vunpack.c.0.s8 %v4067
    %v4069 = vlaneseq
    %v4070 = vshrl.u32 %v4069, 7
    %v4071 = vsub.s32 %v4068, %v4070
    %v4072 = vrot.slane %v4058, %v4071
    %v4073 = vcombine.low %v4040, %v4056
    %v4074 = vcombine.high %v4040, %v4056
    %v4076 = vunpack.c.l.s4 1934713408
    %v4077 = vunpack.c.0.s8 %v4076
    %v4078 = vlaneseq
    %v4079 = vshrl.u32 %v4078, 7
    %v4080 = vsub.s32 %v4077, %v4079
    %v4081 = vrot.slane %v4073, %v4080
    %v4083 = vunpack.c.l.s4 1934713408
    %v4084 = vunpack.c.0.s8 %v4083
    %v4085 = vlaneseq
    %v4086 = vshrl.u32 %v4085, 7
    %v4087 = vsub.s32 %v4084, %v4086
    %v4088 = vrot.slane %v4074, %v4087
    %v4089 = vcombine.high %v4065, 0
    %v4090 = vcombine.high %v4072, 0
    %v4091 = vcombine.high %v4081, 0
    %v4092 = vcombine.high %v4088, 0
    %v4093 = vcombine.low %v3255, %v3271
    %v4094 = vcombine.high %v3255, %v3271
    %v4096 = vunpack.c.l.s4 1983009808
    %v4097 = vunpack.c.0.s8 %v4096
    %v4098 = vlaneseq
    %v4099 = vshrl.u32 %v4098, 7
    %v4100 = vsub.s32 %v4097, %v4099
    %v4101 = vrot.slane %v4093, %v4100
    %v4103 = vunpack.c.l.s4 1983009808
    %v4104 = vunpack.c.0.s8 %v4103
    %v4105 = vlaneseq
    %v4106 = vshrl.u32 %v4105, 7
    %v4107 = vsub.s32 %v4104, %v4106
    %v4108 = vrot.slane %v4094, %v4107
    %v4109 = vcombine.low %v3263, %v3279
    %v4110 = vcombine.high %v3263, %v3279
    %v4112 = vunpack.c.l.s4 1983009808
    %v4113 = vunpack.c.0.s8 %v4112
    %v4114 = vlaneseq
    %v4115 = vshrl.u32 %v4114, 7
    %v4116 = vsub.s32 %v4113, %v4115
    %v4117 = vrot.slane %v4109, %v4116
    %v4119 = vunpack.c.l.s4 1983009808
    %v4120 = vunpack.c.0.s8 %v4119
    %v4121 = vlaneseq
    %v4122 = vshrl.u32 %v4121, 7
    %v4123 = vsub.s32 %v4120, %v4122
    %v4124 = vrot.slane %v4110, %v4123
    %v4125 = vcombine.low %v3287, %v3303
    %v4126 = vcombine.high %v3287, %v3303
    %v4128 = vunpack.c.l.s4 1983009808
    %v4129 = vunpack.c.0.s8 %v4128
    %v4130 = vlaneseq
    %v4131 = vshrl.u32 %v4130, 7
    %v4132 = vsub.s32 %v4129, %v4131
    %v4133 = vrot.slane %v4125, %v4132
    %v4135 = vunpack.c.l.s4 1983009808
    %v4136 = vunpack.c.0.s8 %v4135
    %v4137 = vlaneseq
    %v4138 = vshrl.u32 %v4137, 7
    %v4139 = vsub.s32 %v4136, %v4138
    %v4140 = vrot.slane %v4126, %v4139
    %v4141 = vcombine.low %v3295, %v3311
    %v4142 = vcombine.high %v3295, %v3311
    %v4144 = vunpack.c.l.s4 1983009808
    %v4145 = vunpack.c.0.s8 %v4144
    %v4146 = vlaneseq
    %v4147 = vshrl.u32 %v4146, 7
    %v4148 = vsub.s32 %v4145, %v4147
    %v4149 = vrot.slane %v4141, %v4148
    %v4151 = vunpack.c.l.s4 1983009808
    %v4152 = vunpack.c.0.s8 %v4151
    %v4153 = vlaneseq
    %v4154 = vshrl.u32 %v4153, 7
    %v4155 = vsub.s32 %v4152, %v4154
    %v4156 = vrot.slane %v4142, %v4155
    %v4157 = vcombine.low %v4101, %v4117
    %v4158 = vcombine.high %v4101, %v4117
    %v4160 = vunpack.c.l.s4 1934713408
    %v4161 = vunpack.c.0.s8 %v4160
    %v4162 = vlaneseq
    %v4163 = vshrl.u32 %v4162, 7
    %v4164 = vsub.s32 %v4161, %v4163
    %v4165 = vrot.slane %v4157, %v4164
    %v4167 = vunpack.c.l.s4 1934713408
    %v4168 = vunpack.c.0.s8 %v4167
    %v4169 = vlaneseq
    %v4170 = vshrl.u32 %v4169, 7
    %v4171 = vsub.s32 %v4168, %v4170
    %v4172 = vrot.slane %v4158, %v4171
    %v4173 = vcombine.low %v4108, %v4124
    %v4174 = vcombine.high %v4108, %v4124
    %v4176 = vunpack.c.l.s4 1934713408
    %v4177 = vunpack.c.0.s8 %v4176
    %v4178 = vlaneseq
    %v4179 = vshrl.u32 %v4178, 7
    %v4180 = vsub.s32 %v4177, %v4179
    %v4181 = vrot.slane %v4173, %v4180
    %v4183 = vunpack.c.l.s4 1934713408
    %v4184 = vunpack.c.0.s8 %v4183
    %v4185 = vlaneseq
    %v4186 = vshrl.u32 %v4185, 7
    %v4187 = vsub.s32 %v4184, %v4186
    %v4188 = vrot.slane %v4174, %v4187
    %v4189 = vcombine.low %v4133, %v4149
    %v4190 = vcombine.high %v4133, %v4149
    %v4192 = vunpack.c.l.s4 1934713408
    %v4193 = vunpack.c.0.s8 %v4192
    %v4194 = vlaneseq
    %v4195 = vshrl.u32 %v4194, 7
    %v4196 = vsub.s32 %v4193, %v4195
    %v4197 = vrot.slane %v4189, %v4196
    %v4199 = vunpack.c.l.s4 1934713408
    %v4200 = vunpack.c.0.s8 %v4199
    %v4201 = vlaneseq
    %v4202 = vshrl.u32 %v4201, 7
    %v4203 = vsub.s32 %v4200, %v4202
    %v4204 = vrot.slane %v4190, %v4203
    %v4205 = vcombine.low %v4140, %v4156
    %v4206 = vcombine.high %v4140, %v4156
    %v4208 = vunpack.c.l.s4 1934713408
    %v4209 = vunpack.c.0.s8 %v4208
    %v4210 = vlaneseq
    %v4211 = vshrl.u32 %v4210, 7
    %v4212 = vsub.s32 %v4209, %v4211
    %v4213 = vrot.slane %v4205, %v4212
    %v4215 = vunpack.c.l.s4 1934713408
    %v4216 = vunpack.c.0.s8 %v4215
    %v4217 = vlaneseq
    %v4218 = vshrl.u32 %v4217, 7
    %v4219 = vsub.s32 %v4216, %v4218
    %v4220 = vrot.slane %v4206, %v4219
    %v4221 = vcombine.low %v4165, %v4197
    %v4222 = vcombine.high %v4165, %v4197
    %v4223 = vcombine.low %v4172, %v4204
    %v4224 = vcombine.high %v4172, %v4204
    %v4225 = vcombine.low %v4181, %v4213
    %v4226 = vcombine.high %v4181, %v4213
    %v4227 = vcombine.low %v4188, %v4220
    %v4228 = vcombine.high %v4188, %v4220
    %v4229 = vcombine.low %v3259, %v3275
    %v4230 = vcombine.high %v3259, %v3275
    %v4232 = vunpack.c.l.s4 1983009808
    %v4233 = vunpack.c.0.s8 %v4232
    %v4234 = vlaneseq
    %v4235 = vshrl.u32 %v4234, 7
    %v4236 = vsub.s32 %v4233, %v4235
    %v4237 = vrot.slane %v4229, %v4236
    %v4239 = vunpack.c.l.s4 1983009808
    %v4240 = vunpack.c.0.s8 %v4239
    %v4241 = vlaneseq
    %v4242 = vshrl.u32 %v4241, 7
    %v4243 = vsub.s32 %v4240, %v4242
    %v4244 = vrot.slane %v4230, %v4243
    %v4245 = vcombine.low %v3267, %v3283
    %v4246 = vcombine.high %v3267, %v3283
    %v4248 = vunpack.c.l.s4 1983009808
    %v4249 = vunpack.c.0.s8 %v4248
    %v4250 = vlaneseq
    %v4251 = vshrl.u32 %v4250, 7
    %v4252 = vsub.s32 %v4249, %v4251
    %v4253 = vrot.slane %v4245, %v4252
    %v4255 = vunpack.c.l.s4 1983009808
    %v4256 = vunpack.c.0.s8 %v4255
    %v4257 = vlaneseq
    %v4258 = vshrl.u32 %v4257, 7
    %v4259 = vsub.s32 %v4256, %v4258
    %v4260 = vrot.slane %v4246, %v4259
    %v4261 = vcombine.low %v3291, %v3307
    %v4262 = vcombine.high %v3291, %v3307
    %v4264 = vunpack.c.l.s4 1983009808
    %v4265 = vunpack.c.0.s8 %v4264
    %v4266 = vlaneseq
    %v4267 = vshrl.u32 %v4266, 7
    %v4268 = vsub.s32 %v4265, %v4267
    %v4269 = vrot.slane %v4261, %v4268
    %v4271 = vunpack.c.l.s4 1983009808
    %v4272 = vunpack.c.0.s8 %v4271
    %v4273 = vlaneseq
    %v4274 = vshrl.u32 %v4273, 7
    %v4275 = vsub.s32 %v4272, %v4274
    %v4276 = vrot.slane %v4262, %v4275
    %v4277 = vcombine.low %v3299, %v3315
    %v4278 = vcombine.high %v3299, %v3315
    %v4280 = vunpack.c.l.s4 1983009808
    %v4281 = vunpack.c.0.s8 %v4280
    %v4282 = vlaneseq
    %v4283 = vshrl.u32 %v4282, 7
    %v4284 = vsub.s32 %v4281, %v4283
    %v4285 = vrot.slane %v4277, %v4284
    %v4287 = vunpack.c.l.s4 1983009808
    %v4288 = vunpack.c.0.s8 %v4287
    %v4289 = vlaneseq
    %v4290 = vshrl.u32 %v4289, 7
    %v4291 = vsub.s32 %v4288, %v4290
    %v4292 = vrot.slane %v4278, %v4291
    %v4293 = vcombine.low %v4237, %v4253
    %v4294 = vcombine.high %v4237, %v4253
    %v4296 = vunpack.c.l.s4 1934713408
    %v4297 = vunpack.c.0.s8 %v4296
    %v4298 = vlaneseq
    %v4299 = vshrl.u32 %v4298, 7
    %v4300 = vsub.s32 %v4297, %v4299
    %v4301 = vrot.slane %v4293, %v4300
    %v4303 = vunpack.c.l.s4 1934713408
    %v4304 = vunpack.c.0.s8 %v4303
    %v4305 = vlaneseq
    %v4306 = vshrl.u32 %v4305, 7
    %v4307 = vsub.s32 %v4304, %v4306
    %v4308 = vrot.slane %v4294, %v4307
    %v4309 = vcombine.low %v4244, %v4260
    %v4310 = vcombine.high %v4244, %v4260
    %v4312 = vunpack.c.l.s4 1934713408
    %v4313 = vunpack.c.0.s8 %v4312
    %v4314 = vlaneseq
    %v4315 = vshrl.u32 %v4314, 7
    %v4316 = vsub.s32 %v4313, %v4315
    %v4317 = vrot.slane %v4309, %v4316
    %v4319 = vunpack.c.l.s4 1934713408
    %v4320 = vunpack.c.0.s8 %v4319
    %v4321 = vlaneseq
    %v4322 = vshrl.u32 %v4321, 7
    %v4323 = vsub.s32 %v4320, %v4322
    %v4324 = vrot.slane %v4310, %v4323
    %v4325 = vcombine.low %v4269, %v4285
    %v4326 = vcombine.high %v4269, %v4285
    %v4328 = vunpack.c.l.s4 1934713408
    %v4329 = vunpack.c.0.s8 %v4328
    %v4330 = vlaneseq
    %v4331 = vshrl.u32 %v4330, 7
    %v4332 = vsub.s32 %v4329, %v4331
    %v4333 = vrot.slane %v4325, %v4332
    %v4335 = vunpack.c.l.s4 1934713408
    %v4336 = vunpack.c.0.s8 %v4335
    %v4337 = vlaneseq
    %v4338 = vshrl.u32 %v4337, 7
    %v4339 = vsub.s32 %v4336, %v4338
    %v4340 = vrot.slane %v4326, %v4339
    %v4341 = vcombine.low %v4276, %v4292
    %v4342 = vcombine.high %v4276, %v4292
    %v4344 = vunpack.c.l.s4 1934713408
    %v4345 = vunpack.c.0.s8 %v4344
    %v4346 = vlaneseq
    %v4347 = vshrl.u32 %v4346, 7
    %v4348 = vsub.s32 %v4345, %v4347
    %v4349 = vrot.slane %v4341, %v4348
    %v4351 = vunpack.c.l.s4 1934713408
    %v4352 = vunpack.c.0.s8 %v4351
    %v4353 = vlaneseq
    %v4354 = vshrl.u32 %v4353, 7
    %v4355 = vsub.s32 %v4352, %v4354
    %v4356 = vrot.slane %v4342, %v4355
    %v4357 = vcombine.low %v4301, %v4333
    %v4358 = vcombine.high %v4301, %v4333
    %v4359 = vcombine.low %v4308, %v4340
    %v4360 = vcombine.high %v4308, %v4340
    %v4361 = vcombine.low %v4317, %v4349
    %v4362 = vcombine.high %v4317, %v4349
    %v4363 = vcombine.low %v4324, %v4356
    %v4364 = vcombine.high %v4324, %v4356
    %v4365 = vcombine.low %v3319, %v3335
    %v4366 = vcombine.high %v3319, %v3335
    %v4368 = vunpack.c.l.s4 1983009808
    %v4369 = vunpack.c.0.s8 %v4368
    %v4370 = vlaneseq
    %v4371 = vshrl.u32 %v4370, 7
    %v4372 = vsub.s32 %v4369, %v4371
    %v4373 = vrot.slane %v4365, %v4372
    %v4375 = vunpack.c.l.s4 1983009808
    %v4376 = vunpack.c.0.s8 %v4375
    %v4377 = vlaneseq
    %v4378 = vshrl.u32 %v4377, 7
    %v4379 = vsub.s32 %v4376, %v4378
    %v4380 = vrot.slane %v4366, %v4379
    %v4381 = vcombine.low %v3327, %v3343
    %v4382 = vcombine.high %v3327, %v3343
    %v4384 = vunpack.c.l.s4 1983009808
    %v4385 = vunpack.c.0.s8 %v4384
    %v4386 = vlaneseq
    %v4387 = vshrl.u32 %v4386, 7
    %v4388 = vsub.s32 %v4385, %v4387
    %v4389 = vrot.slane %v4381, %v4388
    %v4391 = vunpack.c.l.s4 1983009808
    %v4392 = vunpack.c.0.s8 %v4391
    %v4393 = vlaneseq
    %v4394 = vshrl.u32 %v4393, 7
    %v4395 = vsub.s32 %v4392, %v4394
    %v4396 = vrot.slane %v4382, %v4395
    %v4397 = vcombine.low %v3351, %v3367
    %v4398 = vcombine.high %v3351, %v3367
    %v4400 = vunpack.c.l.s4 1983009808
    %v4401 = vunpack.c.0.s8 %v4400
    %v4402 = vlaneseq
    %v4403 = vshrl.u32 %v4402, 7
    %v4404 = vsub.s32 %v4401, %v4403
    %v4405 = vrot.slane %v4397, %v4404
    %v4407 = vunpack.c.l.s4 1983009808
    %v4408 = vunpack.c.0.s8 %v4407
    %v4409 = vlaneseq
    %v4410 = vshrl.u32 %v4409, 7
    %v4411 = vsub.s32 %v4408, %v4410
    %v4412 = vrot.slane %v4398, %v4411
    %v4413 = vcombine.low %v3359, %v3375
    %v4414 = vcombine.high %v3359, %v3375
    %v4416 = vunpack.c.l.s4 1983009808
    %v4417 = vunpack.c.0.s8 %v4416
    %v4418 = vlaneseq
    %v4419 = vshrl.u32 %v4418, 7
    %v4420 = vsub.s32 %v4417, %v4419
    %v4421 = vrot.slane %v4413, %v4420
    %v4423 = vunpack.c.l.s4 1983009808
    %v4424 = vunpack.c.0.s8 %v4423
    %v4425 = vlaneseq
    %v4426 = vshrl.u32 %v4425, 7
    %v4427 = vsub.s32 %v4424, %v4426
    %v4428 = vrot.slane %v4414, %v4427
    %v4429 = vcombine.low %v4373, %v4389
    %v4430 = vcombine.high %v4373, %v4389
    %v4432 = vunpack.c.l.s4 1934713408
    %v4433 = vunpack.c.0.s8 %v4432
    %v4434 = vlaneseq
    %v4435 = vshrl.u32 %v4434, 7
    %v4436 = vsub.s32 %v4433, %v4435
    %v4437 = vrot.slane %v4429, %v4436
    %v4439 = vunpack.c.l.s4 1934713408
    %v4440 = vunpack.c.0.s8 %v4439
    %v4441 = vlaneseq
    %v4442 = vshrl.u32 %v4441, 7
    %v4443 = vsub.s32 %v4440, %v4442
    %v4444 = vrot.slane %v4430, %v4443
    %v4445 = vcombine.low %v4380, %v4396
    %v4446 = vcombine.high %v4380, %v4396
    %v4448 = vunpack.c.l.s4 1934713408
    %v4449 = vunpack.c.0.s8 %v4448
    %v4450 = vlaneseq
    %v4451 = vshrl.u32 %v4450, 7
    %v4452 = vsub.s32 %v4449, %v4451
    %v4453 = vrot.slane %v4445, %v4452
    %v4455 = vunpack.c.l.s4 1934713408
    %v4456 = vunpack.c.0.s8 %v4455
    %v4457 = vlaneseq
    %v4458 = vshrl.u32 %v4457, 7
    %v4459 = vsub.s32 %v4456, %v4458
    %v4460 = vrot.slane %v4446, %v4459
    %v4461 = vcombine.low %v4405, %v4421
    %v4462 = vcombine.high %v4405, %v4421
    %v4464 = vunpack.c.l.s4 1934713408
    %v4465 = vunpack.c.0.s8 %v4464
    %v4466 = vlaneseq
    %v4467 = vshrl.u32 %v4466, 7
    %v4468 = vsub.s32 %v4465, %v4467
    %v4469 = vrot.slane %v4461, %v4468
    %v4471 = vunpack.c.l.s4 1934713408
    %v4472 = vunpack.c.0.s8 %v4471
    %v4473 = vlaneseq
    %v4474 = vshrl.u32 %v4473, 7
    %v4475 = vsub.s32 %v4472, %v4474
    %v4476 = vrot.slane %v4462, %v4475
    %v4477 = vcombine.low %v4412, %v4428
    %v4478 = vcombine.high %v4412, %v4428
    %v4480 = vunpack.c.l.s4 1934713408
    %v4481 = vunpack.c.0.s8 %v4480
    %v4482 = vlaneseq
    %v4483 = vshrl.u32 %v4482, 7
    %v4484 = vsub.s32 %v4481, %v4483
    %v4485 = vrot.slane %v4477, %v4484
    %v4487 = vunpack.c.l.s4 1934713408
    %v4488 = vunpack.c.0.s8 %v4487
    %v4489 = vlaneseq
    %v4490 = vshrl.u32 %v4489, 7
    %v4491 = vsub.s32 %v4488, %v4490
    %v4492 = vrot.slane %v4478, %v4491
    %v4493 = vcombine.low %v4437, %v4469
    %v4494 = vcombine.high %v4437, %v4469
    %v4495 = vcombine.low %v4444, %v4476
    %v4496 = vcombine.high %v4444, %v4476
    %v4497 = vcombine.low %v4453, %v4485
    %v4498 = vcombine.high %v4453, %v4485
    %v4499 = vcombine.low %v4460, %v4492
    %v4500 = vcombine.high %v4460, %v4492
    %v4501 = vcombine.low %v3323, %v3339
    %v4502 = vcombine.high %v3323, %v3339
    %v4504 = vunpack.c.l.s4 1983009808
    %v4505 = vunpack.c.0.s8 %v4504
    %v4506 = vlaneseq
    %v4507 = vshrl.u32 %v4506, 7
    %v4508 = vsub.s32 %v4505, %v4507
    %v4509 = vrot.slane %v4501, %v4508
    %v4511 = vunpack.c.l.s4 1983009808
    %v4512 = vunpack.c.0.s8 %v4511
    %v4513 = vlaneseq
    %v4514 = vshrl.u32 %v4513, 7
    %v4515 = vsub.s32 %v4512, %v4514
    %v4516 = vrot.slane %v4502, %v4515
    %v4517 = vcombine.low %v3331, %v3347
    %v4518 = vcombine.high %v3331, %v3347
    %v4520 = vunpack.c.l.s4 1983009808
    %v4521 = vunpack.c.0.s8 %v4520
    %v4522 = vlaneseq
    %v4523 = vshrl.u32 %v4522, 7
    %v4524 = vsub.s32 %v4521, %v4523
    %v4525 = vrot.slane %v4517, %v4524
    %v4527 = vunpack.c.l.s4 1983009808
    %v4528 = vunpack.c.0.s8 %v4527
    %v4529 = vlaneseq
    %v4530 = vshrl.u32 %v4529, 7
    %v4531 = vsub.s32 %v4528, %v4530
    %v4532 = vrot.slane %v4518, %v4531
    %v4533 = vcombine.low %v3355, %v3371
    %v4534 = vcombine.high %v3355, %v3371
    %v4536 = vunpack.c.l.s4 1983009808
    %v4537 = vunpack.c.0.s8 %v4536
    %v4538 = vlaneseq
    %v4539 = vshrl.u32 %v4538, 7
    %v4540 = vsub.s32 %v4537, %v4539
    %v4541 = vrot.slane %v4533, %v4540
    %v4543 = vunpack.c.l.s4 1983009808
    %v4544 = vunpack.c.0.s8 %v4543
    %v4545 = vlaneseq
    %v4546 = vshrl.u32 %v4545, 7
    %v4547 = vsub.s32 %v4544, %v4546
    %v4548 = vrot.slane %v4534, %v4547
    %v4549 = vcombine.low %v3363, %v3379
    %v4550 = vcombine.high %v3363, %v3379
    %v4552 = vunpack.c.l.s4 1983009808
    %v4553 = vunpack.c.0.s8 %v4552
    %v4554 = vlaneseq
    %v4555 = vshrl.u32 %v4554, 7
    %v4556 = vsub.s32 %v4553, %v4555
    %v4557 = vrot.slane %v4549, %v4556
    %v4559 = vunpack.c.l.s4 1983009808
    %v4560 = vunpack.c.0.s8 %v4559
    %v4561 = vlaneseq
    %v4562 = vshrl.u32 %v4561, 7
    %v4563 = vsub.s32 %v4560, %v4562
    %v4564 = vrot.slane %v4550, %v4563
    %v4565 = vcombine.low %v4509, %v4525
    %v4566 = vcombine.high %v4509, %v4525
    %v4568 = vunpack.c.l.s4 1934713408
    %v4569 = vunpack.c.0.s8 %v4568
    %v4570 = vlaneseq
    %v4571 = vshrl.u32 %v4570, 7
    %v4572 = vsub.s32 %v4569, %v4571
    %v4573 = vrot.slane %v4565, %v4572
    %v4575 = vunpack.c.l.s4 1934713408
    %v4576 = vunpack.c.0.s8 %v4575
    %v4577 = vlaneseq
    %v4578 = vshrl.u32 %v4577, 7
    %v4579 = vsub.s32 %v4576, %v4578
    %v4580 = vrot.slane %v4566, %v4579
    %v4581 = vcombine.low %v4516, %v4532
    %v4582 = vcombine.high %v4516, %v4532
    %v4584 = vunpack.c.l.s4 1934713408
    %v4585 = vunpack.c.0.s8 %v4584
    %v4586 = vlaneseq
    %v4587 = vshrl.u32 %v4586, 7
    %v4588 = vsub.s32 %v4585, %v4587
    %v4589 = vrot.slane %v4581, %v4588
    %v4591 = vunpack.c.l.s4 1934713408
    %v4592 = vunpack.c.0.s8 %v4591
    %v4593 = vlaneseq
    %v4594 = vshrl.u32 %v4593, 7
    %v4595 = vsub.s32 %v4592, %v4594
    %v4596 = vrot.slane %v4582, %v4595
    %v4597 = vcombine.low %v4541, %v4557
    %v4598 = vcombine.high %v4541, %v4557
    %v4600 = vunpack.c.l.s4 1934713408
    %v4601 = vunpack.c.0.s8 %v4600
    %v4602 = vlaneseq
    %v4603 = vshrl.u32 %v4602, 7
    %v4604 = vsub.s32 %v4601, %v4603
    %v4605 = vrot.slane %v4597, %v4604
    %v4607 = vunpack.c.l.s4 1934713408
    %v4608 = vunpack.c.0.s8 %v4607
    %v4609 = vlaneseq
    %v4610 = vshrl.u32 %v4609, 7
    %v4611 = vsub.s32 %v4608, %v4610
    %v4612 = vrot.slane %v4598, %v4611
    %v4613 = vcombine.low %v4548, %v4564
    %v4614 = vcombine.high %v4548, %v4564
    %v4616 = vunpack.c.l.s4 1934713408
    %v4617 = vunpack.c.0.s8 %v4616
    %v4618 = vlaneseq
    %v4619 = vshrl.u32 %v4618, 7
    %v4620 = vsub.s32 %v4617, %v4619
    %v4621 = vrot.slane %v4613, %v4620
    %v4623 = vunpack.c.l.s4 1934713408
    %v4624 = vunpack.c.0.s8 %v4623
    %v4625 = vlaneseq
    %v4626 = vshrl.u32 %v4625, 7
    %v4627 = vsub.s32 %v4624, %v4626
    %v4628 = vrot.slane %v4614, %v4627
    %v4629 = vcombine.low %v4573, %v4605
    %v4630 = vcombine.high %v4573, %v4605
    %v4631 = vcombine.low %v4580, %v4612
    %v4632 = vcombine.high %v4580, %v4612
    %v4633 = vcombine.low %v4589, %v4621
    %v4634 = vcombine.high %v4589, %v4621
    %v4635 = vcombine.low %v4596, %v4628
    %v4636 = vcombine.high %v4596, %v4628
    %v4637 = vcombine.low %v3383, %v3399
    %v4638 = vcombine.high %v3383, %v3399
    %v4640 = vunpack.c.l.s4 1983009808
    %v4641 = vunpack.c.0.s8 %v4640
    %v4642 = vlaneseq
    %v4643 = vshrl.u32 %v4642, 7
    %v4644 = vsub.s32 %v4641, %v4643
    %v4645 = vrot.slane %v4637, %v4644
    %v4647 = vunpack.c.l.s4 1983009808
    %v4648 = vunpack.c.0.s8 %v4647
    %v4649 = vlaneseq
    %v4650 = vshrl.u32 %v4649, 7
    %v4651 = vsub.s32 %v4648, %v4650
    %v4652 = vrot.slane %v4638, %v4651
    %v4653 = vcombine.low %v3391, %v3407
    %v4654 = vcombine.high %v3391, %v3407
    %v4656 = vunpack.c.l.s4 1983009808
    %v4657 = vunpack.c.0.s8 %v4656
    %v4658 = vlaneseq
    %v4659 = vshrl.u32 %v4658, 7
    %v4660 = vsub.s32 %v4657, %v4659
    %v4661 = vrot.slane %v4653, %v4660
    %v4663 = vunpack.c.l.s4 1983009808
    %v4664 = vunpack.c.0.s8 %v4663
    %v4665 = vlaneseq
    %v4666 = vshrl.u32 %v4665, 7
    %v4667 = vsub.s32 %v4664, %v4666
    %v4668 = vrot.slane %v4654, %v4667
    %v4669 = vcombine.low %v4645, %v4661
    %v4670 = vcombine.high %v4645, %v4661
    %v4672 = vunpack.c.l.s4 1934713408
    %v4673 = vunpack.c.0.s8 %v4672
    %v4674 = vlaneseq
    %v4675 = vshrl.u32 %v4674, 7
    %v4676 = vsub.s32 %v4673, %v4675
    %v4677 = vrot.slane %v4669, %v4676
    %v4679 = vunpack.c.l.s4 1934713408
    %v4680 = vunpack.c.0.s8 %v4679
    %v4681 = vlaneseq
    %v4682 = vshrl.u32 %v4681, 7
    %v4683 = vsub.s32 %v4680, %v4682
    %v4684 = vrot.slane %v4670, %v4683
    %v4685 = vcombine.low %v4652, %v4668
    %v4686 = vcombine.high %v4652, %v4668
    %v4688 = vunpack.c.l.s4 1934713408
    %v4689 = vunpack.c.0.s8 %v4688
    %v4690 = vlaneseq
    %v4691 = vshrl.u32 %v4690, 7
    %v4692 = vsub.s32 %v4689, %v4691
    %v4693 = vrot.slane %v4685, %v4692
    %v4695 = vunpack.c.l.s4 1934713408
    %v4696 = vunpack.c.0.s8 %v4695
    %v4697 = vlaneseq
    %v4698 = vshrl.u32 %v4697, 7
    %v4699 = vsub.s32 %v4696, %v4698
    %v4700 = vrot.slane %v4686, %v4699
    %v4701 = vcombine.high %v4677, 0
    %v4702 = vcombine.high %v4684, 0
    %v4703 = vcombine.high %v4693, 0
    %v4704 = vcombine.high %v4700, 0
    %v4705 = vcombine.low %v3387, %v3403
    %v4706 = vcombine.high %v3387, %v3403
    %v4708 = vunpack.c.l.s4 1983009808
    %v4709 = vunpack.c.0.s8 %v4708
    %v4710 = vlaneseq
    %v4711 = vshrl.u32 %v4710, 7
    %v4712 = vsub.s32 %v4709, %v4711
    %v4713 = vrot.slane %v4705, %v4712
    %v4715 = vunpack.c.l.s4 1983009808
    %v4716 = vunpack.c.0.s8 %v4715
    %v4717 = vlaneseq
    %v4718 = vshrl.u32 %v4717, 7
    %v4719 = vsub.s32 %v4716, %v4718
    %v4720 = vrot.slane %v4706, %v4719
    %v4721 = vcombine.low %v3395, %v3411
    %v4722 = vcombine.high %v3395, %v3411
    %v4724 = vunpack.c.l.s4 1983009808
    %v4725 = vunpack.c.0.s8 %v4724
    %v4726 = vlaneseq
    %v4727 = vshrl.u32 %v4726, 7
    %v4728 = vsub.s32 %v4725, %v4727
    %v4729 = vrot.slane %v4721, %v4728
    %v4731 = vunpack.c.l.s4 1983009808
    %v4732 = vunpack.c.0.s8 %v4731
    %v4733 = vlaneseq
    %v4734 = vshrl.u32 %v4733, 7
    %v4735 = vsub.s32 %v4732, %v4734
    %v4736 = vrot.slane %v4722, %v4735
    %v4737 = vcombine.low %v4713, %v4729
    %v4738 = vcombine.high %v4713, %v4729
    %v4740 = vunpack.c.l.s4 1934713408
    %v4741 = vunpack.c.0.s8 %v4740
    %v4742 = vlaneseq
    %v4743 = vshrl.u32 %v4742, 7
    %v4744 = vsub.s32 %v4741, %v4743
    %v4745 = vrot.slane %v4737, %v4744
    %v4747 = vunpack.c.l.s4 1934713408
    %v4748 = vunpack.c.0.s8 %v4747
    %v4749 = vlaneseq
    %v4750 = vshrl.u32 %v4749, 7
    %v4751 = vsub.s32 %v4748, %v4750
    %v4752 = vrot.slane %v4738, %v4751
    %v4753 = vcombine.low %v4720, %v4736
    %v4754 = vcombine.high %v4720, %v4736
    %v4756 = vunpack.c.l.s4 1934713408
    %v4757 = vunpack.c.0.s8 %v4756
    %v4758 = vlaneseq
    %v4759 = vshrl.u32 %v4758, 7
    %v4760 = vsub.s32 %v4757, %v4759
    %v4761 = vrot.slane %v4753, %v4760
    %v4763 = vunpack.c.l.s4 1934713408
    %v4764 = vunpack.c.0.s8 %v4763
    %v4765 = vlaneseq
    %v4766 = vshrl.u32 %v4765, 7
    %v4767 = vsub.s32 %v4764, %v4766
    %v4768 = vrot.slane %v4754, %v4767
    %v4769 = vcombine.high %v4745, 0
    %v4770 = vcombine.high %v4752, 0
    %v4771 = vcombine.high %v4761, 0
    %v4772 = vcombine.high %v4768, 0
    %4773 = vxpose.xlu0.c.b16.start [1/8] %v3541, 128
    %4774 = vxpose.xlu0.c.b16.cont [2/8] %v3813, 128
    %4775 = vxpose.xlu0.c.b16.cont [3/8] %v3997, 128
    %4776 = vxpose.xlu0.c.b16.cont [4/8] 0, 128
    %4777 = vxpose.xlu0.c.b16.cont [5/8] 0, 128
    %4778 = vxpose.xlu0.c.b16.cont [6/8] 0, 128
    %4779 = vxpose.xlu0.c.b16.cont [7/8] 0, 128
    %4780 = vxpose.xlu0.c.b16.end [8/8] 0, 128
    %v4781 = vpop.trf.xlu0
    %v4782 = vpop.trf.xlu0
    %v4783 = vpop.trf.xlu0
    %v4784 = vpop.trf.xlu0
    %v4785 = vpop.trf.xlu0
    %v4786 = vpop.trf.xlu0
    %v4787 = vpop.trf.xlu0
    %v4788 = vpop.trf.xlu0
    %4789 = vxpose.xlu0.c.b16.start [1/8] %v3677, 128
    %4790 = vxpose.xlu0.c.b16.cont [2/8] %v3949, 128
    %4791 = vxpose.xlu0.c.b16.cont [3/8] %v4065, 128
    %4792 = vxpose.xlu0.c.b16.cont [4/8] 0, 128
    %4793 = vxpose.xlu0.c.b16.cont [5/8] 0, 128
    %4794 = vxpose.xlu0.c.b16.cont [6/8] 0, 128
    %4795 = vxpose.xlu0.c.b16.cont [7/8] 0, 128
    %4796 = vxpose.xlu0.c.b16.end [8/8] 0, 128
    %v4797 = vpop.trf.xlu0
    %v4798 = vpop.trf.xlu0
    %v4799 = vpop.trf.xlu0
    %v4800 = vpop.trf.xlu0
    %v4801 = vpop.trf.xlu0
    %v4802 = vpop.trf.xlu0
    %v4803 = vpop.trf.xlu0
    %v4804 = vpop.trf.xlu0
    %4805 = vxpose.xlu0.c.b16.start [1/8] %v3542, 128
    %4806 = vxpose.xlu0.c.b16.cont [2/8] %v3814, 128
    %4807 = vxpose.xlu0.c.b16.cont [3/8] %v4021, 128
    %4808 = vxpose.xlu0.c.b16.cont [4/8] 0, 128
    %4809 = vxpose.xlu0.c.b16.cont [5/8] 0, 128
    %4810 = vxpose.xlu0.c.b16.cont [6/8] 0, 128
    %4811 = vxpose.xlu0.c.b16.cont [7/8] 0, 128
    %4812 = vxpose.xlu0.c.b16.end [8/8] 0, 128
    %v4813 = vpop.trf.xlu0
    %v4814 = vpop.trf.xlu0
    %v4815 = vpop.trf.xlu0
    %v4816 = vpop.trf.xlu0
    %v4817 = vpop.trf.xlu0
    %v4818 = vpop.trf.xlu0
    %v4819 = vpop.trf.xlu0
    %v4820 = vpop.trf.xlu0
    %4821 = vxpose.xlu0.c.b16.start [1/8] %v3678, 128
    %4822 = vxpose.xlu0.c.b16.cont [2/8] %v3950, 128
    %4823 = vxpose.xlu0.c.b16.cont [3/8] %v4089, 128
    %4824 = vxpose.xlu0.c.b16.cont [4/8] 0, 128
    %4825 = vxpose.xlu0.c.b16.cont [5/8] 0, 128
    %4826 = vxpose.xlu0.c.b16.cont [6/8] 0, 128
    %4827 = vxpose.xlu0.c.b16.cont [7/8] 0, 128
    %4828 = vxpose.xlu0.c.b16.end [8/8] 0, 128
    %v4829 = vpop.trf.xlu0
    %v4830 = vpop.trf.xlu0
    %v4831 = vpop.trf.xlu0
    %v4832 = vpop.trf.xlu0
    %v4833 = vpop.trf.xlu0
    %v4834 = vpop.trf.xlu0
    %v4835 = vpop.trf.xlu0
    %v4836 = vpop.trf.xlu0
    %4837 = vxpose.xlu0.c.b16.start [1/8] %v3543, 128
    %4838 = vxpose.xlu0.c.b16.cont [2/8] %v3815, 128
    %4839 = vxpose.xlu0.c.b16.cont [3/8] %v4004, 128
    %4840 = vxpose.xlu0.c.b16.cont [4/8] 0, 128
    %4841 = vxpose.xlu0.c.b16.cont [5/8] 0, 128
    %4842 = vxpose.xlu0.c.b16.cont [6/8] 0, 128
    %4843 = vxpose.xlu0.c.b16.cont [7/8] 0, 128
    %4844 = vxpose.xlu0.c.b16.end [8/8] 0, 128
    %v4845 = vpop.trf.xlu0
    %v4846 = vpop.trf.xlu0
    %v4847 = vpop.trf.xlu0
    %v4848 = vpop.trf.xlu0
    %v4849 = vpop.trf.xlu0
    %v4850 = vpop.trf.xlu0
    %v4851 = vpop.trf.xlu0
    %v4852 = vpop.trf.xlu0
    %4853 = vxpose.xlu0.c.b16.start [1/8] %v3679, 128
    %4854 = vxpose.xlu0.c.b16.cont [2/8] %v3951, 128
    %4855 = vxpose.xlu0.c.b16.cont [3/8] %v4072, 128
    %4856 = vxpose.xlu0.c.b16.cont [4/8] 0, 128
    %4857 = vxpose.xlu0.c.b16.cont [5/8] 0, 128
    %4858 = vxpose.xlu0.c.b16.cont [6/8] 0, 128
    %4859 = vxpose.xlu0.c.b16.cont [7/8] 0, 128
    %4860 = vxpose.xlu0.c.b16.end [8/8] 0, 128
    %v4861 = vpop.trf.xlu0
    %v4862 = vpop.trf.xlu0
    %v4863 = vpop.trf.xlu0
    %v4864 = vpop.trf.xlu0
    %v4865 = vpop.trf.xlu0
    %v4866 = vpop.trf.xlu0
    %v4867 = vpop.trf.xlu0
    %v4868 = vpop.trf.xlu0
    %4869 = vxpose.xlu0.c.b16.start [1/8] %v3544, 128
    %4870 = vxpose.xlu0.c.b16.cont [2/8] %v3816, 128
    %4871 = vxpose.xlu0.c.b16.cont [3/8] %v4022, 128
    %4872 = vxpose.xlu0.c.b16.cont [4/8] 0, 128
    %4873 = vxpose.xlu0.c.b16.cont [5/8] 0, 128
    %4874 = vxpose.xlu0.c.b16.cont [6/8] 0, 128
    %4875 = vxpose.xlu0.c.b16.cont [7/8] 0, 128
    %4876 = vxpose.xlu0.c.b16.end [8/8] 0, 128
    %v4877 = vpop.trf.xlu0
    %v4878 = vpop.trf.xlu0
    %v4879 = vpop.trf.xlu0
    %v4880 = vpop.trf.xlu0
    %v4881 = vpop.trf.xlu0
    %v4882 = vpop.trf.xlu0
    %v4883 = vpop.trf.xlu0
    %v4884 = vpop.trf.xlu0
    %4885 = vxpose.xlu0.c.b16.start [1/8] %v3680, 128
    %4886 = vxpose.xlu0.c.b16.cont [2/8] %v3952, 128
    %4887 = vxpose.xlu0.c.b16.cont [3/8] %v4090, 128
    %4888 = vxpose.xlu0.c.b16.cont [4/8] 0, 128
    %4889 = vxpose.xlu0.c.b16.cont [5/8] 0, 128
    %4890 = vxpose.xlu0.c.b16.cont [6/8] 0, 128
    %4891 = vxpose.xlu0.c.b16.cont [7/8] 0, 128
    %4892 = vxpose.xlu0.c.b16.end [8/8] 0, 128
    %v4893 = vpop.trf.xlu0
    %v4894 = vpop.trf.xlu0
    %v4895 = vpop.trf.xlu0
    %v4896 = vpop.trf.xlu0
    %v4897 = vpop.trf.xlu0
    %v4898 = vpop.trf.xlu0
    %v4899 = vpop.trf.xlu0
    %v4900 = vpop.trf.xlu0
    %4901 = vxpose.xlu0.c.b16.start [1/8] %v3545, 128
    %4902 = vxpose.xlu0.c.b16.cont [2/8] %v3817, 128
    %4903 = vxpose.xlu0.c.b16.cont [3/8] %v4013, 128
    %4904 = vxpose.xlu0.c.b16.cont [4/8] 0, 128
    %4905 = vxpose.xlu0.c.b16.cont [5/8] 0, 128
    %4906 = vxpose.xlu0.c.b16.cont [6/8] 0, 128
    %4907 = vxpose.xlu0.c.b16.cont [7/8] 0, 128
    %4908 = vxpose.xlu0.c.b16.end [8/8] 0, 128
    %v4909 = vpop.trf.xlu0
    %v4910 = vpop.trf.xlu0
    %v4911 = vpop.trf.xlu0
    %v4912 = vpop.trf.xlu0
    %v4913 = vpop.trf.xlu0
    %v4914 = vpop.trf.xlu0
    %v4915 = vpop.trf.xlu0
    %v4916 = vpop.trf.xlu0
    %4917 = vxpose.xlu0.c.b16.start [1/8] %v3681, 128
    %4918 = vxpose.xlu0.c.b16.cont [2/8] %v3953, 128
    %4919 = vxpose.xlu0.c.b16.cont [3/8] %v4081, 128
    %4920 = vxpose.xlu0.c.b16.cont [4/8] 0, 128
    %4921 = vxpose.xlu0.c.b16.cont [5/8] 0, 128
    %4922 = vxpose.xlu0.c.b16.cont [6/8] 0, 128
    %4923 = vxpose.xlu0.c.b16.cont [7/8] 0, 128
    %4924 = vxpose.xlu0.c.b16.end [8/8] 0, 128
    %v4925 = vpop.trf.xlu0
    %v4926 = vpop.trf.xlu0
    %v4927 = vpop.trf.xlu0
    %v4928 = vpop.trf.xlu0
    %v4929 = vpop.trf.xlu0
    %v4930 = vpop.trf.xlu0
    %v4931 = vpop.trf.xlu0
    %v4932 = vpop.trf.xlu0
    %4933 = vxpose.xlu0.c.b16.start [1/8] %v3546, 128
    %4934 = vxpose.xlu0.c.b16.cont [2/8] %v3818, 128
    %4935 = vxpose.xlu0.c.b16.cont [3/8] %v4023, 128
    %4936 = vxpose.xlu0.c.b16.cont [4/8] 0, 128
    %4937 = vxpose.xlu0.c.b16.cont [5/8] 0, 128
    %4938 = vxpose.xlu0.c.b16.cont [6/8] 0, 128
    %4939 = vxpose.xlu0.c.b16.cont [7/8] 0, 128
    %4940 = vxpose.xlu0.c.b16.end [8/8] 0, 128
    %v4941 = vpop.trf.xlu0
    %v4942 = vpop.trf.xlu0
    %v4943 = vpop.trf.xlu0
    %v4944 = vpop.trf.xlu0
    %v4945 = vpop.trf.xlu0
    %v4946 = vpop.trf.xlu0
    %v4947 = vpop.trf.xlu0
    %v4948 = vpop.trf.xlu0
    %4949 = vxpose.xlu0.c.b16.start [1/8] %v3682, 128
    %4950 = vxpose.xlu0.c.b16.cont [2/8] %v3954, 128
    %4951 = vxpose.xlu0.c.b16.cont [3/8] %v4091, 128
    %4952 = vxpose.xlu0.c.b16.cont [4/8] 0, 128
    %4953 = vxpose.xlu0.c.b16.cont [5/8] 0, 128
    %4954 = vxpose.xlu0.c.b16.cont [6/8] 0, 128
    %4955 = vxpose.xlu0.c.b16.cont [7/8] 0, 128
    %4956 = vxpose.xlu0.c.b16.end [8/8] 0, 128
    %v4957 = vpop.trf.xlu0
    %v4958 = vpop.trf.xlu0
    %v4959 = vpop.trf.xlu0
    %v4960 = vpop.trf.xlu0
    %v4961 = vpop.trf.xlu0
    %v4962 = vpop.trf.xlu0
    %v4963 = vpop.trf.xlu0
    %v4964 = vpop.trf.xlu0
    %4965 = vxpose.xlu0.c.b16.start [1/8] %v3547, 128
    %4966 = vxpose.xlu0.c.b16.cont [2/8] %v3819, 128
    %4967 = vxpose.xlu0.c.b16.cont [3/8] %v4020, 128
    %4968 = vxpose.xlu0.c.b16.cont [4/8] 0, 128
    %4969 = vxpose.xlu0.c.b16.cont [5/8] 0, 128
    %4970 = vxpose.xlu0.c.b16.cont [6/8] 0, 128
    %4971 = vxpose.xlu0.c.b16.cont [7/8] 0, 128
    %4972 = vxpose.xlu0.c.b16.end [8/8] 0, 128
    %v4973 = vpop.trf.xlu0
    %v4974 = vpop.trf.xlu0
    %v4975 = vpop.trf.xlu0
    %v4976 = vpop.trf.xlu0
    %v4977 = vpop.trf.xlu0
    %v4978 = vpop.trf.xlu0
    %v4979 = vpop.trf.xlu0
    %v4980 = vpop.trf.xlu0
    %4981 = vxpose.xlu0.c.b16.start [1/8] %v3683, 128
    %4982 = vxpose.xlu0.c.b16.cont [2/8] %v3955, 128
    %4983 = vxpose.xlu0.c.b16.cont [3/8] %v4088, 128
    %4984 = vxpose.xlu0.c.b16.cont [4/8] 0, 128
    %4985 = vxpose.xlu0.c.b16.cont [5/8] 0, 128
    %4986 = vxpose.xlu0.c.b16.cont [6/8] 0, 128
    %4987 = vxpose.xlu0.c.b16.cont [7/8] 0, 128
    %4988 = vxpose.xlu0.c.b16.end [8/8] 0, 128
    %v4989 = vpop.trf.xlu0
    %v4990 = vpop.trf.xlu0
    %v4991 = vpop.trf.xlu0
    %v4992 = vpop.trf.xlu0
    %v4993 = vpop.trf.xlu0
    %v4994 = vpop.trf.xlu0
    %v4995 = vpop.trf.xlu0
    %v4996 = vpop.trf.xlu0
    %4997 = vxpose.xlu0.c.b16.start [1/8] %v3548, 128
    %4998 = vxpose.xlu0.c.b16.cont [2/8] %v3820, 128
    %4999 = vxpose.xlu0.c.b16.cont [3/8] %v4024, 128
    %5000 = vxpose.xlu0.c.b16.cont [4/8] 0, 128
    %5001 = vxpose.xlu0.c.b16.cont [5/8] 0, 128
    %5002 = vxpose.xlu0.c.b16.cont [6/8] 0, 128
    %5003 = vxpose.xlu0.c.b16.cont [7/8] 0, 128
    %5004 = vxpose.xlu0.c.b16.end [8/8] 0, 128
    %v5005 = vpop.trf.xlu0
    %v5006 = vpop.trf.xlu0
    %v5007 = vpop.trf.xlu0
    %v5008 = vpop.trf.xlu0
    %v5009 = vpop.trf.xlu0
    %v5010 = vpop.trf.xlu0
    %v5011 = vpop.trf.xlu0
    %v5012 = vpop.trf.xlu0
    %5013 = vxpose.xlu0.c.b16.start [1/8] %v3684, 128
    %5014 = vxpose.xlu0.c.b16.cont [2/8] %v3956, 128
    %5015 = vxpose.xlu0.c.b16.cont [3/8] %v4092, 128
    %5016 = vxpose.xlu0.c.b16.cont [4/8] 0, 128
    %5017 = vxpose.xlu0.c.b16.cont [5/8] 0, 128
    %5018 = vxpose.xlu0.c.b16.cont [6/8] 0, 128
    %5019 = vxpose.xlu0.c.b16.cont [7/8] 0, 128
    %5020 = vxpose.xlu0.c.b16.end [8/8] 0, 128
    %v5021 = vpop.trf.xlu0
    %v5022 = vpop.trf.xlu0
    %v5023 = vpop.trf.xlu0
    %v5024 = vpop.trf.xlu0
    %v5025 = vpop.trf.xlu0
    %v5026 = vpop.trf.xlu0
    %v5027 = vpop.trf.xlu0
    %v5028 = vpop.trf.xlu0
    %5029 = vxpose.xlu0.c.b16.start [1/8] %v4221, 128
    %5030 = vxpose.xlu0.c.b16.cont [2/8] %v4493, 128
    %5031 = vxpose.xlu0.c.b16.cont [3/8] %v4677, 128
    %5032 = vxpose.xlu0.c.b16.cont [4/8] 0, 128
    %5033 = vxpose.xlu0.c.b16.cont [5/8] 0, 128
    %5034 = vxpose.xlu0.c.b16.cont [6/8] 0, 128
    %5035 = vxpose.xlu0.c.b16.cont [7/8] 0, 128
    %5036 = vxpose.xlu0.c.b16.end [8/8] 0, 128
    %v5037 = vpop.trf.xlu0
    %v5038 = vpop.trf.xlu0
    %v5039 = vpop.trf.xlu0
    %v5040 = vpop.trf.xlu0
    %v5041 = vpop.trf.xlu0
    %v5042 = vpop.trf.xlu0
    %v5043 = vpop.trf.xlu0
    %v5044 = vpop.trf.xlu0
    %5045 = vxpose.xlu0.c.b16.start [1/8] %v4357, 128
    %5046 = vxpose.xlu0.c.b16.cont [2/8] %v4629, 128
    %5047 = vxpose.xlu0.c.b16.cont [3/8] %v4745, 128
    %5048 = vxpose.xlu0.c.b16.cont [4/8] 0, 128
    %5049 = vxpose.xlu0.c.b16.cont [5/8] 0, 128
    %5050 = vxpose.xlu0.c.b16.cont [6/8] 0, 128
    %5051 = vxpose.xlu0.c.b16.cont [7/8] 0, 128
    %5052 = vxpose.xlu0.c.b16.end [8/8] 0, 128
    %v5053 = vpop.trf.xlu0
    %v5054 = vpop.trf.xlu0
    %v5055 = vpop.trf.xlu0
    %v5056 = vpop.trf.xlu0
    %v5057 = vpop.trf.xlu0
    %v5058 = vpop.trf.xlu0
    %v5059 = vpop.trf.xlu0
    %v5060 = vpop.trf.xlu0
    %5061 = vxpose.xlu0.c.b16.start [1/8] %v4222, 128
    %5062 = vxpose.xlu0.c.b16.cont [2/8] %v4494, 128
    %5063 = vxpose.xlu0.c.b16.cont [3/8] %v4701, 128
    %5064 = vxpose.xlu0.c.b16.cont [4/8] 0, 128
    %5065 = vxpose.xlu0.c.b16.cont [5/8] 0, 128
    %5066 = vxpose.xlu0.c.b16.cont [6/8] 0, 128
    %5067 = vxpose.xlu0.c.b16.cont [7/8] 0, 128
    %5068 = vxpose.xlu0.c.b16.end [8/8] 0, 128
    %v5069 = vpop.trf.xlu0
    %v5070 = vpop.trf.xlu0
    %v5071 = vpop.trf.xlu0
    %v5072 = vpop.trf.xlu0
    %v5073 = vpop.trf.xlu0
    %v5074 = vpop.trf.xlu0
    %v5075 = vpop.trf.xlu0
    %v5076 = vpop.trf.xlu0
    %5077 = vxpose.xlu0.c.b16.start [1/8] %v4358, 128
    %5078 = vxpose.xlu0.c.b16.cont [2/8] %v4630, 128
    %5079 = vxpose.xlu0.c.b16.cont [3/8] %v4769, 128
    %5080 = vxpose.xlu0.c.b16.cont [4/8] 0, 128
    %5081 = vxpose.xlu0.c.b16.cont [5/8] 0, 128
    %5082 = vxpose.xlu0.c.b16.cont [6/8] 0, 128
    %5083 = vxpose.xlu0.c.b16.cont [7/8] 0, 128
    %5084 = vxpose.xlu0.c.b16.end [8/8] 0, 128
    %v5085 = vpop.trf.xlu0
    %v5086 = vpop.trf.xlu0
    %v5087 = vpop.trf.xlu0
    %v5088 = vpop.trf.xlu0
    %v5089 = vpop.trf.xlu0
    %v5090 = vpop.trf.xlu0
    %v5091 = vpop.trf.xlu0
    %v5092 = vpop.trf.xlu0
    %5093 = vxpose.xlu0.c.b16.start [1/8] %v4223, 128
    %5094 = vxpose.xlu0.c.b16.cont [2/8] %v4495, 128
    %5095 = vxpose.xlu0.c.b16.cont [3/8] %v4684, 128
    %5096 = vxpose.xlu0.c.b16.cont [4/8] 0, 128
    %5097 = vxpose.xlu0.c.b16.cont [5/8] 0, 128
    %5098 = vxpose.xlu0.c.b16.cont [6/8] 0, 128
    %5099 = vxpose.xlu0.c.b16.cont [7/8] 0, 128
    %5100 = vxpose.xlu0.c.b16.end [8/8] 0, 128
    %v5101 = vpop.trf.xlu0
    %v5102 = vpop.trf.xlu0
    %v5103 = vpop.trf.xlu0
    %v5104 = vpop.trf.xlu0
    %v5105 = vpop.trf.xlu0
    %v5106 = vpop.trf.xlu0
    %v5107 = vpop.trf.xlu0
    %v5108 = vpop.trf.xlu0
    %5109 = vxpose.xlu0.c.b16.start [1/8] %v4359, 128
    %5110 = vxpose.xlu0.c.b16.cont [2/8] %v4631, 128
    %5111 = vxpose.xlu0.c.b16.cont [3/8] %v4752, 128
    %5112 = vxpose.xlu0.c.b16.cont [4/8] 0, 128
    %5113 = vxpose.xlu0.c.b16.cont [5/8] 0, 128
    %5114 = vxpose.xlu0.c.b16.cont [6/8] 0, 128
    %5115 = vxpose.xlu0.c.b16.cont [7/8] 0, 128
    %5116 = vxpose.xlu0.c.b16.end [8/8] 0, 128
    %v5117 = vpop.trf.xlu0
    %v5118 = vpop.trf.xlu0
    %v5119 = vpop.trf.xlu0
    %v5120 = vpop.trf.xlu0
    %v5121 = vpop.trf.xlu0
    %v5122 = vpop.trf.xlu0
    %v5123 = vpop.trf.xlu0
    %v5124 = vpop.trf.xlu0
    %5125 = vxpose.xlu0.c.b16.start [1/8] %v4224, 128
    %5126 = vxpose.xlu0.c.b16.cont [2/8] %v4496, 128
    %5127 = vxpose.xlu0.c.b16.cont [3/8] %v4702, 128
    %5128 = vxpose.xlu0.c.b16.cont [4/8] 0, 128
    %5129 = vxpose.xlu0.c.b16.cont [5/8] 0, 128
    %5130 = vxpose.xlu0.c.b16.cont [6/8] 0, 128
    %5131 = vxpose.xlu0.c.b16.cont [7/8] 0, 128
    %5132 = vxpose.xlu0.c.b16.end [8/8] 0, 128
    %v5133 = vpop.trf.xlu0
    %v5134 = vpop.trf.xlu0
    %v5135 = vpop.trf.xlu0
    %v5136 = vpop.trf.xlu0
    %v5137 = vpop.trf.xlu0
    %v5138 = vpop.trf.xlu0
    %v5139 = vpop.trf.xlu0
    %v5140 = vpop.trf.xlu0
    %5141 = vxpose.xlu0.c.b16.start [1/8] %v4360, 128
    %5142 = vxpose.xlu0.c.b16.cont [2/8] %v4632, 128
    %5143 = vxpose.xlu0.c.b16.cont [3/8] %v4770, 128
    %5144 = vxpose.xlu0.c.b16.cont [4/8] 0, 128
    %5145 = vxpose.xlu0.c.b16.cont [5/8] 0, 128
    %5146 = vxpose.xlu0.c.b16.cont [6/8] 0, 128
    %5147 = vxpose.xlu0.c.b16.cont [7/8] 0, 128
    %5148 = vxpose.xlu0.c.b16.end [8/8] 0, 128
    %v5149 = vpop.trf.xlu0
    %v5150 = vpop.trf.xlu0
    %v5151 = vpop.trf.xlu0
    %v5152 = vpop.trf.xlu0
    %v5153 = vpop.trf.xlu0
    %v5154 = vpop.trf.xlu0
    %v5155 = vpop.trf.xlu0
    %v5156 = vpop.trf.xlu0
    %5157 = vxpose.xlu0.c.b16.start [1/8] %v4225, 128
    %5158 = vxpose.xlu0.c.b16.cont [2/8] %v4497, 128
    %5159 = vxpose.xlu0.c.b16.cont [3/8] %v4693, 128
    %5160 = vxpose.xlu0.c.b16.cont [4/8] 0, 128
    %5161 = vxpose.xlu0.c.b16.cont [5/8] 0, 128
    %5162 = vxpose.xlu0.c.b16.cont [6/8] 0, 128
    %5163 = vxpose.xlu0.c.b16.cont [7/8] 0, 128
    %5164 = vxpose.xlu0.c.b16.end [8/8] 0, 128
    %v5165 = vpop.trf.xlu0
    %v5166 = vpop.trf.xlu0
    %v5167 = vpop.trf.xlu0
    %v5168 = vpop.trf.xlu0
    %v5169 = vpop.trf.xlu0
    %v5170 = vpop.trf.xlu0
    %v5171 = vpop.trf.xlu0
    %v5172 = vpop.trf.xlu0
    %5173 = vxpose.xlu0.c.b16.start [1/8] %v4361, 128
    %5174 = vxpose.xlu0.c.b16.cont [2/8] %v4633, 128
    %5175 = vxpose.xlu0.c.b16.cont [3/8] %v4761, 128
    %5176 = vxpose.xlu0.c.b16.cont [4/8] 0, 128
    %5177 = vxpose.xlu0.c.b16.cont [5/8] 0, 128
    %5178 = vxpose.xlu0.c.b16.cont [6/8] 0, 128
    %5179 = vxpose.xlu0.c.b16.cont [7/8] 0, 128
    %5180 = vxpose.xlu0.c.b16.end [8/8] 0, 128
    %v5181 = vpop.trf.xlu0
    %v5182 = vpop.trf.xlu0
    %v5183 = vpop.trf.xlu0
    %v5184 = vpop.trf.xlu0
    %v5185 = vpop.trf.xlu0
    %v5186 = vpop.trf.xlu0
    %v5187 = vpop.trf.xlu0
    %v5188 = vpop.trf.xlu0
    %5189 = vxpose.xlu0.c.b16.start [1/8] %v4226, 128
    %5190 = vxpose.xlu0.c.b16.cont [2/8] %v4498, 128
    %5191 = vxpose.xlu0.c.b16.cont [3/8] %v4703, 128
    %5192 = vxpose.xlu0.c.b16.cont [4/8] 0, 128
    %5193 = vxpose.xlu0.c.b16.cont [5/8] 0, 128
    %5194 = vxpose.xlu0.c.b16.cont [6/8] 0, 128
    %5195 = vxpose.xlu0.c.b16.cont [7/8] 0, 128
    %5196 = vxpose.xlu0.c.b16.end [8/8] 0, 128
    %v5197 = vpop.trf.xlu0
    %v5198 = vpop.trf.xlu0
    %v5199 = vpop.trf.xlu0
    %v5200 = vpop.trf.xlu0
    %v5201 = vpop.trf.xlu0
    %v5202 = vpop.trf.xlu0
    %v5203 = vpop.trf.xlu0
    %v5204 = vpop.trf.xlu0
    %5205 = vxpose.xlu0.c.b16.start [1/8] %v4362, 128
    %5206 = vxpose.xlu0.c.b16.cont [2/8] %v4634, 128
    %5207 = vxpose.xlu0.c.b16.cont [3/8] %v4771, 128
    %5208 = vxpose.xlu0.c.b16.cont [4/8] 0, 128
    %5209 = vxpose.xlu0.c.b16.cont [5/8] 0, 128
    %5210 = vxpose.xlu0.c.b16.cont [6/8] 0, 128
    %5211 = vxpose.xlu0.c.b16.cont [7/8] 0, 128
    %5212 = vxpose.xlu0.c.b16.end [8/8] 0, 128
    %v5213 = vpop.trf.xlu0
    %v5214 = vpop.trf.xlu0
    %v5215 = vpop.trf.xlu0
    %v5216 = vpop.trf.xlu0
    %v5217 = vpop.trf.xlu0
    %v5218 = vpop.trf.xlu0
    %v5219 = vpop.trf.xlu0
    %v5220 = vpop.trf.xlu0
    %5221 = vxpose.xlu0.c.b16.start [1/8] %v4227, 128
    %5222 = vxpose.xlu0.c.b16.cont [2/8] %v4499, 128
    %5223 = vxpose.xlu0.c.b16.cont [3/8] %v4700, 128
    %5224 = vxpose.xlu0.c.b16.cont [4/8] 0, 128
    %5225 = vxpose.xlu0.c.b16.cont [5/8] 0, 128
    %5226 = vxpose.xlu0.c.b16.cont [6/8] 0, 128
    %5227 = vxpose.xlu0.c.b16.cont [7/8] 0, 128
    %5228 = vxpose.xlu0.c.b16.end [8/8] 0, 128
    %v5229 = vpop.trf.xlu0
    %v5230 = vpop.trf.xlu0
    %v5231 = vpop.trf.xlu0
    %v5232 = vpop.trf.xlu0
    %v5233 = vpop.trf.xlu0
    %v5234 = vpop.trf.xlu0
    %v5235 = vpop.trf.xlu0
    %v5236 = vpop.trf.xlu0
    %5237 = vxpose.xlu0.c.b16.start [1/8] %v4363, 128
    %5238 = vxpose.xlu0.c.b16.cont [2/8] %v4635, 128
    %5239 = vxpose.xlu0.c.b16.cont [3/8] %v4768, 128
    %5240 = vxpose.xlu0.c.b16.cont [4/8] 0, 128
    %5241 = vxpose.xlu0.c.b16.cont [5/8] 0, 128
    %5242 = vxpose.xlu0.c.b16.cont [6/8] 0, 128
    %5243 = vxpose.xlu0.c.b16.cont [7/8] 0, 128
    %5244 = vxpose.xlu0.c.b16.end [8/8] 0, 128
    %v5245 = vpop.trf.xlu0
    %v5246 = vpop.trf.xlu0
    %v5247 = vpop.trf.xlu0
    %v5248 = vpop.trf.xlu0
    %v5249 = vpop.trf.xlu0
    %v5250 = vpop.trf.xlu0
    %v5251 = vpop.trf.xlu0
    %v5252 = vpop.trf.xlu0
    %5253 = vxpose.xlu0.c.b16.start [1/8] %v4228, 128
    %5254 = vxpose.xlu0.c.b16.cont [2/8] %v4500, 128
    %5255 = vxpose.xlu0.c.b16.cont [3/8] %v4704, 128
    %5256 = vxpose.xlu0.c.b16.cont [4/8] 0, 128
    %5257 = vxpose.xlu0.c.b16.cont [5/8] 0, 128
    %5258 = vxpose.xlu0.c.b16.cont [6/8] 0, 128
    %5259 = vxpose.xlu0.c.b16.cont [7/8] 0, 128
    %5260 = vxpose.xlu0.c.b16.end [8/8] 0, 128
    %v5261 = vpop.trf.xlu0
    %v5262 = vpop.trf.xlu0
    %v5263 = vpop.trf.xlu0
    %v5264 = vpop.trf.xlu0
    %v5265 = vpop.trf.xlu0
    %v5266 = vpop.trf.xlu0
    %v5267 = vpop.trf.xlu0
    %v5268 = vpop.trf.xlu0
    %5269 = vxpose.xlu0.c.b16.start [1/8] %v4364, 128
    %5270 = vxpose.xlu0.c.b16.cont [2/8] %v4636, 128
    %5271 = vxpose.xlu0.c.b16.cont [3/8] %v4772, 128
    %5272 = vxpose.xlu0.c.b16.cont [4/8] 0, 128
    %5273 = vxpose.xlu0.c.b16.cont [5/8] 0, 128
    %5274 = vxpose.xlu0.c.b16.cont [6/8] 0, 128
    %5275 = vxpose.xlu0.c.b16.cont [7/8] 0, 128
    %5276 = vxpose.xlu0.c.b16.end [8/8] 0, 128
    %v5277 = vpop.trf.xlu0
    %v5278 = vpop.trf.xlu0
    %v5279 = vpop.trf.xlu0
    %v5280 = vpop.trf.xlu0
    %v5281 = vpop.trf.xlu0
    %v5282 = vpop.trf.xlu0
    %v5283 = vpop.trf.xlu0
    %v5284 = vpop.trf.xlu0
    %v5285 = vcombine.low %v4781, %v4845
    %v5287 = vunpack.c.l.s4 1983009808
    %v5288 = vunpack.c.0.s8 %v5287
    %v5289 = vlaneseq
    %v5290 = vshrl.u32 %v5289, 7
    %v5291 = vsub.s32 %v5288, %v5290
    %v5292 = vrot.slane %v5285, %v5291
    %v5293 = vcombine.low %v4813, %v4877
    %v5295 = vunpack.c.l.s4 1983009808
    %v5296 = vunpack.c.0.s8 %v5295
    %v5297 = vlaneseq
    %v5298 = vshrl.u32 %v5297, 7
    %v5299 = vsub.s32 %v5296, %v5298
    %v5300 = vrot.slane %v5293, %v5299
    %v5301 = vcombine.low %v4909, %v4973
    %v5303 = vunpack.c.l.s4 1983009808
    %v5304 = vunpack.c.0.s8 %v5303
    %v5305 = vlaneseq
    %v5306 = vshrl.u32 %v5305, 7
    %v5307 = vsub.s32 %v5304, %v5306
    %v5308 = vrot.slane %v5301, %v5307
    %v5309 = vcombine.low %v4941, %v5005
    %v5311 = vunpack.c.l.s4 1983009808
    %v5312 = vunpack.c.0.s8 %v5311
    %v5313 = vlaneseq
    %v5314 = vshrl.u32 %v5313, 7
    %v5315 = vsub.s32 %v5312, %v5314
    %v5316 = vrot.slane %v5309, %v5315
    %v5317 = vcombine.low %v5292, %v5300
    %v5319 = vunpack.c.l.s4 1934713408
    %v5320 = vunpack.c.0.s8 %v5319
    %v5321 = vlaneseq
    %v5322 = vshrl.u32 %v5321, 7
    %v5323 = vsub.s32 %v5320, %v5322
    %v5324 = vrot.slane %v5317, %v5323
    %v5325 = vcombine.low %v5308, %v5316
    %v5327 = vunpack.c.l.s4 1934713408
    %v5328 = vunpack.c.0.s8 %v5327
    %v5329 = vlaneseq
    %v5330 = vshrl.u32 %v5329, 7
    %v5331 = vsub.s32 %v5328, %v5330
    %v5332 = vrot.slane %v5325, %v5331
    %v5333 = vcombine.low %v5324, %v5332
    %v5334 = vcombine.high %v5324, %v5332
    %v5335 = vcombine.low %v4797, %v4861
    %v5337 = vunpack.c.l.s4 1983009808
    %v5338 = vunpack.c.0.s8 %v5337
    %v5339 = vlaneseq
    %v5340 = vshrl.u32 %v5339, 7
    %v5341 = vsub.s32 %v5338, %v5340
    %v5342 = vrot.slane %v5335, %v5341
    %v5343 = vcombine.low %v4829, %v4893
    %v5345 = vunpack.c.l.s4 1983009808
    %v5346 = vunpack.c.0.s8 %v5345
    %v5347 = vlaneseq
    %v5348 = vshrl.u32 %v5347, 7
    %v5349 = vsub.s32 %v5346, %v5348
    %v5350 = vrot.slane %v5343, %v5349
    %v5351 = vcombine.low %v4925, %v4989
    %v5353 = vunpack.c.l.s4 1983009808
    %v5354 = vunpack.c.0.s8 %v5353
    %v5355 = vlaneseq
    %v5356 = vshrl.u32 %v5355, 7
    %v5357 = vsub.s32 %v5354, %v5356
    %v5358 = vrot.slane %v5351, %v5357
    %v5359 = vcombine.low %v4957, %v5021
    %v5361 = vunpack.c.l.s4 1983009808
    %v5362 = vunpack.c.0.s8 %v5361
    %v5363 = vlaneseq
    %v5364 = vshrl.u32 %v5363, 7
    %v5365 = vsub.s32 %v5362, %v5364
    %v5366 = vrot.slane %v5359, %v5365
    %v5367 = vcombine.low %v5342, %v5350
    %v5369 = vunpack.c.l.s4 1934713408
    %v5370 = vunpack.c.0.s8 %v5369
    %v5371 = vlaneseq
    %v5372 = vshrl.u32 %v5371, 7
    %v5373 = vsub.s32 %v5370, %v5372
    %v5374 = vrot.slane %v5367, %v5373
    %v5375 = vcombine.low %v5358, %v5366
    %v5377 = vunpack.c.l.s4 1934713408
    %v5378 = vunpack.c.0.s8 %v5377
    %v5379 = vlaneseq
    %v5380 = vshrl.u32 %v5379, 7
    %v5381 = vsub.s32 %v5378, %v5380
    %v5382 = vrot.slane %v5375, %v5381
    %v5383 = vcombine.low %v5374, %v5382
    %v5384 = vcombine.high %v5374, %v5382
    %v5385 = vcombine.low %v5037, %v5101
    %v5387 = vunpack.c.l.s4 1983009808
    %v5388 = vunpack.c.0.s8 %v5387
    %v5389 = vlaneseq
    %v5390 = vshrl.u32 %v5389, 7
    %v5391 = vsub.s32 %v5388, %v5390
    %v5392 = vrot.slane %v5385, %v5391
    %v5393 = vcombine.low %v5069, %v5133
    %v5395 = vunpack.c.l.s4 1983009808
    %v5396 = vunpack.c.0.s8 %v5395
    %v5397 = vlaneseq
    %v5398 = vshrl.u32 %v5397, 7
    %v5399 = vsub.s32 %v5396, %v5398
    %v5400 = vrot.slane %v5393, %v5399
    %v5401 = vcombine.low %v5165, %v5229
    %v5403 = vunpack.c.l.s4 1983009808
    %v5404 = vunpack.c.0.s8 %v5403
    %v5405 = vlaneseq
    %v5406 = vshrl.u32 %v5405, 7
    %v5407 = vsub.s32 %v5404, %v5406
    %v5408 = vrot.slane %v5401, %v5407
    %v5409 = vcombine.low %v5197, %v5261
    %v5411 = vunpack.c.l.s4 1983009808
    %v5412 = vunpack.c.0.s8 %v5411
    %v5413 = vlaneseq
    %v5414 = vshrl.u32 %v5413, 7
    %v5415 = vsub.s32 %v5412, %v5414
    %v5416 = vrot.slane %v5409, %v5415
    %v5417 = vcombine.low %v5392, %v5400
    %v5419 = vunpack.c.l.s4 1934713408
    %v5420 = vunpack.c.0.s8 %v5419
    %v5421 = vlaneseq
    %v5422 = vshrl.u32 %v5421, 7
    %v5423 = vsub.s32 %v5420, %v5422
    %v5424 = vrot.slane %v5417, %v5423
    %v5425 = vcombine.low %v5408, %v5416
    %v5427 = vunpack.c.l.s4 1934713408
    %v5428 = vunpack.c.0.s8 %v5427
    %v5429 = vlaneseq
    %v5430 = vshrl.u32 %v5429, 7
    %v5431 = vsub.s32 %v5428, %v5430
    %v5432 = vrot.slane %v5425, %v5431
    %v5433 = vcombine.low %v5424, %v5432
    %v5434 = vcombine.high %v5424, %v5432
    %v5435 = vcombine.low %v5053, %v5117
    %v5437 = vunpack.c.l.s4 1983009808
    %v5438 = vunpack.c.0.s8 %v5437
    %v5439 = vlaneseq
    %v5440 = vshrl.u32 %v5439, 7
    %v5441 = vsub.s32 %v5438, %v5440
    %v5442 = vrot.slane %v5435, %v5441
    %v5443 = vcombine.low %v5085, %v5149
    %v5445 = vunpack.c.l.s4 1983009808
    %v5446 = vunpack.c.0.s8 %v5445
    %v5447 = vlaneseq
    %v5448 = vshrl.u32 %v5447, 7
    %v5449 = vsub.s32 %v5446, %v5448
    %v5450 = vrot.slane %v5443, %v5449
    %v5451 = vcombine.low %v5181, %v5245
    %v5453 = vunpack.c.l.s4 1983009808
    %v5454 = vunpack.c.0.s8 %v5453
    %v5455 = vlaneseq
    %v5456 = vshrl.u32 %v5455, 7
    %v5457 = vsub.s32 %v5454, %v5456
    %v5458 = vrot.slane %v5451, %v5457
    %v5459 = vcombine.low %v5213, %v5277
    %v5461 = vunpack.c.l.s4 1983009808
    %v5462 = vunpack.c.0.s8 %v5461
    %v5463 = vlaneseq
    %v5464 = vshrl.u32 %v5463, 7
    %v5465 = vsub.s32 %v5462, %v5464
    %v5466 = vrot.slane %v5459, %v5465
    %v5467 = vcombine.low %v5442, %v5450
    %v5469 = vunpack.c.l.s4 1934713408
    %v5470 = vunpack.c.0.s8 %v5469
    %v5471 = vlaneseq
    %v5472 = vshrl.u32 %v5471, 7
    %v5473 = vsub.s32 %v5470, %v5472
    %v5474 = vrot.slane %v5467, %v5473
    %v5475 = vcombine.low %v5458, %v5466
    %v5477 = vunpack.c.l.s4 1934713408
    %v5478 = vunpack.c.0.s8 %v5477
    %v5479 = vlaneseq
    %v5480 = vshrl.u32 %v5479, 7
    %v5481 = vsub.s32 %v5478, %v5480
    %v5482 = vrot.slane %v5475, %v5481
    %v5483 = vcombine.low %v5474, %v5482
    %v5484 = vcombine.high %v5474, %v5482
    %v5487 = vpack.i.b16 %v5383, %v5333
    %v5489 = vshrl.u32 %v5333, 16
    %v5490 = vshrl.u32 %v5383, 16
    %v5491 = vpack.i.b16 %v5490, %v5489
    %v5495 = vpack.i.b16 %v5384, %v5334
    %v5497 = vshrl.u32 %v5334, 16
    %v5498 = vshrl.u32 %v5384, 16
    %v5499 = vpack.i.b16 %v5498, %v5497
    %v5503 = vpack.i.b16 %v5483, %v5433
    %v5505 = vshrl.u32 %v5433, 16
    %v5506 = vshrl.u32 %v5483, 16
    %v5507 = vpack.i.b16 %v5506, %v5505
    %v5511 = vpack.i.b16 %v5484, %v5434
    %v5513 = vshrl.u32 %v5434, 16
    %v5514 = vshrl.u32 %v5484, 16
    %v5515 = vpack.i.b16 %v5514, %v5513
    %vm5517 = vcmask 261120
    %v5519 = vsel %vm5517, %v2419, 0
    %v5522 = vsel %vm5517, %v2431, 0
    %v5525 = vsel %vm5517, %v2443, 0
    %5527 = vmatprep.subr.bf16.mxu0 0
    %5528 = vmatpush1.bf16.msra.mxu0 %v5487
    %5529 = vmatprep.subr.bf16.mxu0 0
    %5530 = vmatpush1.bf16.msra.mxu0 %v5503
    %5531 = vmatprep.subr.bf16.mxu0 0
    %5532 = vmatpush1.bf16.msra.mxu0 0
    %5533 = vmatprep.subr.bf16.mxu0 0
    %5534 = vmatpush1.bf16.msra.mxu0 0
    %5535 = vmatprep.subr.bf16.mxu0 0
    %5536 = vmatpush1.bf16.msra.mxu0 0
    %5537 = vmatprep.subr.bf16.mxu0 0
    %5538 = vmatpush1.bf16.msra.mxu0 0
    %5539 = vmatprep.subr.bf16.mxu0 0
    %5540 = vmatpush1.bf16.msra.mxu0 0
    %5541 = vmatprep.subr.bf16.mxu0 0
    %5542 = vmatpush1.bf16.msra.mxu0 0
    %5543 = vmatprep.subr.bf16.mxu0 0
    %5544 = vmatpush1.bf16.msra.mxu0 0
    %5545 = vmatprep.subr.bf16.mxu0 0
    %5546 = vmatpush1.bf16.msra.mxu0 0
    %5547 = vmatprep.subr.bf16.mxu0 0
    %5548 = vmatpush1.bf16.msra.mxu0 0
    %5549 = vmatprep.subr.bf16.mxu0 0
    %5550 = vmatpush1.bf16.msra.mxu0 0
    %5551 = vmatprep.subr.bf16.mxu0 0
    %5552 = vmatpush1.bf16.msra.mxu0 0
    %5553 = vmatprep.subr.bf16.mxu0 0
    %5554 = vmatpush1.bf16.msra.mxu0 0
    %5555 = vmatprep.subr.bf16.mxu0 0
    %5556 = vmatpush1.bf16.msra.mxu0 0
    %5557 = vmatprep.subr.bf16.mxu0 0
    %5558 = vmatpush1.bf16.msra.mxu0 0
    %5559 = vmatprep.mubr.bf16.mxu0 0
    %5560 = vmatmul.mubr.bf16.gmra.mrb[0].mxu0 %v5519
    %v5561 = vpop.f32.mrb[0].mxu0
    %v5562 = vadd.f32 %v2162, %v5561
    %v5563 = vpop.f32.mrb[0].mxu0
    %v5564 = vpop.f32.mrb[0].mxu0
    %v5565 = vadd.f32 %v2163, %v5564
    %v5566 = vpop.f32.mrb[0].mxu0
    %5567 = vmatprep.mubr.bf16.mxu0 0
    %5568 = vmatmul.mubr.bf16.gmra.mrb[0].mxu0 %v5522
    %v5569 = vpop.f32.mrb[0].mxu0
    %v5570 = vadd.f32 %v2164, %v5569
    %v5571 = vpop.f32.mrb[0].mxu0
    %v5572 = vpop.f32.mrb[0].mxu0
    %v5573 = vadd.f32 %v2165, %v5572
    %v5574 = vpop.f32.mrb[0].mxu0
    %5575 = vmatprep.mubr.bf16.mxu0 0
    %5576 = vmatmul.mubr.bf16.gmra.mrb[0].mxu0 %v5525
    %v5577 = vpop.f32.mrb[0].mxu0
    %v5578 = vadd.f32 %v2166, %v5577
    %v5579 = vpop.f32.mrb[0].mxu0
    %v5580 = vpop.f32.mrb[0].mxu0
    %v5581 = vpop.f32.mrb[0].mxu0
    %5582 = vdwg.mxu0
    %v5584 = vsel %vm5517, %v2422, 0
    %v5587 = vsel %vm5517, %v2434, 0
    %v5590 = vsel %vm5517, %v2446, 0
    %5592 = vmatprep.subr.bf16.mxu0 0
    %5593 = vmatpush1.bf16.msra.mxu0 %v5491
    %5594 = vmatprep.subr.bf16.mxu0 0
    %5595 = vmatpush1.bf16.msra.mxu0 %v5507
    %5596 = vmatprep.subr.bf16.mxu0 0
    %5597 = vmatpush1.bf16.msra.mxu0 0
    %5598 = vmatprep.subr.bf16.mxu0 0
    %5599 = vmatpush1.bf16.msra.mxu0 0
    %5600 = vmatprep.subr.bf16.mxu0 0
    %5601 = vmatpush1.bf16.msra.mxu0 0
    %5602 = vmatprep.subr.bf16.mxu0 0
    %5603 = vmatpush1.bf16.msra.mxu0 0
    %5604 = vmatprep.subr.bf16.mxu0 0
    %5605 = vmatpush1.bf16.msra.mxu0 0
    %5606 = vmatprep.subr.bf16.mxu0 0
    %5607 = vmatpush1.bf16.msra.mxu0 0
    %5608 = vmatprep.subr.bf16.mxu0 0
    %5609 = vmatpush1.bf16.msra.mxu0 0
    %5610 = vmatprep.subr.bf16.mxu0 0
    %5611 = vmatpush1.bf16.msra.mxu0 0
    %5612 = vmatprep.subr.bf16.mxu0 0
    %5613 = vmatpush1.bf16.msra.mxu0 0
    %5614 = vmatprep.subr.bf16.mxu0 0
    %5615 = vmatpush1.bf16.msra.mxu0 0
    %5616 = vmatprep.subr.bf16.mxu0 0
    %5617 = vmatpush1.bf16.msra.mxu0 0
    %5618 = vmatprep.subr.bf16.mxu0 0
    %5619 = vmatpush1.bf16.msra.mxu0 0
    %5620 = vmatprep.subr.bf16.mxu0 0
    %5621 = vmatpush1.bf16.msra.mxu0 0
    %5622 = vmatprep.subr.bf16.mxu0 0
    %5623 = vmatpush1.bf16.msra.mxu0 0
    %5624 = vmatprep.mubr.bf16.mxu0 0
    %5625 = vmatmul.mubr.bf16.gmra.mrb[0].mxu0 %v5584
    %v5626 = vpop.f32.mrb[0].mxu0
    %v5627 = vadd.f32 %v2162, %v5626
    %v5628 = vpop.f32.mrb[0].mxu0
    %v5629 = vpop.f32.mrb[0].mxu0
    %v5630 = vadd.f32 %v2163, %v5629
    %v5631 = vpop.f32.mrb[0].mxu0
    %5632 = vmatprep.mubr.bf16.mxu0 0
    %5633 = vmatmul.mubr.bf16.gmra.mrb[0].mxu0 %v5587
    %v5634 = vpop.f32.mrb[0].mxu0
    %v5635 = vadd.f32 %v2164, %v5634
    %v5636 = vpop.f32.mrb[0].mxu0
    %v5637 = vpop.f32.mrb[0].mxu0
    %v5638 = vadd.f32 %v2165, %v5637
    %v5639 = vpop.f32.mrb[0].mxu0
    %5640 = vmatprep.mubr.bf16.mxu0 0
    %5641 = vmatmul.mubr.bf16.gmra.mrb[0].mxu0 %v5590
    %v5642 = vpop.f32.mrb[0].mxu0
    %v5643 = vadd.f32 %v2166, %v5642
    %v5644 = vpop.f32.mrb[0].mxu0
    %v5645 = vpop.f32.mrb[0].mxu0
    %v5646 = vpop.f32.mrb[0].mxu0
    %5647 = vdwg.mxu0
    %v5649 = vsel %vm5517, %v2425, 0
    %v5652 = vsel %vm5517, %v2437, 0
    %v5655 = vsel %vm5517, %v2449, 0
    %5657 = vmatprep.subr.bf16.mxu0 0
    %5658 = vmatpush1.bf16.msra.mxu0 %v5495
    %5659 = vmatprep.subr.bf16.mxu0 0
    %5660 = vmatpush1.bf16.msra.mxu0 %v5511
    %5661 = vmatprep.subr.bf16.mxu0 0
    %5662 = vmatpush1.bf16.msra.mxu0 0
    %5663 = vmatprep.subr.bf16.mxu0 0
    %5664 = vmatpush1.bf16.msra.mxu0 0
    %5665 = vmatprep.subr.bf16.mxu0 0
    %5666 = vmatpush1.bf16.msra.mxu0 0
    %5667 = vmatprep.subr.bf16.mxu0 0
    %5668 = vmatpush1.bf16.msra.mxu0 0
    %5669 = vmatprep.subr.bf16.mxu0 0
    %5670 = vmatpush1.bf16.msra.mxu0 0
    %5671 = vmatprep.subr.bf16.mxu0 0
    %5672 = vmatpush1.bf16.msra.mxu0 0
    %5673 = vmatprep.subr.bf16.mxu0 0
    %5674 = vmatpush1.bf16.msra.mxu0 0
    %5675 = vmatprep.subr.bf16.mxu0 0
    %5676 = vmatpush1.bf16.msra.mxu0 0
    %5677 = vmatprep.subr.bf16.mxu0 0
    %5678 = vmatpush1.bf16.msra.mxu0 0
    %5679 = vmatprep.subr.bf16.mxu0 0
    %5680 = vmatpush1.bf16.msra.mxu0 0
    %5681 = vmatprep.subr.bf16.mxu0 0
    %5682 = vmatpush1.bf16.msra.mxu0 0
    %5683 = vmatprep.subr.bf16.mxu0 0
    %5684 = vmatpush1.bf16.msra.mxu0 0
    %5685 = vmatprep.subr.bf16.mxu0 0
    %5686 = vmatpush1.bf16.msra.mxu0 0
    %5687 = vmatprep.subr.bf16.mxu0 0
    %5688 = vmatpush1.bf16.msra.mxu0 0
    %5689 = vmatprep.mubr.bf16.mxu0 0
    %5690 = vmatmul.mubr.bf16.gmra.mrb[0].mxu0 %v5649
    %v5691 = vpop.f32.mrb[0].mxu0
    %v5692 = vadd.f32 %v2162, %v5691
    %v5693 = vpop.f32.mrb[0].mxu0
    %v5694 = vpop.f32.mrb[0].mxu0
    %v5695 = vadd.f32 %v2163, %v5694
    %v5696 = vpop.f32.mrb[0].mxu0
    %5697 = vmatprep.mubr.bf16.mxu0 0
    %5698 = vmatmul.mubr.bf16.gmra.mrb[0].mxu0 %v5652
    %v5699 = vpop.f32.mrb[0].mxu0
    %v5700 = vadd.f32 %v2164, %v5699
    %v5701 = vpop.f32.mrb[0].mxu0
    %v5702 = vpop.f32.mrb[0].mxu0
    %v5703 = vadd.f32 %v2165, %v5702
    %v5704 = vpop.f32.mrb[0].mxu0
    %5705 = vmatprep.mubr.bf16.mxu0 0
    %5706 = vmatmul.mubr.bf16.gmra.mrb[0].mxu0 %v5655
    %v5707 = vpop.f32.mrb[0].mxu0
    %v5708 = vadd.f32 %v2166, %v5707
    %v5709 = vpop.f32.mrb[0].mxu0
    %v5710 = vpop.f32.mrb[0].mxu0
    %v5711 = vpop.f32.mrb[0].mxu0
    %5712 = vdwg.mxu0
    %v5714 = vsel %vm5517, %v2428, 0
    %v5717 = vsel %vm5517, %v2440, 0
    %v5720 = vsel %vm5517, %v2452, 0
    %5722 = vmatprep.subr.bf16.mxu0 0
    %5723 = vmatpush1.bf16.msra.mxu0 %v5499
    %5724 = vmatprep.subr.bf16.mxu0 0
    %5725 = vmatpush1.bf16.msra.mxu0 %v5515
    %5726 = vmatprep.subr.bf16.mxu0 0
    %5727 = vmatpush1.bf16.msra.mxu0 0
    %5728 = vmatprep.subr.bf16.mxu0 0
    %5729 = vmatpush1.bf16.msra.mxu0 0
    %5730 = vmatprep.subr.bf16.mxu0 0
    %5731 = vmatpush1.bf16.msra.mxu0 0
    %5732 = vmatprep.subr.bf16.mxu0 0
    %5733 = vmatpush1.bf16.msra.mxu0 0
    %5734 = vmatprep.subr.bf16.mxu0 0
    %5735 = vmatpush1.bf16.msra.mxu0 0
    %5736 = vmatprep.subr.bf16.mxu0 0
    %5737 = vmatpush1.bf16.msra.mxu0 0
    %5738 = vmatprep.subr.bf16.mxu0 0
    %5739 = vmatpush1.bf16.msra.mxu0 0
    %5740 = vmatprep.subr.bf16.mxu0 0
    %5741 = vmatpush1.bf16.msra.mxu0 0
    %5742 = vmatprep.subr.bf16.mxu0 0
    %5743 = vmatpush1.bf16.msra.mxu0 0
    %5744 = vmatprep.subr.bf16.mxu0 0
    %5745 = vmatpush1.bf16.msra.mxu0 0
    %5746 = vmatprep.subr.bf16.mxu0 0
    %5747 = vmatpush1.bf16.msra.mxu0 0
    %5748 = vmatprep.subr.bf16.mxu0 0
    %5749 = vmatpush1.bf16.msra.mxu0 0
    %5750 = vmatprep.subr.bf16.mxu0 0
    %5751 = vmatpush1.bf16.msra.mxu0 0
    %5752 = vmatprep.subr.bf16.mxu0 0
    %5753 = vmatpush1.bf16.msra.mxu0 0
    %5754 = vmatprep.mubr.bf16.mxu0 0
    %5755 = vmatmul.mubr.bf16.gmra.mrb[0].mxu0 %v5714
    %v5756 = vpop.f32.mrb[0].mxu0
    %v5757 = vadd.f32 %v2162, %v5756
    %v5758 = vpop.f32.mrb[0].mxu0
    %v5759 = vpop.f32.mrb[0].mxu0
    %v5760 = vadd.f32 %v2163, %v5759
    %v5761 = vpop.f32.mrb[0].mxu0
    %5762 = vmatprep.mubr.bf16.mxu0 0
    %5763 = vmatmul.mubr.bf16.gmra.mrb[0].mxu0 %v5717
    %v5764 = vpop.f32.mrb[0].mxu0
    %v5765 = vadd.f32 %v2164, %v5764
    %v5766 = vpop.f32.mrb[0].mxu0
    %v5767 = vpop.f32.mrb[0].mxu0
    %v5768 = vadd.f32 %v2165, %v5767
    %v5769 = vpop.f32.mrb[0].mxu0
    %5770 = vmatprep.mubr.bf16.mxu0 0
    %5771 = vmatmul.mubr.bf16.gmra.mrb[0].mxu0 %v5720
    %v5772 = vpop.f32.mrb[0].mxu0
    %v5773 = vadd.f32 %v2166, %v5772
    %v5774 = vpop.f32.mrb[0].mxu0
    %v5775 = vpop.f32.mrb[0].mxu0
    %v5776 = vpop.f32.mrb[0].mxu0
    %5777 = vdwg.mxu0
    %vm5778 = vcmask 326656
    %v5779 = vsel %vm5778, %v5562, -inf
    %5780 = vmax.xlane.f32.xlu0 %v5779
    %v5781 = vpop.xlane.xlu0 %5780
    %v5782 = vsel %vm5778, %v5565, -inf
    %5783 = vmax.xlane.f32.xlu0 %v5782
    %v5784 = vpop.xlane.xlu0 %5783
    %v5785 = vsel %vm5778, %v5570, -inf
    %5786 = vmax.xlane.f32.xlu0 %v5785
    %v5787 = vpop.xlane.xlu0 %5786
    %v5788 = vsel %vm5778, %v5573, -inf
    %5789 = vmax.xlane.f32.xlu0 %v5788
    %v5790 = vpop.xlane.xlu0 %5789
    %v5791 = vsel %vm5778, %v5578, -inf
    %5792 = vmax.xlane.f32.xlu0 %v5791
    %v5793 = vpop.xlane.xlu0 %5792
    %v5794 = vsel %vm5778, %v5627, -inf
    %5795 = vmax.xlane.f32.xlu0 %v5794
    %v5796 = vpop.xlane.xlu0 %5795
    %v5797 = vsel %vm5778, %v5630, -inf
    %5798 = vmax.xlane.f32.xlu0 %v5797
    %v5799 = vpop.xlane.xlu0 %5798
    %v5800 = vsel %vm5778, %v5635, -inf
    %5801 = vmax.xlane.f32.xlu0 %v5800
    %v5802 = vpop.xlane.xlu0 %5801
    %v5803 = vsel %vm5778, %v5638, -inf
    %5804 = vmax.xlane.f32.xlu0 %v5803
    %v5805 = vpop.xlane.xlu0 %5804
    %v5806 = vsel %vm5778, %v5643, -inf
    %5807 = vmax.xlane.f32.xlu0 %v5806
    %v5808 = vpop.xlane.xlu0 %5807
    %v5809 = vsel %vm5778, %v5692, -inf
    %5810 = vmax.xlane.f32.xlu0 %v5809
    %v5811 = vpop.xlane.xlu0 %5810
    %v5812 = vsel %vm5778, %v5695, -inf
    %5813 = vmax.xlane.f32.xlu0 %v5812
    %v5814 = vpop.xlane.xlu0 %5813
    %v5815 = vsel %vm5778, %v5700, -inf
    %5816 = vmax.xlane.f32.xlu0 %v5815
    %v5817 = vpop.xlane.xlu0 %5816
    %v5818 = vsel %vm5778, %v5703, -inf
    %5819 = vmax.xlane.f32.xlu0 %v5818
    %v5820 = vpop.xlane.xlu0 %5819
    %v5821 = vsel %vm5778, %v5708, -inf
    %5822 = vmax.xlane.f32.xlu0 %v5821
    %v5823 = vpop.xlane.xlu0 %5822
    %v5824 = vsel %vm5778, %v5757, -inf
    %5825 = vmax.xlane.f32.xlu0 %v5824
    %v5826 = vpop.xlane.xlu0 %5825
    %v5827 = vsel %vm5778, %v5760, -inf
    %5828 = vmax.xlane.f32.xlu0 %v5827
    %v5829 = vpop.xlane.xlu0 %5828
    %v5830 = vsel %vm5778, %v5765, -inf
    %5831 = vmax.xlane.f32.xlu0 %v5830
    %v5832 = vpop.xlane.xlu0 %5831
    %v5833 = vsel %vm5778, %v5768, -inf
    %5834 = vmax.xlane.f32.xlu0 %v5833
    %v5835 = vpop.xlane.xlu0 %5834
    %v5836 = vsel %vm5778, %v5773, -inf
    %5837 = vmax.xlane.f32.xlu0 %v5836
    %v5838 = vpop.xlane.xlu0 %5837
    %v5839 = vsub.f32 %v5562, %v5781
    %v5840 = vsub.f32 %v5565, %v5784
    %v5841 = vsub.f32 %v5570, %v5787
    %v5842 = vsub.f32 %v5573, %v5790
    %v5843 = vsub.f32 %v5578, %v5793
    %v5844 = vsub.f32 %v5627, %v5796
    %v5845 = vsub.f32 %v5630, %v5799
    %v5846 = vsub.f32 %v5635, %v5802
    %v5847 = vsub.f32 %v5638, %v5805
    %v5848 = vsub.f32 %v5643, %v5808
    %v5849 = vsub.f32 %v5692, %v5811
    %v5850 = vsub.f32 %v5695, %v5814
    %v5851 = vsub.f32 %v5700, %v5817
    %v5852 = vsub.f32 %v5703, %v5820
    %v5853 = vsub.f32 %v5708, %v5823
    %v5854 = vsub.f32 %v5757, %v5826
    %v5855 = vsub.f32 %v5760, %v5829
    %v5856 = vsub.f32 %v5765, %v5832
    %v5857 = vsub.f32 %v5768, %v5835
    %v5858 = vsub.f32 %v5773, %v5838
    %v5859 = vmul.f32 %v5839, 1.442695
    %v5860 = vpow.pop %v5859
    %v5861 = vmul.f32 %v5840, 1.442695
    %v5862 = vpow.pop %v5861
    %v5863 = vmul.f32 %v5841, 1.442695
    %v5864 = vpow.pop %v5863
    %v5865 = vmul.f32 %v5842, 1.442695
    %v5866 = vpow.pop %v5865
    %v5867 = vmul.f32 %v5843, 1.442695
    %v5868 = vpow.pop %v5867
    %v5869 = vmul.f32 %v5844, 1.442695
    %v5870 = vpow.pop %v5869
    %v5871 = vmul.f32 %v5845, 1.442695
    %v5872 = vpow.pop %v5871
    %v5873 = vmul.f32 %v5846, 1.442695
    %v5874 = vpow.pop %v5873
    %v5875 = vmul.f32 %v5847, 1.442695
    %v5876 = vpow.pop %v5875
    %v5877 = vmul.f32 %v5848, 1.442695
    %v5878 = vpow.pop %v5877
    %v5879 = vmul.f32 %v5849, 1.442695
    %v5880 = vpow.pop %v5879
    %v5881 = vmul.f32 %v5850, 1.442695
    %v5882 = vpow.pop %v5881
    %v5883 = vmul.f32 %v5851, 1.442695
    %v5884 = vpow.pop %v5883
    %v5885 = vmul.f32 %v5852, 1.442695
    %v5886 = vpow.pop %v5885
    %v5887 = vmul.f32 %v5853, 1.442695
    %v5888 = vpow.pop %v5887
    %v5889 = vmul.f32 %v5854, 1.442695
    %v5890 = vpow.pop %v5889
    %v5891 = vmul.f32 %v5855, 1.442695
    %v5892 = vpow.pop %v5891
    %v5893 = vmul.f32 %v5856, 1.442695
    %v5894 = vpow.pop %v5893
    %v5895 = vmul.f32 %v5857, 1.442695
    %v5896 = vpow.pop %v5895
    %v5897 = vmul.f32 %v5858, 1.442695
    %v5898 = vpow.pop %v5897
    %v5899 = vsel %vm5778, %v5860, 0.0
    %5900 = vadd.xlane.f32.xlu0 %v5899
    %v5901 = vpop.xlane.xlu0 %5900
    %v5902 = vsel %vm5778, %v5862, 0.0
    %5903 = vadd.xlane.f32.xlu0 %v5902
    %v5904 = vpop.xlane.xlu0 %5903
    %v5905 = vsel %vm5778, %v5864, 0.0
    %5906 = vadd.xlane.f32.xlu0 %v5905
    %v5907 = vpop.xlane.xlu0 %5906
    %v5908 = vsel %vm5778, %v5866, 0.0
    %5909 = vadd.xlane.f32.xlu0 %v5908
    %v5910 = vpop.xlane.xlu0 %5909
    %v5911 = vsel %vm5778, %v5868, 0.0
    %5912 = vadd.xlane.f32.xlu0 %v5911
    %v5913 = vpop.xlane.xlu0 %5912
    %v5914 = vsel %vm5778, %v5870, 0.0
    %5915 = vadd.xlane.f32.xlu0 %v5914
    %v5916 = vpop.xlane.xlu0 %5915
    %v5917 = vsel %vm5778, %v5872, 0.0
    %5918 = vadd.xlane.f32.xlu0 %v5917
    %v5919 = vpop.xlane.xlu0 %5918
    %v5920 = vsel %vm5778, %v5874, 0.0
    %5921 = vadd.xlane.f32.xlu0 %v5920
    %v5922 = vpop.xlane.xlu0 %5921
    %v5923 = vsel %vm5778, %v5876, 0.0
    %5924 = vadd.xlane.f32.xlu0 %v5923
    %v5925 = vpop.xlane.xlu0 %5924
    %v5926 = vsel %vm5778, %v5878, 0.0
    %5927 = vadd.xlane.f32.xlu0 %v5926
    %v5928 = vpop.xlane.xlu0 %5927
    %v5929 = vsel %vm5778, %v5880, 0.0
    %5930 = vadd.xlane.f32.xlu0 %v5929
    %v5931 = vpop.xlane.xlu0 %5930
    %v5932 = vsel %vm5778, %v5882, 0.0
    %5933 = vadd.xlane.f32.xlu0 %v5932
    %v5934 = vpop.xlane.xlu0 %5933
    %v5935 = vsel %vm5778, %v5884, 0.0
    %5936 = vadd.xlane.f32.xlu0 %v5935
    %v5937 = vpop.xlane.xlu0 %5936
    %v5938 = vsel %vm5778, %v5886, 0.0
    %5939 = vadd.xlane.f32.xlu0 %v5938
    %v5940 = vpop.xlane.xlu0 %5939
    %v5941 = vsel %vm5778, %v5888, 0.0
    %5942 = vadd.xlane.f32.xlu0 %v5941
    %v5943 = vpop.xlane.xlu0 %5942
    %v5944 = vsel %vm5778, %v5890, 0.0
    %5945 = vadd.xlane.f32.xlu0 %v5944
    %v5946 = vpop.xlane.xlu0 %5945
    %v5947 = vsel %vm5778, %v5892, 0.0
    %5948 = vadd.xlane.f32.xlu0 %v5947
    %v5949 = vpop.xlane.xlu0 %5948
    %v5950 = vsel %vm5778, %v5894, 0.0
    %5951 = vadd.xlane.f32.xlu0 %v5950
    %v5952 = vpop.xlane.xlu0 %5951
    %v5953 = vsel %vm5778, %v5896, 0.0
    %5954 = vadd.xlane.f32.xlu0 %v5953
    %v5955 = vpop.xlane.xlu0 %5954
    %v5956 = vsel %vm5778, %v5898, 0.0
    %5957 = vadd.xlane.f32.xlu0 %v5956
    %v5958 = vpop.xlane.xlu0 %5957
    %v5959 = vrcp.pop %v5901
    %v5960 = vrcp.pop %v5904
    %v5961 = vrcp.pop %v5907
    %v5962 = vrcp.pop %v5910
    %v5963 = vrcp.pop %v5913
    %v5964 = vrcp.pop %v5916
    %v5965 = vrcp.pop %v5919
    %v5966 = vrcp.pop %v5922
    %v5967 = vrcp.pop %v5925
    %v5968 = vrcp.pop %v5928
    %v5969 = vrcp.pop %v5931
    %v5970 = vrcp.pop %v5934
    %v5971 = vrcp.pop %v5937
    %v5972 = vrcp.pop %v5940
    %v5973 = vrcp.pop %v5943
    %v5974 = vrcp.pop %v5946
    %v5975 = vrcp.pop %v5949
    %v5976 = vrcp.pop %v5952
    %v5977 = vrcp.pop %v5955
    %v5978 = vrcp.pop %v5958
    %v5979 = vmul.f32 %v5860, %v5959
    %v5980 = vmul.f32 %v5862, %v5960
    %v5981 = vmul.f32 %v5864, %v5961
    %v5982 = vmul.f32 %v5866, %v5962
    %v5983 = vmul.f32 %v5868, %v5963
    %v5984 = vmul.f32 %v5870, %v5964
    %v5985 = vmul.f32 %v5872, %v5965
    %v5986 = vmul.f32 %v5874, %v5966
    %v5987 = vmul.f32 %v5876, %v5967
    %v5988 = vmul.f32 %v5878, %v5968
    %v5989 = vmul.f32 %v5880, %v5969
    %v5990 = vmul.f32 %v5882, %v5970
    %v5991 = vmul.f32 %v5884, %v5971
    %v5992 = vmul.f32 %v5886, %v5972
    %v5993 = vmul.f32 %v5888, %v5973
    %v5994 = vmul.f32 %v5890, %v5974
    %v5995 = vmul.f32 %v5892, %v5975
    %v5996 = vmul.f32 %v5894, %v5976
    %v5997 = vmul.f32 %v5896, %v5977
    %v5998 = vmul.f32 %v5898, %v5978
    %v5999 = vpack.c.bf16 %v5980, %v5979
    %v6000 = vpack.c.bf16 %v5982, %v5981
    %v6001 = vpack.c.bf16 %v5983, %v5983
    %v6002 = vpack.c.bf16 %v5985, %v5984
    %v6003 = vpack.c.bf16 %v5987, %v5986
    %v6004 = vpack.c.bf16 %v5988, %v5988
    %v6005 = vpack.c.bf16 %v5990, %v5989
    %v6006 = vpack.c.bf16 %v5992, %v5991
    %v6007 = vpack.c.bf16 %v5993, %v5993
    %v6008 = vpack.c.bf16 %v5995, %v5994
    %v6009 = vpack.c.bf16 %v5997, %v5996
    %v6010 = vpack.c.bf16 %v5998, %v5998
    %6011 = vxpose.xlu0.c.b16.start [1/8] %v2122, 128
    %6012 = vxpose.xlu0.c.b16.cont [2/8] 0, 128
    %6013 = vxpose.xlu0.c.b16.cont [3/8] 0, 128
    %6014 = vxpose.xlu0.c.b16.cont [4/8] 0, 128
    %6015 = vxpose.xlu0.c.b16.cont [5/8] 0, 128
    %6016 = vxpose.xlu0.c.b16.cont [6/8] 0, 128
    %6017 = vxpose.xlu0.c.b16.cont [7/8] 0, 128
    %6018 = vxpose.xlu0.c.b16.end [8/8] 0, 128
    %v6019 = vpop.trf.xlu0
    %v6020 = vpop.trf.xlu0
    %v6021 = vpop.trf.xlu0
    %v6022 = vpop.trf.xlu0
    %v6023 = vpop.trf.xlu0
    %v6024 = vpop.trf.xlu0
    %v6025 = vpop.trf.xlu0
    %v6026 = vpop.trf.xlu0
    %6027 = vxpose.xlu0.c.b16.start [1/8] %v2123, 128
    %6028 = vxpose.xlu0.c.b16.cont [2/8] 0, 128
    %6029 = vxpose.xlu0.c.b16.cont [3/8] 0, 128
    %6030 = vxpose.xlu0.c.b16.cont [4/8] 0, 128
    %6031 = vxpose.xlu0.c.b16.cont [5/8] 0, 128
    %6032 = vxpose.xlu0.c.b16.cont [6/8] 0, 128
    %6033 = vxpose.xlu0.c.b16.cont [7/8] 0, 128
    %6034 = vxpose.xlu0.c.b16.end [8/8] 0, 128
    %v6035 = vpop.trf.xlu0
    %v6036 = vpop.trf.xlu0
    %v6037 = vpop.trf.xlu0
    %v6038 = vpop.trf.xlu0
    %v6039 = vpop.trf.xlu0
    %v6040 = vpop.trf.xlu0
    %v6041 = vpop.trf.xlu0
    %v6042 = vpop.trf.xlu0
    %6043 = vxpose.xlu0.c.b16.start [1/8] %v2124, 128
    %6044 = vxpose.xlu0.c.b16.cont [2/8] 0, 128
    %6045 = vxpose.xlu0.c.b16.cont [3/8] 0, 128
    %6046 = vxpose.xlu0.c.b16.cont [4/8] 0, 128
    %6047 = vxpose.xlu0.c.b16.cont [5/8] 0, 128
    %6048 = vxpose.xlu0.c.b16.cont [6/8] 0, 128
    %6049 = vxpose.xlu0.c.b16.cont [7/8] 0, 128
    %6050 = vxpose.xlu0.c.b16.end [8/8] 0, 128
    %v6051 = vpop.trf.xlu0
    %v6052 = vpop.trf.xlu0
    %v6053 = vpop.trf.xlu0
    %v6054 = vpop.trf.xlu0
    %v6055 = vpop.trf.xlu0
    %v6056 = vpop.trf.xlu0
    %v6057 = vpop.trf.xlu0
    %v6058 = vpop.trf.xlu0
    %6059 = vxpose.xlu0.c.b16.start [1/8] %v2125, 128
    %6060 = vxpose.xlu0.c.b16.cont [2/8] 0, 128
    %6061 = vxpose.xlu0.c.b16.cont [3/8] 0, 128
    %6062 = vxpose.xlu0.c.b16.cont [4/8] 0, 128
    %6063 = vxpose.xlu0.c.b16.cont [5/8] 0, 128
    %6064 = vxpose.xlu0.c.b16.cont [6/8] 0, 128
    %6065 = vxpose.xlu0.c.b16.cont [7/8] 0, 128
    %6066 = vxpose.xlu0.c.b16.end [8/8] 0, 128
    %v6067 = vpop.trf.xlu0
    %v6068 = vpop.trf.xlu0
    %v6069 = vpop.trf.xlu0
    %v6070 = vpop.trf.xlu0
    %v6071 = vpop.trf.xlu0
    %v6072 = vpop.trf.xlu0
    %v6073 = vpop.trf.xlu0
    %v6074 = vpop.trf.xlu0
    %6075 = vxpose.xlu0.c.b16.start [1/8] %v2126, 128
    %6076 = vxpose.xlu0.c.b16.cont [2/8] 0, 128
    %6077 = vxpose.xlu0.c.b16.cont [3/8] 0, 128
    %6078 = vxpose.xlu0.c.b16.cont [4/8] 0, 128
    %6079 = vxpose.xlu0.c.b16.cont [5/8] 0, 128
    %6080 = vxpose.xlu0.c.b16.cont [6/8] 0, 128
    %6081 = vxpose.xlu0.c.b16.cont [7/8] 0, 128
    %6082 = vxpose.xlu0.c.b16.end [8/8] 0, 128
    %v6083 = vpop.trf.xlu0
    %v6084 = vpop.trf.xlu0
    %v6085 = vpop.trf.xlu0
    %v6086 = vpop.trf.xlu0
    %v6087 = vpop.trf.xlu0
    %v6088 = vpop.trf.xlu0
    %v6089 = vpop.trf.xlu0
    %v6090 = vpop.trf.xlu0
    %6091 = vxpose.xlu0.c.b16.start [1/8] %v2127, 128
    %6092 = vxpose.xlu0.c.b16.cont [2/8] 0, 128
    %6093 = vxpose.xlu0.c.b16.cont [3/8] 0, 128
    %6094 = vxpose.xlu0.c.b16.cont [4/8] 0, 128
    %6095 = vxpose.xlu0.c.b16.cont [5/8] 0, 128
    %6096 = vxpose.xlu0.c.b16.cont [6/8] 0, 128
    %6097 = vxpose.xlu0.c.b16.cont [7/8] 0, 128
    %6098 = vxpose.xlu0.c.b16.end [8/8] 0, 128
    %v6099 = vpop.trf.xlu0
    %v6100 = vpop.trf.xlu0
    %v6101 = vpop.trf.xlu0
    %v6102 = vpop.trf.xlu0
    %v6103 = vpop.trf.xlu0
    %v6104 = vpop.trf.xlu0
    %v6105 = vpop.trf.xlu0
    %v6106 = vpop.trf.xlu0
    %6107 = vxpose.xlu0.c.b16.start [1/8] %v2128, 128
    %6108 = vxpose.xlu0.c.b16.cont [2/8] 0, 128
    %6109 = vxpose.xlu0.c.b16.cont [3/8] 0, 128
    %6110 = vxpose.xlu0.c.b16.cont [4/8] 0, 128
    %6111 = vxpose.xlu0.c.b16.cont [5/8] 0, 128
    %6112 = vxpose.xlu0.c.b16.cont [6/8] 0, 128
    %6113 = vxpose.xlu0.c.b16.cont [7/8] 0, 128
    %6114 = vxpose.xlu0.c.b16.end [8/8] 0, 128
    %v6115 = vpop.trf.xlu0
    %v6116 = vpop.trf.xlu0
    %v6117 = vpop.trf.xlu0
    %v6118 = vpop.trf.xlu0
    %v6119 = vpop.trf.xlu0
    %v6120 = vpop.trf.xlu0
    %v6121 = vpop.trf.xlu0
    %v6122 = vpop.trf.xlu0
    %6123 = vxpose.xlu0.c.b16.start [1/8] %v2129, 128
    %6124 = vxpose.xlu0.c.b16.cont [2/8] 0, 128
    %6125 = vxpose.xlu0.c.b16.cont [3/8] 0, 128
    %6126 = vxpose.xlu0.c.b16.cont [4/8] 0, 128
    %6127 = vxpose.xlu0.c.b16.cont [5/8] 0, 128
    %6128 = vxpose.xlu0.c.b16.cont [6/8] 0, 128
    %6129 = vxpose.xlu0.c.b16.cont [7/8] 0, 128
    %6130 = vxpose.xlu0.c.b16.end [8/8] 0, 128
    %v6131 = vpop.trf.xlu0
    %v6132 = vpop.trf.xlu0
    %v6133 = vpop.trf.xlu0
    %v6134 = vpop.trf.xlu0
    %v6135 = vpop.trf.xlu0
    %v6136 = vpop.trf.xlu0
    %v6137 = vpop.trf.xlu0
    %v6138 = vpop.trf.xlu0
    %6139 = vxpose.xlu0.c.b16.start [1/8] %v2130, 128
    %6140 = vxpose.xlu0.c.b16.cont [2/8] 0, 128
    %6141 = vxpose.xlu0.c.b16.cont [3/8] 0, 128
    %6142 = vxpose.xlu0.c.b16.cont [4/8] 0, 128
    %6143 = vxpose.xlu0.c.b16.cont [5/8] 0, 128
    %6144 = vxpose.xlu0.c.b16.cont [6/8] 0, 128
    %6145 = vxpose.xlu0.c.b16.cont [7/8] 0, 128
    %6146 = vxpose.xlu0.c.b16.end [8/8] 0, 128
    %v6147 = vpop.trf.xlu0
    %v6148 = vpop.trf.xlu0
    %v6149 = vpop.trf.xlu0
    %v6150 = vpop.trf.xlu0
    %v6151 = vpop.trf.xlu0
    %v6152 = vpop.trf.xlu0
    %v6153 = vpop.trf.xlu0
    %v6154 = vpop.trf.xlu0
    %6155 = vxpose.xlu0.c.b16.start [1/8] %v2131, 128
    %6156 = vxpose.xlu0.c.b16.cont [2/8] 0, 128
    %6157 = vxpose.xlu0.c.b16.cont [3/8] 0, 128
    %6158 = vxpose.xlu0.c.b16.cont [4/8] 0, 128
    %6159 = vxpose.xlu0.c.b16.cont [5/8] 0, 128
    %6160 = vxpose.xlu0.c.b16.cont [6/8] 0, 128
    %6161 = vxpose.xlu0.c.b16.cont [7/8] 0, 128
    %6162 = vxpose.xlu0.c.b16.end [8/8] 0, 128
    %v6163 = vpop.trf.xlu0
    %v6164 = vpop.trf.xlu0
    %v6165 = vpop.trf.xlu0
    %v6166 = vpop.trf.xlu0
    %v6167 = vpop.trf.xlu0
    %v6168 = vpop.trf.xlu0
    %v6169 = vpop.trf.xlu0
    %v6170 = vpop.trf.xlu0
    %6171 = vxpose.xlu0.c.b16.start [1/8] %v2132, 128
    %6172 = vxpose.xlu0.c.b16.cont [2/8] 0, 128
    %6173 = vxpose.xlu0.c.b16.cont [3/8] 0, 128
    %6174 = vxpose.xlu0.c.b16.cont [4/8] 0, 128
    %6175 = vxpose.xlu0.c.b16.cont [5/8] 0, 128
    %6176 = vxpose.xlu0.c.b16.cont [6/8] 0, 128
    %6177 = vxpose.xlu0.c.b16.cont [7/8] 0, 128
    %6178 = vxpose.xlu0.c.b16.end [8/8] 0, 128
    %v6179 = vpop.trf.xlu0
    %v6180 = vpop.trf.xlu0
    %v6181 = vpop.trf.xlu0
    %v6182 = vpop.trf.xlu0
    %v6183 = vpop.trf.xlu0
    %v6184 = vpop.trf.xlu0
    %v6185 = vpop.trf.xlu0
    %v6186 = vpop.trf.xlu0
    %6187 = vxpose.xlu0.c.b16.start [1/8] %v2133, 128
    %6188 = vxpose.xlu0.c.b16.cont [2/8] 0, 128
    %6189 = vxpose.xlu0.c.b16.cont [3/8] 0, 128
    %6190 = vxpose.xlu0.c.b16.cont [4/8] 0, 128
    %6191 = vxpose.xlu0.c.b16.cont [5/8] 0, 128
    %6192 = vxpose.xlu0.c.b16.cont [6/8] 0, 128
    %6193 = vxpose.xlu0.c.b16.cont [7/8] 0, 128
    %6194 = vxpose.xlu0.c.b16.end [8/8] 0, 128
    %v6195 = vpop.trf.xlu0
    %v6196 = vpop.trf.xlu0
    %v6197 = vpop.trf.xlu0
    %v6198 = vpop.trf.xlu0
    %v6199 = vpop.trf.xlu0
    %v6200 = vpop.trf.xlu0
    %v6201 = vpop.trf.xlu0
    %v6202 = vpop.trf.xlu0
    %6203 = vxpose.xlu0.c.b16.start [1/8] %v2134, 128
    %6204 = vxpose.xlu0.c.b16.cont [2/8] 0, 128
    %6205 = vxpose.xlu0.c.b16.cont [3/8] 0, 128
    %6206 = vxpose.xlu0.c.b16.cont [4/8] 0, 128
    %6207 = vxpose.xlu0.c.b16.cont [5/8] 0, 128
    %6208 = vxpose.xlu0.c.b16.cont [6/8] 0, 128
    %6209 = vxpose.xlu0.c.b16.cont [7/8] 0, 128
    %6210 = vxpose.xlu0.c.b16.end [8/8] 0, 128
    %v6211 = vpop.trf.xlu0
    %v6212 = vpop.trf.xlu0
    %v6213 = vpop.trf.xlu0
    %v6214 = vpop.trf.xlu0
    %v6215 = vpop.trf.xlu0
    %v6216 = vpop.trf.xlu0
    %v6217 = vpop.trf.xlu0
    %v6218 = vpop.trf.xlu0
    %6219 = vxpose.xlu0.c.b16.start [1/8] %v2135, 128
    %6220 = vxpose.xlu0.c.b16.cont [2/8] 0, 128
    %6221 = vxpose.xlu0.c.b16.cont [3/8] 0, 128
    %6222 = vxpose.xlu0.c.b16.cont [4/8] 0, 128
    %6223 = vxpose.xlu0.c.b16.cont [5/8] 0, 128
    %6224 = vxpose.xlu0.c.b16.cont [6/8] 0, 128
    %6225 = vxpose.xlu0.c.b16.cont [7/8] 0, 128
    %6226 = vxpose.xlu0.c.b16.end [8/8] 0, 128
    %v6227 = vpop.trf.xlu0
    %v6228 = vpop.trf.xlu0
    %v6229 = vpop.trf.xlu0
    %v6230 = vpop.trf.xlu0
    %v6231 = vpop.trf.xlu0
    %v6232 = vpop.trf.xlu0
    %v6233 = vpop.trf.xlu0
    %v6234 = vpop.trf.xlu0
    %6235 = vxpose.xlu0.c.b16.start [1/8] %v2136, 128
    %6236 = vxpose.xlu0.c.b16.cont [2/8] 0, 128
    %6237 = vxpose.xlu0.c.b16.cont [3/8] 0, 128
    %6238 = vxpose.xlu0.c.b16.cont [4/8] 0, 128
    %6239 = vxpose.xlu0.c.b16.cont [5/8] 0, 128
    %6240 = vxpose.xlu0.c.b16.cont [6/8] 0, 128
    %6241 = vxpose.xlu0.c.b16.cont [7/8] 0, 128
    %6242 = vxpose.xlu0.c.b16.end [8/8] 0, 128
    %v6243 = vpop.trf.xlu0
    %v6244 = vpop.trf.xlu0
    %v6245 = vpop.trf.xlu0
    %v6246 = vpop.trf.xlu0
    %v6247 = vpop.trf.xlu0
    %v6248 = vpop.trf.xlu0
    %v6249 = vpop.trf.xlu0
    %v6250 = vpop.trf.xlu0
    %6251 = vxpose.xlu0.c.b16.start [1/8] %v2137, 128
    %6252 = vxpose.xlu0.c.b16.cont [2/8] 0, 128
    %6253 = vxpose.xlu0.c.b16.cont [3/8] 0, 128
    %6254 = vxpose.xlu0.c.b16.cont [4/8] 0, 128
    %6255 = vxpose.xlu0.c.b16.cont [5/8] 0, 128
    %6256 = vxpose.xlu0.c.b16.cont [6/8] 0, 128
    %6257 = vxpose.xlu0.c.b16.cont [7/8] 0, 128
    %6258 = vxpose.xlu0.c.b16.end [8/8] 0, 128
    %v6259 = vpop.trf.xlu0
    %v6260 = vpop.trf.xlu0
    %v6261 = vpop.trf.xlu0
    %v6262 = vpop.trf.xlu0
    %v6263 = vpop.trf.xlu0
    %v6264 = vpop.trf.xlu0
    %v6265 = vpop.trf.xlu0
    %v6266 = vpop.trf.xlu0
    %6267 = vxpose.xlu0.c.b16.start [1/8] %v2138, 128
    %6268 = vxpose.xlu0.c.b16.cont [2/8] 0, 128
    %6269 = vxpose.xlu0.c.b16.cont [3/8] 0, 128
    %6270 = vxpose.xlu0.c.b16.cont [4/8] 0, 128
    %6271 = vxpose.xlu0.c.b16.cont [5/8] 0, 128
    %6272 = vxpose.xlu0.c.b16.cont [6/8] 0, 128
    %6273 = vxpose.xlu0.c.b16.cont [7/8] 0, 128
    %6274 = vxpose.xlu0.c.b16.end [8/8] 0, 128
    %v6275 = vpop.trf.xlu0
    %v6276 = vpop.trf.xlu0
    %v6277 = vpop.trf.xlu0
    %v6278 = vpop.trf.xlu0
    %v6279 = vpop.trf.xlu0
    %v6280 = vpop.trf.xlu0
    %v6281 = vpop.trf.xlu0
    %v6282 = vpop.trf.xlu0
    %6283 = vxpose.xlu0.c.b16.start [1/8] %v2139, 128
    %6284 = vxpose.xlu0.c.b16.cont [2/8] 0, 128
    %6285 = vxpose.xlu0.c.b16.cont [3/8] 0, 128
    %6286 = vxpose.xlu0.c.b16.cont [4/8] 0, 128
    %6287 = vxpose.xlu0.c.b16.cont [5/8] 0, 128
    %6288 = vxpose.xlu0.c.b16.cont [6/8] 0, 128
    %6289 = vxpose.xlu0.c.b16.cont [7/8] 0, 128
    %6290 = vxpose.xlu0.c.b16.end [8/8] 0, 128
    %v6291 = vpop.trf.xlu0
    %v6292 = vpop.trf.xlu0
    %v6293 = vpop.trf.xlu0
    %v6294 = vpop.trf.xlu0
    %v6295 = vpop.trf.xlu0
    %v6296 = vpop.trf.xlu0
    %v6297 = vpop.trf.xlu0
    %v6298 = vpop.trf.xlu0
    %6299 = vxpose.xlu0.c.b16.start [1/8] %v2140, 128
    %6300 = vxpose.xlu0.c.b16.cont [2/8] 0, 128
    %6301 = vxpose.xlu0.c.b16.cont [3/8] 0, 128
    %6302 = vxpose.xlu0.c.b16.cont [4/8] 0, 128
    %6303 = vxpose.xlu0.c.b16.cont [5/8] 0, 128
    %6304 = vxpose.xlu0.c.b16.cont [6/8] 0, 128
    %6305 = vxpose.xlu0.c.b16.cont [7/8] 0, 128
    %6306 = vxpose.xlu0.c.b16.end [8/8] 0, 128
    %v6307 = vpop.trf.xlu0
    %v6308 = vpop.trf.xlu0
    %v6309 = vpop.trf.xlu0
    %v6310 = vpop.trf.xlu0
    %v6311 = vpop.trf.xlu0
    %v6312 = vpop.trf.xlu0
    %v6313 = vpop.trf.xlu0
    %v6314 = vpop.trf.xlu0
    %6315 = vxpose.xlu0.c.b16.start [1/8] %v2141, 128
    %6316 = vxpose.xlu0.c.b16.cont [2/8] 0, 128
    %6317 = vxpose.xlu0.c.b16.cont [3/8] 0, 128
    %6318 = vxpose.xlu0.c.b16.cont [4/8] 0, 128
    %6319 = vxpose.xlu0.c.b16.cont [5/8] 0, 128
    %6320 = vxpose.xlu0.c.b16.cont [6/8] 0, 128
    %6321 = vxpose.xlu0.c.b16.cont [7/8] 0, 128
    %6322 = vxpose.xlu0.c.b16.end [8/8] 0, 128
    %v6323 = vpop.trf.xlu0
    %v6324 = vpop.trf.xlu0
    %v6325 = vpop.trf.xlu0
    %v6326 = vpop.trf.xlu0
    %v6327 = vpop.trf.xlu0
    %v6328 = vpop.trf.xlu0
    %v6329 = vpop.trf.xlu0
    %v6330 = vpop.trf.xlu0
    %6331 = vxpose.xlu0.c.b16.start [1/8] %v2142, 128
    %6332 = vxpose.xlu0.c.b16.cont [2/8] 0, 128
    %6333 = vxpose.xlu0.c.b16.cont [3/8] 0, 128
    %6334 = vxpose.xlu0.c.b16.cont [4/8] 0, 128
    %6335 = vxpose.xlu0.c.b16.cont [5/8] 0, 128
    %6336 = vxpose.xlu0.c.b16.cont [6/8] 0, 128
    %6337 = vxpose.xlu0.c.b16.cont [7/8] 0, 128
    %6338 = vxpose.xlu0.c.b16.end [8/8] 0, 128
    %v6339 = vpop.trf.xlu0
    %v6340 = vpop.trf.xlu0
    %v6341 = vpop.trf.xlu0
    %v6342 = vpop.trf.xlu0
    %v6343 = vpop.trf.xlu0
    %v6344 = vpop.trf.xlu0
    %v6345 = vpop.trf.xlu0
    %v6346 = vpop.trf.xlu0
    %6347 = vxpose.xlu0.c.b16.start [1/8] %v2143, 128
    %6348 = vxpose.xlu0.c.b16.cont [2/8] 0, 128
    %6349 = vxpose.xlu0.c.b16.cont [3/8] 0, 128
    %6350 = vxpose.xlu0.c.b16.cont [4/8] 0, 128
    %6351 = vxpose.xlu0.c.b16.cont [5/8] 0, 128
    %6352 = vxpose.xlu0.c.b16.cont [6/8] 0, 128
    %6353 = vxpose.xlu0.c.b16.cont [7/8] 0, 128
    %6354 = vxpose.xlu0.c.b16.end [8/8] 0, 128
    %v6355 = vpop.trf.xlu0
    %v6356 = vpop.trf.xlu0
    %v6357 = vpop.trf.xlu0
    %v6358 = vpop.trf.xlu0
    %v6359 = vpop.trf.xlu0
    %v6360 = vpop.trf.xlu0
    %v6361 = vpop.trf.xlu0
    %v6362 = vpop.trf.xlu0
    %6363 = vxpose.xlu0.c.b16.start [1/8] %v2144, 128
    %6364 = vxpose.xlu0.c.b16.cont [2/8] 0, 128
    %6365 = vxpose.xlu0.c.b16.cont [3/8] 0, 128
    %6366 = vxpose.xlu0.c.b16.cont [4/8] 0, 128
    %6367 = vxpose.xlu0.c.b16.cont [5/8] 0, 128
    %6368 = vxpose.xlu0.c.b16.cont [6/8] 0, 128
    %6369 = vxpose.xlu0.c.b16.cont [7/8] 0, 128
    %6370 = vxpose.xlu0.c.b16.end [8/8] 0, 128
    %v6371 = vpop.trf.xlu0
    %v6372 = vpop.trf.xlu0
    %v6373 = vpop.trf.xlu0
    %v6374 = vpop.trf.xlu0
    %v6375 = vpop.trf.xlu0
    %v6376 = vpop.trf.xlu0
    %v6377 = vpop.trf.xlu0
    %v6378 = vpop.trf.xlu0
    %6379 = vxpose.xlu0.c.b16.start [1/8] %v2145, 128
    %6380 = vxpose.xlu0.c.b16.cont [2/8] 0, 128
    %6381 = vxpose.xlu0.c.b16.cont [3/8] 0, 128
    %6382 = vxpose.xlu0.c.b16.cont [4/8] 0, 128
    %6383 = vxpose.xlu0.c.b16.cont [5/8] 0, 128
    %6384 = vxpose.xlu0.c.b16.cont [6/8] 0, 128
    %6385 = vxpose.xlu0.c.b16.cont [7/8] 0, 128
    %6386 = vxpose.xlu0.c.b16.end [8/8] 0, 128
    %v6387 = vpop.trf.xlu0
    %v6388 = vpop.trf.xlu0
    %v6389 = vpop.trf.xlu0
    %v6390 = vpop.trf.xlu0
    %v6391 = vpop.trf.xlu0
    %v6392 = vpop.trf.xlu0
    %v6393 = vpop.trf.xlu0
    %v6394 = vpop.trf.xlu0
    %6395 = vxpose.xlu0.c.b16.start [1/8] %v2146, 128
    %6396 = vxpose.xlu0.c.b16.cont [2/8] 0, 128
    %6397 = vxpose.xlu0.c.b16.cont [3/8] 0, 128
    %6398 = vxpose.xlu0.c.b16.cont [4/8] 0, 128
    %6399 = vxpose.xlu0.c.b16.cont [5/8] 0, 128
    %6400 = vxpose.xlu0.c.b16.cont [6/8] 0, 128
    %6401 = vxpose.xlu0.c.b16.cont [7/8] 0, 128
    %6402 = vxpose.xlu0.c.b16.end [8/8] 0, 128
    %v6403 = vpop.trf.xlu0
    %v6404 = vpop.trf.xlu0
    %v6405 = vpop.trf.xlu0
    %v6406 = vpop.trf.xlu0
    %v6407 = vpop.trf.xlu0
    %v6408 = vpop.trf.xlu0
    %v6409 = vpop.trf.xlu0
    %v6410 = vpop.trf.xlu0
    %6411 = vxpose.xlu0.c.b16.start [1/8] %v2147, 128
    %6412 = vxpose.xlu0.c.b16.cont [2/8] 0, 128
    %6413 = vxpose.xlu0.c.b16.cont [3/8] 0, 128
    %6414 = vxpose.xlu0.c.b16.cont [4/8] 0, 128
    %6415 = vxpose.xlu0.c.b16.cont [5/8] 0, 128
    %6416 = vxpose.xlu0.c.b16.cont [6/8] 0, 128
    %6417 = vxpose.xlu0.c.b16.cont [7/8] 0, 128
    %6418 = vxpose.xlu0.c.b16.end [8/8] 0, 128
    %v6419 = vpop.trf.xlu0
    %v6420 = vpop.trf.xlu0
    %v6421 = vpop.trf.xlu0
    %v6422 = vpop.trf.xlu0
    %v6423 = vpop.trf.xlu0
    %v6424 = vpop.trf.xlu0
    %v6425 = vpop.trf.xlu0
    %v6426 = vpop.trf.xlu0
    %6427 = vxpose.xlu0.c.b16.start [1/8] %v2148, 128
    %6428 = vxpose.xlu0.c.b16.cont [2/8] 0, 128
    %6429 = vxpose.xlu0.c.b16.cont [3/8] 0, 128
    %6430 = vxpose.xlu0.c.b16.cont [4/8] 0, 128
    %6431 = vxpose.xlu0.c.b16.cont [5/8] 0, 128
    %6432 = vxpose.xlu0.c.b16.cont [6/8] 0, 128
    %6433 = vxpose.xlu0.c.b16.cont [7/8] 0, 128
    %6434 = vxpose.xlu0.c.b16.end [8/8] 0, 128
    %v6435 = vpop.trf.xlu0
    %v6436 = vpop.trf.xlu0
    %v6437 = vpop.trf.xlu0
    %v6438 = vpop.trf.xlu0
    %v6439 = vpop.trf.xlu0
    %v6440 = vpop.trf.xlu0
    %v6441 = vpop.trf.xlu0
    %v6442 = vpop.trf.xlu0
    %6443 = vxpose.xlu0.c.b16.start [1/8] %v2149, 128
    %6444 = vxpose.xlu0.c.b16.cont [2/8] 0, 128
    %6445 = vxpose.xlu0.c.b16.cont [3/8] 0, 128
    %6446 = vxpose.xlu0.c.b16.cont [4/8] 0, 128
    %6447 = vxpose.xlu0.c.b16.cont [5/8] 0, 128
    %6448 = vxpose.xlu0.c.b16.cont [6/8] 0, 128
    %6449 = vxpose.xlu0.c.b16.cont [7/8] 0, 128
    %6450 = vxpose.xlu0.c.b16.end [8/8] 0, 128
    %v6451 = vpop.trf.xlu0
    %v6452 = vpop.trf.xlu0
    %v6453 = vpop.trf.xlu0
    %v6454 = vpop.trf.xlu0
    %v6455 = vpop.trf.xlu0
    %v6456 = vpop.trf.xlu0
    %v6457 = vpop.trf.xlu0
    %v6458 = vpop.trf.xlu0
    %6459 = vxpose.xlu0.c.b16.start [1/8] %v2150, 128
    %6460 = vxpose.xlu0.c.b16.cont [2/8] 0, 128
    %6461 = vxpose.xlu0.c.b16.cont [3/8] 0, 128
    %6462 = vxpose.xlu0.c.b16.cont [4/8] 0, 128
    %6463 = vxpose.xlu0.c.b16.cont [5/8] 0, 128
    %6464 = vxpose.xlu0.c.b16.cont [6/8] 0, 128
    %6465 = vxpose.xlu0.c.b16.cont [7/8] 0, 128
    %6466 = vxpose.xlu0.c.b16.end [8/8] 0, 128
    %v6467 = vpop.trf.xlu0
    %v6468 = vpop.trf.xlu0
    %v6469 = vpop.trf.xlu0
    %v6470 = vpop.trf.xlu0
    %v6471 = vpop.trf.xlu0
    %v6472 = vpop.trf.xlu0
    %v6473 = vpop.trf.xlu0
    %v6474 = vpop.trf.xlu0
    %6475 = vxpose.xlu0.c.b16.start [1/8] %v2151, 128
    %6476 = vxpose.xlu0.c.b16.cont [2/8] 0, 128
    %6477 = vxpose.xlu0.c.b16.cont [3/8] 0, 128
    %6478 = vxpose.xlu0.c.b16.cont [4/8] 0, 128
    %6479 = vxpose.xlu0.c.b16.cont [5/8] 0, 128
    %6480 = vxpose.xlu0.c.b16.cont [6/8] 0, 128
    %6481 = vxpose.xlu0.c.b16.cont [7/8] 0, 128
    %6482 = vxpose.xlu0.c.b16.end [8/8] 0, 128
    %v6483 = vpop.trf.xlu0
    %v6484 = vpop.trf.xlu0
    %v6485 = vpop.trf.xlu0
    %v6486 = vpop.trf.xlu0
    %v6487 = vpop.trf.xlu0
    %v6488 = vpop.trf.xlu0
    %v6489 = vpop.trf.xlu0
    %v6490 = vpop.trf.xlu0
    %6491 = vxpose.xlu0.c.b16.start [1/8] %v2152, 128
    %6492 = vxpose.xlu0.c.b16.cont [2/8] 0, 128
    %6493 = vxpose.xlu0.c.b16.cont [3/8] 0, 128
    %6494 = vxpose.xlu0.c.b16.cont [4/8] 0, 128
    %6495 = vxpose.xlu0.c.b16.cont [5/8] 0, 128
    %6496 = vxpose.xlu0.c.b16.cont [6/8] 0, 128
    %6497 = vxpose.xlu0.c.b16.cont [7/8] 0, 128
    %6498 = vxpose.xlu0.c.b16.end [8/8] 0, 128
    %v6499 = vpop.trf.xlu0
    %v6500 = vpop.trf.xlu0
    %v6501 = vpop.trf.xlu0
    %v6502 = vpop.trf.xlu0
    %v6503 = vpop.trf.xlu0
    %v6504 = vpop.trf.xlu0
    %v6505 = vpop.trf.xlu0
    %v6506 = vpop.trf.xlu0
    %6507 = vxpose.xlu0.c.b16.start [1/8] %v2153, 128
    %6508 = vxpose.xlu0.c.b16.cont [2/8] 0, 128
    %6509 = vxpose.xlu0.c.b16.cont [3/8] 0, 128
    %6510 = vxpose.xlu0.c.b16.cont [4/8] 0, 128
    %6511 = vxpose.xlu0.c.b16.cont [5/8] 0, 128
    %6512 = vxpose.xlu0.c.b16.cont [6/8] 0, 128
    %6513 = vxpose.xlu0.c.b16.cont [7/8] 0, 128
    %6514 = vxpose.xlu0.c.b16.end [8/8] 0, 128
    %v6515 = vpop.trf.xlu0
    %v6516 = vpop.trf.xlu0
    %v6517 = vpop.trf.xlu0
    %v6518 = vpop.trf.xlu0
    %v6519 = vpop.trf.xlu0
    %v6520 = vpop.trf.xlu0
    %v6521 = vpop.trf.xlu0
    %v6522 = vpop.trf.xlu0
    %6523 = vxpose.xlu0.c.b16.start [1/8] %v2154, 128
    %6524 = vxpose.xlu0.c.b16.cont [2/8] 0, 128
    %6525 = vxpose.xlu0.c.b16.cont [3/8] 0, 128
    %6526 = vxpose.xlu0.c.b16.cont [4/8] 0, 128
    %6527 = vxpose.xlu0.c.b16.cont [5/8] 0, 128
    %6528 = vxpose.xlu0.c.b16.cont [6/8] 0, 128
    %6529 = vxpose.xlu0.c.b16.cont [7/8] 0, 128
    %6530 = vxpose.xlu0.c.b16.end [8/8] 0, 128
    %v6531 = vpop.trf.xlu0
    %v6532 = vpop.trf.xlu0
    %v6533 = vpop.trf.xlu0
    %v6534 = vpop.trf.xlu0
    %v6535 = vpop.trf.xlu0
    %v6536 = vpop.trf.xlu0
    %v6537 = vpop.trf.xlu0
    %v6538 = vpop.trf.xlu0
    %6539 = vxpose.xlu0.c.b16.start [1/8] %v2155, 128
    %6540 = vxpose.xlu0.c.b16.cont [2/8] 0, 128
    %6541 = vxpose.xlu0.c.b16.cont [3/8] 0, 128
    %6542 = vxpose.xlu0.c.b16.cont [4/8] 0, 128
    %6543 = vxpose.xlu0.c.b16.cont [5/8] 0, 128
    %6544 = vxpose.xlu0.c.b16.cont [6/8] 0, 128
    %6545 = vxpose.xlu0.c.b16.cont [7/8] 0, 128
    %6546 = vxpose.xlu0.c.b16.end [8/8] 0, 128
    %v6547 = vpop.trf.xlu0
    %v6548 = vpop.trf.xlu0
    %v6549 = vpop.trf.xlu0
    %v6550 = vpop.trf.xlu0
    %v6551 = vpop.trf.xlu0
    %v6552 = vpop.trf.xlu0
    %v6553 = vpop.trf.xlu0
    %v6554 = vpop.trf.xlu0
    %6555 = vxpose.xlu0.c.b16.start [1/8] %v2156, 128
    %6556 = vxpose.xlu0.c.b16.cont [2/8] 0, 128
    %6557 = vxpose.xlu0.c.b16.cont [3/8] 0, 128
    %6558 = vxpose.xlu0.c.b16.cont [4/8] 0, 128
    %6559 = vxpose.xlu0.c.b16.cont [5/8] 0, 128
    %6560 = vxpose.xlu0.c.b16.cont [6/8] 0, 128
    %6561 = vxpose.xlu0.c.b16.cont [7/8] 0, 128
    %6562 = vxpose.xlu0.c.b16.end [8/8] 0, 128
    %v6563 = vpop.trf.xlu0
    %v6564 = vpop.trf.xlu0
    %v6565 = vpop.trf.xlu0
    %v6566 = vpop.trf.xlu0
    %v6567 = vpop.trf.xlu0
    %v6568 = vpop.trf.xlu0
    %v6569 = vpop.trf.xlu0
    %v6570 = vpop.trf.xlu0
    %6571 = vxpose.xlu0.c.b16.start [1/8] %v2157, 128
    %6572 = vxpose.xlu0.c.b16.cont [2/8] 0, 128
    %6573 = vxpose.xlu0.c.b16.cont [3/8] 0, 128
    %6574 = vxpose.xlu0.c.b16.cont [4/8] 0, 128
    %6575 = vxpose.xlu0.c.b16.cont [5/8] 0, 128
    %6576 = vxpose.xlu0.c.b16.cont [6/8] 0, 128
    %6577 = vxpose.xlu0.c.b16.cont [7/8] 0, 128
    %6578 = vxpose.xlu0.c.b16.end [8/8] 0, 128
    %v6579 = vpop.trf.xlu0
    %v6580 = vpop.trf.xlu0
    %v6581 = vpop.trf.xlu0
    %v6582 = vpop.trf.xlu0
    %v6583 = vpop.trf.xlu0
    %v6584 = vpop.trf.xlu0
    %v6585 = vpop.trf.xlu0
    %v6586 = vpop.trf.xlu0
    %6587 = vxpose.xlu0.c.b16.start [1/8] %v2158, 128
    %6588 = vxpose.xlu0.c.b16.cont [2/8] 0, 128
    %6589 = vxpose.xlu0.c.b16.cont [3/8] 0, 128
    %6590 = vxpose.xlu0.c.b16.cont [4/8] 0, 128
    %6591 = vxpose.xlu0.c.b16.cont [5/8] 0, 128
    %6592 = vxpose.xlu0.c.b16.cont [6/8] 0, 128
    %6593 = vxpose.xlu0.c.b16.cont [7/8] 0, 128
    %6594 = vxpose.xlu0.c.b16.end [8/8] 0, 128
    %v6595 = vpop.trf.xlu0
    %v6596 = vpop.trf.xlu0
    %v6597 = vpop.trf.xlu0
    %v6598 = vpop.trf.xlu0
    %v6599 = vpop.trf.xlu0
    %v6600 = vpop.trf.xlu0
    %v6601 = vpop.trf.xlu0
    %v6602 = vpop.trf.xlu0
    %6603 = vxpose.xlu0.c.b16.start [1/8] %v2159, 128
    %6604 = vxpose.xlu0.c.b16.cont [2/8] 0, 128
    %6605 = vxpose.xlu0.c.b16.cont [3/8] 0, 128
    %6606 = vxpose.xlu0.c.b16.cont [4/8] 0, 128
    %6607 = vxpose.xlu0.c.b16.cont [5/8] 0, 128
    %6608 = vxpose.xlu0.c.b16.cont [6/8] 0, 128
    %6609 = vxpose.xlu0.c.b16.cont [7/8] 0, 128
    %6610 = vxpose.xlu0.c.b16.end [8/8] 0, 128
    %v6611 = vpop.trf.xlu0
    %v6612 = vpop.trf.xlu0
    %v6613 = vpop.trf.xlu0
    %v6614 = vpop.trf.xlu0
    %v6615 = vpop.trf.xlu0
    %v6616 = vpop.trf.xlu0
    %v6617 = vpop.trf.xlu0
    %v6618 = vpop.trf.xlu0
    %6619 = vxpose.xlu0.c.b16.start [1/8] %v2160, 128
    %6620 = vxpose.xlu0.c.b16.cont [2/8] 0, 128
    %6621 = vxpose.xlu0.c.b16.cont [3/8] 0, 128
    %6622 = vxpose.xlu0.c.b16.cont [4/8] 0, 128
    %6623 = vxpose.xlu0.c.b16.cont [5/8] 0, 128
    %6624 = vxpose.xlu0.c.b16.cont [6/8] 0, 128
    %6625 = vxpose.xlu0.c.b16.cont [7/8] 0, 128
    %6626 = vxpose.xlu0.c.b16.end [8/8] 0, 128
    %v6627 = vpop.trf.xlu0
    %v6628 = vpop.trf.xlu0
    %v6629 = vpop.trf.xlu0
    %v6630 = vpop.trf.xlu0
    %v6631 = vpop.trf.xlu0
    %v6632 = vpop.trf.xlu0
    %v6633 = vpop.trf.xlu0
    %v6634 = vpop.trf.xlu0
    %6635 = vxpose.xlu0.c.b16.start [1/8] %v2161, 128
    %6636 = vxpose.xlu0.c.b16.cont [2/8] 0, 128
    %6637 = vxpose.xlu0.c.b16.cont [3/8] 0, 128
    %6638 = vxpose.xlu0.c.b16.cont [4/8] 0, 128
    %6639 = vxpose.xlu0.c.b16.cont [5/8] 0, 128
    %6640 = vxpose.xlu0.c.b16.cont [6/8] 0, 128
    %6641 = vxpose.xlu0.c.b16.cont [7/8] 0, 128
    %6642 = vxpose.xlu0.c.b16.end [8/8] 0, 128
    %v6643 = vpop.trf.xlu0
    %v6644 = vpop.trf.xlu0
    %v6645 = vpop.trf.xlu0
    %v6646 = vpop.trf.xlu0
    %v6647 = vpop.trf.xlu0
    %v6648 = vpop.trf.xlu0
    %v6649 = vpop.trf.xlu0
    %v6650 = vpop.trf.xlu0
    %v6653 = vpack.i.b16 %v6035, %v6019
    %v6655 = vshrl.u32 %v6019, 16
    %v6656 = vshrl.u32 %v6035, 16
    %v6657 = vpack.i.b16 %v6656, %v6655
    %v6661 = vpack.i.b16 %v6067, %v6051
    %v6663 = vshrl.u32 %v6051, 16
    %v6664 = vshrl.u32 %v6067, 16
    %v6665 = vpack.i.b16 %v6664, %v6663
    %v6669 = vpack.i.b16 %v6099, %v6083
    %v6671 = vshrl.u32 %v6083, 16
    %v6672 = vshrl.u32 %v6099, 16
    %v6673 = vpack.i.b16 %v6672, %v6671
    %v6677 = vpack.i.b16 %v6131, %v6115
    %v6679 = vshrl.u32 %v6115, 16
    %v6680 = vshrl.u32 %v6131, 16
    %v6681 = vpack.i.b16 %v6680, %v6679
    %v6685 = vpack.i.b16 %v6163, %v6147
    %v6687 = vshrl.u32 %v6147, 16
    %v6688 = vshrl.u32 %v6163, 16
    %v6689 = vpack.i.b16 %v6688, %v6687
    %v6693 = vpack.i.b16 %v6195, %v6179
    %v6695 = vshrl.u32 %v6179, 16
    %v6696 = vshrl.u32 %v6195, 16
    %v6697 = vpack.i.b16 %v6696, %v6695
    %v6701 = vpack.i.b16 %v6227, %v6211
    %v6703 = vshrl.u32 %v6211, 16
    %v6704 = vshrl.u32 %v6227, 16
    %v6705 = vpack.i.b16 %v6704, %v6703
    %v6709 = vpack.i.b16 %v6259, %v6243
    %v6711 = vshrl.u32 %v6243, 16
    %v6712 = vshrl.u32 %v6259, 16
    %v6713 = vpack.i.b16 %v6712, %v6711
    %v6717 = vpack.i.b16 %v6291, %v6275
    %v6719 = vshrl.u32 %v6275, 16
    %v6720 = vshrl.u32 %v6291, 16
    %v6721 = vpack.i.b16 %v6720, %v6719
    %v6725 = vpack.i.b16 %v6323, %v6307
    %v6727 = vshrl.u32 %v6307, 16
    %v6728 = vshrl.u32 %v6323, 16
    %v6729 = vpack.i.b16 %v6728, %v6727
    %v6733 = vpack.i.b16 %v6355, %v6339
    %v6735 = vshrl.u32 %v6339, 16
    %v6736 = vshrl.u32 %v6355, 16
    %v6737 = vpack.i.b16 %v6736, %v6735
    %v6741 = vpack.i.b16 %v6387, %v6371
    %v6743 = vshrl.u32 %v6371, 16
    %v6744 = vshrl.u32 %v6387, 16
    %v6745 = vpack.i.b16 %v6744, %v6743
    %v6749 = vpack.i.b16 %v6419, %v6403
    %v6751 = vshrl.u32 %v6403, 16
    %v6752 = vshrl.u32 %v6419, 16
    %v6753 = vpack.i.b16 %v6752, %v6751
    %v6757 = vpack.i.b16 %v6451, %v6435
    %v6759 = vshrl.u32 %v6435, 16
    %v6760 = vshrl.u32 %v6451, 16
    %v6761 = vpack.i.b16 %v6760, %v6759
    %v6765 = vpack.i.b16 %v6483, %v6467
    %v6767 = vshrl.u32 %v6467, 16
    %v6768 = vshrl.u32 %v6483, 16
    %v6769 = vpack.i.b16 %v6768, %v6767
    %v6773 = vpack.i.b16 %v6515, %v6499
    %v6775 = vshrl.u32 %v6499, 16
    %v6776 = vshrl.u32 %v6515, 16
    %v6777 = vpack.i.b16 %v6776, %v6775
    %v6781 = vpack.i.b16 %v6547, %v6531
    %v6783 = vshrl.u32 %v6531, 16
    %v6784 = vshrl.u32 %v6547, 16
    %v6785 = vpack.i.b16 %v6784, %v6783
    %v6789 = vpack.i.b16 %v6579, %v6563
    %v6791 = vshrl.u32 %v6563, 16
    %v6792 = vshrl.u32 %v6579, 16
    %v6793 = vpack.i.b16 %v6792, %v6791
    %v6797 = vpack.i.b16 %v6611, %v6595
    %v6799 = vshrl.u32 %v6595, 16
    %v6800 = vshrl.u32 %v6611, 16
    %v6801 = vpack.i.b16 %v6800, %v6799
    %v6805 = vpack.i.b16 %v6643, %v6627
    %v6807 = vshrl.u32 %v6627, 16
    %v6808 = vshrl.u32 %v6643, 16
    %v6809 = vpack.i.b16 %v6808, %v6807
    %v6813 = vpack.i.b16 %v6036, %v6020
    %v6815 = vshrl.u32 %v6020, 16
    %v6816 = vshrl.u32 %v6036, 16
    %v6817 = vpack.i.b16 %v6816, %v6815
    %v6821 = vpack.i.b16 %v6068, %v6052
    %v6823 = vshrl.u32 %v6052, 16
    %v6824 = vshrl.u32 %v6068, 16
    %v6825 = vpack.i.b16 %v6824, %v6823
    %v6829 = vpack.i.b16 %v6100, %v6084
    %v6831 = vshrl.u32 %v6084, 16
    %v6832 = vshrl.u32 %v6100, 16
    %v6833 = vpack.i.b16 %v6832, %v6831
    %v6837 = vpack.i.b16 %v6132, %v6116
    %v6839 = vshrl.u32 %v6116, 16
    %v6840 = vshrl.u32 %v6132, 16
    %v6841 = vpack.i.b16 %v6840, %v6839
    %v6845 = vpack.i.b16 %v6164, %v6148
    %v6847 = vshrl.u32 %v6148, 16
    %v6848 = vshrl.u32 %v6164, 16
    %v6849 = vpack.i.b16 %v6848, %v6847
    %v6853 = vpack.i.b16 %v6196, %v6180
    %v6855 = vshrl.u32 %v6180, 16
    %v6856 = vshrl.u32 %v6196, 16
    %v6857 = vpack.i.b16 %v6856, %v6855
    %v6861 = vpack.i.b16 %v6228, %v6212
    %v6863 = vshrl.u32 %v6212, 16
    %v6864 = vshrl.u32 %v6228, 16
    %v6865 = vpack.i.b16 %v6864, %v6863
    %v6869 = vpack.i.b16 %v6260, %v6244
    %v6871 = vshrl.u32 %v6244, 16
    %v6872 = vshrl.u32 %v6260, 16
    %v6873 = vpack.i.b16 %v6872, %v6871
    %v6877 = vpack.i.b16 %v6292, %v6276
    %v6879 = vshrl.u32 %v6276, 16
    %v6880 = vshrl.u32 %v6292, 16
    %v6881 = vpack.i.b16 %v6880, %v6879
    %v6885 = vpack.i.b16 %v6324, %v6308
    %v6887 = vshrl.u32 %v6308, 16
    %v6888 = vshrl.u32 %v6324, 16
    %v6889 = vpack.i.b16 %v6888, %v6887
    %v6893 = vpack.i.b16 %v6356, %v6340
    %v6895 = vshrl.u32 %v6340, 16
    %v6896 = vshrl.u32 %v6356, 16
    %v6897 = vpack.i.b16 %v6896, %v6895
    %v6901 = vpack.i.b16 %v6388, %v6372
    %v6903 = vshrl.u32 %v6372, 16
    %v6904 = vshrl.u32 %v6388, 16
    %v6905 = vpack.i.b16 %v6904, %v6903
    %v6909 = vpack.i.b16 %v6420, %v6404
    %v6911 = vshrl.u32 %v6404, 16
    %v6912 = vshrl.u32 %v6420, 16
    %v6913 = vpack.i.b16 %v6912, %v6911
    %v6917 = vpack.i.b16 %v6452, %v6436
    %v6919 = vshrl.u32 %v6436, 16
    %v6920 = vshrl.u32 %v6452, 16
    %v6921 = vpack.i.b16 %v6920, %v6919
    %v6925 = vpack.i.b16 %v6484, %v6468
    %v6927 = vshrl.u32 %v6468, 16
    %v6928 = vshrl.u32 %v6484, 16
    %v6929 = vpack.i.b16 %v6928, %v6927
    %v6933 = vpack.i.b16 %v6516, %v6500
    %v6935 = vshrl.u32 %v6500, 16
    %v6936 = vshrl.u32 %v6516, 16
    %v6937 = vpack.i.b16 %v6936, %v6935
    %v6941 = vpack.i.b16 %v6548, %v6532
    %v6943 = vshrl.u32 %v6532, 16
    %v6944 = vshrl.u32 %v6548, 16
    %v6945 = vpack.i.b16 %v6944, %v6943
    %v6949 = vpack.i.b16 %v6580, %v6564
    %v6951 = vshrl.u32 %v6564, 16
    %v6952 = vshrl.u32 %v6580, 16
    %v6953 = vpack.i.b16 %v6952, %v6951
    %v6957 = vpack.i.b16 %v6612, %v6596
    %v6959 = vshrl.u32 %v6596, 16
    %v6960 = vshrl.u32 %v6612, 16
    %v6961 = vpack.i.b16 %v6960, %v6959
    %v6965 = vpack.i.b16 %v6644, %v6628
    %v6967 = vshrl.u32 %v6628, 16
    %v6968 = vshrl.u32 %v6644, 16
    %v6969 = vpack.i.b16 %v6968, %v6967
    %v6971 = vcombine.low %v6653, %v6669
    %v6972 = vcombine.high %v6653, %v6669
    %v6974 = vunpack.c.l.s4 1983009808
    %v6975 = vunpack.c.0.s8 %v6974
    %v6976 = vlaneseq
    %v6977 = vshrl.u32 %v6976, 7
    %v6978 = vsub.s32 %v6975, %v6977
    %v6979 = vrot.slane %v6971, %v6978
    %v6981 = vunpack.c.l.s4 1983009808
    %v6982 = vunpack.c.0.s8 %v6981
    %v6983 = vlaneseq
    %v6984 = vshrl.u32 %v6983, 7
    %v6985 = vsub.s32 %v6982, %v6984
    %v6986 = vrot.slane %v6972, %v6985
    %v6987 = vcombine.low %v6661, %v6677
    %v6988 = vcombine.high %v6661, %v6677
    %v6990 = vunpack.c.l.s4 1983009808
    %v6991 = vunpack.c.0.s8 %v6990
    %v6992 = vlaneseq
    %v6993 = vshrl.u32 %v6992, 7
    %v6994 = vsub.s32 %v6991, %v6993
    %v6995 = vrot.slane %v6987, %v6994
    %v6997 = vunpack.c.l.s4 1983009808
    %v6998 = vunpack.c.0.s8 %v6997
    %v6999 = vlaneseq
    %v7000 = vshrl.u32 %v6999, 7
    %v7001 = vsub.s32 %v6998, %v7000
    %v7002 = vrot.slane %v6988, %v7001
    %v7003 = vcombine.low %v6685, %v6701
    %v7004 = vcombine.high %v6685, %v6701
    %v7006 = vunpack.c.l.s4 1983009808
    %v7007 = vunpack.c.0.s8 %v7006
    %v7008 = vlaneseq
    %v7009 = vshrl.u32 %v7008, 7
    %v7010 = vsub.s32 %v7007, %v7009
    %v7011 = vrot.slane %v7003, %v7010
    %v7013 = vunpack.c.l.s4 1983009808
    %v7014 = vunpack.c.0.s8 %v7013
    %v7015 = vlaneseq
    %v7016 = vshrl.u32 %v7015, 7
    %v7017 = vsub.s32 %v7014, %v7016
    %v7018 = vrot.slane %v7004, %v7017
    %v7019 = vcombine.low %v6693, %v6709
    %v7020 = vcombine.high %v6693, %v6709
    %v7022 = vunpack.c.l.s4 1983009808
    %v7023 = vunpack.c.0.s8 %v7022
    %v7024 = vlaneseq
    %v7025 = vshrl.u32 %v7024, 7
    %v7026 = vsub.s32 %v7023, %v7025
    %v7027 = vrot.slane %v7019, %v7026
    %v7029 = vunpack.c.l.s4 1983009808
    %v7030 = vunpack.c.0.s8 %v7029
    %v7031 = vlaneseq
    %v7032 = vshrl.u32 %v7031, 7
    %v7033 = vsub.s32 %v7030, %v7032
    %v7034 = vrot.slane %v7020, %v7033
    %v7035 = vcombine.low %v6979, %v6995
    %v7036 = vcombine.high %v6979, %v6995
    %v7038 = vunpack.c.l.s4 1934713408
    %v7039 = vunpack.c.0.s8 %v7038
    %v7040 = vlaneseq
    %v7041 = vshrl.u32 %v7040, 7
    %v7042 = vsub.s32 %v7039, %v7041
    %v7043 = vrot.slane %v7035, %v7042
    %v7045 = vunpack.c.l.s4 1934713408
    %v7046 = vunpack.c.0.s8 %v7045
    %v7047 = vlaneseq
    %v7048 = vshrl.u32 %v7047, 7
    %v7049 = vsub.s32 %v7046, %v7048
    %v7050 = vrot.slane %v7036, %v7049
    %v7051 = vcombine.low %v6986, %v7002
    %v7052 = vcombine.high %v6986, %v7002
    %v7054 = vunpack.c.l.s4 1934713408
    %v7055 = vunpack.c.0.s8 %v7054
    %v7056 = vlaneseq
    %v7057 = vshrl.u32 %v7056, 7
    %v7058 = vsub.s32 %v7055, %v7057
    %v7059 = vrot.slane %v7051, %v7058
    %v7061 = vunpack.c.l.s4 1934713408
    %v7062 = vunpack.c.0.s8 %v7061
    %v7063 = vlaneseq
    %v7064 = vshrl.u32 %v7063, 7
    %v7065 = vsub.s32 %v7062, %v7064
    %v7066 = vrot.slane %v7052, %v7065
    %v7067 = vcombine.low %v7011, %v7027
    %v7068 = vcombine.high %v7011, %v7027
    %v7070 = vunpack.c.l.s4 1934713408
    %v7071 = vunpack.c.0.s8 %v7070
    %v7072 = vlaneseq
    %v7073 = vshrl.u32 %v7072, 7
    %v7074 = vsub.s32 %v7071, %v7073
    %v7075 = vrot.slane %v7067, %v7074
    %v7077 = vunpack.c.l.s4 1934713408
    %v7078 = vunpack.c.0.s8 %v7077
    %v7079 = vlaneseq
    %v7080 = vshrl.u32 %v7079, 7
    %v7081 = vsub.s32 %v7078, %v7080
    %v7082 = vrot.slane %v7068, %v7081
    %v7083 = vcombine.low %v7018, %v7034
    %v7084 = vcombine.high %v7018, %v7034
    %v7086 = vunpack.c.l.s4 1934713408
    %v7087 = vunpack.c.0.s8 %v7086
    %v7088 = vlaneseq
    %v7089 = vshrl.u32 %v7088, 7
    %v7090 = vsub.s32 %v7087, %v7089
    %v7091 = vrot.slane %v7083, %v7090
    %v7093 = vunpack.c.l.s4 1934713408
    %v7094 = vunpack.c.0.s8 %v7093
    %v7095 = vlaneseq
    %v7096 = vshrl.u32 %v7095, 7
    %v7097 = vsub.s32 %v7094, %v7096
    %v7098 = vrot.slane %v7084, %v7097
    %v7099 = vcombine.low %v7043, %v7075
    %v7100 = vcombine.high %v7043, %v7075
    %v7101 = vcombine.low %v7050, %v7082
    %v7102 = vcombine.high %v7050, %v7082
    %v7103 = vcombine.low %v7059, %v7091
    %v7104 = vcombine.high %v7059, %v7091
    %v7105 = vcombine.low %v7066, %v7098
    %v7106 = vcombine.high %v7066, %v7098
    %v7107 = vcombine.low %v6657, %v6673
    %v7108 = vcombine.high %v6657, %v6673
    %v7110 = vunpack.c.l.s4 1983009808
    %v7111 = vunpack.c.0.s8 %v7110
    %v7112 = vlaneseq
    %v7113 = vshrl.u32 %v7112, 7
    %v7114 = vsub.s32 %v7111, %v7113
    %v7115 = vrot.slane %v7107, %v7114
    %v7117 = vunpack.c.l.s4 1983009808
    %v7118 = vunpack.c.0.s8 %v7117
    %v7119 = vlaneseq
    %v7120 = vshrl.u32 %v7119, 7
    %v7121 = vsub.s32 %v7118, %v7120
    %v7122 = vrot.slane %v7108, %v7121
    %v7123 = vcombine.low %v6665, %v6681
    %v7124 = vcombine.high %v6665, %v6681
    %v7126 = vunpack.c.l.s4 1983009808
    %v7127 = vunpack.c.0.s8 %v7126
    %v7128 = vlaneseq
    %v7129 = vshrl.u32 %v7128, 7
    %v7130 = vsub.s32 %v7127, %v7129
    %v7131 = vrot.slane %v7123, %v7130
    %v7133 = vunpack.c.l.s4 1983009808
    %v7134 = vunpack.c.0.s8 %v7133
    %v7135 = vlaneseq
    %v7136 = vshrl.u32 %v7135, 7
    %v7137 = vsub.s32 %v7134, %v7136
    %v7138 = vrot.slane %v7124, %v7137
    %v7139 = vcombine.low %v6689, %v6705
    %v7140 = vcombine.high %v6689, %v6705
    %v7142 = vunpack.c.l.s4 1983009808
    %v7143 = vunpack.c.0.s8 %v7142
    %v7144 = vlaneseq
    %v7145 = vshrl.u32 %v7144, 7
    %v7146 = vsub.s32 %v7143, %v7145
    %v7147 = vrot.slane %v7139, %v7146
    %v7149 = vunpack.c.l.s4 1983009808
    %v7150 = vunpack.c.0.s8 %v7149
    %v7151 = vlaneseq
    %v7152 = vshrl.u32 %v7151, 7
    %v7153 = vsub.s32 %v7150, %v7152
    %v7154 = vrot.slane %v7140, %v7153
    %v7155 = vcombine.low %v6697, %v6713
    %v7156 = vcombine.high %v6697, %v6713
    %v7158 = vunpack.c.l.s4 1983009808
    %v7159 = vunpack.c.0.s8 %v7158
    %v7160 = vlaneseq
    %v7161 = vshrl.u32 %v7160, 7
    %v7162 = vsub.s32 %v7159, %v7161
    %v7163 = vrot.slane %v7155, %v7162
    %v7165 = vunpack.c.l.s4 1983009808
    %v7166 = vunpack.c.0.s8 %v7165
    %v7167 = vlaneseq
    %v7168 = vshrl.u32 %v7167, 7
    %v7169 = vsub.s32 %v7166, %v7168
    %v7170 = vrot.slane %v7156, %v7169
    %v7171 = vcombine.low %v7115, %v7131
    %v7172 = vcombine.high %v7115, %v7131
    %v7174 = vunpack.c.l.s4 1934713408
    %v7175 = vunpack.c.0.s8 %v7174
    %v7176 = vlaneseq
    %v7177 = vshrl.u32 %v7176, 7
    %v7178 = vsub.s32 %v7175, %v7177
    %v7179 = vrot.slane %v7171, %v7178
    %v7181 = vunpack.c.l.s4 1934713408
    %v7182 = vunpack.c.0.s8 %v7181
    %v7183 = vlaneseq
    %v7184 = vshrl.u32 %v7183, 7
    %v7185 = vsub.s32 %v7182, %v7184
    %v7186 = vrot.slane %v7172, %v7185
    %v7187 = vcombine.low %v7122, %v7138
    %v7188 = vcombine.high %v7122, %v7138
    %v7190 = vunpack.c.l.s4 1934713408
    %v7191 = vunpack.c.0.s8 %v7190
    %v7192 = vlaneseq
    %v7193 = vshrl.u32 %v7192, 7
    %v7194 = vsub.s32 %v7191, %v7193
    %v7195 = vrot.slane %v7187, %v7194
    %v7197 = vunpack.c.l.s4 1934713408
    %v7198 = vunpack.c.0.s8 %v7197
    %v7199 = vlaneseq
    %v7200 = vshrl.u32 %v7199, 7
    %v7201 = vsub.s32 %v7198, %v7200
    %v7202 = vrot.slane %v7188, %v7201
    %v7203 = vcombine.low %v7147, %v7163
    %v7204 = vcombine.high %v7147, %v7163
    %v7206 = vunpack.c.l.s4 1934713408
    %v7207 = vunpack.c.0.s8 %v7206
    %v7208 = vlaneseq
    %v7209 = vshrl.u32 %v7208, 7
    %v7210 = vsub.s32 %v7207, %v7209
    %v7211 = vrot.slane %v7203, %v7210
    %v7213 = vunpack.c.l.s4 1934713408
    %v7214 = vunpack.c.0.s8 %v7213
    %v7215 = vlaneseq
    %v7216 = vshrl.u32 %v7215, 7
    %v7217 = vsub.s32 %v7214, %v7216
    %v7218 = vrot.slane %v7204, %v7217
    %v7219 = vcombine.low %v7154, %v7170
    %v7220 = vcombine.high %v7154, %v7170
    %v7222 = vunpack.c.l.s4 1934713408
    %v7223 = vunpack.c.0.s8 %v7222
    %v7224 = vlaneseq
    %v7225 = vshrl.u32 %v7224, 7
    %v7226 = vsub.s32 %v7223, %v7225
    %v7227 = vrot.slane %v7219, %v7226
    %v7229 = vunpack.c.l.s4 1934713408
    %v7230 = vunpack.c.0.s8 %v7229
    %v7231 = vlaneseq
    %v7232 = vshrl.u32 %v7231, 7
    %v7233 = vsub.s32 %v7230, %v7232
    %v7234 = vrot.slane %v7220, %v7233
    %v7235 = vcombine.low %v7179, %v7211
    %v7236 = vcombine.high %v7179, %v7211
    %v7237 = vcombine.low %v7186, %v7218
    %v7238 = vcombine.high %v7186, %v7218
    %v7239 = vcombine.low %v7195, %v7227
    %v7240 = vcombine.high %v7195, %v7227
    %v7241 = vcombine.low %v7202, %v7234
    %v7242 = vcombine.high %v7202, %v7234
    %v7243 = vcombine.low %v6717, %v6733
    %v7244 = vcombine.high %v6717, %v6733
    %v7246 = vunpack.c.l.s4 1983009808
    %v7247 = vunpack.c.0.s8 %v7246
    %v7248 = vlaneseq
    %v7249 = vshrl.u32 %v7248, 7
    %v7250 = vsub.s32 %v7247, %v7249
    %v7251 = vrot.slane %v7243, %v7250
    %v7253 = vunpack.c.l.s4 1983009808
    %v7254 = vunpack.c.0.s8 %v7253
    %v7255 = vlaneseq
    %v7256 = vshrl.u32 %v7255, 7
    %v7257 = vsub.s32 %v7254, %v7256
    %v7258 = vrot.slane %v7244, %v7257
    %v7259 = vcombine.low %v6725, %v6741
    %v7260 = vcombine.high %v6725, %v6741
    %v7262 = vunpack.c.l.s4 1983009808
    %v7263 = vunpack.c.0.s8 %v7262
    %v7264 = vlaneseq
    %v7265 = vshrl.u32 %v7264, 7
    %v7266 = vsub.s32 %v7263, %v7265
    %v7267 = vrot.slane %v7259, %v7266
    %v7269 = vunpack.c.l.s4 1983009808
    %v7270 = vunpack.c.0.s8 %v7269
    %v7271 = vlaneseq
    %v7272 = vshrl.u32 %v7271, 7
    %v7273 = vsub.s32 %v7270, %v7272
    %v7274 = vrot.slane %v7260, %v7273
    %v7275 = vcombine.low %v6749, %v6765
    %v7276 = vcombine.high %v6749, %v6765
    %v7278 = vunpack.c.l.s4 1983009808
    %v7279 = vunpack.c.0.s8 %v7278
    %v7280 = vlaneseq
    %v7281 = vshrl.u32 %v7280, 7
    %v7282 = vsub.s32 %v7279, %v7281
    %v7283 = vrot.slane %v7275, %v7282
    %v7285 = vunpack.c.l.s4 1983009808
    %v7286 = vunpack.c.0.s8 %v7285
    %v7287 = vlaneseq
    %v7288 = vshrl.u32 %v7287, 7
    %v7289 = vsub.s32 %v7286, %v7288
    %v7290 = vrot.slane %v7276, %v7289
    %v7291 = vcombine.low %v6757, %v6773
    %v7292 = vcombine.high %v6757, %v6773
    %v7294 = vunpack.c.l.s4 1983009808
    %v7295 = vunpack.c.0.s8 %v7294
    %v7296 = vlaneseq
    %v7297 = vshrl.u32 %v7296, 7
    %v7298 = vsub.s32 %v7295, %v7297
    %v7299 = vrot.slane %v7291, %v7298
    %v7301 = vunpack.c.l.s4 1983009808
    %v7302 = vunpack.c.0.s8 %v7301
    %v7303 = vlaneseq
    %v7304 = vshrl.u32 %v7303, 7
    %v7305 = vsub.s32 %v7302, %v7304
    %v7306 = vrot.slane %v7292, %v7305
    %v7307 = vcombine.low %v7251, %v7267
    %v7308 = vcombine.high %v7251, %v7267
    %v7310 = vunpack.c.l.s4 1934713408
    %v7311 = vunpack.c.0.s8 %v7310
    %v7312 = vlaneseq
    %v7313 = vshrl.u32 %v7312, 7
    %v7314 = vsub.s32 %v7311, %v7313
    %v7315 = vrot.slane %v7307, %v7314
    %v7317 = vunpack.c.l.s4 1934713408
    %v7318 = vunpack.c.0.s8 %v7317
    %v7319 = vlaneseq
    %v7320 = vshrl.u32 %v7319, 7
    %v7321 = vsub.s32 %v7318, %v7320
    %v7322 = vrot.slane %v7308, %v7321
    %v7323 = vcombine.low %v7258, %v7274
    %v7324 = vcombine.high %v7258, %v7274
    %v7326 = vunpack.c.l.s4 1934713408
    %v7327 = vunpack.c.0.s8 %v7326
    %v7328 = vlaneseq
    %v7329 = vshrl.u32 %v7328, 7
    %v7330 = vsub.s32 %v7327, %v7329
    %v7331 = vrot.slane %v7323, %v7330
    %v7333 = vunpack.c.l.s4 1934713408
    %v7334 = vunpack.c.0.s8 %v7333
    %v7335 = vlaneseq
    %v7336 = vshrl.u32 %v7335, 7
    %v7337 = vsub.s32 %v7334, %v7336
    %v7338 = vrot.slane %v7324, %v7337
    %v7339 = vcombine.low %v7283, %v7299
    %v7340 = vcombine.high %v7283, %v7299
    %v7342 = vunpack.c.l.s4 1934713408
    %v7343 = vunpack.c.0.s8 %v7342
    %v7344 = vlaneseq
    %v7345 = vshrl.u32 %v7344, 7
    %v7346 = vsub.s32 %v7343, %v7345
    %v7347 = vrot.slane %v7339, %v7346
    %v7349 = vunpack.c.l.s4 1934713408
    %v7350 = vunpack.c.0.s8 %v7349
    %v7351 = vlaneseq
    %v7352 = vshrl.u32 %v7351, 7
    %v7353 = vsub.s32 %v7350, %v7352
    %v7354 = vrot.slane %v7340, %v7353
    %v7355 = vcombine.low %v7290, %v7306
    %v7356 = vcombine.high %v7290, %v7306
    %v7358 = vunpack.c.l.s4 1934713408
    %v7359 = vunpack.c.0.s8 %v7358
    %v7360 = vlaneseq
    %v7361 = vshrl.u32 %v7360, 7
    %v7362 = vsub.s32 %v7359, %v7361
    %v7363 = vrot.slane %v7355, %v7362
    %v7365 = vunpack.c.l.s4 1934713408
    %v7366 = vunpack.c.0.s8 %v7365
    %v7367 = vlaneseq
    %v7368 = vshrl.u32 %v7367, 7
    %v7369 = vsub.s32 %v7366, %v7368
    %v7370 = vrot.slane %v7356, %v7369
    %v7371 = vcombine.low %v7315, %v7347
    %v7372 = vcombine.high %v7315, %v7347
    %v7373 = vcombine.low %v7322, %v7354
    %v7374 = vcombine.high %v7322, %v7354
    %v7375 = vcombine.low %v7331, %v7363
    %v7376 = vcombine.high %v7331, %v7363
    %v7377 = vcombine.low %v7338, %v7370
    %v7378 = vcombine.high %v7338, %v7370
    %v7379 = vcombine.low %v6721, %v6737
    %v7380 = vcombine.high %v6721, %v6737
    %v7382 = vunpack.c.l.s4 1983009808
    %v7383 = vunpack.c.0.s8 %v7382
    %v7384 = vlaneseq
    %v7385 = vshrl.u32 %v7384, 7
    %v7386 = vsub.s32 %v7383, %v7385
    %v7387 = vrot.slane %v7379, %v7386
    %v7389 = vunpack.c.l.s4 1983009808
    %v7390 = vunpack.c.0.s8 %v7389
    %v7391 = vlaneseq
    %v7392 = vshrl.u32 %v7391, 7
    %v7393 = vsub.s32 %v7390, %v7392
    %v7394 = vrot.slane %v7380, %v7393
    %v7395 = vcombine.low %v6729, %v6745
    %v7396 = vcombine.high %v6729, %v6745
    %v7398 = vunpack.c.l.s4 1983009808
    %v7399 = vunpack.c.0.s8 %v7398
    %v7400 = vlaneseq
    %v7401 = vshrl.u32 %v7400, 7
    %v7402 = vsub.s32 %v7399, %v7401
    %v7403 = vrot.slane %v7395, %v7402
    %v7405 = vunpack.c.l.s4 1983009808
    %v7406 = vunpack.c.0.s8 %v7405
    %v7407 = vlaneseq
    %v7408 = vshrl.u32 %v7407, 7
    %v7409 = vsub.s32 %v7406, %v7408
    %v7410 = vrot.slane %v7396, %v7409
    %v7411 = vcombine.low %v6753, %v6769
    %v7412 = vcombine.high %v6753, %v6769
    %v7414 = vunpack.c.l.s4 1983009808
    %v7415 = vunpack.c.0.s8 %v7414
    %v7416 = vlaneseq
    %v7417 = vshrl.u32 %v7416, 7
    %v7418 = vsub.s32 %v7415, %v7417
    %v7419 = vrot.slane %v7411, %v7418
    %v7421 = vunpack.c.l.s4 1983009808
    %v7422 = vunpack.c.0.s8 %v7421
    %v7423 = vlaneseq
    %v7424 = vshrl.u32 %v7423, 7
    %v7425 = vsub.s32 %v7422, %v7424
    %v7426 = vrot.slane %v7412, %v7425
    %v7427 = vcombine.low %v6761, %v6777
    %v7428 = vcombine.high %v6761, %v6777
    %v7430 = vunpack.c.l.s4 1983009808
    %v7431 = vunpack.c.0.s8 %v7430
    %v7432 = vlaneseq
    %v7433 = vshrl.u32 %v7432, 7
    %v7434 = vsub.s32 %v7431, %v7433
    %v7435 = vrot.slane %v7427, %v7434
    %v7437 = vunpack.c.l.s4 1983009808
    %v7438 = vunpack.c.0.s8 %v7437
    %v7439 = vlaneseq
    %v7440 = vshrl.u32 %v7439, 7
    %v7441 = vsub.s32 %v7438, %v7440
    %v7442 = vrot.slane %v7428, %v7441
    %v7443 = vcombine.low %v7387, %v7403
    %v7444 = vcombine.high %v7387, %v7403
    %v7446 = vunpack.c.l.s4 1934713408
    %v7447 = vunpack.c.0.s8 %v7446
    %v7448 = vlaneseq
    %v7449 = vshrl.u32 %v7448, 7
    %v7450 = vsub.s32 %v7447, %v7449
    %v7451 = vrot.slane %v7443, %v7450
    %v7453 = vunpack.c.l.s4 1934713408
    %v7454 = vunpack.c.0.s8 %v7453
    %v7455 = vlaneseq
    %v7456 = vshrl.u32 %v7455, 7
    %v7457 = vsub.s32 %v7454, %v7456
    %v7458 = vrot.slane %v7444, %v7457
    %v7459 = vcombine.low %v7394, %v7410
    %v7460 = vcombine.high %v7394, %v7410
    %v7462 = vunpack.c.l.s4 1934713408
    %v7463 = vunpack.c.0.s8 %v7462
    %v7464 = vlaneseq
    %v7465 = vshrl.u32 %v7464, 7
    %v7466 = vsub.s32 %v7463, %v7465
    %v7467 = vrot.slane %v7459, %v7466
    %v7469 = vunpack.c.l.s4 1934713408
    %v7470 = vunpack.c.0.s8 %v7469
    %v7471 = vlaneseq
    %v7472 = vshrl.u32 %v7471, 7
    %v7473 = vsub.s32 %v7470, %v7472
    %v7474 = vrot.slane %v7460, %v7473
    %v7475 = vcombine.low %v7419, %v7435
    %v7476 = vcombine.high %v7419, %v7435
    %v7478 = vunpack.c.l.s4 1934713408
    %v7479 = vunpack.c.0.s8 %v7478
    %v7480 = vlaneseq
    %v7481 = vshrl.u32 %v7480, 7
    %v7482 = vsub.s32 %v7479, %v7481
    %v7483 = vrot.slane %v7475, %v7482
    %v7485 = vunpack.c.l.s4 1934713408
    %v7486 = vunpack.c.0.s8 %v7485
    %v7487 = vlaneseq
    %v7488 = vshrl.u32 %v7487, 7
    %v7489 = vsub.s32 %v7486, %v7488
    %v7490 = vrot.slane %v7476, %v7489
    %v7491 = vcombine.low %v7426, %v7442
    %v7492 = vcombine.high %v7426, %v7442
    %v7494 = vunpack.c.l.s4 1934713408
    %v7495 = vunpack.c.0.s8 %v7494
    %v7496 = vlaneseq
    %v7497 = vshrl.u32 %v7496, 7
    %v7498 = vsub.s32 %v7495, %v7497
    %v7499 = vrot.slane %v7491, %v7498
    %v7501 = vunpack.c.l.s4 1934713408
    %v7502 = vunpack.c.0.s8 %v7501
    %v7503 = vlaneseq
    %v7504 = vshrl.u32 %v7503, 7
    %v7505 = vsub.s32 %v7502, %v7504
    %v7506 = vrot.slane %v7492, %v7505
    %v7507 = vcombine.low %v7451, %v7483
    %v7508 = vcombine.high %v7451, %v7483
    %v7509 = vcombine.low %v7458, %v7490
    %v7510 = vcombine.high %v7458, %v7490
    %v7511 = vcombine.low %v7467, %v7499
    %v7512 = vcombine.high %v7467, %v7499
    %v7513 = vcombine.low %v7474, %v7506
    %v7514 = vcombine.high %v7474, %v7506
    %v7515 = vcombine.low %v6781, %v6797
    %v7516 = vcombine.high %v6781, %v6797
    %v7518 = vunpack.c.l.s4 1983009808
    %v7519 = vunpack.c.0.s8 %v7518
    %v7520 = vlaneseq
    %v7521 = vshrl.u32 %v7520, 7
    %v7522 = vsub.s32 %v7519, %v7521
    %v7523 = vrot.slane %v7515, %v7522
    %v7525 = vunpack.c.l.s4 1983009808
    %v7526 = vunpack.c.0.s8 %v7525
    %v7527 = vlaneseq
    %v7528 = vshrl.u32 %v7527, 7
    %v7529 = vsub.s32 %v7526, %v7528
    %v7530 = vrot.slane %v7516, %v7529
    %v7531 = vcombine.low %v6789, %v6805
    %v7532 = vcombine.high %v6789, %v6805
    %v7534 = vunpack.c.l.s4 1983009808
    %v7535 = vunpack.c.0.s8 %v7534
    %v7536 = vlaneseq
    %v7537 = vshrl.u32 %v7536, 7
    %v7538 = vsub.s32 %v7535, %v7537
    %v7539 = vrot.slane %v7531, %v7538
    %v7541 = vunpack.c.l.s4 1983009808
    %v7542 = vunpack.c.0.s8 %v7541
    %v7543 = vlaneseq
    %v7544 = vshrl.u32 %v7543, 7
    %v7545 = vsub.s32 %v7542, %v7544
    %v7546 = vrot.slane %v7532, %v7545
    %v7547 = vcombine.low %v7523, %v7539
    %v7548 = vcombine.high %v7523, %v7539
    %v7550 = vunpack.c.l.s4 1934713408
    %v7551 = vunpack.c.0.s8 %v7550
    %v7552 = vlaneseq
    %v7553 = vshrl.u32 %v7552, 7
    %v7554 = vsub.s32 %v7551, %v7553
    %v7555 = vrot.slane %v7547, %v7554
    %v7557 = vunpack.c.l.s4 1934713408
    %v7558 = vunpack.c.0.s8 %v7557
    %v7559 = vlaneseq
    %v7560 = vshrl.u32 %v7559, 7
    %v7561 = vsub.s32 %v7558, %v7560
    %v7562 = vrot.slane %v7548, %v7561
    %v7563 = vcombine.low %v7530, %v7546
    %v7564 = vcombine.high %v7530, %v7546
    %v7566 = vunpack.c.l.s4 1934713408
    %v7567 = vunpack.c.0.s8 %v7566
    %v7568 = vlaneseq
    %v7569 = vshrl.u32 %v7568, 7
    %v7570 = vsub.s32 %v7567, %v7569
    %v7571 = vrot.slane %v7563, %v7570
    %v7573 = vunpack.c.l.s4 1934713408
    %v7574 = vunpack.c.0.s8 %v7573
    %v7575 = vlaneseq
    %v7576 = vshrl.u32 %v7575, 7
    %v7577 = vsub.s32 %v7574, %v7576
    %v7578 = vrot.slane %v7564, %v7577
    %v7579 = vcombine.high %v7555, 0
    %v7580 = vcombine.high %v7562, 0
    %v7581 = vcombine.high %v7571, 0
    %v7582 = vcombine.high %v7578, 0
    %v7583 = vcombine.low %v6785, %v6801
    %v7584 = vcombine.high %v6785, %v6801
    %v7586 = vunpack.c.l.s4 1983009808
    %v7587 = vunpack.c.0.s8 %v7586
    %v7588 = vlaneseq
    %v7589 = vshrl.u32 %v7588, 7
    %v7590 = vsub.s32 %v7587, %v7589
    %v7591 = vrot.slane %v7583, %v7590
    %v7593 = vunpack.c.l.s4 1983009808
    %v7594 = vunpack.c.0.s8 %v7593
    %v7595 = vlaneseq
    %v7596 = vshrl.u32 %v7595, 7
    %v7597 = vsub.s32 %v7594, %v7596
    %v7598 = vrot.slane %v7584, %v7597
    %v7599 = vcombine.low %v6793, %v6809
    %v7600 = vcombine.high %v6793, %v6809
    %v7602 = vunpack.c.l.s4 1983009808
    %v7603 = vunpack.c.0.s8 %v7602
    %v7604 = vlaneseq
    %v7605 = vshrl.u32 %v7604, 7
    %v7606 = vsub.s32 %v7603, %v7605
    %v7607 = vrot.slane %v7599, %v7606
    %v7609 = vunpack.c.l.s4 1983009808
    %v7610 = vunpack.c.0.s8 %v7609
    %v7611 = vlaneseq
    %v7612 = vshrl.u32 %v7611, 7
    %v7613 = vsub.s32 %v7610, %v7612
    %v7614 = vrot.slane %v7600, %v7613
    %v7615 = vcombine.low %v7591, %v7607
    %v7616 = vcombine.high %v7591, %v7607
    %v7618 = vunpack.c.l.s4 1934713408
    %v7619 = vunpack.c.0.s8 %v7618
    %v7620 = vlaneseq
    %v7621 = vshrl.u32 %v7620, 7
    %v7622 = vsub.s32 %v7619, %v7621
    %v7623 = vrot.slane %v7615, %v7622
    %v7625 = vunpack.c.l.s4 1934713408
    %v7626 = vunpack.c.0.s8 %v7625
    %v7627 = vlaneseq
    %v7628 = vshrl.u32 %v7627, 7
    %v7629 = vsub.s32 %v7626, %v7628
    %v7630 = vrot.slane %v7616, %v7629
    %v7631 = vcombine.low %v7598, %v7614
    %v7632 = vcombine.high %v7598, %v7614
    %v7634 = vunpack.c.l.s4 1934713408
    %v7635 = vunpack.c.0.s8 %v7634
    %v7636 = vlaneseq
    %v7637 = vshrl.u32 %v7636, 7
    %v7638 = vsub.s32 %v7635, %v7637
    %v7639 = vrot.slane %v7631, %v7638
    %v7641 = vunpack.c.l.s4 1934713408
    %v7642 = vunpack.c.0.s8 %v7641
    %v7643 = vlaneseq
    %v7644 = vshrl.u32 %v7643, 7
    %v7645 = vsub.s32 %v7642, %v7644
    %v7646 = vrot.slane %v7632, %v7645
    %v7647 = vcombine.high %v7623, 0
    %v7648 = vcombine.high %v7630, 0
    %v7649 = vcombine.high %v7639, 0
    %v7650 = vcombine.high %v7646, 0
    %v7651 = vcombine.low %v6813, %v6829
    %v7652 = vcombine.high %v6813, %v6829
    %v7654 = vunpack.c.l.s4 1983009808
    %v7655 = vunpack.c.0.s8 %v7654
    %v7656 = vlaneseq
    %v7657 = vshrl.u32 %v7656, 7
    %v7658 = vsub.s32 %v7655, %v7657
    %v7659 = vrot.slane %v7651, %v7658
    %v7661 = vunpack.c.l.s4 1983009808
    %v7662 = vunpack.c.0.s8 %v7661
    %v7663 = vlaneseq
    %v7664 = vshrl.u32 %v7663, 7
    %v7665 = vsub.s32 %v7662, %v7664
    %v7666 = vrot.slane %v7652, %v7665
    %v7667 = vcombine.low %v6821, %v6837
    %v7668 = vcombine.high %v6821, %v6837
    %v7670 = vunpack.c.l.s4 1983009808
    %v7671 = vunpack.c.0.s8 %v7670
    %v7672 = vlaneseq
    %v7673 = vshrl.u32 %v7672, 7
    %v7674 = vsub.s32 %v7671, %v7673
    %v7675 = vrot.slane %v7667, %v7674
    %v7677 = vunpack.c.l.s4 1983009808
    %v7678 = vunpack.c.0.s8 %v7677
    %v7679 = vlaneseq
    %v7680 = vshrl.u32 %v7679, 7
    %v7681 = vsub.s32 %v7678, %v7680
    %v7682 = vrot.slane %v7668, %v7681
    %v7683 = vcombine.low %v6845, %v6861
    %v7684 = vcombine.high %v6845, %v6861
    %v7686 = vunpack.c.l.s4 1983009808
    %v7687 = vunpack.c.0.s8 %v7686
    %v7688 = vlaneseq
    %v7689 = vshrl.u32 %v7688, 7
    %v7690 = vsub.s32 %v7687, %v7689
    %v7691 = vrot.slane %v7683, %v7690
    %v7693 = vunpack.c.l.s4 1983009808
    %v7694 = vunpack.c.0.s8 %v7693
    %v7695 = vlaneseq
    %v7696 = vshrl.u32 %v7695, 7
    %v7697 = vsub.s32 %v7694, %v7696
    %v7698 = vrot.slane %v7684, %v7697
    %v7699 = vcombine.low %v6853, %v6869
    %v7700 = vcombine.high %v6853, %v6869
    %v7702 = vunpack.c.l.s4 1983009808
    %v7703 = vunpack.c.0.s8 %v7702
    %v7704 = vlaneseq
    %v7705 = vshrl.u32 %v7704, 7
    %v7706 = vsub.s32 %v7703, %v7705
    %v7707 = vrot.slane %v7699, %v7706
    %v7709 = vunpack.c.l.s4 1983009808
    %v7710 = vunpack.c.0.s8 %v7709
    %v7711 = vlaneseq
    %v7712 = vshrl.u32 %v7711, 7
    %v7713 = vsub.s32 %v7710, %v7712
    %v7714 = vrot.slane %v7700, %v7713
    %v7715 = vcombine.low %v7659, %v7675
    %v7716 = vcombine.high %v7659, %v7675
    %v7718 = vunpack.c.l.s4 1934713408
    %v7719 = vunpack.c.0.s8 %v7718
    %v7720 = vlaneseq
    %v7721 = vshrl.u32 %v7720, 7
    %v7722 = vsub.s32 %v7719, %v7721
    %v7723 = vrot.slane %v7715, %v7722
    %v7725 = vunpack.c.l.s4 1934713408
    %v7726 = vunpack.c.0.s8 %v7725
    %v7727 = vlaneseq
    %v7728 = vshrl.u32 %v7727, 7
    %v7729 = vsub.s32 %v7726, %v7728
    %v7730 = vrot.slane %v7716, %v7729
    %v7731 = vcombine.low %v7666, %v7682
    %v7732 = vcombine.high %v7666, %v7682
    %v7734 = vunpack.c.l.s4 1934713408
    %v7735 = vunpack.c.0.s8 %v7734
    %v7736 = vlaneseq
    %v7737 = vshrl.u32 %v7736, 7
    %v7738 = vsub.s32 %v7735, %v7737
    %v7739 = vrot.slane %v7731, %v7738
    %v7741 = vunpack.c.l.s4 1934713408
    %v7742 = vunpack.c.0.s8 %v7741
    %v7743 = vlaneseq
    %v7744 = vshrl.u32 %v7743, 7
    %v7745 = vsub.s32 %v7742, %v7744
    %v7746 = vrot.slane %v7732, %v7745
    %v7747 = vcombine.low %v7691, %v7707
    %v7748 = vcombine.high %v7691, %v7707
    %v7750 = vunpack.c.l.s4 1934713408
    %v7751 = vunpack.c.0.s8 %v7750
    %v7752 = vlaneseq
    %v7753 = vshrl.u32 %v7752, 7
    %v7754 = vsub.s32 %v7751, %v7753
    %v7755 = vrot.slane %v7747, %v7754
    %v7757 = vunpack.c.l.s4 1934713408
    %v7758 = vunpack.c.0.s8 %v7757
    %v7759 = vlaneseq
    %v7760 = vshrl.u32 %v7759, 7
    %v7761 = vsub.s32 %v7758, %v7760
    %v7762 = vrot.slane %v7748, %v7761
    %v7763 = vcombine.low %v7698, %v7714
    %v7764 = vcombine.high %v7698, %v7714
    %v7766 = vunpack.c.l.s4 1934713408
    %v7767 = vunpack.c.0.s8 %v7766
    %v7768 = vlaneseq
    %v7769 = vshrl.u32 %v7768, 7
    %v7770 = vsub.s32 %v7767, %v7769
    %v7771 = vrot.slane %v7763, %v7770
    %v7773 = vunpack.c.l.s4 1934713408
    %v7774 = vunpack.c.0.s8 %v7773
    %v7775 = vlaneseq
    %v7776 = vshrl.u32 %v7775, 7
    %v7777 = vsub.s32 %v7774, %v7776
    %v7778 = vrot.slane %v7764, %v7777
    %v7779 = vcombine.low %v7723, %v7755
    %v7780 = vcombine.high %v7723, %v7755
    %v7781 = vcombine.low %v7730, %v7762
    %v7782 = vcombine.high %v7730, %v7762
    %v7783 = vcombine.low %v7739, %v7771
    %v7784 = vcombine.high %v7739, %v7771
    %v7785 = vcombine.low %v7746, %v7778
    %v7786 = vcombine.high %v7746, %v7778
    %v7787 = vcombine.low %v6817, %v6833
    %v7788 = vcombine.high %v6817, %v6833
    %v7790 = vunpack.c.l.s4 1983009808
    %v7791 = vunpack.c.0.s8 %v7790
    %v7792 = vlaneseq
    %v7793 = vshrl.u32 %v7792, 7
    %v7794 = vsub.s32 %v7791, %v7793
    %v7795 = vrot.slane %v7787, %v7794
    %v7797 = vunpack.c.l.s4 1983009808
    %v7798 = vunpack.c.0.s8 %v7797
    %v7799 = vlaneseq
    %v7800 = vshrl.u32 %v7799, 7
    %v7801 = vsub.s32 %v7798, %v7800
    %v7802 = vrot.slane %v7788, %v7801
    %v7803 = vcombine.low %v6825, %v6841
    %v7804 = vcombine.high %v6825, %v6841
    %v7806 = vunpack.c.l.s4 1983009808
    %v7807 = vunpack.c.0.s8 %v7806
    %v7808 = vlaneseq
    %v7809 = vshrl.u32 %v7808, 7
    %v7810 = vsub.s32 %v7807, %v7809
    %v7811 = vrot.slane %v7803, %v7810
    %v7813 = vunpack.c.l.s4 1983009808
    %v7814 = vunpack.c.0.s8 %v7813
    %v7815 = vlaneseq
    %v7816 = vshrl.u32 %v7815, 7
    %v7817 = vsub.s32 %v7814, %v7816
    %v7818 = vrot.slane %v7804, %v7817
    %v7819 = vcombine.low %v6849, %v6865
    %v7820 = vcombine.high %v6849, %v6865
    %v7822 = vunpack.c.l.s4 1983009808
    %v7823 = vunpack.c.0.s8 %v7822
    %v7824 = vlaneseq
    %v7825 = vshrl.u32 %v7824, 7
    %v7826 = vsub.s32 %v7823, %v7825
    %v7827 = vrot.slane %v7819, %v7826
    %v7829 = vunpack.c.l.s4 1983009808
    %v7830 = vunpack.c.0.s8 %v7829
    %v7831 = vlaneseq
    %v7832 = vshrl.u32 %v7831, 7
    %v7833 = vsub.s32 %v7830, %v7832
    %v7834 = vrot.slane %v7820, %v7833
    %v7835 = vcombine.low %v6857, %v6873
    %v7836 = vcombine.high %v6857, %v6873
    %v7838 = vunpack.c.l.s4 1983009808
    %v7839 = vunpack.c.0.s8 %v7838
    %v7840 = vlaneseq
    %v7841 = vshrl.u32 %v7840, 7
    %v7842 = vsub.s32 %v7839, %v7841
    %v7843 = vrot.slane %v7835, %v7842
    %v7845 = vunpack.c.l.s4 1983009808
    %v7846 = vunpack.c.0.s8 %v7845
    %v7847 = vlaneseq
    %v7848 = vshrl.u32 %v7847, 7
    %v7849 = vsub.s32 %v7846, %v7848
    %v7850 = vrot.slane %v7836, %v7849
    %v7851 = vcombine.low %v7795, %v7811
    %v7852 = vcombine.high %v7795, %v7811
    %v7854 = vunpack.c.l.s4 1934713408
    %v7855 = vunpack.c.0.s8 %v7854
    %v7856 = vlaneseq
    %v7857 = vshrl.u32 %v7856, 7
    %v7858 = vsub.s32 %v7855, %v7857
    %v7859 = vrot.slane %v7851, %v7858
    %v7861 = vunpack.c.l.s4 1934713408
    %v7862 = vunpack.c.0.s8 %v7861
    %v7863 = vlaneseq
    %v7864 = vshrl.u32 %v7863, 7
    %v7865 = vsub.s32 %v7862, %v7864
    %v7866 = vrot.slane %v7852, %v7865
    %v7867 = vcombine.low %v7802, %v7818
    %v7868 = vcombine.high %v7802, %v7818
    %v7870 = vunpack.c.l.s4 1934713408
    %v7871 = vunpack.c.0.s8 %v7870
    %v7872 = vlaneseq
    %v7873 = vshrl.u32 %v7872, 7
    %v7874 = vsub.s32 %v7871, %v7873
    %v7875 = vrot.slane %v7867, %v7874
    %v7877 = vunpack.c.l.s4 1934713408
    %v7878 = vunpack.c.0.s8 %v7877
    %v7879 = vlaneseq
    %v7880 = vshrl.u32 %v7879, 7
    %v7881 = vsub.s32 %v7878, %v7880
    %v7882 = vrot.slane %v7868, %v7881
    %v7883 = vcombine.low %v7827, %v7843
    %v7884 = vcombine.high %v7827, %v7843
    %v7886 = vunpack.c.l.s4 1934713408
    %v7887 = vunpack.c.0.s8 %v7886
    %v7888 = vlaneseq
    %v7889 = vshrl.u32 %v7888, 7
    %v7890 = vsub.s32 %v7887, %v7889
    %v7891 = vrot.slane %v7883, %v7890
    %v7893 = vunpack.c.l.s4 1934713408
    %v7894 = vunpack.c.0.s8 %v7893
    %v7895 = vlaneseq
    %v7896 = vshrl.u32 %v7895, 7
    %v7897 = vsub.s32 %v7894, %v7896
    %v7898 = vrot.slane %v7884, %v7897
    %v7899 = vcombine.low %v7834, %v7850
    %v7900 = vcombine.high %v7834, %v7850
    %v7902 = vunpack.c.l.s4 1934713408
    %v7903 = vunpack.c.0.s8 %v7902
    %v7904 = vlaneseq
    %v7905 = vshrl.u32 %v7904, 7
    %v7906 = vsub.s32 %v7903, %v7905
    %v7907 = vrot.slane %v7899, %v7906
    %v7909 = vunpack.c.l.s4 1934713408
    %v7910 = vunpack.c.0.s8 %v7909
    %v7911 = vlaneseq
    %v7912 = vshrl.u32 %v7911, 7
    %v7913 = vsub.s32 %v7910, %v7912
    %v7914 = vrot.slane %v7900, %v7913
    %v7915 = vcombine.low %v7859, %v7891
    %v7916 = vcombine.high %v7859, %v7891
    %v7917 = vcombine.low %v7866, %v7898
    %v7918 = vcombine.high %v7866, %v7898
    %v7919 = vcombine.low %v7875, %v7907
    %v7920 = vcombine.high %v7875, %v7907
    %v7921 = vcombine.low %v7882, %v7914
    %v7922 = vcombine.high %v7882, %v7914
    %v7923 = vcombine.low %v6877, %v6893
    %v7924 = vcombine.high %v6877, %v6893
    %v7926 = vunpack.c.l.s4 1983009808
    %v7927 = vunpack.c.0.s8 %v7926
    %v7928 = vlaneseq
    %v7929 = vshrl.u32 %v7928, 7
    %v7930 = vsub.s32 %v7927, %v7929
    %v7931 = vrot.slane %v7923, %v7930
    %v7933 = vunpack.c.l.s4 1983009808
    %v7934 = vunpack.c.0.s8 %v7933
    %v7935 = vlaneseq
    %v7936 = vshrl.u32 %v7935, 7
    %v7937 = vsub.s32 %v7934, %v7936
    %v7938 = vrot.slane %v7924, %v7937
    %v7939 = vcombine.low %v6885, %v6901
    %v7940 = vcombine.high %v6885, %v6901
    %v7942 = vunpack.c.l.s4 1983009808
    %v7943 = vunpack.c.0.s8 %v7942
    %v7944 = vlaneseq
    %v7945 = vshrl.u32 %v7944, 7
    %v7946 = vsub.s32 %v7943, %v7945
    %v7947 = vrot.slane %v7939, %v7946
    %v7949 = vunpack.c.l.s4 1983009808
    %v7950 = vunpack.c.0.s8 %v7949
    %v7951 = vlaneseq
    %v7952 = vshrl.u32 %v7951, 7
    %v7953 = vsub.s32 %v7950, %v7952
    %v7954 = vrot.slane %v7940, %v7953
    %v7955 = vcombine.low %v6909, %v6925
    %v7956 = vcombine.high %v6909, %v6925
    %v7958 = vunpack.c.l.s4 1983009808
    %v7959 = vunpack.c.0.s8 %v7958
    %v7960 = vlaneseq
    %v7961 = vshrl.u32 %v7960, 7
    %v7962 = vsub.s32 %v7959, %v7961
    %v7963 = vrot.slane %v7955, %v7962
    %v7965 = vunpack.c.l.s4 1983009808
    %v7966 = vunpack.c.0.s8 %v7965
    %v7967 = vlaneseq
    %v7968 = vshrl.u32 %v7967, 7
    %v7969 = vsub.s32 %v7966, %v7968
    %v7970 = vrot.slane %v7956, %v7969
    %v7971 = vcombine.low %v6917, %v6933
    %v7972 = vcombine.high %v6917, %v6933
    %v7974 = vunpack.c.l.s4 1983009808
    %v7975 = vunpack.c.0.s8 %v7974
    %v7976 = vlaneseq
    %v7977 = vshrl.u32 %v7976, 7
    %v7978 = vsub.s32 %v7975, %v7977
    %v7979 = vrot.slane %v7971, %v7978
    %v7981 = vunpack.c.l.s4 1983009808
    %v7982 = vunpack.c.0.s8 %v7981
    %v7983 = vlaneseq
    %v7984 = vshrl.u32 %v7983, 7
    %v7985 = vsub.s32 %v7982, %v7984
    %v7986 = vrot.slane %v7972, %v7985
    %v7987 = vcombine.low %v7931, %v7947
    %v7988 = vcombine.high %v7931, %v7947
    %v7990 = vunpack.c.l.s4 1934713408
    %v7991 = vunpack.c.0.s8 %v7990
    %v7992 = vlaneseq
    %v7993 = vshrl.u32 %v7992, 7
    %v7994 = vsub.s32 %v7991, %v7993
    %v7995 = vrot.slane %v7987, %v7994
    %v7997 = vunpack.c.l.s4 1934713408
    %v7998 = vunpack.c.0.s8 %v7997
    %v7999 = vlaneseq
    %v8000 = vshrl.u32 %v7999, 7
    %v8001 = vsub.s32 %v7998, %v8000
    %v8002 = vrot.slane %v7988, %v8001
    %v8003 = vcombine.low %v7938, %v7954
    %v8004 = vcombine.high %v7938, %v7954
    %v8006 = vunpack.c.l.s4 1934713408
    %v8007 = vunpack.c.0.s8 %v8006
    %v8008 = vlaneseq
    %v8009 = vshrl.u32 %v8008, 7
    %v8010 = vsub.s32 %v8007, %v8009
    %v8011 = vrot.slane %v8003, %v8010
    %v8013 = vunpack.c.l.s4 1934713408
    %v8014 = vunpack.c.0.s8 %v8013
    %v8015 = vlaneseq
    %v8016 = vshrl.u32 %v8015, 7
    %v8017 = vsub.s32 %v8014, %v8016
    %v8018 = vrot.slane %v8004, %v8017
    %v8019 = vcombine.low %v7963, %v7979
    %v8020 = vcombine.high %v7963, %v7979
    %v8022 = vunpack.c.l.s4 1934713408
    %v8023 = vunpack.c.0.s8 %v8022
    %v8024 = vlaneseq
    %v8025 = vshrl.u32 %v8024, 7
    %v8026 = vsub.s32 %v8023, %v8025
    %v8027 = vrot.slane %v8019, %v8026
    %v8029 = vunpack.c.l.s4 1934713408
    %v8030 = vunpack.c.0.s8 %v8029
    %v8031 = vlaneseq
    %v8032 = vshrl.u32 %v8031, 7
    %v8033 = vsub.s32 %v8030, %v8032
    %v8034 = vrot.slane %v8020, %v8033
    %v8035 = vcombine.low %v7970, %v7986
    %v8036 = vcombine.high %v7970, %v7986
    %v8038 = vunpack.c.l.s4 1934713408
    %v8039 = vunpack.c.0.s8 %v8038
    %v8040 = vlaneseq
    %v8041 = vshrl.u32 %v8040, 7
    %v8042 = vsub.s32 %v8039, %v8041
    %v8043 = vrot.slane %v8035, %v8042
    %v8045 = vunpack.c.l.s4 1934713408
    %v8046 = vunpack.c.0.s8 %v8045
    %v8047 = vlaneseq
    %v8048 = vshrl.u32 %v8047, 7
    %v8049 = vsub.s32 %v8046, %v8048
    %v8050 = vrot.slane %v8036, %v8049
    %v8051 = vcombine.low %v7995, %v8027
    %v8052 = vcombine.high %v7995, %v8027
    %v8053 = vcombine.low %v8002, %v8034
    %v8054 = vcombine.high %v8002, %v8034
    %v8055 = vcombine.low %v8011, %v8043
    %v8056 = vcombine.high %v8011, %v8043
    %v8057 = vcombine.low %v8018, %v8050
    %v8058 = vcombine.high %v8018, %v8050
    %v8059 = vcombine.low %v6881, %v6897
    %v8060 = vcombine.high %v6881, %v6897
    %v8062 = vunpack.c.l.s4 1983009808
    %v8063 = vunpack.c.0.s8 %v8062
    %v8064 = vlaneseq
    %v8065 = vshrl.u32 %v8064, 7
    %v8066 = vsub.s32 %v8063, %v8065
    %v8067 = vrot.slane %v8059, %v8066
    %v8069 = vunpack.c.l.s4 1983009808
    %v8070 = vunpack.c.0.s8 %v8069
    %v8071 = vlaneseq
    %v8072 = vshrl.u32 %v8071, 7
    %v8073 = vsub.s32 %v8070, %v8072
    %v8074 = vrot.slane %v8060, %v8073
    %v8075 = vcombine.low %v6889, %v6905
    %v8076 = vcombine.high %v6889, %v6905
    %v8078 = vunpack.c.l.s4 1983009808
    %v8079 = vunpack.c.0.s8 %v8078
    %v8080 = vlaneseq
    %v8081 = vshrl.u32 %v8080, 7
    %v8082 = vsub.s32 %v8079, %v8081
    %v8083 = vrot.slane %v8075, %v8082
    %v8085 = vunpack.c.l.s4 1983009808
    %v8086 = vunpack.c.0.s8 %v8085
    %v8087 = vlaneseq
    %v8088 = vshrl.u32 %v8087, 7
    %v8089 = vsub.s32 %v8086, %v8088
    %v8090 = vrot.slane %v8076, %v8089
    %v8091 = vcombine.low %v6913, %v6929
    %v8092 = vcombine.high %v6913, %v6929
    %v8094 = vunpack.c.l.s4 1983009808
    %v8095 = vunpack.c.0.s8 %v8094
    %v8096 = vlaneseq
    %v8097 = vshrl.u32 %v8096, 7
    %v8098 = vsub.s32 %v8095, %v8097
    %v8099 = vrot.slane %v8091, %v8098
    %v8101 = vunpack.c.l.s4 1983009808
    %v8102 = vunpack.c.0.s8 %v8101
    %v8103 = vlaneseq
    %v8104 = vshrl.u32 %v8103, 7
    %v8105 = vsub.s32 %v8102, %v8104
    %v8106 = vrot.slane %v8092, %v8105
    %v8107 = vcombine.low %v6921, %v6937
    %v8108 = vcombine.high %v6921, %v6937
    %v8110 = vunpack.c.l.s4 1983009808
    %v8111 = vunpack.c.0.s8 %v8110
    %v8112 = vlaneseq
    %v8113 = vshrl.u32 %v8112, 7
    %v8114 = vsub.s32 %v8111, %v8113
    %v8115 = vrot.slane %v8107, %v8114
    %v8117 = vunpack.c.l.s4 1983009808
    %v8118 = vunpack.c.0.s8 %v8117
    %v8119 = vlaneseq
    %v8120 = vshrl.u32 %v8119, 7
    %v8121 = vsub.s32 %v8118, %v8120
    %v8122 = vrot.slane %v8108, %v8121
    %v8123 = vcombine.low %v8067, %v8083
    %v8124 = vcombine.high %v8067, %v8083
    %v8126 = vunpack.c.l.s4 1934713408
    %v8127 = vunpack.c.0.s8 %v8126
    %v8128 = vlaneseq
    %v8129 = vshrl.u32 %v8128, 7
    %v8130 = vsub.s32 %v8127, %v8129
    %v8131 = vrot.slane %v8123, %v8130
    %v8133 = vunpack.c.l.s4 1934713408
    %v8134 = vunpack.c.0.s8 %v8133
    %v8135 = vlaneseq
    %v8136 = vshrl.u32 %v8135, 7
    %v8137 = vsub.s32 %v8134, %v8136
    %v8138 = vrot.slane %v8124, %v8137
    %v8139 = vcombine.low %v8074, %v8090
    %v8140 = vcombine.high %v8074, %v8090
    %v8142 = vunpack.c.l.s4 1934713408
    %v8143 = vunpack.c.0.s8 %v8142
    %v8144 = vlaneseq
    %v8145 = vshrl.u32 %v8144, 7
    %v8146 = vsub.s32 %v8143, %v8145
    %v8147 = vrot.slane %v8139, %v8146
    %v8149 = vunpack.c.l.s4 1934713408
    %v8150 = vunpack.c.0.s8 %v8149
    %v8151 = vlaneseq
    %v8152 = vshrl.u32 %v8151, 7
    %v8153 = vsub.s32 %v8150, %v8152
    %v8154 = vrot.slane %v8140, %v8153
    %v8155 = vcombine.low %v8099, %v8115
    %v8156 = vcombine.high %v8099, %v8115
    %v8158 = vunpack.c.l.s4 1934713408
    %v8159 = vunpack.c.0.s8 %v8158
    %v8160 = vlaneseq
    %v8161 = vshrl.u32 %v8160, 7
    %v8162 = vsub.s32 %v8159, %v8161
    %v8163 = vrot.slane %v8155, %v8162
    %v8165 = vunpack.c.l.s4 1934713408
    %v8166 = vunpack.c.0.s8 %v8165
    %v8167 = vlaneseq
    %v8168 = vshrl.u32 %v8167, 7
    %v8169 = vsub.s32 %v8166, %v8168
    %v8170 = vrot.slane %v8156, %v8169
    %v8171 = vcombine.low %v8106, %v8122
    %v8172 = vcombine.high %v8106, %v8122
    %v8174 = vunpack.c.l.s4 1934713408
    %v8175 = vunpack.c.0.s8 %v8174
    %v8176 = vlaneseq
    %v8177 = vshrl.u32 %v8176, 7
    %v8178 = vsub.s32 %v8175, %v8177
    %v8179 = vrot.slane %v8171, %v8178
    %v8181 = vunpack.c.l.s4 1934713408
    %v8182 = vunpack.c.0.s8 %v8181
    %v8183 = vlaneseq
    %v8184 = vshrl.u32 %v8183, 7
    %v8185 = vsub.s32 %v8182, %v8184
    %v8186 = vrot.slane %v8172, %v8185
    %v8187 = vcombine.low %v8131, %v8163
    %v8188 = vcombine.high %v8131, %v8163
    %v8189 = vcombine.low %v8138, %v8170
    %v8190 = vcombine.high %v8138, %v8170
    %v8191 = vcombine.low %v8147, %v8179
    %v8192 = vcombine.high %v8147, %v8179
    %v8193 = vcombine.low %v8154, %v8186
    %v8194 = vcombine.high %v8154, %v8186
    %v8195 = vcombine.low %v6941, %v6957
    %v8196 = vcombine.high %v6941, %v6957
    %v8198 = vunpack.c.l.s4 1983009808
    %v8199 = vunpack.c.0.s8 %v8198
    %v8200 = vlaneseq
    %v8201 = vshrl.u32 %v8200, 7
    %v8202 = vsub.s32 %v8199, %v8201
    %v8203 = vrot.slane %v8195, %v8202
    %v8205 = vunpack.c.l.s4 1983009808
    %v8206 = vunpack.c.0.s8 %v8205
    %v8207 = vlaneseq
    %v8208 = vshrl.u32 %v8207, 7
    %v8209 = vsub.s32 %v8206, %v8208
    %v8210 = vrot.slane %v8196, %v8209
    %v8211 = vcombine.low %v6949, %v6965
    %v8212 = vcombine.high %v6949, %v6965
    %v8214 = vunpack.c.l.s4 1983009808
    %v8215 = vunpack.c.0.s8 %v8214
    %v8216 = vlaneseq
    %v8217 = vshrl.u32 %v8216, 7
    %v8218 = vsub.s32 %v8215, %v8217
    %v8219 = vrot.slane %v8211, %v8218
    %v8221 = vunpack.c.l.s4 1983009808
    %v8222 = vunpack.c.0.s8 %v8221
    %v8223 = vlaneseq
    %v8224 = vshrl.u32 %v8223, 7
    %v8225 = vsub.s32 %v8222, %v8224
    %v8226 = vrot.slane %v8212, %v8225
    %v8227 = vcombine.low %v8203, %v8219
    %v8228 = vcombine.high %v8203, %v8219
    %v8230 = vunpack.c.l.s4 1934713408
    %v8231 = vunpack.c.0.s8 %v8230
    %v8232 = vlaneseq
    %v8233 = vshrl.u32 %v8232, 7
    %v8234 = vsub.s32 %v8231, %v8233
    %v8235 = vrot.slane %v8227, %v8234
    %v8237 = vunpack.c.l.s4 1934713408
    %v8238 = vunpack.c.0.s8 %v8237
    %v8239 = vlaneseq
    %v8240 = vshrl.u32 %v8239, 7
    %v8241 = vsub.s32 %v8238, %v8240
    %v8242 = vrot.slane %v8228, %v8241
    %v8243 = vcombine.low %v8210, %v8226
    %v8244 = vcombine.high %v8210, %v8226
    %v8246 = vunpack.c.l.s4 1934713408
    %v8247 = vunpack.c.0.s8 %v8246
    %v8248 = vlaneseq
    %v8249 = vshrl.u32 %v8248, 7
    %v8250 = vsub.s32 %v8247, %v8249
    %v8251 = vrot.slane %v8243, %v8250
    %v8253 = vunpack.c.l.s4 1934713408
    %v8254 = vunpack.c.0.s8 %v8253
    %v8255 = vlaneseq
    %v8256 = vshrl.u32 %v8255, 7
    %v8257 = vsub.s32 %v8254, %v8256
    %v8258 = vrot.slane %v8244, %v8257
    %v8259 = vcombine.high %v8235, 0
    %v8260 = vcombine.high %v8242, 0
    %v8261 = vcombine.high %v8251, 0
    %v8262 = vcombine.high %v8258, 0
    %v8263 = vcombine.low %v6945, %v6961
    %v8264 = vcombine.high %v6945, %v6961
    %v8266 = vunpack.c.l.s4 1983009808
    %v8267 = vunpack.c.0.s8 %v8266
    %v8268 = vlaneseq
    %v8269 = vshrl.u32 %v8268, 7
    %v8270 = vsub.s32 %v8267, %v8269
    %v8271 = vrot.slane %v8263, %v8270
    %v8273 = vunpack.c.l.s4 1983009808
    %v8274 = vunpack.c.0.s8 %v8273
    %v8275 = vlaneseq
    %v8276 = vshrl.u32 %v8275, 7
    %v8277 = vsub.s32 %v8274, %v8276
    %v8278 = vrot.slane %v8264, %v8277
    %v8279 = vcombine.low %v6953, %v6969
    %v8280 = vcombine.high %v6953, %v6969
    %v8282 = vunpack.c.l.s4 1983009808
    %v8283 = vunpack.c.0.s8 %v8282
    %v8284 = vlaneseq
    %v8285 = vshrl.u32 %v8284, 7
    %v8286 = vsub.s32 %v8283, %v8285
    %v8287 = vrot.slane %v8279, %v8286
    %v8289 = vunpack.c.l.s4 1983009808
    %v8290 = vunpack.c.0.s8 %v8289
    %v8291 = vlaneseq
    %v8292 = vshrl.u32 %v8291, 7
    %v8293 = vsub.s32 %v8290, %v8292
    %v8294 = vrot.slane %v8280, %v8293
    %v8295 = vcombine.low %v8271, %v8287
    %v8296 = vcombine.high %v8271, %v8287
    %v8298 = vunpack.c.l.s4 1934713408
    %v8299 = vunpack.c.0.s8 %v8298
    %v8300 = vlaneseq
    %v8301 = vshrl.u32 %v8300, 7
    %v8302 = vsub.s32 %v8299, %v8301
    %v8303 = vrot.slane %v8295, %v8302
    %v8305 = vunpack.c.l.s4 1934713408
    %v8306 = vunpack.c.0.s8 %v8305
    %v8307 = vlaneseq
    %v8308 = vshrl.u32 %v8307, 7
    %v8309 = vsub.s32 %v8306, %v8308
    %v8310 = vrot.slane %v8296, %v8309
    %v8311 = vcombine.low %v8278, %v8294
    %v8312 = vcombine.high %v8278, %v8294
    %v8314 = vunpack.c.l.s4 1934713408
    %v8315 = vunpack.c.0.s8 %v8314
    %v8316 = vlaneseq
    %v8317 = vshrl.u32 %v8316, 7
    %v8318 = vsub.s32 %v8315, %v8317
    %v8319 = vrot.slane %v8311, %v8318
    %v8321 = vunpack.c.l.s4 1934713408
    %v8322 = vunpack.c.0.s8 %v8321
    %v8323 = vlaneseq
    %v8324 = vshrl.u32 %v8323, 7
    %v8325 = vsub.s32 %v8322, %v8324
    %v8326 = vrot.slane %v8312, %v8325
    %v8327 = vcombine.high %v8303, 0
    %v8328 = vcombine.high %v8310, 0
    %v8329 = vcombine.high %v8319, 0
    %v8330 = vcombine.high %v8326, 0
    %8331 = vxpose.xlu0.c.b16.start [1/8] %v7099, 128
    %8332 = vxpose.xlu0.c.b16.cont [2/8] %v7371, 128
    %8333 = vxpose.xlu0.c.b16.cont [3/8] %v7555, 128
    %8334 = vxpose.xlu0.c.b16.cont [4/8] 0, 128
    %8335 = vxpose.xlu0.c.b16.cont [5/8] 0, 128
    %8336 = vxpose.xlu0.c.b16.cont [6/8] 0, 128
    %8337 = vxpose.xlu0.c.b16.cont [7/8] 0, 128
    %8338 = vxpose.xlu0.c.b16.end [8/8] 0, 128
    %v8339 = vpop.trf.xlu0
    %v8340 = vpop.trf.xlu0
    %v8341 = vpop.trf.xlu0
    %v8342 = vpop.trf.xlu0
    %v8343 = vpop.trf.xlu0
    %v8344 = vpop.trf.xlu0
    %v8345 = vpop.trf.xlu0
    %v8346 = vpop.trf.xlu0
    %8347 = vxpose.xlu0.c.b16.start [1/8] %v7235, 128
    %8348 = vxpose.xlu0.c.b16.cont [2/8] %v7507, 128
    %8349 = vxpose.xlu0.c.b16.cont [3/8] %v7623, 128
    %8350 = vxpose.xlu0.c.b16.cont [4/8] 0, 128
    %8351 = vxpose.xlu0.c.b16.cont [5/8] 0, 128
    %8352 = vxpose.xlu0.c.b16.cont [6/8] 0, 128
    %8353 = vxpose.xlu0.c.b16.cont [7/8] 0, 128
    %8354 = vxpose.xlu0.c.b16.end [8/8] 0, 128
    %v8355 = vpop.trf.xlu0
    %v8356 = vpop.trf.xlu0
    %v8357 = vpop.trf.xlu0
    %v8358 = vpop.trf.xlu0
    %v8359 = vpop.trf.xlu0
    %v8360 = vpop.trf.xlu0
    %v8361 = vpop.trf.xlu0
    %v8362 = vpop.trf.xlu0
    %8363 = vxpose.xlu0.c.b16.start [1/8] %v7100, 128
    %8364 = vxpose.xlu0.c.b16.cont [2/8] %v7372, 128
    %8365 = vxpose.xlu0.c.b16.cont [3/8] %v7579, 128
    %8366 = vxpose.xlu0.c.b16.cont [4/8] 0, 128
    %8367 = vxpose.xlu0.c.b16.cont [5/8] 0, 128
    %8368 = vxpose.xlu0.c.b16.cont [6/8] 0, 128
    %8369 = vxpose.xlu0.c.b16.cont [7/8] 0, 128
    %8370 = vxpose.xlu0.c.b16.end [8/8] 0, 128
    %v8371 = vpop.trf.xlu0
    %v8372 = vpop.trf.xlu0
    %v8373 = vpop.trf.xlu0
    %v8374 = vpop.trf.xlu0
    %v8375 = vpop.trf.xlu0
    %v8376 = vpop.trf.xlu0
    %v8377 = vpop.trf.xlu0
    %v8378 = vpop.trf.xlu0
    %8379 = vxpose.xlu0.c.b16.start [1/8] %v7236, 128
    %8380 = vxpose.xlu0.c.b16.cont [2/8] %v7508, 128
    %8381 = vxpose.xlu0.c.b16.cont [3/8] %v7647, 128
    %8382 = vxpose.xlu0.c.b16.cont [4/8] 0, 128
    %8383 = vxpose.xlu0.c.b16.cont [5/8] 0, 128
    %8384 = vxpose.xlu0.c.b16.cont [6/8] 0, 128
    %8385 = vxpose.xlu0.c.b16.cont [7/8] 0, 128
    %8386 = vxpose.xlu0.c.b16.end [8/8] 0, 128
    %v8387 = vpop.trf.xlu0
    %v8388 = vpop.trf.xlu0
    %v8389 = vpop.trf.xlu0
    %v8390 = vpop.trf.xlu0
    %v8391 = vpop.trf.xlu0
    %v8392 = vpop.trf.xlu0
    %v8393 = vpop.trf.xlu0
    %v8394 = vpop.trf.xlu0
    %8395 = vxpose.xlu0.c.b16.start [1/8] %v7101, 128
    %8396 = vxpose.xlu0.c.b16.cont [2/8] %v7373, 128
    %8397 = vxpose.xlu0.c.b16.cont [3/8] %v7562, 128
    %8398 = vxpose.xlu0.c.b16.cont [4/8] 0, 128
    %8399 = vxpose.xlu0.c.b16.cont [5/8] 0, 128
    %8400 = vxpose.xlu0.c.b16.cont [6/8] 0, 128
    %8401 = vxpose.xlu0.c.b16.cont [7/8] 0, 128
    %8402 = vxpose.xlu0.c.b16.end [8/8] 0, 128
    %v8403 = vpop.trf.xlu0
    %v8404 = vpop.trf.xlu0
    %v8405 = vpop.trf.xlu0
    %v8406 = vpop.trf.xlu0
    %v8407 = vpop.trf.xlu0
    %v8408 = vpop.trf.xlu0
    %v8409 = vpop.trf.xlu0
    %v8410 = vpop.trf.xlu0
    %8411 = vxpose.xlu0.c.b16.start [1/8] %v7237, 128
    %8412 = vxpose.xlu0.c.b16.cont [2/8] %v7509, 128
    %8413 = vxpose.xlu0.c.b16.cont [3/8] %v7630, 128
    %8414 = vxpose.xlu0.c.b16.cont [4/8] 0, 128
    %8415 = vxpose.xlu0.c.b16.cont [5/8] 0, 128
    %8416 = vxpose.xlu0.c.b16.cont [6/8] 0, 128
    %8417 = vxpose.xlu0.c.b16.cont [7/8] 0, 128
    %8418 = vxpose.xlu0.c.b16.end [8/8] 0, 128
    %v8419 = vpop.trf.xlu0
    %v8420 = vpop.trf.xlu0
    %v8421 = vpop.trf.xlu0
    %v8422 = vpop.trf.xlu0
    %v8423 = vpop.trf.xlu0
    %v8424 = vpop.trf.xlu0
    %v8425 = vpop.trf.xlu0
    %v8426 = vpop.trf.xlu0
    %8427 = vxpose.xlu0.c.b16.start [1/8] %v7102, 128
    %8428 = vxpose.xlu0.c.b16.cont [2/8] %v7374, 128
    %8429 = vxpose.xlu0.c.b16.cont [3/8] %v7580, 128
    %8430 = vxpose.xlu0.c.b16.cont [4/8] 0, 128
    %8431 = vxpose.xlu0.c.b16.cont [5/8] 0, 128
    %8432 = vxpose.xlu0.c.b16.cont [6/8] 0, 128
    %8433 = vxpose.xlu0.c.b16.cont [7/8] 0, 128
    %8434 = vxpose.xlu0.c.b16.end [8/8] 0, 128
    %v8435 = vpop.trf.xlu0
    %v8436 = vpop.trf.xlu0
    %v8437 = vpop.trf.xlu0
    %v8438 = vpop.trf.xlu0
    %v8439 = vpop.trf.xlu0
    %v8440 = vpop.trf.xlu0
    %v8441 = vpop.trf.xlu0
    %v8442 = vpop.trf.xlu0
    %8443 = vxpose.xlu0.c.b16.start [1/8] %v7238, 128
    %8444 = vxpose.xlu0.c.b16.cont [2/8] %v7510, 128
    %8445 = vxpose.xlu0.c.b16.cont [3/8] %v7648, 128
    %8446 = vxpose.xlu0.c.b16.cont [4/8] 0, 128
    %8447 = vxpose.xlu0.c.b16.cont [5/8] 0, 128
    %8448 = vxpose.xlu0.c.b16.cont [6/8] 0, 128
    %8449 = vxpose.xlu0.c.b16.cont [7/8] 0, 128
    %8450 = vxpose.xlu0.c.b16.end [8/8] 0, 128
    %v8451 = vpop.trf.xlu0
    %v8452 = vpop.trf.xlu0
    %v8453 = vpop.trf.xlu0
    %v8454 = vpop.trf.xlu0
    %v8455 = vpop.trf.xlu0
    %v8456 = vpop.trf.xlu0
    %v8457 = vpop.trf.xlu0
    %v8458 = vpop.trf.xlu0
    %8459 = vxpose.xlu0.c.b16.start [1/8] %v7103, 128
    %8460 = vxpose.xlu0.c.b16.cont [2/8] %v7375, 128
    %8461 = vxpose.xlu0.c.b16.cont [3/8] %v7571, 128
    %8462 = vxpose.xlu0.c.b16.cont [4/8] 0, 128
    %8463 = vxpose.xlu0.c.b16.cont [5/8] 0, 128
    %8464 = vxpose.xlu0.c.b16.cont [6/8] 0, 128
    %8465 = vxpose.xlu0.c.b16.cont [7/8] 0, 128
    %8466 = vxpose.xlu0.c.b16.end [8/8] 0, 128
    %v8467 = vpop.trf.xlu0
    %v8468 = vpop.trf.xlu0
    %v8469 = vpop.trf.xlu0
    %v8470 = vpop.trf.xlu0
    %v8471 = vpop.trf.xlu0
    %v8472 = vpop.trf.xlu0
    %v8473 = vpop.trf.xlu0
    %v8474 = vpop.trf.xlu0
    %8475 = vxpose.xlu0.c.b16.start [1/8] %v7239, 128
    %8476 = vxpose.xlu0.c.b16.cont [2/8] %v7511, 128
    %8477 = vxpose.xlu0.c.b16.cont [3/8] %v7639, 128
    %8478 = vxpose.xlu0.c.b16.cont [4/8] 0, 128
    %8479 = vxpose.xlu0.c.b16.cont [5/8] 0, 128
    %8480 = vxpose.xlu0.c.b16.cont [6/8] 0, 128
    %8481 = vxpose.xlu0.c.b16.cont [7/8] 0, 128
    %8482 = vxpose.xlu0.c.b16.end [8/8] 0, 128
    %v8483 = vpop.trf.xlu0
    %v8484 = vpop.trf.xlu0
    %v8485 = vpop.trf.xlu0
    %v8486 = vpop.trf.xlu0
    %v8487 = vpop.trf.xlu0
    %v8488 = vpop.trf.xlu0
    %v8489 = vpop.trf.xlu0
    %v8490 = vpop.trf.xlu0
    %8491 = vxpose.xlu0.c.b16.start [1/8] %v7104, 128
    %8492 = vxpose.xlu0.c.b16.cont [2/8] %v7376, 128
    %8493 = vxpose.xlu0.c.b16.cont [3/8] %v7581, 128
    %8494 = vxpose.xlu0.c.b16.cont [4/8] 0, 128
    %8495 = vxpose.xlu0.c.b16.cont [5/8] 0, 128
    %8496 = vxpose.xlu0.c.b16.cont [6/8] 0, 128
    %8497 = vxpose.xlu0.c.b16.cont [7/8] 0, 128
    %8498 = vxpose.xlu0.c.b16.end [8/8] 0, 128
    %v8499 = vpop.trf.xlu0
    %v8500 = vpop.trf.xlu0
    %v8501 = vpop.trf.xlu0
    %v8502 = vpop.trf.xlu0
    %v8503 = vpop.trf.xlu0
    %v8504 = vpop.trf.xlu0
    %v8505 = vpop.trf.xlu0
    %v8506 = vpop.trf.xlu0
    %8507 = vxpose.xlu0.c.b16.start [1/8] %v7240, 128
    %8508 = vxpose.xlu0.c.b16.cont [2/8] %v7512, 128
    %8509 = vxpose.xlu0.c.b16.cont [3/8] %v7649, 128
    %8510 = vxpose.xlu0.c.b16.cont [4/8] 0, 128
    %8511 = vxpose.xlu0.c.b16.cont [5/8] 0, 128
    %8512 = vxpose.xlu0.c.b16.cont [6/8] 0, 128
    %8513 = vxpose.xlu0.c.b16.cont [7/8] 0, 128
    %8514 = vxpose.xlu0.c.b16.end [8/8] 0, 128
    %v8515 = vpop.trf.xlu0
    %v8516 = vpop.trf.xlu0
    %v8517 = vpop.trf.xlu0
    %v8518 = vpop.trf.xlu0
    %v8519 = vpop.trf.xlu0
    %v8520 = vpop.trf.xlu0
    %v8521 = vpop.trf.xlu0
    %v8522 = vpop.trf.xlu0
    %8523 = vxpose.xlu0.c.b16.start [1/8] %v7105, 128
    %8524 = vxpose.xlu0.c.b16.cont [2/8] %v7377, 128
    %8525 = vxpose.xlu0.c.b16.cont [3/8] %v7578, 128
    %8526 = vxpose.xlu0.c.b16.cont [4/8] 0, 128
    %8527 = vxpose.xlu0.c.b16.cont [5/8] 0, 128
    %8528 = vxpose.xlu0.c.b16.cont [6/8] 0, 128
    %8529 = vxpose.xlu0.c.b16.cont [7/8] 0, 128
    %8530 = vxpose.xlu0.c.b16.end [8/8] 0, 128
    %v8531 = vpop.trf.xlu0
    %v8532 = vpop.trf.xlu0
    %v8533 = vpop.trf.xlu0
    %v8534 = vpop.trf.xlu0
    %v8535 = vpop.trf.xlu0
    %v8536 = vpop.trf.xlu0
    %v8537 = vpop.trf.xlu0
    %v8538 = vpop.trf.xlu0
    %8539 = vxpose.xlu0.c.b16.start [1/8] %v7241, 128
    %8540 = vxpose.xlu0.c.b16.cont [2/8] %v7513, 128
    %8541 = vxpose.xlu0.c.b16.cont [3/8] %v7646, 128
    %8542 = vxpose.xlu0.c.b16.cont [4/8] 0, 128
    %8543 = vxpose.xlu0.c.b16.cont [5/8] 0, 128
    %8544 = vxpose.xlu0.c.b16.cont [6/8] 0, 128
    %8545 = vxpose.xlu0.c.b16.cont [7/8] 0, 128
    %8546 = vxpose.xlu0.c.b16.end [8/8] 0, 128
    %v8547 = vpop.trf.xlu0
    %v8548 = vpop.trf.xlu0
    %v8549 = vpop.trf.xlu0
    %v8550 = vpop.trf.xlu0
    %v8551 = vpop.trf.xlu0
    %v8552 = vpop.trf.xlu0
    %v8553 = vpop.trf.xlu0
    %v8554 = vpop.trf.xlu0
    %8555 = vxpose.xlu0.c.b16.start [1/8] %v7106, 128
    %8556 = vxpose.xlu0.c.b16.cont [2/8] %v7378, 128
    %8557 = vxpose.xlu0.c.b16.cont [3/8] %v7582, 128
    %8558 = vxpose.xlu0.c.b16.cont [4/8] 0, 128
    %8559 = vxpose.xlu0.c.b16.cont [5/8] 0, 128
    %8560 = vxpose.xlu0.c.b16.cont [6/8] 0, 128
    %8561 = vxpose.xlu0.c.b16.cont [7/8] 0, 128
    %8562 = vxpose.xlu0.c.b16.end [8/8] 0, 128
    %v8563 = vpop.trf.xlu0
    %v8564 = vpop.trf.xlu0
    %v8565 = vpop.trf.xlu0
    %v8566 = vpop.trf.xlu0
    %v8567 = vpop.trf.xlu0
    %v8568 = vpop.trf.xlu0
    %v8569 = vpop.trf.xlu0
    %v8570 = vpop.trf.xlu0
    %8571 = vxpose.xlu0.c.b16.start [1/8] %v7242, 128
    %8572 = vxpose.xlu0.c.b16.cont [2/8] %v7514, 128
    %8573 = vxpose.xlu0.c.b16.cont [3/8] %v7650, 128
    %8574 = vxpose.xlu0.c.b16.cont [4/8] 0, 128
    %8575 = vxpose.xlu0.c.b16.cont [5/8] 0, 128
    %8576 = vxpose.xlu0.c.b16.cont [6/8] 0, 128
    %8577 = vxpose.xlu0.c.b16.cont [7/8] 0, 128
    %8578 = vxpose.xlu0.c.b16.end [8/8] 0, 128
    %v8579 = vpop.trf.xlu0
    %v8580 = vpop.trf.xlu0
    %v8581 = vpop.trf.xlu0
    %v8582 = vpop.trf.xlu0
    %v8583 = vpop.trf.xlu0
    %v8584 = vpop.trf.xlu0
    %v8585 = vpop.trf.xlu0
    %v8586 = vpop.trf.xlu0
    %8587 = vxpose.xlu0.c.b16.start [1/8] %v7779, 128
    %8588 = vxpose.xlu0.c.b16.cont [2/8] %v8051, 128
    %8589 = vxpose.xlu0.c.b16.cont [3/8] %v8235, 128
    %8590 = vxpose.xlu0.c.b16.cont [4/8] 0, 128
    %8591 = vxpose.xlu0.c.b16.cont [5/8] 0, 128
    %8592 = vxpose.xlu0.c.b16.cont [6/8] 0, 128
    %8593 = vxpose.xlu0.c.b16.cont [7/8] 0, 128
    %8594 = vxpose.xlu0.c.b16.end [8/8] 0, 128
    %v8595 = vpop.trf.xlu0
    %v8596 = vpop.trf.xlu0
    %v8597 = vpop.trf.xlu0
    %v8598 = vpop.trf.xlu0
    %v8599 = vpop.trf.xlu0
    %v8600 = vpop.trf.xlu0
    %v8601 = vpop.trf.xlu0
    %v8602 = vpop.trf.xlu0
    %8603 = vxpose.xlu0.c.b16.start [1/8] %v7915, 128
    %8604 = vxpose.xlu0.c.b16.cont [2/8] %v8187, 128
    %8605 = vxpose.xlu0.c.b16.cont [3/8] %v8303, 128
    %8606 = vxpose.xlu0.c.b16.cont [4/8] 0, 128
    %8607 = vxpose.xlu0.c.b16.cont [5/8] 0, 128
    %8608 = vxpose.xlu0.c.b16.cont [6/8] 0, 128
    %8609 = vxpose.xlu0.c.b16.cont [7/8] 0, 128
    %8610 = vxpose.xlu0.c.b16.end [8/8] 0, 128
    %v8611 = vpop.trf.xlu0
    %v8612 = vpop.trf.xlu0
    %v8613 = vpop.trf.xlu0
    %v8614 = vpop.trf.xlu0
    %v8615 = vpop.trf.xlu0
    %v8616 = vpop.trf.xlu0
    %v8617 = vpop.trf.xlu0
    %v8618 = vpop.trf.xlu0
    %8619 = vxpose.xlu0.c.b16.start [1/8] %v7780, 128
    %8620 = vxpose.xlu0.c.b16.cont [2/8] %v8052, 128
    %8621 = vxpose.xlu0.c.b16.cont [3/8] %v8259, 128
    %8622 = vxpose.xlu0.c.b16.cont [4/8] 0, 128
    %8623 = vxpose.xlu0.c.b16.cont [5/8] 0, 128
    %8624 = vxpose.xlu0.c.b16.cont [6/8] 0, 128
    %8625 = vxpose.xlu0.c.b16.cont [7/8] 0, 128
    %8626 = vxpose.xlu0.c.b16.end [8/8] 0, 128
    %v8627 = vpop.trf.xlu0
    %v8628 = vpop.trf.xlu0
    %v8629 = vpop.trf.xlu0
    %v8630 = vpop.trf.xlu0
    %v8631 = vpop.trf.xlu0
    %v8632 = vpop.trf.xlu0
    %v8633 = vpop.trf.xlu0
    %v8634 = vpop.trf.xlu0
    %8635 = vxpose.xlu0.c.b16.start [1/8] %v7916, 128
    %8636 = vxpose.xlu0.c.b16.cont [2/8] %v8188, 128
    %8637 = vxpose.xlu0.c.b16.cont [3/8] %v8327, 128
    %8638 = vxpose.xlu0.c.b16.cont [4/8] 0, 128
    %8639 = vxpose.xlu0.c.b16.cont [5/8] 0, 128
    %8640 = vxpose.xlu0.c.b16.cont [6/8] 0, 128
    %8641 = vxpose.xlu0.c.b16.cont [7/8] 0, 128
    %8642 = vxpose.xlu0.c.b16.end [8/8] 0, 128
    %v8643 = vpop.trf.xlu0
    %v8644 = vpop.trf.xlu0
    %v8645 = vpop.trf.xlu0
    %v8646 = vpop.trf.xlu0
    %v8647 = vpop.trf.xlu0
    %v8648 = vpop.trf.xlu0
    %v8649 = vpop.trf.xlu0
    %v8650 = vpop.trf.xlu0
    %8651 = vxpose.xlu0.c.b16.start [1/8] %v7781, 128
    %8652 = vxpose.xlu0.c.b16.cont [2/8] %v8053, 128
    %8653 = vxpose.xlu0.c.b16.cont [3/8] %v8242, 128
    %8654 = vxpose.xlu0.c.b16.cont [4/8] 0, 128
    %8655 = vxpose.xlu0.c.b16.cont [5/8] 0, 128
    %8656 = vxpose.xlu0.c.b16.cont [6/8] 0, 128
    %8657 = vxpose.xlu0.c.b16.cont [7/8] 0, 128
    %8658 = vxpose.xlu0.c.b16.end [8/8] 0, 128
    %v8659 = vpop.trf.xlu0
    %v8660 = vpop.trf.xlu0
    %v8661 = vpop.trf.xlu0
    %v8662 = vpop.trf.xlu0
    %v8663 = vpop.trf.xlu0
    %v8664 = vpop.trf.xlu0
    %v8665 = vpop.trf.xlu0
    %v8666 = vpop.trf.xlu0
    %8667 = vxpose.xlu0.c.b16.start [1/8] %v7917, 128
    %8668 = vxpose.xlu0.c.b16.cont [2/8] %v8189, 128
    %8669 = vxpose.xlu0.c.b16.cont [3/8] %v8310, 128
    %8670 = vxpose.xlu0.c.b16.cont [4/8] 0, 128
    %8671 = vxpose.xlu0.c.b16.cont [5/8] 0, 128
    %8672 = vxpose.xlu0.c.b16.cont [6/8] 0, 128
    %8673 = vxpose.xlu0.c.b16.cont [7/8] 0, 128
    %8674 = vxpose.xlu0.c.b16.end [8/8] 0, 128
    %v8675 = vpop.trf.xlu0
    %v8676 = vpop.trf.xlu0
    %v8677 = vpop.trf.xlu0
    %v8678 = vpop.trf.xlu0
    %v8679 = vpop.trf.xlu0
    %v8680 = vpop.trf.xlu0
    %v8681 = vpop.trf.xlu0
    %v8682 = vpop.trf.xlu0
    %8683 = vxpose.xlu0.c.b16.start [1/8] %v7782, 128
    %8684 = vxpose.xlu0.c.b16.cont [2/8] %v8054, 128
    %8685 = vxpose.xlu0.c.b16.cont [3/8] %v8260, 128
    %8686 = vxpose.xlu0.c.b16.cont [4/8] 0, 128
    %8687 = vxpose.xlu0.c.b16.cont [5/8] 0, 128
    %8688 = vxpose.xlu0.c.b16.cont [6/8] 0, 128
    %8689 = vxpose.xlu0.c.b16.cont [7/8] 0, 128
    %8690 = vxpose.xlu0.c.b16.end [8/8] 0, 128
    %v8691 = vpop.trf.xlu0
    %v8692 = vpop.trf.xlu0
    %v8693 = vpop.trf.xlu0
    %v8694 = vpop.trf.xlu0
    %v8695 = vpop.trf.xlu0
    %v8696 = vpop.trf.xlu0
    %v8697 = vpop.trf.xlu0
    %v8698 = vpop.trf.xlu0
    %8699 = vxpose.xlu0.c.b16.start [1/8] %v7918, 128
    %8700 = vxpose.xlu0.c.b16.cont [2/8] %v8190, 128
    %8701 = vxpose.xlu0.c.b16.cont [3/8] %v8328, 128
    %8702 = vxpose.xlu0.c.b16.cont [4/8] 0, 128
    %8703 = vxpose.xlu0.c.b16.cont [5/8] 0, 128
    %8704 = vxpose.xlu0.c.b16.cont [6/8] 0, 128
    %8705 = vxpose.xlu0.c.b16.cont [7/8] 0, 128
    %8706 = vxpose.xlu0.c.b16.end [8/8] 0, 128
    %v8707 = vpop.trf.xlu0
    %v8708 = vpop.trf.xlu0
    %v8709 = vpop.trf.xlu0
    %v8710 = vpop.trf.xlu0
    %v8711 = vpop.trf.xlu0
    %v8712 = vpop.trf.xlu0
    %v8713 = vpop.trf.xlu0
    %v8714 = vpop.trf.xlu0
    %8715 = vxpose.xlu0.c.b16.start [1/8] %v7783, 128
    %8716 = vxpose.xlu0.c.b16.cont [2/8] %v8055, 128
    %8717 = vxpose.xlu0.c.b16.cont [3/8] %v8251, 128
    %8718 = vxpose.xlu0.c.b16.cont [4/8] 0, 128
    %8719 = vxpose.xlu0.c.b16.cont [5/8] 0, 128
    %8720 = vxpose.xlu0.c.b16.cont [6/8] 0, 128
    %8721 = vxpose.xlu0.c.b16.cont [7/8] 0, 128
    %8722 = vxpose.xlu0.c.b16.end [8/8] 0, 128
    %v8723 = vpop.trf.xlu0
    %v8724 = vpop.trf.xlu0
    %v8725 = vpop.trf.xlu0
    %v8726 = vpop.trf.xlu0
    %v8727 = vpop.trf.xlu0
    %v8728 = vpop.trf.xlu0
    %v8729 = vpop.trf.xlu0
    %v8730 = vpop.trf.xlu0
    %8731 = vxpose.xlu0.c.b16.start [1/8] %v7919, 128
    %8732 = vxpose.xlu0.c.b16.cont [2/8] %v8191, 128
    %8733 = vxpose.xlu0.c.b16.cont [3/8] %v8319, 128
    %8734 = vxpose.xlu0.c.b16.cont [4/8] 0, 128
    %8735 = vxpose.xlu0.c.b16.cont [5/8] 0, 128
    %8736 = vxpose.xlu0.c.b16.cont [6/8] 0, 128
    %8737 = vxpose.xlu0.c.b16.cont [7/8] 0, 128
    %8738 = vxpose.xlu0.c.b16.end [8/8] 0, 128
    %v8739 = vpop.trf.xlu0
    %v8740 = vpop.trf.xlu0
    %v8741 = vpop.trf.xlu0
    %v8742 = vpop.trf.xlu0
    %v8743 = vpop.trf.xlu0
    %v8744 = vpop.trf.xlu0
    %v8745 = vpop.trf.xlu0
    %v8746 = vpop.trf.xlu0
    %8747 = vxpose.xlu0.c.b16.start [1/8] %v7784, 128
    %8748 = vxpose.xlu0.c.b16.cont [2/8] %v8056, 128
    %8749 = vxpose.xlu0.c.b16.cont [3/8] %v8261, 128
    %8750 = vxpose.xlu0.c.b16.cont [4/8] 0, 128
    %8751 = vxpose.xlu0.c.b16.cont [5/8] 0, 128
    %8752 = vxpose.xlu0.c.b16.cont [6/8] 0, 128
    %8753 = vxpose.xlu0.c.b16.cont [7/8] 0, 128
    %8754 = vxpose.xlu0.c.b16.end [8/8] 0, 128
    %v8755 = vpop.trf.xlu0
    %v8756 = vpop.trf.xlu0
    %v8757 = vpop.trf.xlu0
    %v8758 = vpop.trf.xlu0
    %v8759 = vpop.trf.xlu0
    %v8760 = vpop.trf.xlu0
    %v8761 = vpop.trf.xlu0
    %v8762 = vpop.trf.xlu0
    %8763 = vxpose.xlu0.c.b16.start [1/8] %v7920, 128
    %8764 = vxpose.xlu0.c.b16.cont [2/8] %v8192, 128
    %8765 = vxpose.xlu0.c.b16.cont [3/8] %v8329, 128
    %8766 = vxpose.xlu0.c.b16.cont [4/8] 0, 128
    %8767 = vxpose.xlu0.c.b16.cont [5/8] 0, 128
    %8768 = vxpose.xlu0.c.b16.cont [6/8] 0, 128
    %8769 = vxpose.xlu0.c.b16.cont [7/8] 0, 128
    %8770 = vxpose.xlu0.c.b16.end [8/8] 0, 128
    %v8771 = vpop.trf.xlu0
    %v8772 = vpop.trf.xlu0
    %v8773 = vpop.trf.xlu0
    %v8774 = vpop.trf.xlu0
    %v8775 = vpop.trf.xlu0
    %v8776 = vpop.trf.xlu0
    %v8777 = vpop.trf.xlu0
    %v8778 = vpop.trf.xlu0
    %8779 = vxpose.xlu0.c.b16.start [1/8] %v7785, 128
    %8780 = vxpose.xlu0.c.b16.cont [2/8] %v8057, 128
    %8781 = vxpose.xlu0.c.b16.cont [3/8] %v8258, 128
    %8782 = vxpose.xlu0.c.b16.cont [4/8] 0, 128
    %8783 = vxpose.xlu0.c.b16.cont [5/8] 0, 128
    %8784 = vxpose.xlu0.c.b16.cont [6/8] 0, 128
    %8785 = vxpose.xlu0.c.b16.cont [7/8] 0, 128
    %8786 = vxpose.xlu0.c.b16.end [8/8] 0, 128
    %v8787 = vpop.trf.xlu0
    %v8788 = vpop.trf.xlu0
    %v8789 = vpop.trf.xlu0
    %v8790 = vpop.trf.xlu0
    %v8791 = vpop.trf.xlu0
    %v8792 = vpop.trf.xlu0
    %v8793 = vpop.trf.xlu0
    %v8794 = vpop.trf.xlu0
    %8795 = vxpose.xlu0.c.b16.start [1/8] %v7921, 128
    %8796 = vxpose.xlu0.c.b16.cont [2/8] %v8193, 128
    %8797 = vxpose.xlu0.c.b16.cont [3/8] %v8326, 128
    %8798 = vxpose.xlu0.c.b16.cont [4/8] 0, 128
    %8799 = vxpose.xlu0.c.b16.cont [5/8] 0, 128
    %8800 = vxpose.xlu0.c.b16.cont [6/8] 0, 128
    %8801 = vxpose.xlu0.c.b16.cont [7/8] 0, 128
    %8802 = vxpose.xlu0.c.b16.end [8/8] 0, 128
    %v8803 = vpop.trf.xlu0
    %v8804 = vpop.trf.xlu0
    %v8805 = vpop.trf.xlu0
    %v8806 = vpop.trf.xlu0
    %v8807 = vpop.trf.xlu0
    %v8808 = vpop.trf.xlu0
    %v8809 = vpop.trf.xlu0
    %v8810 = vpop.trf.xlu0
    %8811 = vxpose.xlu0.c.b16.start [1/8] %v7786, 128
    %8812 = vxpose.xlu0.c.b16.cont [2/8] %v8058, 128
    %8813 = vxpose.xlu0.c.b16.cont [3/8] %v8262, 128
    %8814 = vxpose.xlu0.c.b16.cont [4/8] 0, 128
    %8815 = vxpose.xlu0.c.b16.cont [5/8] 0, 128
    %8816 = vxpose.xlu0.c.b16.cont [6/8] 0, 128
    %8817 = vxpose.xlu0.c.b16.cont [7/8] 0, 128
    %8818 = vxpose.xlu0.c.b16.end [8/8] 0, 128
    %v8819 = vpop.trf.xlu0
    %v8820 = vpop.trf.xlu0
    %v8821 = vpop.trf.xlu0
    %v8822 = vpop.trf.xlu0
    %v8823 = vpop.trf.xlu0
    %v8824 = vpop.trf.xlu0
    %v8825 = vpop.trf.xlu0
    %v8826 = vpop.trf.xlu0
    %8827 = vxpose.xlu0.c.b16.start [1/8] %v7922, 128
    %8828 = vxpose.xlu0.c.b16.cont [2/8] %v8194, 128
    %8829 = vxpose.xlu0.c.b16.cont [3/8] %v8330, 128
    %8830 = vxpose.xlu0.c.b16.cont [4/8] 0, 128
    %8831 = vxpose.xlu0.c.b16.cont [5/8] 0, 128
    %8832 = vxpose.xlu0.c.b16.cont [6/8] 0, 128
    %8833 = vxpose.xlu0.c.b16.cont [7/8] 0, 128
    %8834 = vxpose.xlu0.c.b16.end [8/8] 0, 128
    %v8835 = vpop.trf.xlu0
    %v8836 = vpop.trf.xlu0
    %v8837 = vpop.trf.xlu0
    %v8838 = vpop.trf.xlu0
    %v8839 = vpop.trf.xlu0
    %v8840 = vpop.trf.xlu0
    %v8841 = vpop.trf.xlu0
    %v8842 = vpop.trf.xlu0
    %v8843 = vcombine.low %v8339, %v8403
    %v8845 = vunpack.c.l.s4 1983009808
    %v8846 = vunpack.c.0.s8 %v8845
    %v8847 = vlaneseq
    %v8848 = vshrl.u32 %v8847, 7
    %v8849 = vsub.s32 %v8846, %v8848
    %v8850 = vrot.slane %v8843, %v8849
    %v8851 = vcombine.low %v8371, %v8435
    %v8853 = vunpack.c.l.s4 1983009808
    %v8854 = vunpack.c.0.s8 %v8853
    %v8855 = vlaneseq
    %v8856 = vshrl.u32 %v8855, 7
    %v8857 = vsub.s32 %v8854, %v8856
    %v8858 = vrot.slane %v8851, %v8857
    %v8859 = vcombine.low %v8467, %v8531
    %v8861 = vunpack.c.l.s4 1983009808
    %v8862 = vunpack.c.0.s8 %v8861
    %v8863 = vlaneseq
    %v8864 = vshrl.u32 %v8863, 7
    %v8865 = vsub.s32 %v8862, %v8864
    %v8866 = vrot.slane %v8859, %v8865
    %v8867 = vcombine.low %v8499, %v8563
    %v8869 = vunpack.c.l.s4 1983009808
    %v8870 = vunpack.c.0.s8 %v8869
    %v8871 = vlaneseq
    %v8872 = vshrl.u32 %v8871, 7
    %v8873 = vsub.s32 %v8870, %v8872
    %v8874 = vrot.slane %v8867, %v8873
    %v8875 = vcombine.low %v8850, %v8858
    %v8877 = vunpack.c.l.s4 1934713408
    %v8878 = vunpack.c.0.s8 %v8877
    %v8879 = vlaneseq
    %v8880 = vshrl.u32 %v8879, 7
    %v8881 = vsub.s32 %v8878, %v8880
    %v8882 = vrot.slane %v8875, %v8881
    %v8883 = vcombine.low %v8866, %v8874
    %v8885 = vunpack.c.l.s4 1934713408
    %v8886 = vunpack.c.0.s8 %v8885
    %v8887 = vlaneseq
    %v8888 = vshrl.u32 %v8887, 7
    %v8889 = vsub.s32 %v8886, %v8888
    %v8890 = vrot.slane %v8883, %v8889
    %v8891 = vcombine.low %v8882, %v8890
    %v8892 = vcombine.high %v8882, %v8890
    %v8893 = vcombine.low %v8355, %v8419
    %v8895 = vunpack.c.l.s4 1983009808
    %v8896 = vunpack.c.0.s8 %v8895
    %v8897 = vlaneseq
    %v8898 = vshrl.u32 %v8897, 7
    %v8899 = vsub.s32 %v8896, %v8898
    %v8900 = vrot.slane %v8893, %v8899
    %v8901 = vcombine.low %v8387, %v8451
    %v8903 = vunpack.c.l.s4 1983009808
    %v8904 = vunpack.c.0.s8 %v8903
    %v8905 = vlaneseq
    %v8906 = vshrl.u32 %v8905, 7
    %v8907 = vsub.s32 %v8904, %v8906
    %v8908 = vrot.slane %v8901, %v8907
    %v8909 = vcombine.low %v8483, %v8547
    %v8911 = vunpack.c.l.s4 1983009808
    %v8912 = vunpack.c.0.s8 %v8911
    %v8913 = vlaneseq
    %v8914 = vshrl.u32 %v8913, 7
    %v8915 = vsub.s32 %v8912, %v8914
    %v8916 = vrot.slane %v8909, %v8915
    %v8917 = vcombine.low %v8515, %v8579
    %v8919 = vunpack.c.l.s4 1983009808
    %v8920 = vunpack.c.0.s8 %v8919
    %v8921 = vlaneseq
    %v8922 = vshrl.u32 %v8921, 7
    %v8923 = vsub.s32 %v8920, %v8922
    %v8924 = vrot.slane %v8917, %v8923
    %v8925 = vcombine.low %v8900, %v8908
    %v8927 = vunpack.c.l.s4 1934713408
    %v8928 = vunpack.c.0.s8 %v8927
    %v8929 = vlaneseq
    %v8930 = vshrl.u32 %v8929, 7
    %v8931 = vsub.s32 %v8928, %v8930
    %v8932 = vrot.slane %v8925, %v8931
    %v8933 = vcombine.low %v8916, %v8924
    %v8935 = vunpack.c.l.s4 1934713408
    %v8936 = vunpack.c.0.s8 %v8935
    %v8937 = vlaneseq
    %v8938 = vshrl.u32 %v8937, 7
    %v8939 = vsub.s32 %v8936, %v8938
    %v8940 = vrot.slane %v8933, %v8939
    %v8941 = vcombine.low %v8932, %v8940
    %v8942 = vcombine.high %v8932, %v8940
    %v8943 = vcombine.low %v8595, %v8659
    %v8945 = vunpack.c.l.s4 1983009808
    %v8946 = vunpack.c.0.s8 %v8945
    %v8947 = vlaneseq
    %v8948 = vshrl.u32 %v8947, 7
    %v8949 = vsub.s32 %v8946, %v8948
    %v8950 = vrot.slane %v8943, %v8949
    %v8951 = vcombine.low %v8627, %v8691
    %v8953 = vunpack.c.l.s4 1983009808
    %v8954 = vunpack.c.0.s8 %v8953
    %v8955 = vlaneseq
    %v8956 = vshrl.u32 %v8955, 7
    %v8957 = vsub.s32 %v8954, %v8956
    %v8958 = vrot.slane %v8951, %v8957
    %v8959 = vcombine.low %v8723, %v8787
    %v8961 = vunpack.c.l.s4 1983009808
    %v8962 = vunpack.c.0.s8 %v8961
    %v8963 = vlaneseq
    %v8964 = vshrl.u32 %v8963, 7
    %v8965 = vsub.s32 %v8962, %v8964
    %v8966 = vrot.slane %v8959, %v8965
    %v8967 = vcombine.low %v8755, %v8819
    %v8969 = vunpack.c.l.s4 1983009808
    %v8970 = vunpack.c.0.s8 %v8969
    %v8971 = vlaneseq
    %v8972 = vshrl.u32 %v8971, 7
    %v8973 = vsub.s32 %v8970, %v8972
    %v8974 = vrot.slane %v8967, %v8973
    %v8975 = vcombine.low %v8950, %v8958
    %v8977 = vunpack.c.l.s4 1934713408
    %v8978 = vunpack.c.0.s8 %v8977
    %v8979 = vlaneseq
    %v8980 = vshrl.u32 %v8979, 7
    %v8981 = vsub.s32 %v8978, %v8980
    %v8982 = vrot.slane %v8975, %v8981
    %v8983 = vcombine.low %v8966, %v8974
    %v8985 = vunpack.c.l.s4 1934713408
    %v8986 = vunpack.c.0.s8 %v8985
    %v8987 = vlaneseq
    %v8988 = vshrl.u32 %v8987, 7
    %v8989 = vsub.s32 %v8986, %v8988
    %v8990 = vrot.slane %v8983, %v8989
    %v8991 = vcombine.low %v8982, %v8990
    %v8992 = vcombine.high %v8982, %v8990
    %v8993 = vcombine.low %v8611, %v8675
    %v8995 = vunpack.c.l.s4 1983009808
    %v8996 = vunpack.c.0.s8 %v8995
    %v8997 = vlaneseq
    %v8998 = vshrl.u32 %v8997, 7
    %v8999 = vsub.s32 %v8996, %v8998
    %v9000 = vrot.slane %v8993, %v8999
    %v9001 = vcombine.low %v8643, %v8707
    %v9003 = vunpack.c.l.s4 1983009808
    %v9004 = vunpack.c.0.s8 %v9003
    %v9005 = vlaneseq
    %v9006 = vshrl.u32 %v9005, 7
    %v9007 = vsub.s32 %v9004, %v9006
    %v9008 = vrot.slane %v9001, %v9007
    %v9009 = vcombine.low %v8739, %v8803
    %v9011 = vunpack.c.l.s4 1983009808
    %v9012 = vunpack.c.0.s8 %v9011
    %v9013 = vlaneseq
    %v9014 = vshrl.u32 %v9013, 7
    %v9015 = vsub.s32 %v9012, %v9014
    %v9016 = vrot.slane %v9009, %v9015
    %v9017 = vcombine.low %v8771, %v8835
    %v9019 = vunpack.c.l.s4 1983009808
    %v9020 = vunpack.c.0.s8 %v9019
    %v9021 = vlaneseq
    %v9022 = vshrl.u32 %v9021, 7
    %v9023 = vsub.s32 %v9020, %v9022
    %v9024 = vrot.slane %v9017, %v9023
    %v9025 = vcombine.low %v9000, %v9008
    %v9027 = vunpack.c.l.s4 1934713408
    %v9028 = vunpack.c.0.s8 %v9027
    %v9029 = vlaneseq
    %v9030 = vshrl.u32 %v9029, 7
    %v9031 = vsub.s32 %v9028, %v9030
    %v9032 = vrot.slane %v9025, %v9031
    %v9033 = vcombine.low %v9016, %v9024
    %v9035 = vunpack.c.l.s4 1934713408
    %v9036 = vunpack.c.0.s8 %v9035
    %v9037 = vlaneseq
    %v9038 = vshrl.u32 %v9037, 7
    %v9039 = vsub.s32 %v9036, %v9038
    %v9040 = vrot.slane %v9033, %v9039
    %v9041 = vcombine.low %v9032, %v9040
    %v9042 = vcombine.high %v9032, %v9040
    %v9045 = vpack.i.b16 %v8941, %v8891
    %v9046 = vshrl.u32 %v8891, 16
    %v9047 = vshrl.u32 %v8941, 16
    %v9048 = vpack.i.b16 %v9047, %v9046
    %v9051 = vpack.i.b16 %v8942, %v8892
    %v9052 = vshrl.u32 %v8892, 16
    %v9053 = vshrl.u32 %v8942, 16
    %v9054 = vpack.i.b16 %v9053, %v9052
    %v9057 = vpack.i.b16 %v9041, %v8991
    %v9058 = vshrl.u32 %v8991, 16
    %v9059 = vshrl.u32 %v9041, 16
    %v9060 = vpack.i.b16 %v9059, %v9058
    %v9063 = vpack.i.b16 %v9042, %v8992
    %v9064 = vshrl.u32 %v8992, 16
    %v9065 = vshrl.u32 %v9042, 16
    %v9066 = vpack.i.b16 %v9065, %v9064
    %v9068 = vsel %vm5778, %v9045, 0
    %v9071 = vsel %vm5778, %v9057, 0
    %v9074 = vsel %vm5778, %v5999, 0
    %v9077 = vsel %vm5778, %v6000, 0
    %v9080 = vsel %vm5778, %v6001, 0
    %9082 = vmatprep.subr.bf16.mxu0 0
    %9083 = vmatpush1.bf16.xpose.msra.mxu0 %v9074
    %9084 = vmatprep.subr.bf16.mxu0 0
    %9085 = vmatpush1.bf16.xpose.msra.mxu0 %v9077
    %9086 = vmatprep.subr.bf16.mxu0 0
    %9087 = vmatpush1.bf16.xpose.msra.mxu0 %v9080
    %9088 = vmatprep.subr.bf16.mxu0 0
    %9089 = vmatpush1.bf16.xpose.msra.mxu0 0
    %9090 = vmatprep.subr.bf16.mxu0 0
    %9091 = vmatpush1.bf16.xpose.msra.mxu0 0
    %9092 = vmatprep.subr.bf16.mxu0 0
    %9093 = vmatpush1.bf16.xpose.msra.mxu0 0
    %9094 = vmatprep.subr.bf16.mxu0 0
    %9095 = vmatpush1.bf16.xpose.msra.mxu0 0
    %9096 = vmatprep.subr.bf16.mxu0 0
    %9097 = vmatpush1.bf16.xpose.msra.mxu0 0
    %9098 = vmatprep.subr.bf16.mxu0 0
    %9099 = vmatpush1.bf16.xpose.msra.mxu0 0
    %9100 = vmatprep.subr.bf16.mxu0 0
    %9101 = vmatpush1.bf16.xpose.msra.mxu0 0
    %9102 = vmatprep.subr.bf16.mxu0 0
    %9103 = vmatpush1.bf16.xpose.msra.mxu0 0
    %9104 = vmatprep.subr.bf16.mxu0 0
    %9105 = vmatpush1.bf16.xpose.msra.mxu0 0
    %9106 = vmatprep.subr.bf16.mxu0 0
    %9107 = vmatpush1.bf16.xpose.msra.mxu0 0
    %9108 = vmatprep.subr.bf16.mxu0 0
    %9109 = vmatpush1.bf16.xpose.msra.mxu0 0
    %9110 = vmatprep.subr.bf16.mxu0 0
    %9111 = vmatpush1.bf16.xpose.msra.mxu0 0
    %9112 = vmatprep.subr.bf16.mxu0 0
    %9113 = vmatpush1.bf16.xpose.msra.mxu0 0
    %9114 = vmatprep.mubr.bf16.mxu0 0
    %9115 = vmatmul.mubr.bf16.gmra.mrb[0].mxu0 %v9068
    %v9116 = vpop.f32.mrb[0].mxu0
    %v9117 = vadd.f32 0.0, %v9116
    %v9118 = vpop.f32.mrb[0].mxu0
    %v9119 = vpop.f32.mrb[0].mxu0
    %v9120 = vadd.f32 0.0, %v9119
    %v9121 = vpop.f32.mrb[0].mxu0
    %9122 = vmatprep.mubr.bf16.mxu0 0
    %9123 = vmatmul.mubr.bf16.gmra.mrb[0].mxu0 %v9071
    %v9124 = vpop.f32.mrb[0].mxu0
    %v9125 = vadd.f32 0.0, %v9124
    %v9126 = vpop.f32.mrb[0].mxu0
    %v9127 = vpop.f32.mrb[0].mxu0
    %v9128 = vadd.f32 0.0, %v9127
    %v9129 = vpop.f32.mrb[0].mxu0
    %9130 = vdwg.mxu0
    %v9132 = vsel %vm5778, %v9048, 0
    %v9135 = vsel %vm5778, %v9060, 0
    %v9138 = vsel %vm5778, %v6002, 0
    %v9141 = vsel %vm5778, %v6003, 0
    %v9144 = vsel %vm5778, %v6004, 0
    %9146 = vmatprep.subr.bf16.mxu0 0
    %9147 = vmatpush1.bf16.xpose.msra.mxu0 %v9138
    %9148 = vmatprep.subr.bf16.mxu0 0
    %9149 = vmatpush1.bf16.xpose.msra.mxu0 %v9141
    %9150 = vmatprep.subr.bf16.mxu0 0
    %9151 = vmatpush1.bf16.xpose.msra.mxu0 %v9144
    %9152 = vmatprep.subr.bf16.mxu0 0
    %9153 = vmatpush1.bf16.xpose.msra.mxu0 0
    %9154 = vmatprep.subr.bf16.mxu0 0
    %9155 = vmatpush1.bf16.xpose.msra.mxu0 0
    %9156 = vmatprep.subr.bf16.mxu0 0
    %9157 = vmatpush1.bf16.xpose.msra.mxu0 0
    %9158 = vmatprep.subr.bf16.mxu0 0
    %9159 = vmatpush1.bf16.xpose.msra.mxu0 0
    %9160 = vmatprep.subr.bf16.mxu0 0
    %9161 = vmatpush1.bf16.xpose.msra.mxu0 0
    %9162 = vmatprep.subr.bf16.mxu0 0
    %9163 = vmatpush1.bf16.xpose.msra.mxu0 0
    %9164 = vmatprep.subr.bf16.mxu0 0
    %9165 = vmatpush1.bf16.xpose.msra.mxu0 0
    %9166 = vmatprep.subr.bf16.mxu0 0
    %9167 = vmatpush1.bf16.xpose.msra.mxu0 0
    %9168 = vmatprep.subr.bf16.mxu0 0
    %9169 = vmatpush1.bf16.xpose.msra.mxu0 0
    %9170 = vmatprep.subr.bf16.mxu0 0
    %9171 = vmatpush1.bf16.xpose.msra.mxu0 0
    %9172 = vmatprep.subr.bf16.mxu0 0
    %9173 = vmatpush1.bf16.xpose.msra.mxu0 0
    %9174 = vmatprep.subr.bf16.mxu0 0
    %9175 = vmatpush1.bf16.xpose.msra.mxu0 0
    %9176 = vmatprep.subr.bf16.mxu0 0
    %9177 = vmatpush1.bf16.xpose.msra.mxu0 0
    %9178 = vmatprep.mubr.bf16.mxu0 0
    %9179 = vmatmul.mubr.bf16.gmra.mrb[0].mxu0 %v9132
    %v9180 = vpop.f32.mrb[0].mxu0
    %v9181 = vadd.f32 0.0, %v9180
    %v9182 = vpop.f32.mrb[0].mxu0
    %v9183 = vpop.f32.mrb[0].mxu0
    %v9184 = vadd.f32 0.0, %v9183
    %v9185 = vpop.f32.mrb[0].mxu0
    %9186 = vmatprep.mubr.bf16.mxu0 0
    %9187 = vmatmul.mubr.bf16.gmra.mrb[0].mxu0 %v9135
    %v9188 = vpop.f32.mrb[0].mxu0
    %v9189 = vadd.f32 0.0, %v9188
    %v9190 = vpop.f32.mrb[0].mxu0
    %v9191 = vpop.f32.mrb[0].mxu0
    %v9192 = vadd.f32 0.0, %v9191
    %v9193 = vpop.f32.mrb[0].mxu0
    %9194 = vdwg.mxu0
    %v9196 = vsel %vm5778, %v9051, 0
    %v9199 = vsel %vm5778, %v9063, 0
    %v9202 = vsel %vm5778, %v6005, 0
    %v9205 = vsel %vm5778, %v6006, 0
    %v9208 = vsel %vm5778, %v6007, 0
    %9210 = vmatprep.subr.bf16.mxu0 0
    %9211 = vmatpush1.bf16.xpose.msra.mxu0 %v9202
    %9212 = vmatprep.subr.bf16.mxu0 0
    %9213 = vmatpush1.bf16.xpose.msra.mxu0 %v9205
    %9214 = vmatprep.subr.bf16.mxu0 0
    %9215 = vmatpush1.bf16.xpose.msra.mxu0 %v9208
    %9216 = vmatprep.subr.bf16.mxu0 0
    %9217 = vmatpush1.bf16.xpose.msra.mxu0 0
    %9218 = vmatprep.subr.bf16.mxu0 0
    %9219 = vmatpush1.bf16.xpose.msra.mxu0 0
    %9220 = vmatprep.subr.bf16.mxu0 0
    %9221 = vmatpush1.bf16.xpose.msra.mxu0 0
    %9222 = vmatprep.subr.bf16.mxu0 0
    %9223 = vmatpush1.bf16.xpose.msra.mxu0 0
    %9224 = vmatprep.subr.bf16.mxu0 0
    %9225 = vmatpush1.bf16.xpose.msra.mxu0 0
    %9226 = vmatprep.subr.bf16.mxu0 0
    %9227 = vmatpush1.bf16.xpose.msra.mxu0 0
    %9228 = vmatprep.subr.bf16.mxu0 0
    %9229 = vmatpush1.bf16.xpose.msra.mxu0 0
    %9230 = vmatprep.subr.bf16.mxu0 0
    %9231 = vmatpush1.bf16.xpose.msra.mxu0 0
    %9232 = vmatprep.subr.bf16.mxu0 0
    %9233 = vmatpush1.bf16.xpose.msra.mxu0 0
    %9234 = vmatprep.subr.bf16.mxu0 0
    %9235 = vmatpush1.bf16.xpose.msra.mxu0 0
    %9236 = vmatprep.subr.bf16.mxu0 0
    %9237 = vmatpush1.bf16.xpose.msra.mxu0 0
    %9238 = vmatprep.subr.bf16.mxu0 0
    %9239 = vmatpush1.bf16.xpose.msra.mxu0 0
    %9240 = vmatprep.subr.bf16.mxu0 0
    %9241 = vmatpush1.bf16.xpose.msra.mxu0 0
    %9242 = vmatprep.mubr.bf16.mxu0 0
    %9243 = vmatmul.mubr.bf16.gmra.mrb[0].mxu0 %v9196
    %v9244 = vpop.f32.mrb[0].mxu0
    %v9245 = vadd.f32 0.0, %v9244
    %v9246 = vpop.f32.mrb[0].mxu0
    %v9247 = vpop.f32.mrb[0].mxu0
    %v9248 = vadd.f32 0.0, %v9247
    %v9249 = vpop.f32.mrb[0].mxu0
    %9250 = vmatprep.mubr.bf16.mxu0 0
    %9251 = vmatmul.mubr.bf16.gmra.mrb[0].mxu0 %v9199
    %v9252 = vpop.f32.mrb[0].mxu0
    %v9253 = vadd.f32 0.0, %v9252
    %v9254 = vpop.f32.mrb[0].mxu0
    %v9255 = vpop.f32.mrb[0].mxu0
    %v9256 = vadd.f32 0.0, %v9255
    %v9257 = vpop.f32.mrb[0].mxu0
    %9258 = vdwg.mxu0
    %v9260 = vsel %vm5778, %v9054, 0
    %v9263 = vsel %vm5778, %v9066, 0
    %v9266 = vsel %vm5778, %v6008, 0
    %v9269 = vsel %vm5778, %v6009, 0
    %v9272 = vsel %vm5778, %v6010, 0
    %9274 = vmatprep.subr.bf16.mxu0 0
    %9275 = vmatpush1.bf16.xpose.msra.mxu0 %v9266
    %9276 = vmatprep.subr.bf16.mxu0 0
    %9277 = vmatpush1.bf16.xpose.msra.mxu0 %v9269
    %9278 = vmatprep.subr.bf16.mxu0 0
    %9279 = vmatpush1.bf16.xpose.msra.mxu0 %v9272
    %9280 = vmatprep.subr.bf16.mxu0 0
    %9281 = vmatpush1.bf16.xpose.msra.mxu0 0
    %9282 = vmatprep.subr.bf16.mxu0 0
    %9283 = vmatpush1.bf16.xpose.msra.mxu0 0
    %9284 = vmatprep.subr.bf16.mxu0 0
    %9285 = vmatpush1.bf16.xpose.msra.mxu0 0
    %9286 = vmatprep.subr.bf16.mxu0 0
    %9287 = vmatpush1.bf16.xpose.msra.mxu0 0
    %9288 = vmatprep.subr.bf16.mxu0 0
    %9289 = vmatpush1.bf16.xpose.msra.mxu0 0
    %9290 = vmatprep.subr.bf16.mxu0 0
    %9291 = vmatpush1.bf16.xpose.msra.mxu0 0
    %9292 = vmatprep.subr.bf16.mxu0 0
    %9293 = vmatpush1.bf16.xpose.msra.mxu0 0
    %9294 = vmatprep.subr.bf16.mxu0 0
    %9295 = vmatpush1.bf16.xpose.msra.mxu0 0
    %9296 = vmatprep.subr.bf16.mxu0 0
    %9297 = vmatpush1.bf16.xpose.msra.mxu0 0
    %9298 = vmatprep.subr.bf16.mxu0 0
    %9299 = vmatpush1.bf16.xpose.msra.mxu0 0
    %9300 = vmatprep.subr.bf16.mxu0 0
    %9301 = vmatpush1.bf16.xpose.msra.mxu0 0
    %9302 = vmatprep.subr.bf16.mxu0 0
    %9303 = vmatpush1.bf16.xpose.msra.mxu0 0
    %9304 = vmatprep.subr.bf16.mxu0 0
    %9305 = vmatpush1.bf16.xpose.msra.mxu0 0
    %9306 = vmatprep.mubr.bf16.mxu0 0
    %9307 = vmatmul.mubr.bf16.gmra.mrb[0].mxu0 %v9260
    %v9308 = vpop.f32.mrb[0].mxu0
    %v9309 = vadd.f32 0.0, %v9308
    %v9310 = vpop.f32.mrb[0].mxu0
    %v9311 = vpop.f32.mrb[0].mxu0
    %v9312 = vadd.f32 0.0, %v9311
    %v9313 = vpop.f32.mrb[0].mxu0
    %9314 = vmatprep.mubr.bf16.mxu0 0
    %9315 = vmatmul.mubr.bf16.gmra.mrb[0].mxu0 %v9263
    %v9316 = vpop.f32.mrb[0].mxu0
    %v9317 = vadd.f32 0.0, %v9316
    %v9318 = vpop.f32.mrb[0].mxu0
    %v9319 = vpop.f32.mrb[0].mxu0
    %v9320 = vadd.f32 0.0, %v9319
    %v9321 = vpop.f32.mrb[0].mxu0
    %9322 = vdwg.mxu0
    %9323 = vxpose.xlu0.b32.start [1/16] %v9117, 128
    %9324 = vxpose.xlu0.b32.cont [2/16] %v9120, 128
    %9325 = vxpose.xlu0.b32.cont [3/16] %v9125, 128
    %9326 = vxpose.xlu0.b32.cont [4/16] %v9128, 128
    %9327 = vxpose.xlu0.b32.cont [5/16] 0.0, 128
    %9328 = vxpose.xlu0.b32.cont [6/16] 0.0, 128
    %9329 = vxpose.xlu0.b32.cont [7/16] 0.0, 128
    %9330 = vxpose.xlu0.b32.cont [8/16] 0.0, 128
    %9331 = vxpose.xlu0.b32.cont [9/16] 0.0, 128
    %9332 = vxpose.xlu0.b32.cont [10/16] 0.0, 128
    %9333 = vxpose.xlu0.b32.cont [11/16] 0.0, 128
    %9334 = vxpose.xlu0.b32.cont [12/16] 0.0, 128
    %9335 = vxpose.xlu0.b32.cont [13/16] 0.0, 128
    %9336 = vxpose.xlu0.b32.cont [14/16] 0.0, 128
    %9337 = vxpose.xlu0.b32.cont [15/16] 0.0, 128
    %9338 = vxpose.xlu0.b32.end [16/16] 0.0, 128
    %v9339 = vpop.trf.xlu0
    %v9340 = vpop.trf.xlu0
    %v9341 = vpop.trf.xlu0
    %v9342 = vpop.trf.xlu0
    %v9343 = vpop.trf.xlu0
    %v9344 = vpop.trf.xlu0
    %v9345 = vpop.trf.xlu0
    %v9346 = vpop.trf.xlu0
    %v9347 = vpop.trf.xlu0
    %v9348 = vpop.trf.xlu0
    %v9349 = vpop.trf.xlu0
    %v9350 = vpop.trf.xlu0
    %v9351 = vpop.trf.xlu0
    %v9352 = vpop.trf.xlu0
    %v9353 = vpop.trf.xlu0
    %v9354 = vpop.trf.xlu0
    %9355 = vxpose.xlu0.b32.start [1/16] %v9181, 128
    %9356 = vxpose.xlu0.b32.cont [2/16] %v9184, 128
    %9357 = vxpose.xlu0.b32.cont [3/16] %v9189, 128
    %9358 = vxpose.xlu0.b32.cont [4/16] %v9192, 128
    %9359 = vxpose.xlu0.b32.cont [5/16] 0.0, 128
    %9360 = vxpose.xlu0.b32.cont [6/16] 0.0, 128
    %9361 = vxpose.xlu0.b32.cont [7/16] 0.0, 128
    %9362 = vxpose.xlu0.b32.cont [8/16] 0.0, 128
    %9363 = vxpose.xlu0.b32.cont [9/16] 0.0, 128
    %9364 = vxpose.xlu0.b32.cont [10/16] 0.0, 128
    %9365 = vxpose.xlu0.b32.cont [11/16] 0.0, 128
    %9366 = vxpose.xlu0.b32.cont [12/16] 0.0, 128
    %9367 = vxpose.xlu0.b32.cont [13/16] 0.0, 128
    %9368 = vxpose.xlu0.b32.cont [14/16] 0.0, 128
    %9369 = vxpose.xlu0.b32.cont [15/16] 0.0, 128
    %9370 = vxpose.xlu0.b32.end [16/16] 0.0, 128
    %v9371 = vpop.trf.xlu0
    %v9372 = vpop.trf.xlu0
    %v9373 = vpop.trf.xlu0
    %v9374 = vpop.trf.xlu0
    %v9375 = vpop.trf.xlu0
    %v9376 = vpop.trf.xlu0
    %v9377 = vpop.trf.xlu0
    %v9378 = vpop.trf.xlu0
    %v9379 = vpop.trf.xlu0
    %v9380 = vpop.trf.xlu0
    %v9381 = vpop.trf.xlu0
    %v9382 = vpop.trf.xlu0
    %v9383 = vpop.trf.xlu0
    %v9384 = vpop.trf.xlu0
    %v9385 = vpop.trf.xlu0
    %v9386 = vpop.trf.xlu0
    %9387 = vxpose.xlu0.b32.start [1/16] %v9245, 128
    %9388 = vxpose.xlu0.b32.cont [2/16] %v9248, 128
    %9389 = vxpose.xlu0.b32.cont [3/16] %v9253, 128
    %9390 = vxpose.xlu0.b32.cont [4/16] %v9256, 128
    %9391 = vxpose.xlu0.b32.cont [5/16] 0.0, 128
    %9392 = vxpose.xlu0.b32.cont [6/16] 0.0, 128
    %9393 = vxpose.xlu0.b32.cont [7/16] 0.0, 128
    %9394 = vxpose.xlu0.b32.cont [8/16] 0.0, 128
    %9395 = vxpose.xlu0.b32.cont [9/16] 0.0, 128
    %9396 = vxpose.xlu0.b32.cont [10/16] 0.0, 128
    %9397 = vxpose.xlu0.b32.cont [11/16] 0.0, 128
    %9398 = vxpose.xlu0.b32.cont [12/16] 0.0, 128
    %9399 = vxpose.xlu0.b32.cont [13/16] 0.0, 128
    %9400 = vxpose.xlu0.b32.cont [14/16] 0.0, 128
    %9401 = vxpose.xlu0.b32.cont [15/16] 0.0, 128
    %9402 = vxpose.xlu0.b32.end [16/16] 0.0, 128
    %v9403 = vpop.trf.xlu0
    %v9404 = vpop.trf.xlu0
    %v9405 = vpop.trf.xlu0
    %v9406 = vpop.trf.xlu0
    %v9407 = vpop.trf.xlu0
    %v9408 = vpop.trf.xlu0
    %v9409 = vpop.trf.xlu0
    %v9410 = vpop.trf.xlu0
    %v9411 = vpop.trf.xlu0
    %v9412 = vpop.trf.xlu0
    %v9413 = vpop.trf.xlu0
    %v9414 = vpop.trf.xlu0
    %v9415 = vpop.trf.xlu0
    %v9416 = vpop.trf.xlu0
    %v9417 = vpop.trf.xlu0
    %v9418 = vpop.trf.xlu0
    %9419 = vxpose.xlu0.b32.start [1/16] %v9309, 128
    %9420 = vxpose.xlu0.b32.cont [2/16] %v9312, 128
    %9421 = vxpose.xlu0.b32.cont [3/16] %v9317, 128
    %9422 = vxpose.xlu0.b32.cont [4/16] %v9320, 128
    %9423 = vxpose.xlu0.b32.cont [5/16] 0.0, 128
    %9424 = vxpose.xlu0.b32.cont [6/16] 0.0, 128
    %9425 = vxpose.xlu0.b32.cont [7/16] 0.0, 128
    %9426 = vxpose.xlu0.b32.cont [8/16] 0.0, 128
    %9427 = vxpose.xlu0.b32.cont [9/16] 0.0, 128
    %9428 = vxpose.xlu0.b32.cont [10/16] 0.0, 128
    %9429 = vxpose.xlu0.b32.cont [11/16] 0.0, 128
    %9430 = vxpose.xlu0.b32.cont [12/16] 0.0, 128
    %9431 = vxpose.xlu0.b32.cont [13/16] 0.0, 128
    %9432 = vxpose.xlu0.b32.cont [14/16] 0.0, 128
    %9433 = vxpose.xlu0.b32.cont [15/16] 0.0, 128
    %9434 = vxpose.xlu0.b32.end [16/16] 0.0, 128
    %v9435 = vpop.trf.xlu0
    %v9436 = vpop.trf.xlu0
    %v9437 = vpop.trf.xlu0
    %v9438 = vpop.trf.xlu0
    %v9439 = vpop.trf.xlu0
    %v9440 = vpop.trf.xlu0
    %v9441 = vpop.trf.xlu0
    %v9442 = vpop.trf.xlu0
    %v9443 = vpop.trf.xlu0
    %v9444 = vpop.trf.xlu0
    %v9445 = vpop.trf.xlu0
    %v9446 = vpop.trf.xlu0
    %v9447 = vpop.trf.xlu0
    %v9448 = vpop.trf.xlu0
    %v9449 = vpop.trf.xlu0
    %v9450 = vpop.trf.xlu0
    %v9451 = vcombine.low %v9339, %v9403
    %v9452 = vcombine.high %v9339, %v9403
    %v9454 = vunpack.c.l.s4 1983009808
    %v9455 = vunpack.c.0.s8 %v9454
    %v9456 = vlaneseq
    %v9457 = vshrl.u32 %v9456, 7
    %v9458 = vsub.s32 %v9455, %v9457
    %v9459 = vrot.slane %v9451, %v9458
    %v9461 = vunpack.c.l.s4 1983009808
    %v9462 = vunpack.c.0.s8 %v9461
    %v9463 = vlaneseq
    %v9464 = vshrl.u32 %v9463, 7
    %v9465 = vsub.s32 %v9462, %v9464
    %v9466 = vrot.slane %v9452, %v9465
    %v9467 = vcombine.low %v9371, %v9435
    %v9468 = vcombine.high %v9371, %v9435
    %v9470 = vunpack.c.l.s4 1983009808
    %v9471 = vunpack.c.0.s8 %v9470
    %v9472 = vlaneseq
    %v9473 = vshrl.u32 %v9472, 7
    %v9474 = vsub.s32 %v9471, %v9473
    %v9475 = vrot.slane %v9467, %v9474
    %v9477 = vunpack.c.l.s4 1983009808
    %v9478 = vunpack.c.0.s8 %v9477
    %v9479 = vlaneseq
    %v9480 = vshrl.u32 %v9479, 7
    %v9481 = vsub.s32 %v9478, %v9480
    %v9482 = vrot.slane %v9468, %v9481
    %v9483 = vcombine.low %v9459, %v9475
    %v9484 = vcombine.high %v9459, %v9475
    %v9486 = vunpack.c.l.s4 1934713408
    %v9487 = vunpack.c.0.s8 %v9486
    %v9488 = vlaneseq
    %v9489 = vshrl.u32 %v9488, 7
    %v9490 = vsub.s32 %v9487, %v9489
    %v9491 = vrot.slane %v9483, %v9490
    %v9493 = vunpack.c.l.s4 1934713408
    %v9494 = vunpack.c.0.s8 %v9493
    %v9495 = vlaneseq
    %v9496 = vshrl.u32 %v9495, 7
    %v9497 = vsub.s32 %v9494, %v9496
    %v9498 = vrot.slane %v9484, %v9497
    %v9499 = vcombine.low %v9466, %v9482
    %v9500 = vcombine.high %v9466, %v9482
    %v9502 = vunpack.c.l.s4 1934713408
    %v9503 = vunpack.c.0.s8 %v9502
    %v9504 = vlaneseq
    %v9505 = vshrl.u32 %v9504, 7
    %v9506 = vsub.s32 %v9503, %v9505
    %v9507 = vrot.slane %v9499, %v9506
    %v9509 = vunpack.c.l.s4 1934713408
    %v9510 = vunpack.c.0.s8 %v9509
    %v9511 = vlaneseq
    %v9512 = vshrl.u32 %v9511, 7
    %v9513 = vsub.s32 %v9510, %v9512
    %v9514 = vrot.slane %v9500, %v9513
    %v9515 = vcombine.high %v9491, 0.0
    %v9516 = vcombine.high %v9498, 0.0
    %v9517 = vcombine.high %v9507, 0.0
    %v9518 = vcombine.high %v9514, 0.0
    %v9519 = vcombine.low %v9340, %v9404
    %v9520 = vcombine.high %v9340, %v9404
    %v9522 = vunpack.c.l.s4 1983009808
    %v9523 = vunpack.c.0.s8 %v9522
    %v9524 = vlaneseq
    %v9525 = vshrl.u32 %v9524, 7
    %v9526 = vsub.s32 %v9523, %v9525
    %v9527 = vrot.slane %v9519, %v9526
    %v9529 = vunpack.c.l.s4 1983009808
    %v9530 = vunpack.c.0.s8 %v9529
    %v9531 = vlaneseq
    %v9532 = vshrl.u32 %v9531, 7
    %v9533 = vsub.s32 %v9530, %v9532
    %v9534 = vrot.slane %v9520, %v9533
    %v9535 = vcombine.low %v9372, %v9436
    %v9536 = vcombine.high %v9372, %v9436
    %v9538 = vunpack.c.l.s4 1983009808
    %v9539 = vunpack.c.0.s8 %v9538
    %v9540 = vlaneseq
    %v9541 = vshrl.u32 %v9540, 7
    %v9542 = vsub.s32 %v9539, %v9541
    %v9543 = vrot.slane %v9535, %v9542
    %v9545 = vunpack.c.l.s4 1983009808
    %v9546 = vunpack.c.0.s8 %v9545
    %v9547 = vlaneseq
    %v9548 = vshrl.u32 %v9547, 7
    %v9549 = vsub.s32 %v9546, %v9548
    %v9550 = vrot.slane %v9536, %v9549
    %v9551 = vcombine.low %v9527, %v9543
    %v9552 = vcombine.high %v9527, %v9543
    %v9554 = vunpack.c.l.s4 1934713408
    %v9555 = vunpack.c.0.s8 %v9554
    %v9556 = vlaneseq
    %v9557 = vshrl.u32 %v9556, 7
    %v9558 = vsub.s32 %v9555, %v9557
    %v9559 = vrot.slane %v9551, %v9558
    %v9561 = vunpack.c.l.s4 1934713408
    %v9562 = vunpack.c.0.s8 %v9561
    %v9563 = vlaneseq
    %v9564 = vshrl.u32 %v9563, 7
    %v9565 = vsub.s32 %v9562, %v9564
    %v9566 = vrot.slane %v9552, %v9565
    %v9567 = vcombine.low %v9534, %v9550
    %v9568 = vcombine.high %v9534, %v9550
    %v9570 = vunpack.c.l.s4 1934713408
    %v9571 = vunpack.c.0.s8 %v9570
    %v9572 = vlaneseq
    %v9573 = vshrl.u32 %v9572, 7
    %v9574 = vsub.s32 %v9571, %v9573
    %v9575 = vrot.slane %v9567, %v9574
    %v9577 = vunpack.c.l.s4 1934713408
    %v9578 = vunpack.c.0.s8 %v9577
    %v9579 = vlaneseq
    %v9580 = vshrl.u32 %v9579, 7
    %v9581 = vsub.s32 %v9578, %v9580
    %v9582 = vrot.slane %v9568, %v9581
    %v9583 = vcombine.high %v9559, 0.0
    %v9584 = vcombine.high %v9566, 0.0
    %v9585 = vcombine.high %v9575, 0.0
    %v9586 = vcombine.high %v9582, 0.0
    %v9587 = vcombine.low %v9341, %v9405
    %v9588 = vcombine.high %v9341, %v9405
    %v9590 = vunpack.c.l.s4 1983009808
    %v9591 = vunpack.c.0.s8 %v9590
    %v9592 = vlaneseq
    %v9593 = vshrl.u32 %v9592, 7
    %v9594 = vsub.s32 %v9591, %v9593
    %v9595 = vrot.slane %v9587, %v9594
    %v9597 = vunpack.c.l.s4 1983009808
    %v9598 = vunpack.c.0.s8 %v9597
    %v9599 = vlaneseq
    %v9600 = vshrl.u32 %v9599, 7
    %v9601 = vsub.s32 %v9598, %v9600
    %v9602 = vrot.slane %v9588, %v9601
    %v9603 = vcombine.low %v9373, %v9437
    %v9604 = vcombine.high %v9373, %v9437
    %v9606 = vunpack.c.l.s4 1983009808
    %v9607 = vunpack.c.0.s8 %v9606
    %v9608 = vlaneseq
    %v9609 = vshrl.u32 %v9608, 7
    %v9610 = vsub.s32 %v9607, %v9609
    %v9611 = vrot.slane %v9603, %v9610
    %v9613 = vunpack.c.l.s4 1983009808
    %v9614 = vunpack.c.0.s8 %v9613
    %v9615 = vlaneseq
    %v9616 = vshrl.u32 %v9615, 7
    %v9617 = vsub.s32 %v9614, %v9616
    %v9618 = vrot.slane %v9604, %v9617
    %v9619 = vcombine.low %v9595, %v9611
    %v9620 = vcombine.high %v9595, %v9611
    %v9622 = vunpack.c.l.s4 1934713408
    %v9623 = vunpack.c.0.s8 %v9622
    %v9624 = vlaneseq
    %v9625 = vshrl.u32 %v9624, 7
    %v9626 = vsub.s32 %v9623, %v9625
    %v9627 = vrot.slane %v9619, %v9626
    %v9629 = vunpack.c.l.s4 1934713408
    %v9630 = vunpack.c.0.s8 %v9629
    %v9631 = vlaneseq
    %v9632 = vshrl.u32 %v9631, 7
    %v9633 = vsub.s32 %v9630, %v9632
    %v9634 = vrot.slane %v9620, %v9633
    %v9635 = vcombine.low %v9602, %v9618
    %v9636 = vcombine.high %v9602, %v9618
    %v9638 = vunpack.c.l.s4 1934713408
    %v9639 = vunpack.c.0.s8 %v9638
    %v9640 = vlaneseq
    %v9641 = vshrl.u32 %v9640, 7
    %v9642 = vsub.s32 %v9639, %v9641
    %v9643 = vrot.slane %v9635, %v9642
    %v9645 = vunpack.c.l.s4 1934713408
    %v9646 = vunpack.c.0.s8 %v9645
    %v9647 = vlaneseq
    %v9648 = vshrl.u32 %v9647, 7
    %v9649 = vsub.s32 %v9646, %v9648
    %v9650 = vrot.slane %v9636, %v9649
    %v9651 = vcombine.high %v9627, 0.0
    %v9652 = vcombine.high %v9634, 0.0
    %v9653 = vcombine.high %v9643, 0.0
    %v9654 = vcombine.high %v9650, 0.0
    %v9655 = vcombine.low %v9342, %v9406
    %v9656 = vcombine.high %v9342, %v9406
    %v9658 = vunpack.c.l.s4 1983009808
    %v9659 = vunpack.c.0.s8 %v9658
    %v9660 = vlaneseq
    %v9661 = vshrl.u32 %v9660, 7
    %v9662 = vsub.s32 %v9659, %v9661
    %v9663 = vrot.slane %v9655, %v9662
    %v9665 = vunpack.c.l.s4 1983009808
    %v9666 = vunpack.c.0.s8 %v9665
    %v9667 = vlaneseq
    %v9668 = vshrl.u32 %v9667, 7
    %v9669 = vsub.s32 %v9666, %v9668
    %v9670 = vrot.slane %v9656, %v9669
    %v9671 = vcombine.low %v9374, %v9438
    %v9672 = vcombine.high %v9374, %v9438
    %v9674 = vunpack.c.l.s4 1983009808
    %v9675 = vunpack.c.0.s8 %v9674
    %v9676 = vlaneseq
    %v9677 = vshrl.u32 %v9676, 7
    %v9678 = vsub.s32 %v9675, %v9677
    %v9679 = vrot.slane %v9671, %v9678
    %v9681 = vunpack.c.l.s4 1983009808
    %v9682 = vunpack.c.0.s8 %v9681
    %v9683 = vlaneseq
    %v9684 = vshrl.u32 %v9683, 7
    %v9685 = vsub.s32 %v9682, %v9684
    %v9686 = vrot.slane %v9672, %v9685
    %v9687 = vcombine.low %v9663, %v9679
    %v9688 = vcombine.high %v9663, %v9679
    %v9690 = vunpack.c.l.s4 1934713408
    %v9691 = vunpack.c.0.s8 %v9690
    %v9692 = vlaneseq
    %v9693 = vshrl.u32 %v9692, 7
    %v9694 = vsub.s32 %v9691, %v9693
    %v9695 = vrot.slane %v9687, %v9694
    %v9697 = vunpack.c.l.s4 1934713408
    %v9698 = vunpack.c.0.s8 %v9697
    %v9699 = vlaneseq
    %v9700 = vshrl.u32 %v9699, 7
    %v9701 = vsub.s32 %v9698, %v9700
    %v9702 = vrot.slane %v9688, %v9701
    %v9703 = vcombine.low %v9670, %v9686
    %v9704 = vcombine.high %v9670, %v9686
    %v9706 = vunpack.c.l.s4 1934713408
    %v9707 = vunpack.c.0.s8 %v9706
    %v9708 = vlaneseq
    %v9709 = vshrl.u32 %v9708, 7
    %v9710 = vsub.s32 %v9707, %v9709
    %v9711 = vrot.slane %v9703, %v9710
    %v9713 = vunpack.c.l.s4 1934713408
    %v9714 = vunpack.c.0.s8 %v9713
    %v9715 = vlaneseq
    %v9716 = vshrl.u32 %v9715, 7
    %v9717 = vsub.s32 %v9714, %v9716
    %v9718 = vrot.slane %v9704, %v9717
    %v9719 = vcombine.high %v9695, 0.0
    %v9720 = vcombine.high %v9702, 0.0
    %v9721 = vcombine.high %v9711, 0.0
    %v9722 = vcombine.high %v9718, 0.0
    %v9723 = vcombine.low %v9343, %v9407
    %v9724 = vcombine.high %v9343, %v9407
    %v9726 = vunpack.c.l.s4 1983009808
    %v9727 = vunpack.c.0.s8 %v9726
    %v9728 = vlaneseq
    %v9729 = vshrl.u32 %v9728, 7
    %v9730 = vsub.s32 %v9727, %v9729
    %v9731 = vrot.slane %v9723, %v9730
    %v9733 = vunpack.c.l.s4 1983009808
    %v9734 = vunpack.c.0.s8 %v9733
    %v9735 = vlaneseq
    %v9736 = vshrl.u32 %v9735, 7
    %v9737 = vsub.s32 %v9734, %v9736
    %v9738 = vrot.slane %v9724, %v9737
    %v9739 = vcombine.low %v9375, %v9439
    %v9740 = vcombine.high %v9375, %v9439
    %v9742 = vunpack.c.l.s4 1983009808
    %v9743 = vunpack.c.0.s8 %v9742
    %v9744 = vlaneseq
    %v9745 = vshrl.u32 %v9744, 7
    %v9746 = vsub.s32 %v9743, %v9745
    %v9747 = vrot.slane %v9739, %v9746
    %v9749 = vunpack.c.l.s4 1983009808
    %v9750 = vunpack.c.0.s8 %v9749
    %v9751 = vlaneseq
    %v9752 = vshrl.u32 %v9751, 7
    %v9753 = vsub.s32 %v9750, %v9752
    %v9754 = vrot.slane %v9740, %v9753
    %v9755 = vcombine.low %v9731, %v9747
    %v9756 = vcombine.high %v9731, %v9747
    %v9758 = vunpack.c.l.s4 1934713408
    %v9759 = vunpack.c.0.s8 %v9758
    %v9760 = vlaneseq
    %v9761 = vshrl.u32 %v9760, 7
    %v9762 = vsub.s32 %v9759, %v9761
    %v9763 = vrot.slane %v9755, %v9762
    %v9765 = vunpack.c.l.s4 1934713408
    %v9766 = vunpack.c.0.s8 %v9765
    %v9767 = vlaneseq
    %v9768 = vshrl.u32 %v9767, 7
    %v9769 = vsub.s32 %v9766, %v9768
    %v9770 = vrot.slane %v9756, %v9769
    %v9771 = vcombine.low %v9738, %v9754
    %v9772 = vcombine.high %v9738, %v9754
    %v9774 = vunpack.c.l.s4 1934713408
    %v9775 = vunpack.c.0.s8 %v9774
    %v9776 = vlaneseq
    %v9777 = vshrl.u32 %v9776, 7
    %v9778 = vsub.s32 %v9775, %v9777
    %v9779 = vrot.slane %v9771, %v9778
    %v9781 = vunpack.c.l.s4 1934713408
    %v9782 = vunpack.c.0.s8 %v9781
    %v9783 = vlaneseq
    %v9784 = vshrl.u32 %v9783, 7
    %v9785 = vsub.s32 %v9782, %v9784
    %v9786 = vrot.slane %v9772, %v9785
    %v9787 = vcombine.high %v9763, 0.0
    %v9788 = vcombine.high %v9770, 0.0
    %v9789 = vcombine.high %v9779, 0.0
    %v9790 = vcombine.high %v9786, 0.0
    %v9791 = vcombine.low %v9491, %v9498
    %v9793 = vunpack.c.l.s4 1983009808
    %v9794 = vunpack.c.0.s8 %v9793
    %v9795 = vlaneseq
    %v9796 = vshrl.u32 %v9795, 7
    %v9797 = vsub.s32 %v9794, %v9796
    %v9798 = vrot.slane %v9791, %v9797
    %v9799 = vcombine.low %v9515, %v9516
    %v9801 = vunpack.c.l.s4 1983009808
    %v9802 = vunpack.c.0.s8 %v9801
    %v9803 = vlaneseq
    %v9804 = vshrl.u32 %v9803, 7
    %v9805 = vsub.s32 %v9802, %v9804
    %v9806 = vrot.slane %v9799, %v9805
    %v9807 = vcombine.low %v9507, %v9514
    %v9809 = vunpack.c.l.s4 1983009808
    %v9810 = vunpack.c.0.s8 %v9809
    %v9811 = vlaneseq
    %v9812 = vshrl.u32 %v9811, 7
    %v9813 = vsub.s32 %v9810, %v9812
    %v9814 = vrot.slane %v9807, %v9813
    %v9815 = vcombine.low %v9517, %v9518
    %v9817 = vunpack.c.l.s4 1983009808
    %v9818 = vunpack.c.0.s8 %v9817
    %v9819 = vlaneseq
    %v9820 = vshrl.u32 %v9819, 7
    %v9821 = vsub.s32 %v9818, %v9820
    %v9822 = vrot.slane %v9815, %v9821
    %v9823 = vcombine.low %v9798, %v9806
    %v9824 = vcombine.high %v9798, %v9806
    %v9826 = vunpack.c.l.s4 1934713408
    %v9827 = vunpack.c.0.s8 %v9826
    %v9828 = vlaneseq
    %v9829 = vshrl.u32 %v9828, 7
    %v9830 = vsub.s32 %v9827, %v9829
    %v9831 = vrot.slane %v9823, %v9830
    %v9833 = vunpack.c.l.s4 1934713408
    %v9834 = vunpack.c.0.s8 %v9833
    %v9835 = vlaneseq
    %v9836 = vshrl.u32 %v9835, 7
    %v9837 = vsub.s32 %v9834, %v9836
    %v9838 = vrot.slane %v9824, %v9837
    %v9839 = vcombine.low %v9814, %v9822
    %v9840 = vcombine.high %v9814, %v9822
    %v9842 = vunpack.c.l.s4 1934713408
    %v9843 = vunpack.c.0.s8 %v9842
    %v9844 = vlaneseq
    %v9845 = vshrl.u32 %v9844, 7
    %v9846 = vsub.s32 %v9843, %v9845
    %v9847 = vrot.slane %v9839, %v9846
    %v9849 = vunpack.c.l.s4 1934713408
    %v9850 = vunpack.c.0.s8 %v9849
    %v9851 = vlaneseq
    %v9852 = vshrl.u32 %v9851, 7
    %v9853 = vsub.s32 %v9850, %v9852
    %v9854 = vrot.slane %v9840, %v9853
    %v9855 = vcombine.low %v9831, %v9847
    %v9856 = vcombine.high %v9831, %v9847
    %v9857 = vcombine.low %v9838, %v9854
    %v9858 = vcombine.high %v9838, %v9854
    %v9859 = vcombine.low %v9559, %v9566
    %v9861 = vunpack.c.l.s4 1983009808
    %v9862 = vunpack.c.0.s8 %v9861
    %v9863 = vlaneseq
    %v9864 = vshrl.u32 %v9863, 7
    %v9865 = vsub.s32 %v9862, %v9864
    %v9866 = vrot.slane %v9859, %v9865
    %v9867 = vcombine.low %v9583, %v9584
    %v9869 = vunpack.c.l.s4 1983009808
    %v9870 = vunpack.c.0.s8 %v9869
    %v9871 = vlaneseq
    %v9872 = vshrl.u32 %v9871, 7
    %v9873 = vsub.s32 %v9870, %v9872
    %v9874 = vrot.slane %v9867, %v9873
    %v9875 = vcombine.low %v9575, %v9582
    %v9877 = vunpack.c.l.s4 1983009808
    %v9878 = vunpack.c.0.s8 %v9877
    %v9879 = vlaneseq
    %v9880 = vshrl.u32 %v9879, 7
    %v9881 = vsub.s32 %v9878, %v9880
    %v9882 = vrot.slane %v9875, %v9881
    %v9883 = vcombine.low %v9585, %v9586
    %v9885 = vunpack.c.l.s4 1983009808
    %v9886 = vunpack.c.0.s8 %v9885
    %v9887 = vlaneseq
    %v9888 = vshrl.u32 %v9887, 7
    %v9889 = vsub.s32 %v9886, %v9888
    %v9890 = vrot.slane %v9883, %v9889
    %v9891 = vcombine.low %v9866, %v9874
    %v9892 = vcombine.high %v9866, %v9874
    %v9894 = vunpack.c.l.s4 1934713408
    %v9895 = vunpack.c.0.s8 %v9894
    %v9896 = vlaneseq
    %v9897 = vshrl.u32 %v9896, 7
    %v9898 = vsub.s32 %v9895, %v9897
    %v9899 = vrot.slane %v9891, %v9898
    %v9901 = vunpack.c.l.s4 1934713408
    %v9902 = vunpack.c.0.s8 %v9901
    %v9903 = vlaneseq
    %v9904 = vshrl.u32 %v9903, 7
    %v9905 = vsub.s32 %v9902, %v9904
    %v9906 = vrot.slane %v9892, %v9905
    %v9907 = vcombine.low %v9882, %v9890
    %v9908 = vcombine.high %v9882, %v9890
    %v9910 = vunpack.c.l.s4 1934713408
    %v9911 = vunpack.c.0.s8 %v9910
    %v9912 = vlaneseq
    %v9913 = vshrl.u32 %v9912, 7
    %v9914 = vsub.s32 %v9911, %v9913
    %v9915 = vrot.slane %v9907, %v9914
    %v9917 = vunpack.c.l.s4 1934713408
    %v9918 = vunpack.c.0.s8 %v9917
    %v9919 = vlaneseq
    %v9920 = vshrl.u32 %v9919, 7
    %v9921 = vsub.s32 %v9918, %v9920
    %v9922 = vrot.slane %v9908, %v9921
    %v9923 = vcombine.low %v9899, %v9915
    %v9924 = vcombine.high %v9899, %v9915
    %v9925 = vcombine.low %v9906, %v9922
    %v9926 = vcombine.high %v9906, %v9922
    %v9927 = vcombine.low %v9627, %v9634
    %v9929 = vunpack.c.l.s4 1983009808
    %v9930 = vunpack.c.0.s8 %v9929
    %v9931 = vlaneseq
    %v9932 = vshrl.u32 %v9931, 7
    %v9933 = vsub.s32 %v9930, %v9932
    %v9934 = vrot.slane %v9927, %v9933
    %v9935 = vcombine.low %v9651, %v9652
    %v9937 = vunpack.c.l.s4 1983009808
    %v9938 = vunpack.c.0.s8 %v9937
    %v9939 = vlaneseq
    %v9940 = vshrl.u32 %v9939, 7
    %v9941 = vsub.s32 %v9938, %v9940
    %v9942 = vrot.slane %v9935, %v9941
    %v9943 = vcombine.low %v9643, %v9650
    %v9945 = vunpack.c.l.s4 1983009808
    %v9946 = vunpack.c.0.s8 %v9945
    %v9947 = vlaneseq
    %v9948 = vshrl.u32 %v9947, 7
    %v9949 = vsub.s32 %v9946, %v9948
    %v9950 = vrot.slane %v9943, %v9949
    %v9951 = vcombine.low %v9653, %v9654
    %v9953 = vunpack.c.l.s4 1983009808
    %v9954 = vunpack.c.0.s8 %v9953
    %v9955 = vlaneseq
    %v9956 = vshrl.u32 %v9955, 7
    %v9957 = vsub.s32 %v9954, %v9956
    %v9958 = vrot.slane %v9951, %v9957
    %v9959 = vcombine.low %v9934, %v9942
    %v9960 = vcombine.high %v9934, %v9942
    %v9962 = vunpack.c.l.s4 1934713408
    %v9963 = vunpack.c.0.s8 %v9962
    %v9964 = vlaneseq
    %v9965 = vshrl.u32 %v9964, 7
    %v9966 = vsub.s32 %v9963, %v9965
    %v9967 = vrot.slane %v9959, %v9966
    %v9969 = vunpack.c.l.s4 1934713408
    %v9970 = vunpack.c.0.s8 %v9969
    %v9971 = vlaneseq
    %v9972 = vshrl.u32 %v9971, 7
    %v9973 = vsub.s32 %v9970, %v9972
    %v9974 = vrot.slane %v9960, %v9973
    %v9975 = vcombine.low %v9950, %v9958
    %v9976 = vcombine.high %v9950, %v9958
    %v9978 = vunpack.c.l.s4 1934713408
    %v9979 = vunpack.c.0.s8 %v9978
    %v9980 = vlaneseq
    %v9981 = vshrl.u32 %v9980, 7
    %v9982 = vsub.s32 %v9979, %v9981
    %v9983 = vrot.slane %v9975, %v9982
    %v9985 = vunpack.c.l.s4 1934713408
    %v9986 = vunpack.c.0.s8 %v9985
    %v9987 = vlaneseq
    %v9988 = vshrl.u32 %v9987, 7
    %v9989 = vsub.s32 %v9986, %v9988
    %v9990 = vrot.slane %v9976, %v9989
    %v9991 = vcombine.low %v9967, %v9983
    %v9992 = vcombine.high %v9967, %v9983
    %v9993 = vcombine.low %v9974, %v9990
    %v9994 = vcombine.high %v9974, %v9990
    %v9995 = vcombine.low %v9695, %v9702
    %v9997 = vunpack.c.l.s4 1983009808
    %v9998 = vunpack.c.0.s8 %v9997
    %v9999 = vlaneseq
    %v10000 = vshrl.u32 %v9999, 7
    %v10001 = vsub.s32 %v9998, %v10000
    %v10002 = vrot.slane %v9995, %v10001
    %v10003 = vcombine.low %v9719, %v9720
    %v10005 = vunpack.c.l.s4 1983009808
    %v10006 = vunpack.c.0.s8 %v10005
    %v10007 = vlaneseq
    %v10008 = vshrl.u32 %v10007, 7
    %v10009 = vsub.s32 %v10006, %v10008
    %v10010 = vrot.slane %v10003, %v10009
    %v10011 = vcombine.low %v9711, %v9718
    %v10013 = vunpack.c.l.s4 1983009808
    %v10014 = vunpack.c.0.s8 %v10013
    %v10015 = vlaneseq
    %v10016 = vshrl.u32 %v10015, 7
    %v10017 = vsub.s32 %v10014, %v10016
    %v10018 = vrot.slane %v10011, %v10017
    %v10019 = vcombine.low %v9721, %v9722
    %v10021 = vunpack.c.l.s4 1983009808
    %v10022 = vunpack.c.0.s8 %v10021
    %v10023 = vlaneseq
    %v10024 = vshrl.u32 %v10023, 7
    %v10025 = vsub.s32 %v10022, %v10024
    %v10026 = vrot.slane %v10019, %v10025
    %v10027 = vcombine.low %v10002, %v10010
    %v10028 = vcombine.high %v10002, %v10010
    %v10030 = vunpack.c.l.s4 1934713408
    %v10031 = vunpack.c.0.s8 %v10030
    %v10032 = vlaneseq
    %v10033 = vshrl.u32 %v10032, 7
    %v10034 = vsub.s32 %v10031, %v10033
    %v10035 = vrot.slane %v10027, %v10034
    %v10037 = vunpack.c.l.s4 1934713408
    %v10038 = vunpack.c.0.s8 %v10037
    %v10039 = vlaneseq
    %v10040 = vshrl.u32 %v10039, 7
    %v10041 = vsub.s32 %v10038, %v10040
    %v10042 = vrot.slane %v10028, %v10041
    %v10043 = vcombine.low %v10018, %v10026
    %v10044 = vcombine.high %v10018, %v10026
    %v10046 = vunpack.c.l.s4 1934713408
    %v10047 = vunpack.c.0.s8 %v10046
    %v10048 = vlaneseq
    %v10049 = vshrl.u32 %v10048, 7
    %v10050 = vsub.s32 %v10047, %v10049
    %v10051 = vrot.slane %v10043, %v10050
    %v10053 = vunpack.c.l.s4 1934713408
    %v10054 = vunpack.c.0.s8 %v10053
    %v10055 = vlaneseq
    %v10056 = vshrl.u32 %v10055, 7
    %v10057 = vsub.s32 %v10054, %v10056
    %v10058 = vrot.slane %v10044, %v10057
    %v10059 = vcombine.low %v10035, %v10051
    %v10060 = vcombine.high %v10035, %v10051
    %v10061 = vcombine.low %v10042, %v10058
    %v10062 = vcombine.high %v10042, %v10058
    %v10063 = vcombine.low %v9763, %v9770
    %v10065 = vunpack.c.l.s4 1983009808
    %v10066 = vunpack.c.0.s8 %v10065
    %v10067 = vlaneseq
    %v10068 = vshrl.u32 %v10067, 7
    %v10069 = vsub.s32 %v10066, %v10068
    %v10070 = vrot.slane %v10063, %v10069
    %v10071 = vcombine.low %v9787, %v9788
    %v10073 = vunpack.c.l.s4 1983009808
    %v10074 = vunpack.c.0.s8 %v10073
    %v10075 = vlaneseq
    %v10076 = vshrl.u32 %v10075, 7
    %v10077 = vsub.s32 %v10074, %v10076
    %v10078 = vrot.slane %v10071, %v10077
    %v10079 = vcombine.low %v9779, %v9786
    %v10081 = vunpack.c.l.s4 1983009808
    %v10082 = vunpack.c.0.s8 %v10081
    %v10083 = vlaneseq
    %v10084 = vshrl.u32 %v10083, 7
    %v10085 = vsub.s32 %v10082, %v10084
    %v10086 = vrot.slane %v10079, %v10085
    %v10087 = vcombine.low %v9789, %v9790
    %v10089 = vunpack.c.l.s4 1983009808
    %v10090 = vunpack.c.0.s8 %v10089
    %v10091 = vlaneseq
    %v10092 = vshrl.u32 %v10091, 7
    %v10093 = vsub.s32 %v10090, %v10092
    %v10094 = vrot.slane %v10087, %v10093
    %v10095 = vcombine.low %v10070, %v10078
    %v10096 = vcombine.high %v10070, %v10078
    %v10098 = vunpack.c.l.s4 1934713408
    %v10099 = vunpack.c.0.s8 %v10098
    %v10100 = vlaneseq
    %v10101 = vshrl.u32 %v10100, 7
    %v10102 = vsub.s32 %v10099, %v10101
    %v10103 = vrot.slane %v10095, %v10102
    %v10105 = vunpack.c.l.s4 1934713408
    %v10106 = vunpack.c.0.s8 %v10105
    %v10107 = vlaneseq
    %v10108 = vshrl.u32 %v10107, 7
    %v10109 = vsub.s32 %v10106, %v10108
    %v10110 = vrot.slane %v10096, %v10109
    %v10111 = vcombine.low %v10086, %v10094
    %v10112 = vcombine.high %v10086, %v10094
    %v10114 = vunpack.c.l.s4 1934713408
    %v10115 = vunpack.c.0.s8 %v10114
    %v10116 = vlaneseq
    %v10117 = vshrl.u32 %v10116, 7
    %v10118 = vsub.s32 %v10115, %v10117
    %v10119 = vrot.slane %v10111, %v10118
    %v10121 = vunpack.c.l.s4 1934713408
    %v10122 = vunpack.c.0.s8 %v10121
    %v10123 = vlaneseq
    %v10124 = vshrl.u32 %v10123, 7
    %v10125 = vsub.s32 %v10122, %v10124
    %v10126 = vrot.slane %v10112, %v10125
    %v10127 = vcombine.low %v10103, %v10119
    %v10128 = vcombine.high %v10103, %v10119
    %v10129 = vcombine.low %v10110, %v10126
    %v10130 = vcombine.high %v10110, %v10126
    %10136 = vrot.lane.b32.xlu0 %v9856, 32
    %v10137 = vpop.permute.xlu0 %10136
    %10138 = vrot.lane.b32.xlu0 %v9924, 32
    %v10139 = vpop.permute.xlu0 %10138
    %10140 = vrot.lane.b32.xlu0 %v9992, 32
    %v10141 = vpop.permute.xlu0 %10140
    %10142 = vrot.lane.b32.xlu0 %v10060, 32
    %v10143 = vpop.permute.xlu0 %10142
    %10144 = vrot.lane.b32.xlu0 %v10128, 32
    %v10145 = vpop.permute.xlu0 %10144
    %10156 = vrot.lane.b32.xlu0 %v9857, 64
    %v10157 = vpop.permute.xlu0 %10156
    %10158 = vrot.lane.b32.xlu0 %v9925, 64
    %v10159 = vpop.permute.xlu0 %10158
    %10160 = vrot.lane.b32.xlu0 %v9993, 64
    %v10161 = vpop.permute.xlu0 %10160
    %10162 = vrot.lane.b32.xlu0 %v10061, 64
    %v10163 = vpop.permute.xlu0 %10162
    %10164 = vrot.lane.b32.xlu0 %v10129, 64
    %v10165 = vpop.permute.xlu0 %10164
    %10176 = vrot.lane.b32.xlu0 %v9858, 96
    %v10177 = vpop.permute.xlu0 %10176
    %10178 = vrot.lane.b32.xlu0 %v9926, 96
    %v10179 = vpop.permute.xlu0 %10178
    %10180 = vrot.lane.b32.xlu0 %v9994, 96
    %v10181 = vpop.permute.xlu0 %10180
    %10182 = vrot.lane.b32.xlu0 %v10062, 96
    %v10183 = vpop.permute.xlu0 %10182
    %10184 = vrot.lane.b32.xlu0 %v10130, 96
    %v10185 = vpop.permute.xlu0 %10184
    %v10191 = vsel %vm5517, %v9855, %v10137
    %v10192 = vsel %vm5517, %v9923, %v10139
    %v10193 = vsel %vm5517, %v9991, %v10141
    %v10194 = vsel %vm5517, %v10059, %v10143
    %v10195 = vsel %vm5517, %v10127, %v10145
    %v10196 = vsel %vm244, %v10191, %v10157
    %v10197 = vsel %vm244, %v10192, %v10159
    %v10198 = vsel %vm244, %v10193, %v10161
    %v10199 = vsel %vm244, %v10194, %v10163
    %v10200 = vsel %vm244, %v10195, %v10165
    %vm10201 = vcmask 785408
    %v10202 = vsel %vm10201, %v10196, %v10177
    %v10203 = vsel %vm10201, %v10197, %v10179
    %v10204 = vsel %vm10201, %v10198, %v10181
    %v10205 = vsel %vm10201, %v10199, %v10183
    %v10206 = vsel %vm10201, %v10200, %v10185
    %v10207 = vpack.c.bf16 %v10203, %v10202
    %v10208 = vpack.c.bf16 %v10205, %v10204
    %v10209 = vpack.c.bf16 %v10206, %v10206
    %v10210 = vld [vmem:[#allocation6] sm:$0xf]
    %v10211 = vld [vmem:[#allocation6 + $0x4] sm:$0xf]
    %v10212 = vld [vmem:[#allocation6 + $0x8] sm:$0xf]
    %v10213 = vld [vmem:[#allocation6 + $0xc] sm:$0xf]
    %v10214 = vld [vmem:[#allocation6 + $0x10] sm:$0xf]
    %v10215 = vld [vmem:[#allocation6 + $0x14] sm:$0xf]
    %v10216 = vld [vmem:[#allocation6 + $0x18] sm:$0xf]
    %v10217 = vld [vmem:[#allocation6 + $0x1c] sm:$0xf]
    %v10218 = vld [vmem:[#allocation6 + $0x20] sm:$0xf]
    %v10219 = vld [vmem:[#allocation6 + $0x24] sm:$0xf]
    %v10220 = vld [vmem:[#allocation6 + $0x28] sm:$0xf]
    %v10221 = vld [vmem:[#allocation6 + $0x2c] sm:$0xf]
    %v10222 = vld [vmem:[#allocation6 + $0x30] sm:$0xf]
    %v10223 = vld [vmem:[#allocation6 + $0x34] sm:$0xf]
    %v10224 = vld [vmem:[#allocation6 + $0x38] sm:$0xf]
    %v10225 = vld [vmem:[#allocation6 + $0x3c] sm:$0xf]
    %v10226 = vlaneseq
    %v10227 = vshrl.u32 %v10226, 7
    %v10228 = vsub.s32 6, %v10227
    %v10229 = vrot.slane %v483, %v10228
    %v10246 = vunpack.c.l.b16 %v10210
    %v10247 = vunpack.c.l.b16 %v10211
    %v10248 = vunpack.c.l.b16 %v10212
    %v10249 = vunpack.c.l.b16 %v10213
    %v10250 = vunpack.c.l.b16 %v10214
    %v10251 = vunpack.c.l.b16 %v10215
    %v10252 = vunpack.c.l.b16 %v10216
    %v10253 = vunpack.c.l.b16 %v10217
    %v10254 = vunpack.c.l.b16 %v10218
    %v10255 = vunpack.c.l.b16 %v10219
    %v10256 = vunpack.c.l.b16 %v10220
    %v10257 = vunpack.c.l.b16 %v10221
    %v10258 = vunpack.c.l.b16 %v10222
    %v10259 = vunpack.c.l.b16 %v10223
    %v10260 = vunpack.c.l.b16 %v10224
    %v10261 = vunpack.c.l.b16 %v10225
    %v10262 = vpack.c.b16 %v10247, %v10246
    %v10263 = vpack.c.b16 %v10249, %v10248
    %v10264 = vpack.c.b16 %v10251, %v10250
    %v10265 = vpack.c.b16 %v10253, %v10252
    %v10266 = vpack.c.b16 %v10255, %v10254
    %v10267 = vpack.c.b16 %v10257, %v10256
    %v10268 = vpack.c.b16 %v10259, %v10258
    %v10269 = vpack.c.b16 %v10261, %v10260
    %10278 = vmatprep.subr.bf16.mxu0 0
    %10279 = vmatpush1.bf16.msra.mxu0 %v10262
    %10280 = vmatprep.subr.bf16.mxu0 0
    %10281 = vmatpush1.bf16.msra.mxu0 %v10263
    %10282 = vmatprep.subr.bf16.mxu0 0
    %10283 = vmatpush1.bf16.msra.mxu0 %v10264
    %10284 = vmatprep.subr.bf16.mxu0 0
    %10285 = vmatpush1.bf16.msra.mxu0 %v10265
    %10286 = vmatprep.subr.bf16.mxu0 0
    %10287 = vmatpush1.bf16.msra.mxu0 %v10266
    %10288 = vmatprep.subr.bf16.mxu0 0
    %10289 = vmatpush1.bf16.msra.mxu0 %v10267
    %10290 = vmatprep.subr.bf16.mxu0 0
    %10291 = vmatpush1.bf16.msra.mxu0 %v10268
    %10292 = vmatprep.subr.bf16.mxu0 0
    %10293 = vmatpush1.bf16.msra.mxu0 %v10269
    %10294 = vmatprep.subr.bf16.mxu0 0
    %10295 = vmatpush1.bf16.msra.mxu0 0
    %10296 = vmatprep.subr.bf16.mxu0 0
    %10297 = vmatpush1.bf16.msra.mxu0 0
    %10298 = vmatprep.subr.bf16.mxu0 0
    %10299 = vmatpush1.bf16.msra.mxu0 0
    %10300 = vmatprep.subr.bf16.mxu0 0
    %10301 = vmatpush1.bf16.msra.mxu0 0
    %10302 = vmatprep.subr.bf16.mxu0 0
    %10303 = vmatpush1.bf16.msra.mxu0 0
    %10304 = vmatprep.subr.bf16.mxu0 0
    %10305 = vmatpush1.bf16.msra.mxu0 0
    %10306 = vmatprep.subr.bf16.mxu0 0
    %10307 = vmatpush1.bf16.msra.mxu0 0
    %10308 = vmatprep.subr.bf16.mxu0 0
    %10309 = vmatpush1.bf16.msra.mxu0 0
    %10310 = vmatprep.mubr.bf16.mxu0 0
    %10311 = vmatmul.mubr.bf16.gmra.mrb[0].mxu0 %v10207
    %v10312 = vpop.f32.mrb[0].mxu0
    %v10313 = vadd.f32 %v10229, %v10312
    %v10314 = vpop.f32.mrb[0].mxu0
    %v10315 = vpop.f32.mrb[0].mxu0
    %v10316 = vadd.f32 %v10229, %v10315
    %v10317 = vpop.f32.mrb[0].mxu0
    %10318 = vmatprep.mubr.bf16.mxu0 0
    %10319 = vmatmul.mubr.bf16.gmra.mrb[0].mxu0 %v10208
    %v10320 = vpop.f32.mrb[0].mxu0
    %v10321 = vadd.f32 %v10229, %v10320
    %v10322 = vpop.f32.mrb[0].mxu0
    %v10323 = vpop.f32.mrb[0].mxu0
    %v10324 = vadd.f32 %v10229, %v10323
    %v10325 = vpop.f32.mrb[0].mxu0
    %10326 = vmatprep.mubr.bf16.mxu0 0
    %10327 = vmatmul.mubr.bf16.gmra.mrb[0].mxu0 %v10209
    %v10328 = vpop.f32.mrb[0].mxu0
    %v10329 = vadd.f32 %v10229, %v10328
    %v10330 = vpop.f32.mrb[0].mxu0
    %v10331 = vpop.f32.mrb[0].mxu0
    %v10332 = vpop.f32.mrb[0].mxu0
    %10333 = vdwg.mxu0
    %v10334 = vadd.f32 %v478, %v10313
    %v10335 = vadd.f32 %v479, %v10316
    %v10336 = vadd.f32 %v480, %v10321
    %v10337 = vadd.f32 %v481, %v10324
    %v10338 = vadd.f32 %v482, %v10329
    %10339 = vadd.xlane.f32.xlu0 %v10334
    %v10340 = vpop.xlane.xlu0 %10339
    %10341 = vadd.xlane.f32.xlu0 %v10335
    %v10342 = vpop.xlane.xlu0 %10341
    %10343 = vadd.xlane.f32.xlu0 %v10336
    %v10344 = vpop.xlane.xlu0 %10343
    %10345 = vadd.xlane.f32.xlu0 %v10337
    %v10346 = vpop.xlane.xlu0 %10345
    %10347 = vadd.xlane.f32.xlu0 %v10338
    %v10348 = vpop.xlane.xlu0 %10347
    %v10349 = vmul.f32 %v10340, %v495
    %v10350 = vmul.f32 %v10342, %v495
    %v10351 = vmul.f32 %v10344, %v495
    %v10352 = vmul.f32 %v10346, %v495
    %v10353 = vmul.f32 %v10348, %v495
    %v10354 = vsub.f32 %v10334, %v10349
    %v10355 = vsub.f32 %v10335, %v10350
    %v10356 = vsub.f32 %v10336, %v10351
    %v10357 = vsub.f32 %v10337, %v10352
    %v10358 = vsub.f32 %v10338, %v10353
    %v10359 = vmul.f32 %v10354, %v10354
    %v10360 = vmul.f32 %v10355, %v10355
    %v10361 = vmul.f32 %v10356, %v10356
    %v10362 = vmul.f32 %v10357, %v10357
    %v10363 = vmul.f32 %v10358, %v10358
    %10364 = vadd.xlane.f32.xlu0 %v10359
    %v10365 = vpop.xlane.xlu0 %10364
    %10366 = vadd.xlane.f32.xlu0 %v10360
    %v10367 = vpop.xlane.xlu0 %10366
    %10368 = vadd.xlane.f32.xlu0 %v10361
    %v10369 = vpop.xlane.xlu0 %10368
    %10370 = vadd.xlane.f32.xlu0 %v10362
    %v10371 = vpop.xlane.xlu0 %10370
    %10372 = vadd.xlane.f32.xlu0 %v10363
    %v10373 = vpop.xlane.xlu0 %10372
    %v10374 = vmul.f32 %v10365, %v495
    %v10375 = vmul.f32 %v10367, %v495
    %v10376 = vmul.f32 %v10369, %v495
    %v10377 = vmul.f32 %v10371, %v495
    %v10378 = vmul.f32 %v10373, %v495
    %v10379 = vadd.f32 %v10374, 1e-05
    %v10380 = vadd.f32 %v10375, 1e-05
    %v10381 = vadd.f32 %v10376, 1e-05
    %v10382 = vadd.f32 %v10377, 1e-05
    %v10383 = vadd.f32 %v10378, 1e-05
    %v10384 = vrsqrt.pop %v10379
    %v10385 = vrsqrt.pop %v10380
    %v10386 = vrsqrt.pop %v10381
    %v10387 = vrsqrt.pop %v10382
    %v10388 = vrsqrt.pop %v10383
    %v10389 = vmul.f32 %v10354, %v10384
    %v10390 = vmul.f32 %v10355, %v10385
    %v10391 = vmul.f32 %v10356, %v10386
    %v10392 = vmul.f32 %v10357, %v10387
    %v10393 = vmul.f32 %v10358, %v10388
    %v10394 = vlaneseq
    %v10395 = vshrl.u32 %v10394, 7
    %v10396 = vsub.s32 2, %v10395
    %v10397 = vrot.slane %v483, %v10396
    %v10398 = vmul.f32 %v10389, %v10397
    %v10399 = vmul.f32 %v10390, %v10397
    %v10400 = vmul.f32 %v10391, %v10397
    %v10401 = vmul.f32 %v10392, %v10397
    %v10402 = vmul.f32 %v10393, %v10397
    %v10403 = vlaneseq
    %v10404 = vshrl.u32 %v10403, 7
    %v10405 = vsub.s32 3, %v10404
    %v10406 = vrot.slane %v483, %v10405
    %v10407 = vadd.f32 %v10398, %v10406
    %v10408 = vadd.f32 %v10399, %v10406
    %v10409 = vadd.f32 %v10400, %v10406
    %v10410 = vadd.f32 %v10401, %v10406
    %v10411 = vadd.f32 %v10402, %v10406
    %v10412 = vpack.c.bf16 %v10408, %v10407
    %v10413 = vpack.c.bf16 %v10410, %v10409
    %v10414 = vpack.c.bf16 %v10411, %v10411
    %v10415 = vld [vmem:[%s10] sm:$0xff]
    %v10416 = vld [vmem:[%s10 + $0x8] sm:$0xff]
    %v10417 = vld [vmem:[%s10 + $0x10] sm:$0xff]
    %v10418 = vld [vmem:[%s10 + $0x18] sm:$0xff]
    %v10419 = vld [vmem:[%s10 + $0x20] sm:$0xff]
    %v10420 = vld [vmem:[%s10 + $0x28] sm:$0xff]
    %v10421 = vld [vmem:[%s10 + $0x30] sm:$0xff]
    %v10422 = vld [vmem:[%s10 + $0x38] sm:$0xff]
    %v10423 = vld [vmem:[%s10 + $0x40] sm:$0xff]
    %v10424 = vld [vmem:[%s10 + $0x48] sm:$0xff]
    %v10425 = vld [vmem:[%s10 + $0x50] sm:$0xff]
    %v10426 = vld [vmem:[%s10 + $0x58] sm:$0xff]
    %v10427 = vld [vmem:[%s10 + $0x60] sm:$0xff]
    %v10428 = vld [vmem:[%s10 + $0x68] sm:$0xff]
    %v10429 = vld [vmem:[%s10 + $0x70] sm:$0xff]
    %v10430 = vld [vmem:[%s10 + $0x78] sm:$0xff]
    %v10431 = vld [vmem:[%s10 + $0x80] sm:$0xff]
    %v10432 = vld [vmem:[%s10 + $0x88] sm:$0xff]
    %v10433 = vld [vmem:[%s10 + $0x90] sm:$0xff]
    %v10434 = vld [vmem:[%s10 + $0x98] sm:$0xff]
    %v10435 = vld [vmem:[%s10 + $0xa0] sm:$0xff]
    %v10436 = vld [vmem:[%s10 + $0xa8] sm:$0xff]
    %v10437 = vld [vmem:[%s10 + $0xb0] sm:$0xff]
    %v10438 = vld [vmem:[%s10 + $0xb8] sm:$0xff]
    %v10439 = vld [vmem:[%s10 + $0xc0] sm:$0xff]
    %v10440 = vld [vmem:[%s10 + $0xc8] sm:$0xff]
    %v10441 = vld [vmem:[%s10 + $0xd0] sm:$0xff]
    %v10442 = vld [vmem:[%s10 + $0xd8] sm:$0xff]
    %v10443 = vld [vmem:[%s10 + $0xe0] sm:$0xff]
    %v10444 = vld [vmem:[%s10 + $0xe8] sm:$0xff]
    %v10445 = vld [vmem:[%s10 + $0xf0] sm:$0xff]
    %v10446 = vld [vmem:[%s10 + $0xf8] sm:$0xff]
    %v10447 = vlaneseq
    %v10448 = vshrl.u32 %v10447, 7
    %v10449 = vsub.s32 1, %v10448
    %v10450 = vrot.slane %v484, %v10449
    %v10451 = vlaneseq
    %v10452 = vshrl.u32 %v10451, 7
    %v10453 = vsub.s32 3, %v10452
    %v10454 = vrot.slane %v484, %v10453
    %v10455 = vlaneseq
    %v10456 = vshrl.u32 %v10455, 7
    %v10457 = vsub.s32 5, %v10456
    %v10458 = vrot.slane %v484, %v10457
    %v10459 = vlaneseq
    %v10460 = vshrl.u32 %v10459, 7
    %v10461 = vsub.s32 7, %v10460
    %v10462 = vrot.slane %v484, %v10461
    %v10467 = vlaneseq
    %v10468 = vshrl.u32 %v10467, 7
    %v10469 = vsub.s32 1, %v10468
    %v10470 = vrot.slane %v10450, %v10469
    %v10471 = vlaneseq
    %v10472 = vshrl.u32 %v10471, 7
    %v10473 = vsub.s32 1, %v10472
    %v10474 = vrot.slane %v10454, %v10473
    %v10475 = vlaneseq
    %v10476 = vshrl.u32 %v10475, 7
    %v10477 = vsub.s32 1, %v10476
    %v10478 = vrot.slane %v10458, %v10477
    %v10479 = vlaneseq
    %v10480 = vshrl.u32 %v10479, 7
    %v10481 = vsub.s32 1, %v10480
    %v10482 = vrot.slane %v10462, %v10481
    %v10515 = vunpack.c.l.b16 %v10415
    %v10516 = vunpack.c.h.b16 %v10415
    %v10517 = vunpack.c.l.b16 %v10416
    %v10518 = vunpack.c.h.b16 %v10416
    %v10519 = vunpack.c.l.b16 %v10417
    %v10520 = vunpack.c.h.b16 %v10417
    %v10521 = vunpack.c.l.b16 %v10418
    %v10522 = vunpack.c.h.b16 %v10418
    %v10523 = vunpack.c.l.b16 %v10419
    %v10524 = vunpack.c.h.b16 %v10419
    %v10525 = vunpack.c.l.b16 %v10420
    %v10526 = vunpack.c.h.b16 %v10420
    %v10527 = vunpack.c.l.b16 %v10421
    %v10528 = vunpack.c.h.b16 %v10421
    %v10529 = vunpack.c.l.b16 %v10422
    %v10530 = vunpack.c.h.b16 %v10422
    %v10531 = vunpack.c.l.b16 %v10423
    %v10532 = vunpack.c.h.b16 %v10423
    %v10533 = vunpack.c.l.b16 %v10424
    %v10534 = vunpack.c.h.b16 %v10424
    %v10535 = vunpack.c.l.b16 %v10425
    %v10536 = vunpack.c.h.b16 %v10425
    %v10537 = vunpack.c.l.b16 %v10426
    %v10538 = vunpack.c.h.b16 %v10426
    %v10539 = vunpack.c.l.b16 %v10427
    %v10540 = vunpack.c.h.b16 %v10427
    %v10541 = vunpack.c.l.b16 %v10428
    %v10542 = vunpack.c.h.b16 %v10428
    %v10543 = vunpack.c.l.b16 %v10429
    %v10544 = vunpack.c.h.b16 %v10429
    %v10545 = vunpack.c.l.b16 %v10430
    %v10546 = vunpack.c.h.b16 %v10430
    %v10547 = vunpack.c.l.b16 %v10431
    %v10548 = vunpack.c.h.b16 %v10431
    %v10549 = vunpack.c.l.b16 %v10432
    %v10550 = vunpack.c.h.b16 %v10432
    %v10551 = vunpack.c.l.b16 %v10433
    %v10552 = vunpack.c.h.b16 %v10433
    %v10553 = vunpack.c.l.b16 %v10434
    %v10554 = vunpack.c.h.b16 %v10434
    %v10555 = vunpack.c.l.b16 %v10435
    %v10556 = vunpack.c.h.b16 %v10435
    %v10557 = vunpack.c.l.b16 %v10436
    %v10558 = vunpack.c.h.b16 %v10436
    %v10559 = vunpack.c.l.b16 %v10437
    %v10560 = vunpack.c.h.b16 %v10437
    %v10561 = vunpack.c.l.b16 %v10438
    %v10562 = vunpack.c.h.b16 %v10438
    %v10563 = vunpack.c.l.b16 %v10439
    %v10564 = vunpack.c.h.b16 %v10439
    %v10565 = vunpack.c.l.b16 %v10440
    %v10566 = vunpack.c.h.b16 %v10440
    %v10567 = vunpack.c.l.b16 %v10441
    %v10568 = vunpack.c.h.b16 %v10441
    %v10569 = vunpack.c.l.b16 %v10442
    %v10570 = vunpack.c.h.b16 %v10442
    %v10571 = vunpack.c.l.b16 %v10443
    %v10572 = vunpack.c.h.b16 %v10443
    %v10573 = vunpack.c.l.b16 %v10444
    %v10574 = vunpack.c.h.b16 %v10444
    %v10575 = vunpack.c.l.b16 %v10445
    %v10576 = vunpack.c.h.b16 %v10445
    %v10577 = vunpack.c.l.b16 %v10446
    %v10578 = vunpack.c.h.b16 %v10446
    %v10579 = vpack.c.b16 %v10519, %v10515
    %v10580 = vpack.c.b16 %v10520, %v10516
    %v10581 = vpack.c.b16 %v10521, %v10517
    %v10582 = vpack.c.b16 %v10522, %v10518
    %v10583 = vpack.c.b16 %v10527, %v10523
    %v10584 = vpack.c.b16 %v10528, %v10524
    %v10585 = vpack.c.b16 %v10529, %v10525
    %v10586 = vpack.c.b16 %v10530, %v10526
    %v10587 = vpack.c.b16 %v10535, %v10531
    %v10588 = vpack.c.b16 %v10536, %v10532
    %v10589 = vpack.c.b16 %v10537, %v10533
    %v10590 = vpack.c.b16 %v10538, %v10534
    %v10591 = vpack.c.b16 %v10543, %v10539
    %v10592 = vpack.c.b16 %v10544, %v10540
    %v10593 = vpack.c.b16 %v10545, %v10541
    %v10594 = vpack.c.b16 %v10546, %v10542
    %v10595 = vpack.c.b16 %v10551, %v10547
    %v10596 = vpack.c.b16 %v10552, %v10548
    %v10597 = vpack.c.b16 %v10553, %v10549
    %v10598 = vpack.c.b16 %v10554, %v10550
    %v10599 = vpack.c.b16 %v10559, %v10555
    %v10600 = vpack.c.b16 %v10560, %v10556
    %v10601 = vpack.c.b16 %v10561, %v10557
    %v10602 = vpack.c.b16 %v10562, %v10558
    %v10603 = vpack.c.b16 %v10567, %v10563
    %v10604 = vpack.c.b16 %v10568, %v10564
    %v10605 = vpack.c.b16 %v10569, %v10565
    %v10606 = vpack.c.b16 %v10570, %v10566
    %v10607 = vpack.c.b16 %v10575, %v10571
    %v10608 = vpack.c.b16 %v10576, %v10572
    %v10609 = vpack.c.b16 %v10577, %v10573
    %v10610 = vpack.c.b16 %v10578, %v10574
    %10643 = vmatprep.subr.bf16.mxu0 %v10580
    %10644 = vmatpush1.bf16.msra.mxu0 %v10579
    %10645 = vmatprep.subr.bf16.mxu0 %v10584
    %10646 = vmatpush1.bf16.msra.mxu0 %v10583
    %10647 = vmatprep.subr.bf16.mxu0 %v10588
    %10648 = vmatpush1.bf16.msra.mxu0 %v10587
    %10649 = vmatprep.subr.bf16.mxu0 %v10592
    %10650 = vmatpush1.bf16.msra.mxu0 %v10591
    %10651 = vmatprep.subr.bf16.mxu0 %v10596
    %10652 = vmatpush1.bf16.msra.mxu0 %v10595
    %10653 = vmatprep.subr.bf16.mxu0 %v10600
    %10654 = vmatpush1.bf16.msra.mxu0 %v10599
    %10655 = vmatprep.subr.bf16.mxu0 %v10604
    %10656 = vmatpush1.bf16.msra.mxu0 %v10603
    %10657 = vmatprep.subr.bf16.mxu0 %v10608
    %10658 = vmatpush1.bf16.msra.mxu0 %v10607
    %10659 = vmatprep.subr.bf16.mxu0 0
    %10660 = vmatpush1.bf16.msra.mxu0 0
    %10661 = vmatprep.subr.bf16.mxu0 0
    %10662 = vmatpush1.bf16.msra.mxu0 0
    %10663 = vmatprep.subr.bf16.mxu0 0
    %10664 = vmatpush1.bf16.msra.mxu0 0
    %10665 = vmatprep.subr.bf16.mxu0 0
    %10666 = vmatpush1.bf16.msra.mxu0 0
    %10667 = vmatprep.subr.bf16.mxu0 0
    %10668 = vmatpush1.bf16.msra.mxu0 0
    %10669 = vmatprep.subr.bf16.mxu0 0
    %10670 = vmatpush1.bf16.msra.mxu0 0
    %10671 = vmatprep.subr.bf16.mxu0 0
    %10672 = vmatpush1.bf16.msra.mxu0 0
    %10673 = vmatprep.subr.bf16.mxu0 0
    %10674 = vmatpush1.bf16.msra.mxu0 0
    %10675 = vmatprep.mubr.bf16.mxu0 0
    %10676 = vmatmul.mubr.bf16.gmra.mrb[0].mxu0 %v10412
    %v10677 = vpop.f32.mrb[0].mxu0
    %v10678 = vadd.f32 %v10470, %v10677
    %v10679 = vpop.f32.mrb[0].mxu0
    %v10680 = vadd.f32 %v10474, %v10679
    %v10681 = vpop.f32.mrb[0].mxu0
    %v10682 = vadd.f32 %v10470, %v10681
    %v10683 = vpop.f32.mrb[0].mxu0
    %v10684 = vadd.f32 %v10474, %v10683
    %10685 = vmatprep.mubr.bf16.mxu0 0
    %10686 = vmatmul.mubr.bf16.gmra.mrb[0].mxu0 %v10413
    %v10687 = vpop.f32.mrb[0].mxu0
    %v10688 = vadd.f32 %v10470, %v10687
    %v10689 = vpop.f32.mrb[0].mxu0
    %v10690 = vadd.f32 %v10474, %v10689
    %v10691 = vpop.f32.mrb[0].mxu0
    %v10692 = vadd.f32 %v10470, %v10691
    %v10693 = vpop.f32.mrb[0].mxu0
    %v10694 = vadd.f32 %v10474, %v10693
    %10695 = vmatprep.mubr.bf16.mxu0 0
    %10696 = vmatmul.mubr.bf16.gmra.mrb[0].mxu0 %v10414
    %v10697 = vpop.f32.mrb[0].mxu0
    %v10698 = vadd.f32 %v10470, %v10697
    %v10699 = vpop.f32.mrb[0].mxu0
    %v10700 = vadd.f32 %v10474, %v10699
    %v10701 = vpop.f32.mrb[0].mxu0
    %v10702 = vpop.f32.mrb[0].mxu0
    %10703 = vdwg.mxu0
    %10704 = vmatprep.subr.bf16.mxu0 %v10582
    %10705 = vmatpush1.bf16.msra.mxu0 %v10581
    %10706 = vmatprep.subr.bf16.mxu0 %v10586
    %10707 = vmatpush1.bf16.msra.mxu0 %v10585
    %10708 = vmatprep.subr.bf16.mxu0 %v10590
    %10709 = vmatpush1.bf16.msra.mxu0 %v10589
    %10710 = vmatprep.subr.bf16.mxu0 %v10594
    %10711 = vmatpush1.bf16.msra.mxu0 %v10593
    %10712 = vmatprep.subr.bf16.mxu0 %v10598
    %10713 = vmatpush1.bf16.msra.mxu0 %v10597
    %10714 = vmatprep.subr.bf16.mxu0 %v10602
    %10715 = vmatpush1.bf16.msra.mxu0 %v10601
    %10716 = vmatprep.subr.bf16.mxu0 %v10606
    %10717 = vmatpush1.bf16.msra.mxu0 %v10605
    %10718 = vmatprep.subr.bf16.mxu0 %v10610
    %10719 = vmatpush1.bf16.msra.mxu0 %v10609
    %10720 = vmatprep.subr.bf16.mxu0 0
    %10721 = vmatpush1.bf16.msra.mxu0 0
    %10722 = vmatprep.subr.bf16.mxu0 0
    %10723 = vmatpush1.bf16.msra.mxu0 0
    %10724 = vmatprep.subr.bf16.mxu0 0
    %10725 = vmatpush1.bf16.msra.mxu0 0
    %10726 = vmatprep.subr.bf16.mxu0 0
    %10727 = vmatpush1.bf16.msra.mxu0 0
    %10728 = vmatprep.subr.bf16.mxu0 0
    %10729 = vmatpush1.bf16.msra.mxu0 0
    %10730 = vmatprep.subr.bf16.mxu0 0
    %10731 = vmatpush1.bf16.msra.mxu0 0
    %10732 = vmatprep.subr.bf16.mxu0 0
    %10733 = vmatpush1.bf16.msra.mxu0 0
    %10734 = vmatprep.subr.bf16.mxu0 0
    %10735 = vmatpush1.bf16.msra.mxu0 0
    %10736 = vmatprep.mubr.bf16.mxu0 0
    %10737 = vmatmul.mubr.bf16.gmra.mrb[0].mxu0 %v10412
    %v10738 = vpop.f32.mrb[0].mxu0
    %v10739 = vadd.f32 %v10478, %v10738
    %v10740 = vpop.f32.mrb[0].mxu0
    %v10741 = vadd.f32 %v10482, %v10740
    %v10742 = vpop.f32.mrb[0].mxu0
    %v10743 = vadd.f32 %v10478, %v10742
    %v10744 = vpop.f32.mrb[0].mxu0
    %v10745 = vadd.f32 %v10482, %v10744
    %10746 = vmatprep.mubr.bf16.mxu0 0
    %10747 = vmatmul.mubr.bf16.gmra.mrb[0].mxu0 %v10413
    %v10748 = vpop.f32.mrb[0].mxu0
    %v10749 = vadd.f32 %v10478, %v10748
    %v10750 = vpop.f32.mrb[0].mxu0
    %v10751 = vadd.f32 %v10482, %v10750
    %v10752 = vpop.f32.mrb[0].mxu0
    %v10753 = vadd.f32 %v10478, %v10752
    %v10754 = vpop.f32.mrb[0].mxu0
    %v10755 = vadd.f32 %v10482, %v10754
    %10756 = vmatprep.mubr.bf16.mxu0 0
    %10757 = vmatmul.mubr.bf16.gmra.mrb[0].mxu0 %v10414
    %v10758 = vpop.f32.mrb[0].mxu0
    %v10759 = vadd.f32 %v10478, %v10758
    %v10760 = vpop.f32.mrb[0].mxu0
    %v10761 = vadd.f32 %v10482, %v10760
    %v10762 = vpop.f32.mrb[0].mxu0
    %v10763 = vpop.f32.mrb[0].mxu0
    %10764 = vdwg.mxu0
    %v10765 = vmul.f32 %v10678, %v10678
    %v10766 = vmul.f32 %v10680, %v10680
    %v10767 = vmul.f32 %v10739, %v10739
    %v10768 = vmul.f32 %v10741, %v10741
    %v10769 = vmul.f32 %v10682, %v10682
    %v10770 = vmul.f32 %v10684, %v10684
    %v10771 = vmul.f32 %v10743, %v10743
    %v10772 = vmul.f32 %v10745, %v10745
    %v10773 = vmul.f32 %v10688, %v10688
    %v10774 = vmul.f32 %v10690, %v10690
    %v10775 = vmul.f32 %v10749, %v10749
    %v10776 = vmul.f32 %v10751, %v10751
    %v10777 = vmul.f32 %v10692, %v10692
    %v10778 = vmul.f32 %v10694, %v10694
    %v10779 = vmul.f32 %v10753, %v10753
    %v10780 = vmul.f32 %v10755, %v10755
    %v10781 = vmul.f32 %v10698, %v10698
    %v10782 = vmul.f32 %v10700, %v10700
    %v10783 = vmul.f32 %v10759, %v10759
    %v10784 = vmul.f32 %v10761, %v10761
    %v10785 = vmul.f32 %v10678, %v10765
    %v10786 = vmul.f32 %v10680, %v10766
    %v10787 = vmul.f32 %v10739, %v10767
    %v10788 = vmul.f32 %v10741, %v10768
    %v10789 = vmul.f32 %v10682, %v10769
    %v10790 = vmul.f32 %v10684, %v10770
    %v10791 = vmul.f32 %v10743, %v10771
    %v10792 = vmul.f32 %v10745, %v10772
    %v10793 = vmul.f32 %v10688, %v10773
    %v10794 = vmul.f32 %v10690, %v10774
    %v10795 = vmul.f32 %v10749, %v10775
    %v10796 = vmul.f32 %v10751, %v10776
    %v10797 = vmul.f32 %v10692, %v10777
    %v10798 = vmul.f32 %v10694, %v10778
    %v10799 = vmul.f32 %v10753, %v10779
    %v10800 = vmul.f32 %v10755, %v10780
    %v10801 = vmul.f32 %v10698, %v10781
    %v10802 = vmul.f32 %v10700, %v10782
    %v10803 = vmul.f32 %v10759, %v10783
    %v10804 = vmul.f32 %v10761, %v10784
    %v10805 = vmul.f32 %v10785, 0.044715
    %v10806 = vmul.f32 %v10786, 0.044715
    %v10807 = vmul.f32 %v10787, 0.044715
    %v10808 = vmul.f32 %v10788, 0.044715
    %v10809 = vmul.f32 %v10789, 0.044715
    %v10810 = vmul.f32 %v10790, 0.044715
    %v10811 = vmul.f32 %v10791, 0.044715
    %v10812 = vmul.f32 %v10792, 0.044715
    %v10813 = vmul.f32 %v10793, 0.044715
    %v10814 = vmul.f32 %v10794, 0.044715
    %v10815 = vmul.f32 %v10795, 0.044715
    %v10816 = vmul.f32 %v10796, 0.044715
    %v10817 = vmul.f32 %v10797, 0.044715
    %v10818 = vmul.f32 %v10798, 0.044715
    %v10819 = vmul.f32 %v10799, 0.044715
    %v10820 = vmul.f32 %v10800, 0.044715
    %v10821 = vmul.f32 %v10801, 0.044715
    %v10822 = vmul.f32 %v10802, 0.044715
    %v10823 = vmul.f32 %v10803, 0.044715
    %v10824 = vmul.f32 %v10804, 0.044715
    %v10825 = vadd.f32 %v10678, %v10805
    %v10826 = vadd.f32 %v10680, %v10806
    %v10827 = vadd.f32 %v10739, %v10807
    %v10828 = vadd.f32 %v10741, %v10808
    %v10829 = vadd.f32 %v10682, %v10809
    %v10830 = vadd.f32 %v10684, %v10810
    %v10831 = vadd.f32 %v10743, %v10811
    %v10832 = vadd.f32 %v10745, %v10812
    %v10833 = vadd.f32 %v10688, %v10813
    %v10834 = vadd.f32 %v10690, %v10814
    %v10835 = vadd.f32 %v10749, %v10815
    %v10836 = vadd.f32 %v10751, %v10816
    %v10837 = vadd.f32 %v10692, %v10817
    %v10838 = vadd.f32 %v10694, %v10818
    %v10839 = vadd.f32 %v10753, %v10819
    %v10840 = vadd.f32 %v10755, %v10820
    %v10841 = vadd.f32 %v10698, %v10821
    %v10842 = vadd.f32 %v10700, %v10822
    %v10843 = vadd.f32 %v10759, %v10823
    %v10844 = vadd.f32 %v10761, %v10824
    %v10845 = vmul.f32 %v10825, 0.7978846
    %v10846 = vmul.f32 %v10826, 0.7978846
    %v10847 = vmul.f32 %v10827, 0.7978846
    %v10848 = vmul.f32 %v10828, 0.7978846
    %v10849 = vmul.f32 %v10829, 0.7978846
    %v10850 = vmul.f32 %v10830, 0.7978846
    %v10851 = vmul.f32 %v10831, 0.7978846
    %v10852 = vmul.f32 %v10832, 0.7978846
    %v10853 = vmul.f32 %v10833, 0.7978846
    %v10854 = vmul.f32 %v10834, 0.7978846
    %v10855 = vmul.f32 %v10835, 0.7978846
    %v10856 = vmul.f32 %v10836, 0.7978846
    %v10857 = vmul.f32 %v10837, 0.7978846
    %v10858 = vmul.f32 %v10838, 0.7978846
    %v10859 = vmul.f32 %v10839, 0.7978846
    %v10860 = vmul.f32 %v10840, 0.7978846
    %v10861 = vmul.f32 %v10841, 0.7978846
    %v10862 = vmul.f32 %v10842, 0.7978846
    %v10863 = vmul.f32 %v10843, 0.7978846
    %v10864 = vmul.f32 %v10844, 0.7978846
    %v10865 = vtanh.pop %v10845
    %v10866 = vtanh.pop %v10846
    %v10867 = vtanh.pop %v10847
    %v10868 = vtanh.pop %v10848
    %v10869 = vtanh.pop %v10849
    %v10870 = vtanh.pop %v10850
    %v10871 = vtanh.pop %v10851
    %v10872 = vtanh.pop %v10852
    %v10873 = vtanh.pop %v10853
    %v10874 = vtanh.pop %v10854
    %v10875 = vtanh.pop %v10855
    %v10876 = vtanh.pop %v10856
    %v10877 = vtanh.pop %v10857
    %v10878 = vtanh.pop %v10858
    %v10879 = vtanh.pop %v10859
    %v10880 = vtanh.pop %v10860
    %v10881 = vtanh.pop %v10861
    %v10882 = vtanh.pop %v10862
    %v10883 = vtanh.pop %v10863
    %v10884 = vtanh.pop %v10864
    %v10885 = vadd.f32 %v10865, 1.0
    %v10886 = vadd.f32 %v10866, 1.0
    %v10887 = vadd.f32 %v10867, 1.0
    %v10888 = vadd.f32 %v10868, 1.0
    %v10889 = vadd.f32 %v10869, 1.0
    %v10890 = vadd.f32 %v10870, 1.0
    %v10891 = vadd.f32 %v10871, 1.0
    %v10892 = vadd.f32 %v10872, 1.0
    %v10893 = vadd.f32 %v10873, 1.0
    %v10894 = vadd.f32 %v10874, 1.0
    %v10895 = vadd.f32 %v10875, 1.0
    %v10896 = vadd.f32 %v10876, 1.0
    %v10897 = vadd.f32 %v10877, 1.0
    %v10898 = vadd.f32 %v10878, 1.0
    %v10899 = vadd.f32 %v10879, 1.0
    %v10900 = vadd.f32 %v10880, 1.0
    %v10901 = vadd.f32 %v10881, 1.0
    %v10902 = vadd.f32 %v10882, 1.0
    %v10903 = vadd.f32 %v10883, 1.0
    %v10904 = vadd.f32 %v10884, 1.0
    %v10905 = vmul.f32 %v10885, 0.5
    %v10906 = vmul.f32 %v10886, 0.5
    %v10907 = vmul.f32 %v10887, 0.5
    %v10908 = vmul.f32 %v10888, 0.5
    %v10909 = vmul.f32 %v10889, 0.5
    %v10910 = vmul.f32 %v10890, 0.5
    %v10911 = vmul.f32 %v10891, 0.5
    %v10912 = vmul.f32 %v10892, 0.5
    %v10913 = vmul.f32 %v10893, 0.5
    %v10914 = vmul.f32 %v10894, 0.5
    %v10915 = vmul.f32 %v10895, 0.5
    %v10916 = vmul.f32 %v10896, 0.5
    %v10917 = vmul.f32 %v10897, 0.5
    %v10918 = vmul.f32 %v10898, 0.5
    %v10919 = vmul.f32 %v10899, 0.5
    %v10920 = vmul.f32 %v10900, 0.5
    %v10921 = vmul.f32 %v10901, 0.5
    %v10922 = vmul.f32 %v10902, 0.5
    %v10923 = vmul.f32 %v10903, 0.5
    %v10924 = vmul.f32 %v10904, 0.5
    %v10925 = vmul.f32 %v10678, %v10905
    %v10926 = vmul.f32 %v10680, %v10906
    %v10927 = vmul.f32 %v10739, %v10907
    %v10928 = vmul.f32 %v10741, %v10908
    %v10929 = vmul.f32 %v10682, %v10909
    %v10930 = vmul.f32 %v10684, %v10910
    %v10931 = vmul.f32 %v10743, %v10911
    %v10932 = vmul.f32 %v10745, %v10912
    %v10933 = vmul.f32 %v10688, %v10913
    %v10934 = vmul.f32 %v10690, %v10914
    %v10935 = vmul.f32 %v10749, %v10915
    %v10936 = vmul.f32 %v10751, %v10916
    %v10937 = vmul.f32 %v10692, %v10917
    %v10938 = vmul.f32 %v10694, %v10918
    %v10939 = vmul.f32 %v10753, %v10919
    %v10940 = vmul.f32 %v10755, %v10920
    %v10941 = vmul.f32 %v10698, %v10921
    %v10942 = vmul.f32 %v10700, %v10922
    %v10943 = vmul.f32 %v10759, %v10923
    %v10944 = vmul.f32 %v10761, %v10924
    %v10945 = vpack.c.bf16 %v10929, %v10925
    %v10946 = vpack.c.bf16 %v10930, %v10926
    %v10947 = vpack.c.bf16 %v10931, %v10927
    %v10948 = vpack.c.bf16 %v10932, %v10928
    %v10949 = vpack.c.bf16 %v10937, %v10933
    %v10950 = vpack.c.bf16 %v10938, %v10934
    %v10951 = vpack.c.bf16 %v10939, %v10935
    %v10952 = vpack.c.bf16 %v10940, %v10936
    %v10953 = vpack.c.bf16 %v10941, %v10941
    %v10954 = vpack.c.bf16 %v10942, %v10942
    %v10955 = vpack.c.bf16 %v10943, %v10943
    %v10956 = vpack.c.bf16 %v10944, %v10944
    %v10957 = vld [vmem:[#allocation7] sm:$0xf]
    %v10958 = vld [vmem:[#allocation7 + $0x4] sm:$0xf]
    %v10959 = vld [vmem:[#allocation7 + $0x8] sm:$0xf]
    %v10960 = vld [vmem:[#allocation7 + $0xc] sm:$0xf]
    %v10961 = vld [vmem:[#allocation7 + $0x10] sm:$0xf]
    %v10962 = vld [vmem:[#allocation7 + $0x14] sm:$0xf]
    %v10963 = vld [vmem:[#allocation7 + $0x18] sm:$0xf]
    %v10964 = vld [vmem:[#allocation7 + $0x1c] sm:$0xf]
    %v10965 = vld [vmem:[#allocation7 + $0x20] sm:$0xf]
    %v10966 = vld [vmem:[#allocation7 + $0x24] sm:$0xf]
    %v10967 = vld [vmem:[#allocation7 + $0x28] sm:$0xf]
    %v10968 = vld [vmem:[#allocation7 + $0x2c] sm:$0xf]
    %v10969 = vld [vmem:[#allocation7 + $0x30] sm:$0xf]
    %v10970 = vld [vmem:[#allocation7 + $0x34] sm:$0xf]
    %v10971 = vld [vmem:[#allocation7 + $0x38] sm:$0xf]
    %v10972 = vld [vmem:[#allocation7 + $0x3c] sm:$0xf]
    %v10973 = vld [vmem:[#allocation7 + $0x40] sm:$0xf]
    %v10974 = vld [vmem:[#allocation7 + $0x44] sm:$0xf]
    %v10975 = vld [vmem:[#allocation7 + $0x48] sm:$0xf]
    %v10976 = vld [vmem:[#allocation7 + $0x4c] sm:$0xf]
    %v10977 = vld [vmem:[#allocation7 + $0x50] sm:$0xf]
    %v10978 = vld [vmem:[#allocation7 + $0x54] sm:$0xf]
    %v10979 = vld [vmem:[#allocation7 + $0x58] sm:$0xf]
    %v10980 = vld [vmem:[#allocation7 + $0x5c] sm:$0xf]
    %v10981 = vld [vmem:[#allocation7 + $0x60] sm:$0xf]
    %v10982 = vld [vmem:[#allocation7 + $0x64] sm:$0xf]
    %v10983 = vld [vmem:[#allocation7 + $0x68] sm:$0xf]
    %v10984 = vld [vmem:[#allocation7 + $0x6c] sm:$0xf]
    %v10985 = vld [vmem:[#allocation7 + $0x70] sm:$0xf]
    %v10986 = vld [vmem:[#allocation7 + $0x74] sm:$0xf]
    %v10987 = vld [vmem:[#allocation7 + $0x78] sm:$0xf]
    %v10988 = vld [vmem:[#allocation7 + $0x7c] sm:$0xf]
    %v10989 = vld [vmem:[#allocation7 + $0x80] sm:$0xf]
    %v10990 = vld [vmem:[#allocation7 + $0x84] sm:$0xf]
    %v10991 = vld [vmem:[#allocation7 + $0x88] sm:$0xf]
    %v10992 = vld [vmem:[#allocation7 + $0x8c] sm:$0xf]
    %v10993 = vld [vmem:[#allocation7 + $0x90] sm:$0xf]
    %v10994 = vld [vmem:[#allocation7 + $0x94] sm:$0xf]
    %v10995 = vld [vmem:[#allocation7 + $0x98] sm:$0xf]
    %v10996 = vld [vmem:[#allocation7 + $0x9c] sm:$0xf]
    %v10997 = vld [vmem:[#allocation7 + $0xa0] sm:$0xf]
    %v10998 = vld [vmem:[#allocation7 + $0xa4] sm:$0xf]
    %v10999 = vld [vmem:[#allocation7 + $0xa8] sm:$0xf]
    %v11000 = vld [vmem:[#allocation7 + $0xac] sm:$0xf]
    %v11001 = vld [vmem:[#allocation7 + $0xb0] sm:$0xf]
    %v11002 = vld [vmem:[#allocation7 + $0xb4] sm:$0xf]
    %v11003 = vld [vmem:[#allocation7 + $0xb8] sm:$0xf]
    %v11004 = vld [vmem:[#allocation7 + $0xbc] sm:$0xf]
    %v11005 = vld [vmem:[#allocation7 + $0xc0] sm:$0xf]
    %v11006 = vld [vmem:[#allocation7 + $0xc4] sm:$0xf]
    %v11007 = vld [vmem:[#allocation7 + $0xc8] sm:$0xf]
    %v11008 = vld [vmem:[#allocation7 + $0xcc] sm:$0xf]
    %v11009 = vld [vmem:[#allocation7 + $0xd0] sm:$0xf]
    %v11010 = vld [vmem:[#allocation7 + $0xd4] sm:$0xf]
    %v11011 = vld [vmem:[#allocation7 + $0xd8] sm:$0xf]
    %v11012 = vld [vmem:[#allocation7 + $0xdc] sm:$0xf]
    %v11013 = vld [vmem:[#allocation7 + $0xe0] sm:$0xf]
    %v11014 = vld [vmem:[#allocation7 + $0xe4] sm:$0xf]
    %v11015 = vld [vmem:[#allocation7 + $0xe8] sm:$0xf]
    %v11016 = vld [vmem:[#allocation7 + $0xec] sm:$0xf]
    %v11017 = vld [vmem:[#allocation7 + $0xf0] sm:$0xf]
    %v11018 = vld [vmem:[#allocation7 + $0xf4] sm:$0xf]
    %v11019 = vld [vmem:[#allocation7 + $0xf8] sm:$0xf]
    %v11020 = vld [vmem:[#allocation7 + $0xfc] sm:$0xf]
    %v11021 = vlaneseq
    %v11022 = vshrl.u32 %v11021, 7
    %v11023 = vsub.s32 7, %v11022
    %v11024 = vrot.slane %v483, %v11023
    %v11089 = vunpack.c.l.b16 %v10957
    %v11090 = vunpack.c.l.b16 %v10958
    %v11091 = vunpack.c.l.b16 %v10959
    %v11092 = vunpack.c.l.b16 %v10960
    %v11093 = vunpack.c.l.b16 %v10961
    %v11094 = vunpack.c.l.b16 %v10962
    %v11095 = vunpack.c.l.b16 %v10963
    %v11096 = vunpack.c.l.b16 %v10964
    %v11097 = vunpack.c.l.b16 %v10965
    %v11098 = vunpack.c.l.b16 %v10966
    %v11099 = vunpack.c.l.b16 %v10967
    %v11100 = vunpack.c.l.b16 %v10968
    %v11101 = vunpack.c.l.b16 %v10969
    %v11102 = vunpack.c.l.b16 %v10970
    %v11103 = vunpack.c.l.b16 %v10971
    %v11104 = vunpack.c.l.b16 %v10972
    %v11105 = vunpack.c.l.b16 %v10973
    %v11106 = vunpack.c.l.b16 %v10974
    %v11107 = vunpack.c.l.b16 %v10975
    %v11108 = vunpack.c.l.b16 %v10976
    %v11109 = vunpack.c.l.b16 %v10977
    %v11110 = vunpack.c.l.b16 %v10978
    %v11111 = vunpack.c.l.b16 %v10979
    %v11112 = vunpack.c.l.b16 %v10980
    %v11113 = vunpack.c.l.b16 %v10981
    %v11114 = vunpack.c.l.b16 %v10982
    %v11115 = vunpack.c.l.b16 %v10983
    %v11116 = vunpack.c.l.b16 %v10984
    %v11117 = vunpack.c.l.b16 %v10985
    %v11118 = vunpack.c.l.b16 %v10986
    %v11119 = vunpack.c.l.b16 %v10987
    %v11120 = vunpack.c.l.b16 %v10988
    %v11121 = vunpack.c.l.b16 %v10989
    %v11122 = vunpack.c.l.b16 %v10990
    %v11123 = vunpack.c.l.b16 %v10991
    %v11124 = vunpack.c.l.b16 %v10992
    %v11125 = vunpack.c.l.b16 %v10993
    %v11126 = vunpack.c.l.b16 %v10994
    %v11127 = vunpack.c.l.b16 %v10995
    %v11128 = vunpack.c.l.b16 %v10996
    %v11129 = vunpack.c.l.b16 %v10997
    %v11130 = vunpack.c.l.b16 %v10998
    %v11131 = vunpack.c.l.b16 %v10999
    %v11132 = vunpack.c.l.b16 %v11000
    %v11133 = vunpack.c.l.b16 %v11001
    %v11134 = vunpack.c.l.b16 %v11002
    %v11135 = vunpack.c.l.b16 %v11003
    %v11136 = vunpack.c.l.b16 %v11004
    %v11137 = vunpack.c.l.b16 %v11005
    %v11138 = vunpack.c.l.b16 %v11006
    %v11139 = vunpack.c.l.b16 %v11007
    %v11140 = vunpack.c.l.b16 %v11008
    %v11141 = vunpack.c.l.b16 %v11009
    %v11142 = vunpack.c.l.b16 %v11010
    %v11143 = vunpack.c.l.b16 %v11011
    %v11144 = vunpack.c.l.b16 %v11012
    %v11145 = vunpack.c.l.b16 %v11013
    %v11146 = vunpack.c.l.b16 %v11014
    %v11147 = vunpack.c.l.b16 %v11015
    %v11148 = vunpack.c.l.b16 %v11016
    %v11149 = vunpack.c.l.b16 %v11017
    %v11150 = vunpack.c.l.b16 %v11018
    %v11151 = vunpack.c.l.b16 %v11019
    %v11152 = vunpack.c.l.b16 %v11020
    %v11153 = vpack.c.b16 %v11090, %v11089
    %v11154 = vpack.c.b16 %v11092, %v11091
    %v11155 = vpack.c.b16 %v11094, %v11093
    %v11156 = vpack.c.b16 %v11096, %v11095
    %v11157 = vpack.c.b16 %v11098, %v11097
    %v11158 = vpack.c.b16 %v11100, %v11099
    %v11159 = vpack.c.b16 %v11102, %v11101
    %v11160 = vpack.c.b16 %v11104, %v11103
    %v11161 = vpack.c.b16 %v11106, %v11105
    %v11162 = vpack.c.b16 %v11108, %v11107
    %v11163 = vpack.c.b16 %v11110, %v11109
    %v11164 = vpack.c.b16 %v11112, %v11111
    %v11165 = vpack.c.b16 %v11114, %v11113
    %v11166 = vpack.c.b16 %v11116, %v11115
    %v11167 = vpack.c.b16 %v11118, %v11117
    %v11168 = vpack.c.b16 %v11120, %v11119
    %v11169 = vpack.c.b16 %v11122, %v11121
    %v11170 = vpack.c.b16 %v11124, %v11123
    %v11171 = vpack.c.b16 %v11126, %v11125
    %v11172 = vpack.c.b16 %v11128, %v11127
    %v11173 = vpack.c.b16 %v11130, %v11129
    %v11174 = vpack.c.b16 %v11132, %v11131
    %v11175 = vpack.c.b16 %v11134, %v11133
    %v11176 = vpack.c.b16 %v11136, %v11135
    %v11177 = vpack.c.b16 %v11138, %v11137
    %v11178 = vpack.c.b16 %v11140, %v11139
    %v11179 = vpack.c.b16 %v11142, %v11141
    %v11180 = vpack.c.b16 %v11144, %v11143
    %v11181 = vpack.c.b16 %v11146, %v11145
    %v11182 = vpack.c.b16 %v11148, %v11147
    %v11183 = vpack.c.b16 %v11150, %v11149
    %v11184 = vpack.c.b16 %v11152, %v11151
    %11217 = vmatprep.subr.bf16.mxu0 0
    %11218 = vmatpush1.bf16.msra.mxu0 %v11153
    %11219 = vmatprep.subr.bf16.mxu0 0
    %11220 = vmatpush1.bf16.msra.mxu0 %v11154
    %11221 = vmatprep.subr.bf16.mxu0 0
    %11222 = vmatpush1.bf16.msra.mxu0 %v11155
    %11223 = vmatprep.subr.bf16.mxu0 0
    %11224 = vmatpush1.bf16.msra.mxu0 %v11156
    %11225 = vmatprep.subr.bf16.mxu0 0
    %11226 = vmatpush1.bf16.msra.mxu0 %v11157
    %11227 = vmatprep.subr.bf16.mxu0 0
    %11228 = vmatpush1.bf16.msra.mxu0 %v11158
    %11229 = vmatprep.subr.bf16.mxu0 0
    %11230 = vmatpush1.bf16.msra.mxu0 %v11159
    %11231 = vmatprep.subr.bf16.mxu0 0
    %11232 = vmatpush1.bf16.msra.mxu0 %v11160
    %11233 = vmatprep.subr.bf16.mxu0 0
    %11234 = vmatpush1.bf16.msra.mxu0 %v11161
    %11235 = vmatprep.subr.bf16.mxu0 0
    %11236 = vmatpush1.bf16.msra.mxu0 %v11162
    %11237 = vmatprep.subr.bf16.mxu0 0
    %11238 = vmatpush1.bf16.msra.mxu0 %v11163
    %11239 = vmatprep.subr.bf16.mxu0 0
    %11240 = vmatpush1.bf16.msra.mxu0 %v11164
    %11241 = vmatprep.subr.bf16.mxu0 0
    %11242 = vmatpush1.bf16.msra.mxu0 %v11165
    %11243 = vmatprep.subr.bf16.mxu0 0
    %11244 = vmatpush1.bf16.msra.mxu0 %v11166
    %11245 = vmatprep.subr.bf16.mxu0 0
    %11246 = vmatpush1.bf16.msra.mxu0 %v11167
    %11247 = vmatprep.subr.bf16.mxu0 0
    %11248 = vmatpush1.bf16.msra.mxu0 %v11168
    %11249 = vmatprep.mubr.bf16.mxu0 %v10946
    %11250 = vmatmul.mubr.bf16.gmra.mrb[0].mxu0 %v10945
    %v11251 = vpop.f32.mrb[0].mxu0
    %v11252 = vadd.f32 %v11024, %v11251
    %v11253 = vpop.f32.mrb[0].mxu0
    %v11254 = vpop.f32.mrb[0].mxu0
    %v11255 = vadd.f32 %v11024, %v11254
    %v11256 = vpop.f32.mrb[0].mxu0
    %11257 = vmatprep.mubr.bf16.mxu0 %v10950
    %11258 = vmatmul.mubr.bf16.gmra.mrb[0].mxu0 %v10949
    %v11259 = vpop.f32.mrb[0].mxu0
    %v11260 = vadd.f32 %v11024, %v11259
    %v11261 = vpop.f32.mrb[0].mxu0
    %v11262 = vpop.f32.mrb[0].mxu0
    %v11263 = vadd.f32 %v11024, %v11262
    %v11264 = vpop.f32.mrb[0].mxu0
    %11265 = vmatprep.mubr.bf16.mxu0 %v10954
    %11266 = vmatmul.mubr.bf16.gmra.mrb[0].mxu0 %v10953
    %v11267 = vpop.f32.mrb[0].mxu0
    %v11268 = vadd.f32 %v11024, %v11267
    %v11269 = vpop.f32.mrb[0].mxu0
    %v11270 = vpop.f32.mrb[0].mxu0
    %v11271 = vpop.f32.mrb[0].mxu0
    %11272 = vdwg.mxu0
    %11273 = vmatprep.subr.bf16.mxu0 0
    %11274 = vmatpush1.bf16.msra.mxu0 %v11169
    %11275 = vmatprep.subr.bf16.mxu0 0
    %11276 = vmatpush1.bf16.msra.mxu0 %v11170
    %11277 = vmatprep.subr.bf16.mxu0 0
    %11278 = vmatpush1.bf16.msra.mxu0 %v11171
    %11279 = vmatprep.subr.bf16.mxu0 0
    %11280 = vmatpush1.bf16.msra.mxu0 %v11172
    %11281 = vmatprep.subr.bf16.mxu0 0
    %11282 = vmatpush1.bf16.msra.mxu0 %v11173
    %11283 = vmatprep.subr.bf16.mxu0 0
    %11284 = vmatpush1.bf16.msra.mxu0 %v11174
    %11285 = vmatprep.subr.bf16.mxu0 0
    %11286 = vmatpush1.bf16.msra.mxu0 %v11175
    %11287 = vmatprep.subr.bf16.mxu0 0
    %11288 = vmatpush1.bf16.msra.mxu0 %v11176
    %11289 = vmatprep.subr.bf16.mxu0 0
    %11290 = vmatpush1.bf16.msra.mxu0 %v11177
    %11291 = vmatprep.subr.bf16.mxu0 0
    %11292 = vmatpush1.bf16.msra.mxu0 %v11178
    %11293 = vmatprep.subr.bf16.mxu0 0
    %11294 = vmatpush1.bf16.msra.mxu0 %v11179
    %11295 = vmatprep.subr.bf16.mxu0 0
    %11296 = vmatpush1.bf16.msra.mxu0 %v11180
    %11297 = vmatprep.subr.bf16.mxu0 0
    %11298 = vmatpush1.bf16.msra.mxu0 %v11181
    %11299 = vmatprep.subr.bf16.mxu0 0
    %11300 = vmatpush1.bf16.msra.mxu0 %v11182
    %11301 = vmatprep.subr.bf16.mxu0 0
    %11302 = vmatpush1.bf16.msra.mxu0 %v11183
    %11303 = vmatprep.subr.bf16.mxu0 0
    %11304 = vmatpush1.bf16.msra.mxu0 %v11184
    %11305 = vmatprep.mubr.bf16.mxu0 %v10948
    %11306 = vmatmul.mubr.bf16.gmra.mrb[0].mxu0 %v10947
    %v11307 = vpop.f32.mrb[0].mxu0
    %v11308 = vadd.f32 %v11252, %v11307
    %v11309 = vpop.f32.mrb[0].mxu0
    %v11310 = vpop.f32.mrb[0].mxu0
    %v11311 = vadd.f32 %v11255, %v11310
    %v11312 = vpop.f32.mrb[0].mxu0
    %11313 = vmatprep.mubr.bf16.mxu0 %v10952
    %11314 = vmatmul.mubr.bf16.gmra.mrb[0].mxu0 %v10951
    %v11315 = vpop.f32.mrb[0].mxu0
    %v11316 = vadd.f32 %v11260, %v11315
    %v11317 = vpop.f32.mrb[0].mxu0
    %v11318 = vpop.f32.mrb[0].mxu0
    %v11319 = vadd.f32 %v11263, %v11318
    %v11320 = vpop.f32.mrb[0].mxu0
    %11321 = vmatprep.mubr.bf16.mxu0 %v10956
    %11322 = vmatmul.mubr.bf16.gmra.mrb[0].mxu0 %v10955
    %v11323 = vpop.f32.mrb[0].mxu0
    %v11324 = vadd.f32 %v11268, %v11323
    %v11325 = vpop.f32.mrb[0].mxu0
    %v11326 = vpop.f32.mrb[0].mxu0
    %v11327 = vpop.f32.mrb[0].mxu0
    %11328 = vdwg.mxu0
    %v11329 = vadd.f32 %v10334, %v11308
    %v11330 = vadd.f32 %v10335, %v11311
    %v11331 = vadd.f32 %v10336, %v11316
    %v11332 = vadd.f32 %v10337, %v11319
    %v11333 = vadd.f32 %v10338, %v11324
    %11334 = vadd.xlane.f32.xlu0 %v11329
    %v11335 = vpop.xlane.xlu0 %11334
    %11336 = vadd.xlane.f32.xlu0 %v11330
    %v11337 = vpop.xlane.xlu0 %11336
    %11338 = vadd.xlane.f32.xlu0 %v11331
    %v11339 = vpop.xlane.xlu0 %11338
    %11340 = vadd.xlane.f32.xlu0 %v11332
    %v11341 = vpop.xlane.xlu0 %11340
    %11342 = vadd.xlane.f32.xlu0 %v11333
    %v11343 = vpop.xlane.xlu0 %11342
    %v11344 = vmul.f32 %v11335, %v495
    %v11345 = vmul.f32 %v11337, %v495
    %v11346 = vmul.f32 %v11339, %v495
    %v11347 = vmul.f32 %v11341, %v495
    %v11348 = vmul.f32 %v11343, %v495
    %v11349 = vsub.f32 %v11329, %v11344
    %v11350 = vsub.f32 %v11330, %v11345
    %v11351 = vsub.f32 %v11331, %v11346
    %v11352 = vsub.f32 %v11332, %v11347
    %v11353 = vsub.f32 %v11333, %v11348
    %v11354 = vmul.f32 %v11349, %v11349
    %v11355 = vmul.f32 %v11350, %v11350
    %v11356 = vmul.f32 %v11351, %v11351
    %v11357 = vmul.f32 %v11352, %v11352
    %v11358 = vmul.f32 %v11353, %v11353
    %11359 = vadd.xlane.f32.xlu0 %v11354
    %v11360 = vpop.xlane.xlu0 %11359
    %11361 = vadd.xlane.f32.xlu0 %v11355
    %v11362 = vpop.xlane.xlu0 %11361
    %11363 = vadd.xlane.f32.xlu0 %v11356
    %v11364 = vpop.xlane.xlu0 %11363
    %11365 = vadd.xlane.f32.xlu0 %v11357
    %v11366 = vpop.xlane.xlu0 %11365
    %11367 = vadd.xlane.f32.xlu0 %v11358
    %v11368 = vpop.xlane.xlu0 %11367
    %v11369 = vmul.f32 %v11360, %v495
    %v11370 = vmul.f32 %v11362, %v495
    %v11371 = vmul.f32 %v11364, %v495
    %v11372 = vmul.f32 %v11366, %v495
    %v11373 = vmul.f32 %v11368, %v495
    %v11374 = vadd.f32 %v11369, 1e-05
    %v11375 = vadd.f32 %v11370, 1e-05
    %v11376 = vadd.f32 %v11371, 1e-05
    %v11377 = vadd.f32 %v11372, 1e-05
    %v11378 = vadd.f32 %v11373, 1e-05
    %v11379 = vrsqrt.pop %v11374
    %v11380 = vrsqrt.pop %v11375
    %v11381 = vrsqrt.pop %v11376
    %v11382 = vrsqrt.pop %v11377
    %v11383 = vrsqrt.pop %v11378
    %v11384 = vmul.f32 %v11349, %v11379
    %v11385 = vmul.f32 %v11350, %v11380
    %v11386 = vmul.f32 %v11351, %v11381
    %v11387 = vmul.f32 %v11352, %v11382
    %v11388 = vmul.f32 %v11353, %v11383
    %v11389 = vlaneseq
    %v11390 = vshrl.u32 %v11389, 7
    %v11391 = vsub.s32 4, %v11390
    %v11392 = vrot.slane %v483, %v11391
    %v11393 = vmul.f32 %v11384, %v11392
    %v11394 = vmul.f32 %v11385, %v11392
    %v11395 = vmul.f32 %v11386, %v11392
    %v11396 = vmul.f32 %v11387, %v11392
    %v11397 = vmul.f32 %v11388, %v11392
    %v11398 = vlaneseq
    %v11399 = vshrl.u32 %v11398, 7
    %v11400 = vsub.s32 5, %v11399
    %v11401 = vrot.slane %v483, %v11400
    %v11402 = vadd.f32 %v11393, %v11401
    %v11403 = vadd.f32 %v11394, %v11401
    %v11404 = vadd.f32 %v11395, %v11401
    %v11405 = vadd.f32 %v11396, %v11401
    %v11406 = vadd.f32 %v11397, %v11401
    %v11407 = vpack.c.bf16 %v11403, %v11402
    %v11408 = vpack.c.bf16 %v11405, %v11404
    %v11409 = vpack.c.bf16 %v11406, %v11406
    %v11410 = vld [vmem:[#allocation9] sm:$0xf]
    %v11411 = vld [vmem:[#allocation9 + $0x4] sm:$0xf]
    %v11412 = vld [vmem:[#allocation9 + $0x8] sm:$0xf]
    %v11413 = vld [vmem:[#allocation9 + $0xc] sm:$0xf]
    %v11414 = vld [vmem:[#allocation9 + $0x10] sm:$0xf]
    %v11415 = vld [vmem:[#allocation9 + $0x14] sm:$0xf]
    %v11416 = vld [vmem:[#allocation9 + $0x18] sm:$0xf]
    %v11417 = vld [vmem:[#allocation9 + $0x1c] sm:$0xf]
    %v11418 = vld [vmem:[#allocation9 + $0x20] sm:$0xf]
    %v11419 = vld [vmem:[#allocation9 + $0x24] sm:$0xf]
    %v11420 = vld [vmem:[#allocation9 + $0x28] sm:$0xf]
    %v11421 = vld [vmem:[#allocation9 + $0x2c] sm:$0xf]
    %v11422 = vld [vmem:[#allocation9 + $0x30] sm:$0xf]
    %v11423 = vld [vmem:[#allocation9 + $0x34] sm:$0xf]
    %v11424 = vld [vmem:[#allocation9 + $0x38] sm:$0xf]
    %v11425 = vld [vmem:[#allocation9 + $0x3c] sm:$0xf]
    %v11442 = vunpack.c.l.b16 %v11410
    %v11443 = vunpack.c.l.b16 %v11411
    %v11444 = vunpack.c.l.b16 %v11412
    %v11445 = vunpack.c.l.b16 %v11413
    %v11446 = vunpack.c.l.b16 %v11414
    %v11447 = vunpack.c.l.b16 %v11415
    %v11448 = vunpack.c.l.b16 %v11416
    %v11449 = vunpack.c.l.b16 %v11417
    %v11450 = vunpack.c.l.b16 %v11418
    %v11451 = vunpack.c.l.b16 %v11419
    %v11452 = vunpack.c.l.b16 %v11420
    %v11453 = vunpack.c.l.b16 %v11421
    %v11454 = vunpack.c.l.b16 %v11422
    %v11455 = vunpack.c.l.b16 %v11423
    %v11456 = vunpack.c.l.b16 %v11424
    %v11457 = vunpack.c.l.b16 %v11425
    %v11458 = vpack.c.b16 %v11443, %v11442
    %v11459 = vpack.c.b16 %v11445, %v11444
    %v11460 = vpack.c.b16 %v11447, %v11446
    %v11461 = vpack.c.b16 %v11449, %v11448
    %v11462 = vpack.c.b16 %v11451, %v11450
    %v11463 = vpack.c.b16 %v11453, %v11452
    %v11464 = vpack.c.b16 %v11455, %v11454
    %v11465 = vpack.c.b16 %v11457, %v11456
    %11474 = vmatprep.subr.bf16.mxu0 0
    %11475 = vmatpush1.bf16.msra.mxu0 %v11458
    %11476 = vmatprep.subr.bf16.mxu0 0
    %11477 = vmatpush1.bf16.msra.mxu0 %v11459
    %11478 = vmatprep.subr.bf16.mxu0 0
    %11479 = vmatpush1.bf16.msra.mxu0 %v11460
    %11480 = vmatprep.subr.bf16.mxu0 0
    %11481 = vmatpush1.bf16.msra.mxu0 %v11461
    %11482 = vmatprep.subr.bf16.mxu0 0
    %11483 = vmatpush1.bf16.msra.mxu0 %v11462
    %11484 = vmatprep.subr.bf16.mxu0 0
    %11485 = vmatpush1.bf16.msra.mxu0 %v11463
    %11486 = vmatprep.subr.bf16.mxu0 0
    %11487 = vmatpush1.bf16.msra.mxu0 %v11464
    %11488 = vmatprep.subr.bf16.mxu0 0
    %11489 = vmatpush1.bf16.msra.mxu0 %v11465
    %11490 = vmatprep.subr.bf16.mxu0 0
    %11491 = vmatpush1.bf16.msra.mxu0 0
    %11492 = vmatprep.subr.bf16.mxu0 0
    %11493 = vmatpush1.bf16.msra.mxu0 0
    %11494 = vmatprep.subr.bf16.mxu0 0
    %11495 = vmatpush1.bf16.msra.mxu0 0
    %11496 = vmatprep.subr.bf16.mxu0 0
    %11497 = vmatpush1.bf16.msra.mxu0 0
    %11498 = vmatprep.subr.bf16.mxu0 0
    %11499 = vmatpush1.bf16.msra.mxu0 0
    %11500 = vmatprep.subr.bf16.mxu0 0
    %11501 = vmatpush1.bf16.msra.mxu0 0
    %11502 = vmatprep.subr.bf16.mxu0 0
    %11503 = vmatpush1.bf16.msra.mxu0 0
    %11504 = vmatprep.subr.bf16.mxu0 0
    %11505 = vmatpush1.bf16.msra.mxu0 0
    %11506 = vmatprep.mubr.bf16.mxu0 0
    %11507 = vmatmul.mubr.bf16.gmra.mrb[0].mxu0 %v11407
    %v11508 = vpop.f32.mrb[0].mxu0
    %v11509 = vadd.f32 0.0, %v11508
    %v11510 = vpop.f32.mrb[0].mxu0
    %v11511 = vpop.f32.mrb[0].mxu0
    %v11512 = vadd.f32 0.0, %v11511
    %v11513 = vpop.f32.mrb[0].mxu0
    %11514 = vmatprep.mubr.bf16.mxu0 0
    %11515 = vmatmul.mubr.bf16.gmra.mrb[0].mxu0 %v11408
    %v11516 = vpop.f32.mrb[0].mxu0
    %v11517 = vadd.f32 0.0, %v11516
    %v11518 = vpop.f32.mrb[0].mxu0
    %v11519 = vpop.f32.mrb[0].mxu0
    %v11520 = vadd.f32 0.0, %v11519
    %v11521 = vpop.f32.mrb[0].mxu0
    %11522 = vmatprep.mubr.bf16.mxu0 0
    %11523 = vmatmul.mubr.bf16.gmra.mrb[0].mxu0 %v11409
    %v11524 = vpop.f32.mrb[0].mxu0
    %v11525 = vadd.f32 0.0, %v11524
    %v11526 = vpop.f32.mrb[0].mxu0
    %v11527 = vpop.f32.mrb[0].mxu0
    %v11528 = vpop.f32.mrb[0].mxu0
    %11529 = vdwg.mxu0
    %11530 = vst [vmem:[%s13] sm:$0xff] %v11509
    %11531 = vst [vmem:[%s13 + $0x8] sm:$0xff] %v11512
    %11532 = vst [vmem:[%s13 + $0x10] sm:$0xff] %v11517
    %11533 = vst [vmem:[%s13 + $0x18] sm:$0xff] %v11520
    %11534 = vst [vmem:[%s13 + $0x20] sm:$0xff] %v11525
    // Predicated region
    $region74: #{prompt_model_forward.1} parent=1 // pred_check
      _
    $region75: #{prompt_model_forward.1} parent=1 // pred_check_branch
      %11536 = sbr.rel (0) target = $region77
    $region76: #{prompt_model_forward.1} parent=1 // pred_region
      _
    $region77: #{prompt_model_forward.1} parent=1 // pred_fallthru
      _
    // Predicated region
    $region78: #{prompt_model_forward.1} parent=1 // pred_check
      _
    $region79: #{prompt_model_forward.1} parent=1 // pred_check_branch
      %11538 = sbr.rel (0) target = $region81
    $region80: #{prompt_model_forward.1} parent=1 // pred_region
      _
    $region81: #{prompt_model_forward.1} parent=1 // pred_fallthru
      _
    %11539 = vsyncpa [#allocation3], 1
    %11540 = vsyncpa [#allocation5], 1
    %11541 = vsyncpa [#allocation8], 1

</llo_original>
